<compile_context>
chip_gen: v6e
topology: v6e:2x2x1
jax: 0.10.0
libtpu: 0.0.40
codegen_flags: <defaults>
</compile_context>

<pallas_src>
import functools
import math

import jax
import jax.numpy as jnp
import numpy as np
from jax.experimental import pallas as pl
from jax.experimental.pallas import tpu as pltpu


# ----------------------------- kernel body -----------------------------------
def _elu(x):
    # ELU with overflow-safe negative branch.
    return jnp.where(x > 0.0, x, jnp.exp(jnp.minimum(x, 0.0)) - 1.0)


def _gat_layer(h3, w_ext, r1, r2, a_big, *, alpha, bn, C, V, O):
    """One single-head GraphAttentionLayer2D (pre-activation) on a batch tile.

    h3    : (G, V, Tin)  with G = bn * C   ("batch x channel" groups)
    w_ext : (Tin, O + 2) = [W | W @ a[:O] | W @ a[O:]]
    r1,r2 : (V, V*V)     constant expansion matrices:
                            (s1 @ r1)[g, i*V+j] = s1[g, i]
                            (s2 @ r2)[g, i*V+j] = s2[g, j]
    a_big : (V*V, V*V)   kron(adj_norm, I_V): folds the D^-1/2 A D^-1/2 mix
                         into one shared lane-dense matmul on att.
    returns (G, V, O)    h' (pre-ELU)
    """
    G = bn * C
    Tin = h3.shape[-1]

    # --- projection + folded attention-vector columns: one MXU matmul -------
    whx = jnp.dot(h3.reshape(G * V, Tin), w_ext,
                  preferred_element_type=jnp.float32)            # (G*V, O+2)
    whx3 = whx.reshape(G, V, O + 2)
    wh = whx3[:, :, :O]                                          # (G, V, O)  == Wh
    s1 = whx3[:, :, O]                                           # (G, V)     == Wh @ a[:O]
    s2 = whx3[:, :, O + 1]                                       # (G, V)     == Wh @ a[O:]

    # --- lane-dense logits: e[g, i*V+j] = LeakyReLU(s1[g,i] + s2[g,j]) ------
    e = (jnp.dot(s1, r1, preferred_element_type=jnp.float32) +
         jnp.dot(s2, r2, preferred_element_type=jnp.float32))    # (G, V*V), 64 lanes
    e = jnp.where(e > 0, e, alpha * e)

    # --- softmax over the channel axis C, per batch element -----------------
    # (matches torch softmax(e, dim=-1) where the last axis of e is C)
    e3 = e.reshape(bn, C, V * V)
    m = jnp.max(e3, axis=1, keepdims=True)
    p = jnp.exp(e3 - m)
    denom = jnp.sum(p, axis=1, keepdims=True)
    att = (p * pl.reciprocal(denom, approx=True)).reshape(G, V * V)

    # --- adjacency mix as ONE shared lane-dense 2-D matmul -------------------
    #     M[g, v*V+j] = sum_i adj_norm[i, v] * att[g, i*V+j]
    m_dense = jnp.dot(att, a_big, preferred_element_type=jnp.float32)   # (G, V*V)

    # --- per-group neighbor aggregation (single remaining batched matmul) ---
    #     h'[g, v, o] = sum_j M[g, v, j] * Wh[g, j, o]
    m3 = m_dense.reshape(G, V, V)
    hp = jax.lax.dot_general(m3, wh, (((2,), (1,)), ((0,), (0,))),
                             preferred_element_type=jnp.float32)        # (G, V, O)
    return hp


def _baseline2d_kernel(x_ref, w1_ref, w2_ref, r_ref, a1_ref, a2_ref, o_ref, *,
                       alpha, bn, C, V, O1, O2):
    """Fused hidden-GAT -> output-GAT -> tanh for one batch tile.

    x_ref   : (bn, C*V, Tin)      pre-flattened, sublane-dense input
    w*_ref  : (Tin, Ohid + 2)     extended projection matrices
    r_ref   : (2V, V*V)           [r1; r2] logit-expansion constants
    a*_ref  : (V*V, V*V)          kron(adj_norm, I_V) per layer
    o_ref   : (bn, C, V * O2)     lane-dense output (v-major, t-minor flatten)
    """
    T = x_ref.shape[-1]
    G = bn * C
    r_all = r_ref[...]
    r1 = r_all[:V, :]
    r2 = r_all[V:, :]

    h0 = x_ref[...].reshape(G, V, T)                   # pure view of (bn, C*V, T)
    hp1 = _gat_layer(h0, w1_ref[...], r1, r2, a1_ref[...],
                     alpha=alpha, bn=bn, C=C, V=V, O=O1)
    h1 = _elu(hp1)                                     # (G, V, O1) feeds layer-2 proj
    hp2 = _gat_layer(h1, w2_ref[...], r1, r2, a2_ref[...],
                     alpha=alpha, bn=bn, C=C, V=V, O=O2)

    # Lane-densify first, then run ELU + tanh on 128-lane vregs.
    y = hp2.reshape(bn, C, V * O2)
    o_ref[...] = jnp.tanh(_elu(y))


# ----------------------------- wrapper ----------------------------------------
def _prep_layer(layer_params, V):
    """Precompute [W | W@a1 | W@a2] and kron(adj_norm, I_V) for one layer."""
    Wm, a, Bp = layer_params
    O = Wm.shape[1]
    w_ext = jnp.concatenate(
        [Wm, (Wm @ a[:O, 0])[:, None], (Wm @ a[O:, 0])[:, None]], axis=1)
    adj = Bp.astype(jnp.float32) + jnp.eye(V, dtype=jnp.float32)
    adj = (adj - jnp.min(adj)) / (jnp.max(adj) - jnp.min(adj) + 1e-12)
    d = jnp.sum(adj, axis=1)
    d_isqrt = jnp.sqrt(1.0 / (d + 1e-12))
    adj_norm = adj * d_isqrt[:, None] * d_isqrt[None, :]    # D^-1/2 A D^-1/2
    # att @ kron(adj_norm, I_V) == adjacency contraction over the i axis.
    a_big = jnp.kron(adj_norm, jnp.eye(V, dtype=jnp.float32))
    return w_ext.astype(jnp.float32), a_big.astype(jnp.float32)


def _expansion_matrices(V):
    eye = jnp.eye(V, dtype=jnp.float32)
    ones = jnp.ones((1, V), dtype=jnp.float32)
    r1 = jnp.kron(eye, ones)     # (V, V*V): r1[k, i*V+j] = [k == i]
    r2 = jnp.kron(ones, eye)     # (V, V*V): r2[k, i*V+j] = [k == j]
    return jnp.concatenate([r1, r2], axis=0)               # (2V, V*V)


def _pick_bn(N):
    """Batch tile per TPU generation: 1 grid step on 1-TC chips, N/2 on v7x."""
    kind = ""
    try:
        kind = jax.devices()[0].device_kind.lower()
    except Exception:
        pass
    n_tc = 2 if "v7" in kind else 1          # v7x: 2 TensorCores/chip
    bn = N // n_tc if (n_tc > 1 and N % n_tc == 0) else N
    cap = 128                                # VMEM guard once N scales up
    if bn > cap:
        bn = cap
        while N % bn:
            bn -= 1
    return max(bn, 1)


def baseline_model_forward(x, params_hidden, params_output, *, alpha=0.2, bn=None):
    """x: (B, H, W, T, V) float -> (B, H, W, T, V), matching BaselineModel2D."""
    B, H, W, T, V = x.shape
    N, C = B, H * W
    O1 = params_hidden[0].shape[1]
    O2 = params_output[0].shape[1]
    assert O1 == T and params_output[0].shape[0] == O1   # nfeat == nhid == time_steps

    if bn is None:
        bn = _pick_bn(N)
    assert N % bn == 0, "batch tile bn must divide the batch size"

    # (B,H,W,T,V) -> (N, C, V, T) -> (N, C*V, T): the kernel's (G*V, T) matmul
    # operand is then a pure view and the DMA moves sublane-dense slabs.
    x_flat = jnp.transpose(x.reshape(N, C, T, V), (0, 1, 3, 2)) \
                .reshape(N, C * V, T).astype(jnp.float32)
    w1_ext, a_big1 = _prep_layer(params_hidden, V)
    w2_ext, a_big2 = _prep_layer(params_output, V)
    r_expand = _expansion_matrices(V)

    kernel = functools.partial(_baseline2d_kernel, alpha=alpha, bn=bn,
                               C=C, V=V, O1=O1, O2=O2)
    out_flat = pl.pallas_call(
        kernel,
        out_shape=jax.ShapeDtypeStruct((N, C, V * O2), jnp.float32),
        grid=(N // bn,),
        in_specs=[
            pl.BlockSpec((bn, C * V, T), lambda n: (n, 0, 0)),
            pl.BlockSpec((T, O1 + 2), lambda n: (0, 0)),
            pl.BlockSpec((O1, O2 + 2), lambda n: (0, 0)),
            pl.BlockSpec((2 * V, V * V), lambda n: (0, 0)),
            pl.BlockSpec((V * V, V * V), lambda n: (0, 0)),
            pl.BlockSpec((V * V, V * V), lambda n: (0, 0)),
        ],
        out_specs=pl.BlockSpec((bn, C, V * O2), lambda n: (n, 0, 0)),
        compiler_params=pltpu.CompilerParams(
            dimension_semantics=("parallel",),
            vmem_limit_bytes=32 * 1024 * 1024),
    )(x_flat, w1_ext, w2_ext, r_expand, a_big1, a_big2)

    out = out_flat.reshape(N, C, V, O2).transpose(0, 1, 3, 2)    # (N, C, T, V)
    return out.reshape(B, H, W, O2, V)


# ------------------------- pure-JAX reference ---------------------------------
def _gat_layer_ref(x, layer_params, alpha):
    Wm, a, Bp = layer_params
    N, C, T, V = x.shape
    O = Wm.shape[1]
    h = jnp.transpose(x, (0, 3, 1, 2))                  # (N, V, C, T)
    Wh = h @ Wm                                         # (N, V, C, O)
    s1 = Wh @ a[:O, 0]                                  # (N, V, C)
    s2 = Wh @ a[O:, 0]
    e = s1[:, :, None, :] + s2[:, None, :, :]           # (N, Vi, Vj, C)
    e = jnp.where(e > 0, e, alpha * e)
    att = jax.nn.softmax(e, axis=-1)
    adj = Bp + jnp.eye(V, dtype=jnp.float32)
    adj = (adj - jnp.min(adj)) / (jnp.max(adj) - jnp.min(adj) + 1e-12)
    d = jnp.sum(adj, axis=1)
    d_isqrt = jnp.sqrt(1.0 / (d + 1e-12))
    adj_norm = adj * d_isqrt[:, None] * d_isqrt[None, :]
    out1 = jnp.einsum('nijc,njco->nico', att, Wh)
    hp = jnp.einsum('nico,iv->ncov', out1, adj_norm)    # (N, C, O, V)
    return jnp.where(hp > 0, hp, jnp.exp(jnp.minimum(hp, 0.0)) - 1.0)


def baseline_model_ref(x, params_hidden, params_output, alpha=0.2):
    B, H, W, T, V = x.shape
    h = x.reshape(B, H * W, T, V).astype(jnp.float32)
    h = _gat_layer_ref(h, params_hidden, alpha)
    h = _gat_layer_ref(h, params_output, alpha)
    return jnp.tanh(h.reshape(B, H, W, T, V))


# ------------------------------- params ---------------------------------------
def init_layer_params(key, nfeat, nhid, n_vertices):
    """Xavier-uniform-style init matching the torch parameter shapes."""
    k1, k2, k3 = jax.random.split(key, 3)
    gain = 1.414
    bw = gain * math.sqrt(6.0 / (nfeat + nhid))
    Wm = jax.random.uniform(k1, (nfeat, nhid), jnp.float32, -bw, bw)
    ba = gain * math.sqrt(6.0 / (2 * nhid + 1))
    a = jax.random.uniform(k2, (2 * nhid, 1), jnp.float32, -ba, ba)
    # torch init is zeros + 1e-6; add a small deterministic perturbation so the
    # (trainable) adjacency path is exercised non-trivially.
    Bp = 1e-6 + 0.1 * jax.random.uniform(k3, (n_vertices, n_vertices), jnp.float32)
    return (Wm, a, Bp)


if __name__ == "__main__":
    # BaselineModel2D(image_width=4, image_height=4, n_vertices=8, time_steps=16)
    B, Himg, Wimg, T, V = 2, 4, 4, 16, 8     # x: (B, H, W, T, V); C = H*W = 16
    alpha = 0.2

    key = jax.random.PRNGKey(0)
    kx, k1, k2 = jax.random.split(key, 3)
    x = jax.random.normal(kx, (B, Himg, Wimg, T, V), dtype=jnp.float32)
    params_hidden = init_layer_params(k1, nfeat=T, nhid=T, n_vertices=V)
    params_output = init_layer_params(k2, nfeat=T, nhid=T, n_vertices=V)

    fwd = jax.jit(baseline_model_forward, static_argnames=("alpha", "bn"))
    out = jax.block_until_ready(fwd(x, params_hidden, params_output, alpha=alpha))

    ref = baseline_model_ref(x, params_hidden, params_output, alpha=alpha)
    np.testing.assert_allclose(np.asarray(out), np.asarray(ref), rtol=2e-2, atol=2e-2)
    assert out.shape == (B, Himg, Wimg, T, V)

    print("KERNEL_OK")
</pallas_src>

<mosaic_0001>
module attributes {stable_mosaic.version = 11 : i64} {
  func.func @_baseline2d_kernel(%arg0: i32, %arg1: memref<2x128x16xf32, #tpu.memory_space<vmem>>, %arg2: memref<16x18xf32, #tpu.memory_space<vmem>>, %arg3: memref<16x18xf32, #tpu.memory_space<vmem>>, %arg4: memref<16x64xf32, #tpu.memory_space<vmem>>, %arg5: memref<64x64xf32, #tpu.memory_space<vmem>>, %arg6: memref<64x64xf32, #tpu.memory_space<vmem>>, %arg7: memref<2x16x128xf32, #tpu.memory_space<vmem>>) attributes {dimension_semantics = [#tpu.dimension_semantics<parallel>], iteration_bounds = array<i64: 1>, scalar_prefetch = 0 : i64, scratch_operands = 0 : i64, tpu.core_type = #tpu.core_type<tc>, window_params = [{transform_indices = @transform_0, window_bounds = array<i64: 2, 128, 16>}, {pipeline_mode = #tpu.pipeline_mode<synchronous>, transform_indices = @transform_1, window_bounds = array<i64: 16, 18>}, {pipeline_mode = #tpu.pipeline_mode<synchronous>, transform_indices = @transform_2, window_bounds = array<i64: 16, 18>}, {pipeline_mode = #tpu.pipeline_mode<synchronous>, transform_indices = @transform_3, window_bounds = array<i64: 16, 64>}, {pipeline_mode = #tpu.pipeline_mode<synchronous>, transform_indices = @transform_4, window_bounds = array<i64: 64, 64>}, {pipeline_mode = #tpu.pipeline_mode<synchronous>, transform_indices = @transform_5, window_bounds = array<i64: 64, 64>}, {transform_indices = @transform_6, window_bounds = array<i64: 2, 16, 128>}]} {
    %c0 = arith.constant 0 : index
    %c0_0 = arith.constant 0 : index
    %0 = vector.load %arg4[%c0, %c0_0] : memref<16x64xf32, #tpu.memory_space<vmem>>, vector<16x64xf32>
    %1 = vector.extract_strided_slice %0 {offsets = [0, 0], sizes = [8, 64], strides = [1, 1]} : vector<16x64xf32> to vector<8x64xf32>
    %2 = vector.extract_strided_slice %0 {offsets = [8, 0], sizes = [8, 64], strides = [1, 1]} : vector<16x64xf32> to vector<8x64xf32>
    %c0_1 = arith.constant 0 : index
    %c0_2 = arith.constant 0 : index
    %c0_3 = arith.constant 0 : index
    %3 = vector.load %arg1[%c0_1, %c0_2, %c0_3] : memref<2x128x16xf32, #tpu.memory_space<vmem>>, vector<2x128x16xf32>
    %4 = vector.shape_cast %3 : vector<2x128x16xf32> to vector<32x8x16xf32>
    %c0_4 = arith.constant 0 : index
    %c0_5 = arith.constant 0 : index
    %5 = vector.load %arg2[%c0_4, %c0_5] : memref<16x18xf32, #tpu.memory_space<vmem>>, vector<16x18xf32>
    %c0_6 = arith.constant 0 : index
    %c0_7 = arith.constant 0 : index
    %6 = vector.load %arg5[%c0_6, %c0_7] : memref<64x64xf32, #tpu.memory_space<vmem>>, vector<64x64xf32>
    %7 = vector.shape_cast %4 : vector<32x8x16xf32> to vector<256x16xf32>
    %cst = arith.constant dense<0.000000e+00> : vector<256x18xf32>
    %8 = tpu.matmul %7, %5, %cst {dimension_numbers = #tpu.dot_dimension_numbers<[1], [0], [0], [1], [0, 0, 1, 1], [], []>} : vector<256x16xf32>, vector<16x18xf32>, vector<256x18xf32> -> vector<256x18xf32>
    %9 = vector.shape_cast %8 : vector<256x18xf32> to vector<32x8x18xf32>
    %10 = vector.extract_strided_slice %9 {offsets = [0, 0, 0], sizes = [32, 8, 16], strides = [1, 1, 1]} : vector<32x8x18xf32> to vector<32x8x16xf32>
    %11 = vector.extract_strided_slice %9 {offsets = [0, 0, 16], sizes = [32, 8, 1], strides = [1, 1, 1]} : vector<32x8x18xf32> to vector<32x8x1xf32>
    %12 = vector.shape_cast %11 : vector<32x8x1xf32> to vector<32x8xf32>
    %13 = vector.extract_strided_slice %9 {offsets = [0, 0, 17], sizes = [32, 8, 1], strides = [1, 1, 1]} : vector<32x8x18xf32> to vector<32x8x1xf32>
    %14 = vector.shape_cast %13 : vector<32x8x1xf32> to vector<32x8xf32>
    %cst_8 = arith.constant dense<0.000000e+00> : vector<32x64xf32>
    %15 = tpu.matmul %12, %1, %cst_8 {dimension_numbers = #tpu.dot_dimension_numbers<[1], [0], [0], [1], [0, 0, 1, 1], [], []>} : vector<32x8xf32>, vector<8x64xf32>, vector<32x64xf32> -> vector<32x64xf32>
    %cst_9 = arith.constant dense<0.000000e+00> : vector<32x64xf32>
    %16 = tpu.matmul %14, %2, %cst_9 {dimension_numbers = #tpu.dot_dimension_numbers<[1], [0], [0], [1], [0, 0, 1, 1], [], []>} : vector<32x8xf32>, vector<8x64xf32>, vector<32x64xf32> -> vector<32x64xf32>
    %17 = arith.addf %15, %16 : vector<32x64xf32>
    %cst_10 = arith.constant 0.000000e+00 : f32
    %18 = vector.broadcast %cst_10 : f32 to vector<32x64xf32>
    %19 = arith.cmpf ogt, %17, %18 : vector<32x64xf32>
    %cst_11 = arith.constant 2.000000e-01 : f32
    %20 = vector.broadcast %cst_11 : f32 to vector<32x64xf32>
    %21 = arith.mulf %20, %17 : vector<32x64xf32>
    %22 = arith.select %19, %17, %21 : vector<32x64xi1>, vector<32x64xf32>
    %23 = vector.shape_cast %22 : vector<32x64xf32> to vector<2x16x64xf32>
    %cst_12 = arith.constant dense<0xFF800000> : vector<2x64xf32>
    %24 = vector.multi_reduction <maximumf>, %23, %cst_12 [1] : vector<2x16x64xf32> to vector<2x64xf32>
    %25 = vector.shape_cast %24 : vector<2x64xf32> to vector<2x1x64xf32>
    %26 = vector.broadcast %25 : vector<2x1x64xf32> to vector<2x16x64xf32>
    %27 = arith.subf %23, %26 : vector<2x16x64xf32>
    %28 = math.exp %27 : vector<2x16x64xf32>
    %cst_13 = arith.constant dense<0.000000e+00> : vector<2x64xf32>
    %29 = vector.multi_reduction <add>, %28, %cst_13 [1] : vector<2x16x64xf32> to vector<2x64xf32>
    %30 = vector.shape_cast %29 : vector<2x64xf32> to vector<2x1x64xf32>
    %31 = tpu.reciprocal %30 {approx = true} : vector<2x1x64xf32> -> vector<2x1x64xf32>
    %32 = vector.broadcast %31 : vector<2x1x64xf32> to vector<2x16x64xf32>
    %33 = arith.mulf %28, %32 : vector<2x16x64xf32>
    %34 = vector.shape_cast %33 : vector<2x16x64xf32> to vector<32x64xf32>
    %cst_14 = arith.constant dense<0.000000e+00> : vector<32x64xf32>
    %35 = tpu.matmul %34, %6, %cst_14 {dimension_numbers = #tpu.dot_dimension_numbers<[1], [0], [0], [1], [0, 0, 1, 1], [], []>} : vector<32x64xf32>, vector<64x64xf32>, vector<32x64xf32> -> vector<32x64xf32>
    %36 = vector.shape_cast %35 : vector<32x64xf32> to vector<32x8x8xf32>
    %cst_15 = arith.constant dense<0.000000e+00> : vector<32x8x16xf32>
    %37 = tpu.matmul %36, %10, %cst_15 {dimension_numbers = #tpu.dot_dimension_numbers<[2], [1], [1], [2], [0, 0, 0, 1, 1, 2], [0], [0]>} : vector<32x8x8xf32>, vector<32x8x16xf32>, vector<32x8x16xf32> -> vector<32x8x16xf32>
    %cst_16 = arith.constant 0.000000e+00 : f32
    %38 = vector.broadcast %cst_16 : f32 to vector<32x8x16xf32>
    %39 = arith.cmpf ogt, %37, %38 : vector<32x8x16xf32>
    %cst_17 = arith.constant 0.000000e+00 : f32
    %40 = vector.broadcast %cst_17 : f32 to vector<32x8x16xf32>
    %41 = arith.minimumf %37, %40 : vector<32x8x16xf32>
    %42 = math.exp %41 : vector<32x8x16xf32>
    %cst_18 = arith.constant 1.000000e+00 : f32
    %43 = vector.broadcast %cst_18 : f32 to vector<32x8x16xf32>
    %44 = arith.subf %42, %43 : vector<32x8x16xf32>
    %45 = arith.select %39, %37, %44 : vector<32x8x16xi1>, vector<32x8x16xf32>
    %c0_19 = arith.constant 0 : index
    %c0_20 = arith.constant 0 : index
    %46 = vector.load %arg3[%c0_19, %c0_20] : memref<16x18xf32, #tpu.memory_space<vmem>>, vector<16x18xf32>
    %c0_21 = arith.constant 0 : index
    %c0_22 = arith.constant 0 : index
    %47 = vector.load %arg6[%c0_21, %c0_22] : memref<64x64xf32, #tpu.memory_space<vmem>>, vector<64x64xf32>
    %48 = vector.shape_cast %45 : vector<32x8x16xf32> to vector<256x16xf32>
    %cst_23 = arith.constant dense<0.000000e+00> : vector<256x18xf32>
    %49 = tpu.matmul %48, %46, %cst_23 {dimension_numbers = #tpu.dot_dimension_numbers<[1], [0], [0], [1], [0, 0, 1, 1], [], []>} : vector<256x16xf32>, vector<16x18xf32>, vector<256x18xf32> -> vector<256x18xf32>
    %50 = vector.shape_cast %49 : vector<256x18xf32> to vector<32x8x18xf32>
    %51 = vector.extract_strided_slice %50 {offsets = [0, 0, 0], sizes = [32, 8, 16], strides = [1, 1, 1]} : vector<32x8x18xf32> to vector<32x8x16xf32>
    %52 = vector.extract_strided_slice %50 {offsets = [0, 0, 16], sizes = [32, 8, 1], strides = [1, 1, 1]} : vector<32x8x18xf32> to vector<32x8x1xf32>
    %53 = vector.shape_cast %52 : vector<32x8x1xf32> to vector<32x8xf32>
    %54 = vector.extract_strided_slice %50 {offsets = [0, 0, 17], sizes = [32, 8, 1], strides = [1, 1, 1]} : vector<32x8x18xf32> to vector<32x8x1xf32>
    %55 = vector.shape_cast %54 : vector<32x8x1xf32> to vector<32x8xf32>
    %cst_24 = arith.constant dense<0.000000e+00> : vector<32x64xf32>
    %56 = tpu.matmul %53, %1, %cst_24 {dimension_numbers = #tpu.dot_dimension_numbers<[1], [0], [0], [1], [0, 0, 1, 1], [], []>} : vector<32x8xf32>, vector<8x64xf32>, vector<32x64xf32> -> vector<32x64xf32>
    %cst_25 = arith.constant dense<0.000000e+00> : vector<32x64xf32>
    %57 = tpu.matmul %55, %2, %cst_25 {dimension_numbers = #tpu.dot_dimension_numbers<[1], [0], [0], [1], [0, 0, 1, 1], [], []>} : vector<32x8xf32>, vector<8x64xf32>, vector<32x64xf32> -> vector<32x64xf32>
    %58 = arith.addf %56, %57 : vector<32x64xf32>
    %cst_26 = arith.constant 0.000000e+00 : f32
    %59 = vector.broadcast %cst_26 : f32 to vector<32x64xf32>
    %60 = arith.cmpf ogt, %58, %59 : vector<32x64xf32>
    %cst_27 = arith.constant 2.000000e-01 : f32
    %61 = vector.broadcast %cst_27 : f32 to vector<32x64xf32>
    %62 = arith.mulf %61, %58 : vector<32x64xf32>
    %63 = arith.select %60, %58, %62 : vector<32x64xi1>, vector<32x64xf32>
    %64 = vector.shape_cast %63 : vector<32x64xf32> to vector<2x16x64xf32>
    %cst_28 = arith.constant dense<0xFF800000> : vector<2x64xf32>
    %65 = vector.multi_reduction <maximumf>, %64, %cst_28 [1] : vector<2x16x64xf32> to vector<2x64xf32>
    %66 = vector.shape_cast %65 : vector<2x64xf32> to vector<2x1x64xf32>
    %67 = vector.broadcast %66 : vector<2x1x64xf32> to vector<2x16x64xf32>
    %68 = arith.subf %64, %67 : vector<2x16x64xf32>
    %69 = math.exp %68 : vector<2x16x64xf32>
    %cst_29 = arith.constant dense<0.000000e+00> : vector<2x64xf32>
    %70 = vector.multi_reduction <add>, %69, %cst_29 [1] : vector<2x16x64xf32> to vector<2x64xf32>
    %71 = vector.shape_cast %70 : vector<2x64xf32> to vector<2x1x64xf32>
    %72 = tpu.reciprocal %71 {approx = true} : vector<2x1x64xf32> -> vector<2x1x64xf32>
    %73 = vector.broadcast %72 : vector<2x1x64xf32> to vector<2x16x64xf32>
    %74 = arith.mulf %69, %73 : vector<2x16x64xf32>
    %75 = vector.shape_cast %74 : vector<2x16x64xf32> to vector<32x64xf32>
    %cst_30 = arith.constant dense<0.000000e+00> : vector<32x64xf32>
    %76 = tpu.matmul %75, %47, %cst_30 {dimension_numbers = #tpu.dot_dimension_numbers<[1], [0], [0], [1], [0, 0, 1, 1], [], []>} : vector<32x64xf32>, vector<64x64xf32>, vector<32x64xf32> -> vector<32x64xf32>
    %77 = vector.shape_cast %76 : vector<32x64xf32> to vector<32x8x8xf32>
    %cst_31 = arith.constant dense<0.000000e+00> : vector<32x8x16xf32>
    %78 = tpu.matmul %77, %51, %cst_31 {dimension_numbers = #tpu.dot_dimension_numbers<[2], [1], [1], [2], [0, 0, 0, 1, 1, 2], [0], [0]>} : vector<32x8x8xf32>, vector<32x8x16xf32>, vector<32x8x16xf32> -> vector<32x8x16xf32>
    %79 = vector.shape_cast %78 : vector<32x8x16xf32> to vector<2x16x128xf32>
    %cst_32 = arith.constant 0.000000e+00 : f32
    %80 = vector.broadcast %cst_32 : f32 to vector<2x16x128xf32>
    %81 = arith.cmpf ogt, %79, %80 : vector<2x16x128xf32>
    %cst_33 = arith.constant 0.000000e+00 : f32
    %82 = vector.broadcast %cst_33 : f32 to vector<2x16x128xf32>
    %83 = arith.minimumf %79, %82 : vector<2x16x128xf32>
    %84 = math.exp %83 : vector<2x16x128xf32>
    %cst_34 = arith.constant 1.000000e+00 : f32
    %85 = vector.broadcast %cst_34 : f32 to vector<2x16x128xf32>
    %86 = arith.subf %84, %85 : vector<2x16x128xf32>
    %87 = arith.select %81, %79, %86 : vector<2x16x128xi1>, vector<2x16x128xf32>
    %88 = math.tanh %87 : vector<2x16x128xf32>
    %c0_35 = arith.constant 0 : index
    %c0_36 = arith.constant 0 : index
    %c0_37 = arith.constant 0 : index
    %89 = vector.load %arg7[%c0_35, %c0_36, %c0_37] : memref<2x16x128xf32, #tpu.memory_space<vmem>>, vector<2x16x128xf32>
    tpu.vector_store %arg7[%c0_35, %c0_36, %c0_37], %88 {strides = array<i32>} : memref<2x16x128xf32, #tpu.memory_space<vmem>>, vector<2x16x128xf32>,
    return
  }
  func.func @transform_0(%arg0: i32) -> (i32, i32, i32) {
    %c0_i32 = arith.constant 0 : i32
    %c0_i32_0 = arith.constant 0 : i32
    %c0_i32_1 = arith.constant 0 : i32
    return %arg0, %c0_i32, %c0_i32_0 : i32, i32, i32
  }
  func.func @transform_1(%arg0: i32) -> (i32, i32) {
    %c0_i32 = arith.constant 0 : i32
    %c0_i32_0 = arith.constant 0 : i32
    %c0_i32_1 = arith.constant 0 : i32
    return %c0_i32, %c0_i32_0 : i32, i32
  }
  func.func @transform_2(%arg0: i32) -> (i32, i32) {
    %c0_i32 = arith.constant 0 : i32
    %c0_i32_0 = arith.constant 0 : i32
    %c0_i32_1 = arith.constant 0 : i32
    return %c0_i32, %c0_i32_0 : i32, i32
  }
  func.func @transform_3(%arg0: i32) -> (i32, i32) {
    %c0_i32 = arith.constant 0 : i32
    %c0_i32_0 = arith.constant 0 : i32
    %c0_i32_1 = arith.constant 0 : i32
    return %c0_i32, %c0_i32_0 : i32, i32
  }
  func.func @transform_4(%arg0: i32) -> (i32, i32) {
    %c0_i32 = arith.constant 0 : i32
    %c0_i32_0 = arith.constant 0 : i32
    %c0_i32_1 = arith.constant 0 : i32
    return %c0_i32, %c0_i32_0 : i32, i32
  }
  func.func @transform_5(%arg0: i32) -> (i32, i32) {
    %c0_i32 = arith.constant 0 : i32
    %c0_i32_0 = arith.constant 0 : i32
    %c0_i32_1 = arith.constant 0 : i32
    return %c0_i32, %c0_i32_0 : i32, i32
  }
  func.func @transform_6(%arg0: i32) -> (i32, i32, i32) {
    %c0_i32 = arith.constant 0 : i32
    %c0_i32_0 = arith.constant 0 : i32
    %c0_i32_1 = arith.constant 0 : i32
    return %arg0, %c0_i32, %c0_i32_0 : i32, i32, i32
  }
}

</mosaic_0001>

<llo_original>
// kernel: baseline_model_forward.1
$region0: #{baseline_model_forward.1}
  #allocation0 [shape = 'u32[]', space=smem, size = 0x4, offset = 0x4, fixed_abs, tag = 'smem constant byte address 0x4 - core index']
  #allocation1 [shape = 'u32[144,128]{1,0:T(1,128)}', space=vmem, size = 0x12000, scoped, tag = 'internal scratch']
  %s0 = inlined_call_operand.vmem [shape: f32[2,128,16], index: 0, kind: input, shape index: {}]
  %s1 = inlined_call_operand.vmem [shape: f32[16,18], index: 1, kind: input, shape index: {}]
  %s2 = inlined_call_operand.vmem [shape: f32[16,18], index: 2, kind: input, shape index: {}]
  %s3 = inlined_call_operand.vmem [shape: f32[16,64], index: 3, kind: input, shape index: {}]
  %s4 = inlined_call_operand.vmem [shape: f32[64,64], index: 4, kind: input, shape index: {}]
  %s5 = inlined_call_operand.vmem [shape: f32[64,64], index: 5, kind: input, shape index: {}]
  %s6 = inlined_call_operand.vmem [shape: f32[2,16,128], index: 6, kind: output, shape index: {}]
  %s7 = sld [smem:[#allocation0]]
  $region34: #{baseline_model_forward.1} parent=0
    _
  %s9 = ssub.s32 1, %s7
  %s10 = scalar_select 0, %s9, %s7
  // Predicated region
  $region2: #{baseline_model_forward.1} parent=0 // pred_check
    _
  $region3: #{baseline_model_forward.1} parent=0 // pred_check_branch
    %12 = sbr.rel (0) target = $region5
  $region4: #{baseline_model_forward.1} parent=0 // pred_region
    _
  $region5: #{baseline_model_forward.1} parent=0 // pred_fallthru
    _
  // Predicated region
  $region6: #{baseline_model_forward.1} parent=0 // pred_check
    _
  $region7: #{baseline_model_forward.1} parent=0 // pred_check_branch
    %14 = sbr.rel (0) target = $region9
  $region8: #{baseline_model_forward.1} parent=0 // pred_region
    _
  $region9: #{baseline_model_forward.1} parent=0 // pred_fallthru
    _
  // Predicated region
  $region10: #{baseline_model_forward.1} parent=0 // pred_check
    _
  $region11: #{baseline_model_forward.1} parent=0 // pred_check_branch
    %16 = sbr.rel (0) target = $region13
  $region12: #{baseline_model_forward.1} parent=0 // pred_region
    _
  $region13: #{baseline_model_forward.1} parent=0 // pred_fallthru
    _
  // Predicated region
  $region14: #{baseline_model_forward.1} parent=0 // pred_check
    _
  $region15: #{baseline_model_forward.1} parent=0 // pred_check_branch
    %18 = sbr.rel (0) target = $region17
  $region16: #{baseline_model_forward.1} parent=0 // pred_region
    _
  $region17: #{baseline_model_forward.1} parent=0 // pred_fallthru
    _
  // Predicated region
  $region18: #{baseline_model_forward.1} parent=0 // pred_check
    _
  $region19: #{baseline_model_forward.1} parent=0 // pred_check_branch
    %20 = sbr.rel (0) target = $region21
  $region20: #{baseline_model_forward.1} parent=0 // pred_region
    _
  $region21: #{baseline_model_forward.1} parent=0 // pred_fallthru
    _
  // Predicated region
  $region22: #{baseline_model_forward.1} parent=0 // pred_check
    _
  $region23: #{baseline_model_forward.1} parent=0 // pred_check_branch
    %22 = sbr.rel (0) target = $region25
  $region24: #{baseline_model_forward.1} parent=0 // pred_region
    _
  $region25: #{baseline_model_forward.1} parent=0 // pred_fallthru
    _
  %v23 = vld [vmem:[%s3] sm:$0xff]
  %v24 = vld [vmem:[%s3 + $0x8] sm:$0xff]
  %v25 = vld [vmem:[%s0] sm:$0xff]
  %v26 = vld [vmem:[%s0 + $0x8] sm:$0xff]
  %v27 = vld [vmem:[%s0 + $0x10] sm:$0xff]
  %v28 = vld [vmem:[%s0 + $0x18] sm:$0xff]
  %v29 = vld [vmem:[%s0 + $0x20] sm:$0xff]
  %v30 = vld [vmem:[%s0 + $0x28] sm:$0xff]
  %v31 = vld [vmem:[%s0 + $0x30] sm:$0xff]
  %v32 = vld [vmem:[%s0 + $0x38] sm:$0xff]
  %v33 = vld [vmem:[%s0 + $0x40] sm:$0xff]
  %v34 = vld [vmem:[%s0 + $0x48] sm:$0xff]
  %v35 = vld [vmem:[%s0 + $0x50] sm:$0xff]
  %v36 = vld [vmem:[%s0 + $0x58] sm:$0xff]
  %v37 = vld [vmem:[%s0 + $0x60] sm:$0xff]
  %v38 = vld [vmem:[%s0 + $0x68] sm:$0xff]
  %v39 = vld [vmem:[%s0 + $0x70] sm:$0xff]
  %v40 = vld [vmem:[%s0 + $0x78] sm:$0xff]
  %v41 = vld [vmem:[%s0 + $0x80] sm:$0xff]
  %v42 = vld [vmem:[%s0 + $0x88] sm:$0xff]
  %v43 = vld [vmem:[%s0 + $0x90] sm:$0xff]
  %v44 = vld [vmem:[%s0 + $0x98] sm:$0xff]
  %v45 = vld [vmem:[%s0 + $0xa0] sm:$0xff]
  %v46 = vld [vmem:[%s0 + $0xa8] sm:$0xff]
  %v47 = vld [vmem:[%s0 + $0xb0] sm:$0xff]
  %v48 = vld [vmem:[%s0 + $0xb8] sm:$0xff]
  %v49 = vld [vmem:[%s0 + $0xc0] sm:$0xff]
  %v50 = vld [vmem:[%s0 + $0xc8] sm:$0xff]
  %v51 = vld [vmem:[%s0 + $0xd0] sm:$0xff]
  %v52 = vld [vmem:[%s0 + $0xd8] sm:$0xff]
  %v53 = vld [vmem:[%s0 + $0xe0] sm:$0xff]
  %v54 = vld [vmem:[%s0 + $0xe8] sm:$0xff]
  %v55 = vld [vmem:[%s0 + $0xf0] sm:$0xff]
  %v56 = vld [vmem:[%s0 + $0xf8] sm:$0xff]
  %v57 = vld [vmem:[%s1] sm:$0xff]
  %v58 = vld [vmem:[%s1 + $0x8] sm:$0xff]
  %v59 = vld [vmem:[%s4] sm:$0xff]
  %v60 = vld [vmem:[%s4 + $0x8] sm:$0xff]
  %v61 = vld [vmem:[%s4 + $0x10] sm:$0xff]
  %v62 = vld [vmem:[%s4 + $0x18] sm:$0xff]
  %v63 = vld [vmem:[%s4 + $0x20] sm:$0xff]
  %v64 = vld [vmem:[%s4 + $0x28] sm:$0xff]
  %v65 = vld [vmem:[%s4 + $0x30] sm:$0xff]
  %v66 = vld [vmem:[%s4 + $0x38] sm:$0xff]
  %vm67 = vcmask 130048
  %v69 = vsel %vm67, %v25, 0
  %v72 = vsel %vm67, %v26, 0
  %v75 = vsel %vm67, %v27, 0
  %v78 = vsel %vm67, %v28, 0
  %v81 = vsel %vm67, %v29, 0
  %v84 = vsel %vm67, %v30, 0
  %v87 = vsel %vm67, %v31, 0
  %v90 = vsel %vm67, %v32, 0
  %v93 = vsel %vm67, %v33, 0
  %v96 = vsel %vm67, %v34, 0
  %v99 = vsel %vm67, %v35, 0
  %v102 = vsel %vm67, %v36, 0
  %v105 = vsel %vm67, %v37, 0
  %v108 = vsel %vm67, %v38, 0
  %v111 = vsel %vm67, %v39, 0
  %v114 = vsel %vm67, %v40, 0
  %v117 = vsel %vm67, %v41, 0
  %v120 = vsel %vm67, %v42, 0
  %v123 = vsel %vm67, %v43, 0
  %v126 = vsel %vm67, %v44, 0
  %v129 = vsel %vm67, %v45, 0
  %v132 = vsel %vm67, %v46, 0
  %v135 = vsel %vm67, %v47, 0
  %v138 = vsel %vm67, %v48, 0
  %v141 = vsel %vm67, %v49, 0
  %v144 = vsel %vm67, %v50, 0
  %v147 = vsel %vm67, %v51, 0
  %v150 = vsel %vm67, %v52, 0
  %v153 = vsel %vm67, %v53, 0
  %v156 = vsel %vm67, %v54, 0
  %v159 = vsel %vm67, %v55, 0
  %v162 = vsel %vm67, %v56, 0
  %164 = vmatprep.subr.mxu0 0.0
  %165 = vmatpush1.msra.mxu0 0.0
  %166 = vmatprep.subr.mxu0 0.0
  %167 = vmatpush1.msra.mxu0 0.0
  %168 = vmatprep.subr.mxu0 0.0
  %169 = vmatpush1.msra.mxu0 0.0
  %170 = vmatprep.subr.mxu0 0.0
  %171 = vmatpush1.msra.mxu0 0.0
  %172 = vmatprep.subr.mxu0 0.0
  %173 = vmatpush1.msra.mxu0 0.0
  %174 = vmatprep.subr.mxu0 0.0
  %175 = vmatpush1.msra.mxu0 0.0
  %176 = vmatprep.subr.mxu0 0.0
  %177 = vmatpush1.msra.mxu0 0.0
  %178 = vmatprep.subr.mxu0 0.0
  %179 = vmatpush1.msra.mxu0 0.0
  %180 = vmatprep.subr.mxu0 0.0
  %181 = vmatpush1.msra.mxu0 0.0
  %182 = vmatprep.subr.mxu0 0.0
  %183 = vmatpush1.msra.mxu0 0.0
  %184 = vmatprep.subr.mxu0 0.0
  %185 = vmatpush1.msra.mxu0 0.0
  %186 = vmatprep.subr.mxu0 0.0
  %187 = vmatpush1.msra.mxu0 0.0
  %188 = vmatprep.subr.mxu0 0.0
  %189 = vmatpush1.msra.mxu0 0.0
  %190 = vmatprep.subr.mxu0 0.0
  %191 = vmatpush1.msra.mxu0 0.0
  %192 = vmatprep.subr.mxu0 0.0
  %193 = vmatpush1.msra.mxu0 %v58
  %194 = vmatprep.subr.mxu0 0.0
  %195 = vmatpush1.msra.mxu0 %v57
  %196 = vmatprep.subr.mxu0 0.0
  %197 = vmatpush2.msra.mxu0 0.0
  %198 = vmatprep.subr.mxu0 0.0
  %199 = vmatpush2.msra.mxu0 0.0
  %200 = vmatprep.subr.mxu0 0.0
  %201 = vmatpush2.msra.mxu0 0.0
  %202 = vmatprep.subr.mxu0 0.0
  %203 = vmatpush2.msra.mxu0 0.0
  %204 = vmatprep.subr.mxu0 0.0
  %205 = vmatpush2.msra.mxu0 0.0
  %206 = vmatprep.subr.mxu0 0.0
  %207 = vmatpush2.msra.mxu0 0.0
  %208 = vmatprep.subr.mxu0 0.0
  %209 = vmatpush2.msra.mxu0 0.0
  %210 = vmatprep.subr.mxu0 0.0
  %211 = vmatpush2.msra.mxu0 0.0
  %212 = vmatprep.subr.mxu0 0.0
  %213 = vmatpush2.msra.mxu0 0.0
  %214 = vmatprep.subr.mxu0 0.0
  %215 = vmatpush2.msra.mxu0 0.0
  %216 = vmatprep.subr.mxu0 0.0
  %217 = vmatpush2.msra.mxu0 0.0
  %218 = vmatprep.subr.mxu0 0.0
  %219 = vmatpush2.msra.mxu0 0.0
  %220 = vmatprep.subr.mxu0 0.0
  %221 = vmatpush2.msra.mxu0 0.0
  %222 = vmatprep.subr.mxu0 0.0
  %223 = vmatpush2.msra.mxu0 0.0
  %224 = vmatprep.subr.mxu0 0.0
  %225 = vmatpush2.msra.mxu0 0.0
  %226 = vmatprep.subr.mxu0 0.0
  %227 = vmatpush2.msra.mxu0 0.0
  %228 = vmatprep.mubr.f32.mxu0 0.0
  %229 = vmatmul.mubr.f32.gmra.mxu0 %v69
  %v230 = vpop.f32.mrf.mxu0
  %v231 = vadd.f32 0.0, %v230
  %v232 = vpop.f32.mrf.mxu0
  %233 = vmatprep.mubr.f32.mxu0 0.0
  %234 = vmatmul.mubr.f32.gmra.mxu0 %v72
  %v235 = vpop.f32.mrf.mxu0
  %v236 = vadd.f32 0.0, %v235
  %v237 = vpop.f32.mrf.mxu0
  %238 = vmatprep.mubr.f32.mxu0 0.0
  %239 = vmatmul.mubr.f32.gmra.mxu0 %v75
  %v240 = vpop.f32.mrf.mxu0
  %v241 = vadd.f32 0.0, %v240
  %v242 = vpop.f32.mrf.mxu0
  %243 = vmatprep.mubr.f32.mxu0 0.0
  %244 = vmatmul.mubr.f32.gmra.mxu0 %v78
  %v245 = vpop.f32.mrf.mxu0
  %v246 = vadd.f32 0.0, %v245
  %v247 = vpop.f32.mrf.mxu0
  %248 = vmatprep.mubr.f32.mxu0 0.0
  %249 = vmatmul.mubr.f32.gmra.mxu0 %v81
  %v250 = vpop.f32.mrf.mxu0
  %v251 = vadd.f32 0.0, %v250
  %v252 = vpop.f32.mrf.mxu0
  %253 = vmatprep.mubr.f32.mxu0 0.0
  %254 = vmatmul.mubr.f32.gmra.mxu0 %v84
  %v255 = vpop.f32.mrf.mxu0
  %v256 = vadd.f32 0.0, %v255
  %v257 = vpop.f32.mrf.mxu0
  %258 = vmatprep.mubr.f32.mxu0 0.0
  %259 = vmatmul.mubr.f32.gmra.mxu0 %v87
  %v260 = vpop.f32.mrf.mxu0
  %v261 = vadd.f32 0.0, %v260
  %v262 = vpop.f32.mrf.mxu0
  %263 = vmatprep.mubr.f32.mxu0 0.0
  %264 = vmatmul.mubr.f32.gmra.mxu0 %v90
  %v265 = vpop.f32.mrf.mxu0
  %v266 = vadd.f32 0.0, %v265
  %v267 = vpop.f32.mrf.mxu0
  %268 = vmatprep.mubr.f32.mxu0 0.0
  %269 = vmatmul.mubr.f32.gmra.mxu0 %v93
  %v270 = vpop.f32.mrf.mxu0
  %v271 = vadd.f32 0.0, %v270
  %v272 = vpop.f32.mrf.mxu0
  %273 = vmatprep.mubr.f32.mxu0 0.0
  %274 = vmatmul.mubr.f32.gmra.mxu0 %v96
  %v275 = vpop.f32.mrf.mxu0
  %v276 = vadd.f32 0.0, %v275
  %v277 = vpop.f32.mrf.mxu0
  %278 = vmatprep.mubr.f32.mxu0 0.0
  %279 = vmatmul.mubr.f32.gmra.mxu0 %v99
  %v280 = vpop.f32.mrf.mxu0
  %v281 = vadd.f32 0.0, %v280
  %v282 = vpop.f32.mrf.mxu0
  %283 = vmatprep.mubr.f32.mxu0 0.0
  %284 = vmatmul.mubr.f32.gmra.mxu0 %v102
  %v285 = vpop.f32.mrf.mxu0
  %v286 = vadd.f32 0.0, %v285
  %v287 = vpop.f32.mrf.mxu0
  %288 = vmatprep.mubr.f32.mxu0 0.0
  %289 = vmatmul.mubr.f32.gmra.mxu0 %v105
  %v290 = vpop.f32.mrf.mxu0
  %v291 = vadd.f32 0.0, %v290
  %v292 = vpop.f32.mrf.mxu0
  %293 = vmatprep.mubr.f32.mxu0 0.0
  %294 = vmatmul.mubr.f32.gmra.mxu0 %v108
  %v295 = vpop.f32.mrf.mxu0
  %v296 = vadd.f32 0.0, %v295
  %v297 = vpop.f32.mrf.mxu0
  %298 = vmatprep.mubr.f32.mxu0 0.0
  %299 = vmatmul.mubr.f32.gmra.mxu0 %v111
  %v300 = vpop.f32.mrf.mxu0
  %v301 = vadd.f32 0.0, %v300
  %v302 = vpop.f32.mrf.mxu0
  %303 = vmatprep.mubr.f32.mxu0 0.0
  %304 = vmatmul.mubr.f32.gmra.mxu0 %v114
  %v305 = vpop.f32.mrf.mxu0
  %v306 = vadd.f32 0.0, %v305
  %v307 = vpop.f32.mrf.mxu0
  %308 = vmatprep.mubr.f32.mxu0 0.0
  %309 = vmatmul.mubr.f32.gmra.mxu0 %v117
  %v310 = vpop.f32.mrf.mxu0
  %v311 = vadd.f32 0.0, %v310
  %v312 = vpop.f32.mrf.mxu0
  %313 = vmatprep.mubr.f32.mxu0 0.0
  %314 = vmatmul.mubr.f32.gmra.mxu0 %v120
  %v315 = vpop.f32.mrf.mxu0
  %v316 = vadd.f32 0.0, %v315
  %v317 = vpop.f32.mrf.mxu0
  %318 = vmatprep.mubr.f32.mxu0 0.0
  %319 = vmatmul.mubr.f32.gmra.mxu0 %v123
  %v320 = vpop.f32.mrf.mxu0
  %v321 = vadd.f32 0.0, %v320
  %v322 = vpop.f32.mrf.mxu0
  %323 = vmatprep.mubr.f32.mxu0 0.0
  %324 = vmatmul.mubr.f32.gmra.mxu0 %v126
  %v325 = vpop.f32.mrf.mxu0
  %v326 = vadd.f32 0.0, %v325
  %v327 = vpop.f32.mrf.mxu0
  %328 = vmatprep.mubr.f32.mxu0 0.0
  %329 = vmatmul.mubr.f32.gmra.mxu0 %v129
  %v330 = vpop.f32.mrf.mxu0
  %v331 = vadd.f32 0.0, %v330
  %v332 = vpop.f32.mrf.mxu0
  %333 = vmatprep.mubr.f32.mxu0 0.0
  %334 = vmatmul.mubr.f32.gmra.mxu0 %v132
  %v335 = vpop.f32.mrf.mxu0
  %v336 = vadd.f32 0.0, %v335
  %v337 = vpop.f32.mrf.mxu0
  %338 = vmatprep.mubr.f32.mxu0 0.0
  %339 = vmatmul.mubr.f32.gmra.mxu0 %v135
  %v340 = vpop.f32.mrf.mxu0
  %v341 = vadd.f32 0.0, %v340
  %v342 = vpop.f32.mrf.mxu0
  %343 = vmatprep.mubr.f32.mxu0 0.0
  %344 = vmatmul.mubr.f32.gmra.mxu0 %v138
  %v345 = vpop.f32.mrf.mxu0
  %v346 = vadd.f32 0.0, %v345
  %v347 = vpop.f32.mrf.mxu0
  %348 = vmatprep.mubr.f32.mxu0 0.0
  %349 = vmatmul.mubr.f32.gmra.mxu0 %v141
  %v350 = vpop.f32.mrf.mxu0
  %v351 = vadd.f32 0.0, %v350
  %v352 = vpop.f32.mrf.mxu0
  %353 = vmatprep.mubr.f32.mxu0 0.0
  %354 = vmatmul.mubr.f32.gmra.mxu0 %v144
  %v355 = vpop.f32.mrf.mxu0
  %v356 = vadd.f32 0.0, %v355
  %v357 = vpop.f32.mrf.mxu0
  %358 = vmatprep.mubr.f32.mxu0 0.0
  %359 = vmatmul.mubr.f32.gmra.mxu0 %v147
  %v360 = vpop.f32.mrf.mxu0
  %v361 = vadd.f32 0.0, %v360
  %v362 = vpop.f32.mrf.mxu0
  %363 = vmatprep.mubr.f32.mxu0 0.0
  %364 = vmatmul.mubr.f32.gmra.mxu0 %v150
  %v365 = vpop.f32.mrf.mxu0
  %v366 = vadd.f32 0.0, %v365
  %v367 = vpop.f32.mrf.mxu0
  %368 = vmatprep.mubr.f32.mxu0 0.0
  %369 = vmatmul.mubr.f32.gmra.mxu0 %v153
  %v370 = vpop.f32.mrf.mxu0
  %v371 = vadd.f32 0.0, %v370
  %v372 = vpop.f32.mrf.mxu0
  %373 = vmatprep.mubr.f32.mxu0 0.0
  %374 = vmatmul.mubr.f32.gmra.mxu0 %v156
  %v375 = vpop.f32.mrf.mxu0
  %v376 = vadd.f32 0.0, %v375
  %v377 = vpop.f32.mrf.mxu0
  %378 = vmatprep.mubr.f32.mxu0 0.0
  %379 = vmatmul.mubr.f32.gmra.mxu0 %v159
  %v380 = vpop.f32.mrf.mxu0
  %v381 = vadd.f32 0.0, %v380
  %v382 = vpop.f32.mrf.mxu0
  %383 = vmatprep.mubr.f32.mxu0 0.0
  %384 = vmatmul.mubr.f32.gmra.mxu0 %v162
  %v385 = vpop.f32.mrf.mxu0
  %v386 = vadd.f32 0.0, %v385
  %v387 = vpop.f32.mrf.mxu0
  %388 = vdwg.mxu0
  %421 = vset.pattern.permute.xlu0 17
  %422 = vperm.xlu0 %421, %v231
  %v423 = vpop.permute.xlu0 %422
  %424 = vset.pattern.permute.xlu0 17
  %425 = vperm.xlu0 %424, %v236
  %v426 = vpop.permute.xlu0 %425
  %427 = vset.pattern.permute.xlu0 17
  %428 = vperm.xlu0 %427, %v241
  %v429 = vpop.permute.xlu0 %428
  %430 = vset.pattern.permute.xlu0 17
  %431 = vperm.xlu0 %430, %v246
  %v432 = vpop.permute.xlu0 %431
  %433 = vset.pattern.permute.xlu0 17
  %434 = vperm.xlu0 %433, %v251
  %v435 = vpop.permute.xlu0 %434
  %436 = vset.pattern.permute.xlu0 17
  %437 = vperm.xlu0 %436, %v256
  %v438 = vpop.permute.xlu0 %437
  %439 = vset.pattern.permute.xlu0 17
  %440 = vperm.xlu0 %439, %v261
  %v441 = vpop.permute.xlu0 %440
  %442 = vset.pattern.permute.xlu0 17
  %443 = vperm.xlu0 %442, %v266
  %v444 = vpop.permute.xlu0 %443
  %445 = vset.pattern.permute.xlu0 17
  %446 = vperm.xlu0 %445, %v271
  %v447 = vpop.permute.xlu0 %446
  %448 = vset.pattern.permute.xlu0 17
  %449 = vperm.xlu0 %448, %v276
  %v450 = vpop.permute.xlu0 %449
  %451 = vset.pattern.permute.xlu0 17
  %452 = vperm.xlu0 %451, %v281
  %v453 = vpop.permute.xlu0 %452
  %454 = vset.pattern.permute.xlu0 17
  %455 = vperm.xlu0 %454, %v286
  %v456 = vpop.permute.xlu0 %455
  %457 = vset.pattern.permute.xlu0 17
  %458 = vperm.xlu0 %457, %v291
  %v459 = vpop.permute.xlu0 %458
  %460 = vset.pattern.permute.xlu0 17
  %461 = vperm.xlu0 %460, %v296
  %v462 = vpop.permute.xlu0 %461
  %463 = vset.pattern.permute.xlu0 17
  %464 = vperm.xlu0 %463, %v301
  %v465 = vpop.permute.xlu0 %464
  %466 = vset.pattern.permute.xlu0 17
  %467 = vperm.xlu0 %466, %v306
  %v468 = vpop.permute.xlu0 %467
  %469 = vset.pattern.permute.xlu0 17
  %470 = vperm.xlu0 %469, %v311
  %v471 = vpop.permute.xlu0 %470
  %472 = vset.pattern.permute.xlu0 17
  %473 = vperm.xlu0 %472, %v316
  %v474 = vpop.permute.xlu0 %473
  %475 = vset.pattern.permute.xlu0 17
  %476 = vperm.xlu0 %475, %v321
  %v477 = vpop.permute.xlu0 %476
  %478 = vset.pattern.permute.xlu0 17
  %479 = vperm.xlu0 %478, %v326
  %v480 = vpop.permute.xlu0 %479
  %481 = vset.pattern.permute.xlu0 17
  %482 = vperm.xlu0 %481, %v331
  %v483 = vpop.permute.xlu0 %482
  %484 = vset.pattern.permute.xlu0 17
  %485 = vperm.xlu0 %484, %v336
  %v486 = vpop.permute.xlu0 %485
  %487 = vset.pattern.permute.xlu0 17
  %488 = vperm.xlu0 %487, %v341
  %v489 = vpop.permute.xlu0 %488
  %490 = vset.pattern.permute.xlu0 17
  %491 = vperm.xlu0 %490, %v346
  %v492 = vpop.permute.xlu0 %491
  %493 = vset.pattern.permute.xlu0 17
  %494 = vperm.xlu0 %493, %v351
  %v495 = vpop.permute.xlu0 %494
  %496 = vset.pattern.permute.xlu0 17
  %497 = vperm.xlu0 %496, %v356
  %v498 = vpop.permute.xlu0 %497
  %499 = vset.pattern.permute.xlu0 17
  %500 = vperm.xlu0 %499, %v361
  %v501 = vpop.permute.xlu0 %500
  %502 = vset.pattern.permute.xlu0 17
  %503 = vperm.xlu0 %502, %v366
  %v504 = vpop.permute.xlu0 %503
  %505 = vset.pattern.permute.xlu0 17
  %506 = vperm.xlu0 %505, %v371
  %v507 = vpop.permute.xlu0 %506
  %508 = vset.pattern.permute.xlu0 17
  %509 = vperm.xlu0 %508, %v376
  %v510 = vpop.permute.xlu0 %509
  %511 = vset.pattern.permute.xlu0 17
  %512 = vperm.xlu0 %511, %v381
  %v513 = vpop.permute.xlu0 %512
  %514 = vset.pattern.permute.xlu0 17
  %515 = vperm.xlu0 %514, %v386
  %v516 = vpop.permute.xlu0 %515
  %v517 = vlaneseq
  %v518 = vand.u32 %v517, 127
  %v519 = vlaneseq
  %v520 = vshrl.u32 %v519, 7
  %v521 = vsub.s32 %v518, %v520
  %v522 = vrot.slane %v423, %v521
  %v523 = vlaneseq
  %v524 = vshrl.u32 %v523, 7
  %v525 = vsub.s32 %v518, %v524
  %v526 = vrot.slane %v426, %v525
  %v527 = vlaneseq
  %v528 = vshrl.u32 %v527, 7
  %v529 = vsub.s32 %v518, %v528
  %v530 = vrot.slane %v429, %v529
  %v531 = vlaneseq
  %v532 = vshrl.u32 %v531, 7
  %v533 = vsub.s32 %v518, %v532
  %v534 = vrot.slane %v432, %v533
  %v535 = vlaneseq
  %v536 = vshrl.u32 %v535, 7
  %v537 = vsub.s32 %v518, %v536
  %v538 = vrot.slane %v435, %v537
  %v539 = vlaneseq
  %v540 = vshrl.u32 %v539, 7
  %v541 = vsub.s32 %v518, %v540
  %v542 = vrot.slane %v438, %v541
  %v543 = vlaneseq
  %v544 = vshrl.u32 %v543, 7
  %v545 = vsub.s32 %v518, %v544
  %v546 = vrot.slane %v441, %v545
  %v547 = vlaneseq
  %v548 = vshrl.u32 %v547, 7
  %v549 = vsub.s32 %v518, %v548
  %v550 = vrot.slane %v444, %v549
  %v551 = vlaneseq
  %v552 = vshrl.u32 %v551, 7
  %v553 = vsub.s32 %v518, %v552
  %v554 = vrot.slane %v447, %v553
  %v555 = vlaneseq
  %v556 = vshrl.u32 %v555, 7
  %v557 = vsub.s32 %v518, %v556
  %v558 = vrot.slane %v450, %v557
  %v559 = vlaneseq
  %v560 = vshrl.u32 %v559, 7
  %v561 = vsub.s32 %v518, %v560
  %v562 = vrot.slane %v453, %v561
  %v563 = vlaneseq
  %v564 = vshrl.u32 %v563, 7
  %v565 = vsub.s32 %v518, %v564
  %v566 = vrot.slane %v456, %v565
  %v567 = vlaneseq
  %v568 = vshrl.u32 %v567, 7
  %v569 = vsub.s32 %v518, %v568
  %v570 = vrot.slane %v459, %v569
  %v571 = vlaneseq
  %v572 = vshrl.u32 %v571, 7
  %v573 = vsub.s32 %v518, %v572
  %v574 = vrot.slane %v462, %v573
  %v575 = vlaneseq
  %v576 = vshrl.u32 %v575, 7
  %v577 = vsub.s32 %v518, %v576
  %v578 = vrot.slane %v465, %v577
  %v579 = vlaneseq
  %v580 = vshrl.u32 %v579, 7
  %v581 = vsub.s32 %v518, %v580
  %v582 = vrot.slane %v468, %v581
  %v583 = vlaneseq
  %v584 = vshrl.u32 %v583, 7
  %v585 = vsub.s32 %v518, %v584
  %v586 = vrot.slane %v471, %v585
  %v587 = vlaneseq
  %v588 = vshrl.u32 %v587, 7
  %v589 = vsub.s32 %v518, %v588
  %v590 = vrot.slane %v474, %v589
  %v591 = vlaneseq
  %v592 = vshrl.u32 %v591, 7
  %v593 = vsub.s32 %v518, %v592
  %v594 = vrot.slane %v477, %v593
  %v595 = vlaneseq
  %v596 = vshrl.u32 %v595, 7
  %v597 = vsub.s32 %v518, %v596
  %v598 = vrot.slane %v480, %v597
  %v599 = vlaneseq
  %v600 = vshrl.u32 %v599, 7
  %v601 = vsub.s32 %v518, %v600
  %v602 = vrot.slane %v483, %v601
  %v603 = vlaneseq
  %v604 = vshrl.u32 %v603, 7
  %v605 = vsub.s32 %v518, %v604
  %v606 = vrot.slane %v486, %v605
  %v607 = vlaneseq
  %v608 = vshrl.u32 %v607, 7
  %v609 = vsub.s32 %v518, %v608
  %v610 = vrot.slane %v489, %v609
  %v611 = vlaneseq
  %v612 = vshrl.u32 %v611, 7
  %v613 = vsub.s32 %v518, %v612
  %v614 = vrot.slane %v492, %v613
  %v615 = vlaneseq
  %v616 = vshrl.u32 %v615, 7
  %v617 = vsub.s32 %v518, %v616
  %v618 = vrot.slane %v495, %v617
  %v619 = vlaneseq
  %v620 = vshrl.u32 %v619, 7
  %v621 = vsub.s32 %v518, %v620
  %v622 = vrot.slane %v498, %v621
  %v623 = vlaneseq
  %v624 = vshrl.u32 %v623, 7
  %v625 = vsub.s32 %v518, %v624
  %v626 = vrot.slane %v501, %v625
  %v627 = vlaneseq
  %v628 = vshrl.u32 %v627, 7
  %v629 = vsub.s32 %v518, %v628
  %v630 = vrot.slane %v504, %v629
  %v631 = vlaneseq
  %v632 = vshrl.u32 %v631, 7
  %v633 = vsub.s32 %v518, %v632
  %v634 = vrot.slane %v507, %v633
  %v635 = vlaneseq
  %v636 = vshrl.u32 %v635, 7
  %v637 = vsub.s32 %v518, %v636
  %v638 = vrot.slane %v510, %v637
  %v639 = vlaneseq
  %v640 = vshrl.u32 %v639, 7
  %v641 = vsub.s32 %v518, %v640
  %v642 = vrot.slane %v513, %v641
  %v643 = vlaneseq
  %v644 = vshrl.u32 %v643, 7
  %v645 = vsub.s32 %v518, %v644
  %v646 = vrot.slane %v516, %v645
  %vm647 = vcmask 1041409
  %v648 = vsel %vm647, %v526, %v522
  %vm649 = vcmask 1042434
  %v650 = vsel %vm649, %v530, %v648
  %vm651 = vcmask 1043459
  %v652 = vsel %vm651, %v534, %v650
  %vm653 = vcmask 1044484
  %v654 = vsel %vm653, %v538, %v652
  %vm655 = vcmask 1045509
  %v656 = vsel %vm655, %v542, %v654
  %vm657 = vcmask 1046534
  %v658 = vsel %vm657, %v546, %v656
  %vm659 = vcmask 1047559
  %v660 = vsel %vm659, %v550, %v658
  %v661 = vsel %vm647, %v558, %v554
  %v662 = vsel %vm649, %v562, %v661
  %v663 = vsel %vm651, %v566, %v662
  %v664 = vsel %vm653, %v570, %v663
  %v665 = vsel %vm655, %v574, %v664
  %v666 = vsel %vm657, %v578, %v665
  %v667 = vsel %vm659, %v582, %v666
  %v668 = vsel %vm647, %v590, %v586
  %v669 = vsel %vm649, %v594, %v668
  %v670 = vsel %vm651, %v598, %v669
  %v671 = vsel %vm653, %v602, %v670
  %v672 = vsel %vm655, %v606, %v671
  %v673 = vsel %vm657, %v610, %v672
  %v674 = vsel %vm659, %v614, %v673
  %v675 = vsel %vm647, %v622, %v618
  %v676 = vsel %vm649, %v626, %v675
  %v677 = vsel %vm651, %v630, %v676
  %v678 = vsel %vm653, %v634, %v677
  %v679 = vsel %vm655, %v638, %v678
  %v680 = vsel %vm657, %v642, %v679
  %v681 = vsel %vm659, %v646, %v680
  %vm682 = vcmask 64512
  %v683 = vsel %vm682, %v660, 0
  %v685 = vsel %vm682, %v667, 0
  %v687 = vsel %vm682, %v674, 0
  %v689 = vsel %vm682, %v681, 0
  %691 = vmatprep.subr.mxu0 0.0
  %692 = vmatpush1.msra.mxu0 0.0
  %693 = vmatprep.subr.mxu0 0.0
  %694 = vmatpush1.msra.mxu0 0.0
  %695 = vmatprep.subr.mxu0 0.0
  %696 = vmatpush1.msra.mxu0 0.0
  %697 = vmatprep.subr.mxu0 0.0
  %698 = vmatpush1.msra.mxu0 0.0
  %699 = vmatprep.subr.mxu0 0.0
  %700 = vmatpush1.msra.mxu0 0.0
  %701 = vmatprep.subr.mxu0 0.0
  %702 = vmatpush1.msra.mxu0 0.0
  %703 = vmatprep.subr.mxu0 0.0
  %704 = vmatpush1.msra.mxu0 0.0
  %705 = vmatprep.subr.mxu0 0.0
  %706 = vmatpush1.msra.mxu0 0.0
  %707 = vmatprep.subr.mxu0 0.0
  %708 = vmatpush1.msra.mxu0 0.0
  %709 = vmatprep.subr.mxu0 0.0
  %710 = vmatpush1.msra.mxu0 0.0
  %711 = vmatprep.subr.mxu0 0.0
  %712 = vmatpush1.msra.mxu0 0.0
  %713 = vmatprep.subr.mxu0 0.0
  %714 = vmatpush1.msra.mxu0 0.0
  %715 = vmatprep.subr.mxu0 0.0
  %716 = vmatpush1.msra.mxu0 0.0
  %717 = vmatprep.subr.mxu0 0.0
  %718 = vmatpush1.msra.mxu0 0.0
  %719 = vmatprep.subr.mxu0 0.0
  %720 = vmatpush1.msra.mxu0 0.0
  %721 = vmatprep.subr.mxu0 0.0
  %722 = vmatpush1.msra.mxu0 %v24
  %723 = vmatprep.subr.mxu0 0.0
  %724 = vmatpush2.msra.mxu0 0.0
  %725 = vmatprep.subr.mxu0 0.0
  %726 = vmatpush2.msra.mxu0 0.0
  %727 = vmatprep.subr.mxu0 0.0
  %728 = vmatpush2.msra.mxu0 0.0
  %729 = vmatprep.subr.mxu0 0.0
  %730 = vmatpush2.msra.mxu0 0.0
  %731 = vmatprep.subr.mxu0 0.0
  %732 = vmatpush2.msra.mxu0 0.0
  %733 = vmatprep.subr.mxu0 0.0
  %734 = vmatpush2.msra.mxu0 0.0
  %735 = vmatprep.subr.mxu0 0.0
  %736 = vmatpush2.msra.mxu0 0.0
  %737 = vmatprep.subr.mxu0 0.0
  %738 = vmatpush2.msra.mxu0 0.0
  %739 = vmatprep.subr.mxu0 0.0
  %740 = vmatpush2.msra.mxu0 0.0
  %741 = vmatprep.subr.mxu0 0.0
  %742 = vmatpush2.msra.mxu0 0.0
  %743 = vmatprep.subr.mxu0 0.0
  %744 = vmatpush2.msra.mxu0 0.0
  %745 = vmatprep.subr.mxu0 0.0
  %746 = vmatpush2.msra.mxu0 0.0
  %747 = vmatprep.subr.mxu0 0.0
  %748 = vmatpush2.msra.mxu0 0.0
  %749 = vmatprep.subr.mxu0 0.0
  %750 = vmatpush2.msra.mxu0 0.0
  %751 = vmatprep.subr.mxu0 0.0
  %752 = vmatpush2.msra.mxu0 0.0
  %753 = vmatprep.subr.mxu0 0.0
  %754 = vmatpush2.msra.mxu0 0.0
  %755 = vmatprep.mubr.f32.mxu0 0.0
  %756 = vmatmul.mubr.f32.gmra.mxu0 %v683
  %v757 = vpop.f32.mrf.mxu0
  %v758 = vadd.f32 0.0, %v757
  %v759 = vpop.f32.mrf.mxu0
  %760 = vmatprep.mubr.f32.mxu0 0.0
  %761 = vmatmul.mubr.f32.gmra.mxu0 %v685
  %v762 = vpop.f32.mrf.mxu0
  %v763 = vadd.f32 0.0, %v762
  %v764 = vpop.f32.mrf.mxu0
  %765 = vmatprep.mubr.f32.mxu0 0.0
  %766 = vmatmul.mubr.f32.gmra.mxu0 %v687
  %v767 = vpop.f32.mrf.mxu0
  %v768 = vadd.f32 0.0, %v767
  %v769 = vpop.f32.mrf.mxu0
  %770 = vmatprep.mubr.f32.mxu0 0.0
  %771 = vmatmul.mubr.f32.gmra.mxu0 %v689
  %v772 = vpop.f32.mrf.mxu0
  %v773 = vadd.f32 0.0, %v772
  %v774 = vpop.f32.mrf.mxu0
  %775 = vdwg.mxu0
  %776 = vset.pattern.permute.xlu0 16
  %777 = vperm.xlu0 %776, %v231
  %v778 = vpop.permute.xlu0 %777
  %779 = vset.pattern.permute.xlu0 16
  %780 = vperm.xlu0 %779, %v236
  %v781 = vpop.permute.xlu0 %780
  %782 = vset.pattern.permute.xlu0 16
  %783 = vperm.xlu0 %782, %v241
  %v784 = vpop.permute.xlu0 %783
  %785 = vset.pattern.permute.xlu0 16
  %786 = vperm.xlu0 %785, %v246
  %v787 = vpop.permute.xlu0 %786
  %788 = vset.pattern.permute.xlu0 16
  %789 = vperm.xlu0 %788, %v251
  %v790 = vpop.permute.xlu0 %789
  %791 = vset.pattern.permute.xlu0 16
  %792 = vperm.xlu0 %791, %v256
  %v793 = vpop.permute.xlu0 %792
  %794 = vset.pattern.permute.xlu0 16
  %795 = vperm.xlu0 %794, %v261
  %v796 = vpop.permute.xlu0 %795
  %797 = vset.pattern.permute.xlu0 16
  %798 = vperm.xlu0 %797, %v266
  %v799 = vpop.permute.xlu0 %798
  %800 = vset.pattern.permute.xlu0 16
  %801 = vperm.xlu0 %800, %v271
  %v802 = vpop.permute.xlu0 %801
  %803 = vset.pattern.permute.xlu0 16
  %804 = vperm.xlu0 %803, %v276
  %v805 = vpop.permute.xlu0 %804
  %806 = vset.pattern.permute.xlu0 16
  %807 = vperm.xlu0 %806, %v281
  %v808 = vpop.permute.xlu0 %807
  %809 = vset.pattern.permute.xlu0 16
  %810 = vperm.xlu0 %809, %v286
  %v811 = vpop.permute.xlu0 %810
  %812 = vset.pattern.permute.xlu0 16
  %813 = vperm.xlu0 %812, %v291
  %v814 = vpop.permute.xlu0 %813
  %815 = vset.pattern.permute.xlu0 16
  %816 = vperm.xlu0 %815, %v296
  %v817 = vpop.permute.xlu0 %816
  %818 = vset.pattern.permute.xlu0 16
  %819 = vperm.xlu0 %818, %v301
  %v820 = vpop.permute.xlu0 %819
  %821 = vset.pattern.permute.xlu0 16
  %822 = vperm.xlu0 %821, %v306
  %v823 = vpop.permute.xlu0 %822
  %824 = vset.pattern.permute.xlu0 16
  %825 = vperm.xlu0 %824, %v311
  %v826 = vpop.permute.xlu0 %825
  %827 = vset.pattern.permute.xlu0 16
  %828 = vperm.xlu0 %827, %v316
  %v829 = vpop.permute.xlu0 %828
  %830 = vset.pattern.permute.xlu0 16
  %831 = vperm.xlu0 %830, %v321
  %v832 = vpop.permute.xlu0 %831
  %833 = vset.pattern.permute.xlu0 16
  %834 = vperm.xlu0 %833, %v326
  %v835 = vpop.permute.xlu0 %834
  %836 = vset.pattern.permute.xlu0 16
  %837 = vperm.xlu0 %836, %v331
  %v838 = vpop.permute.xlu0 %837
  %839 = vset.pattern.permute.xlu0 16
  %840 = vperm.xlu0 %839, %v336
  %v841 = vpop.permute.xlu0 %840
  %842 = vset.pattern.permute.xlu0 16
  %843 = vperm.xlu0 %842, %v341
  %v844 = vpop.permute.xlu0 %843
  %845 = vset.pattern.permute.xlu0 16
  %846 = vperm.xlu0 %845, %v346
  %v847 = vpop.permute.xlu0 %846
  %848 = vset.pattern.permute.xlu0 16
  %849 = vperm.xlu0 %848, %v351
  %v850 = vpop.permute.xlu0 %849
  %851 = vset.pattern.permute.xlu0 16
  %852 = vperm.xlu0 %851, %v356
  %v853 = vpop.permute.xlu0 %852
  %854 = vset.pattern.permute.xlu0 16
  %855 = vperm.xlu0 %854, %v361
  %v856 = vpop.permute.xlu0 %855
  %857 = vset.pattern.permute.xlu0 16
  %858 = vperm.xlu0 %857, %v366
  %v859 = vpop.permute.xlu0 %858
  %860 = vset.pattern.permute.xlu0 16
  %861 = vperm.xlu0 %860, %v371
  %v862 = vpop.permute.xlu0 %861
  %863 = vset.pattern.permute.xlu0 16
  %864 = vperm.xlu0 %863, %v376
  %v865 = vpop.permute.xlu0 %864
  %866 = vset.pattern.permute.xlu0 16
  %867 = vperm.xlu0 %866, %v381
  %v868 = vpop.permute.xlu0 %867
  %869 = vset.pattern.permute.xlu0 16
  %870 = vperm.xlu0 %869, %v386
  %v871 = vpop.permute.xlu0 %870
  %v872 = vlaneseq
  %v873 = vshrl.u32 %v872, 7
  %v874 = vsub.s32 %v518, %v873
  %v875 = vrot.slane %v778, %v874
  %v876 = vlaneseq
  %v877 = vshrl.u32 %v876, 7
  %v878 = vsub.s32 %v518, %v877
  %v879 = vrot.slane %v781, %v878
  %v880 = vlaneseq
  %v881 = vshrl.u32 %v880, 7
  %v882 = vsub.s32 %v518, %v881
  %v883 = vrot.slane %v784, %v882
  %v884 = vlaneseq
  %v885 = vshrl.u32 %v884, 7
  %v886 = vsub.s32 %v518, %v885
  %v887 = vrot.slane %v787, %v886
  %v888 = vlaneseq
  %v889 = vshrl.u32 %v888, 7
  %v890 = vsub.s32 %v518, %v889
  %v891 = vrot.slane %v790, %v890
  %v892 = vlaneseq
  %v893 = vshrl.u32 %v892, 7
  %v894 = vsub.s32 %v518, %v893
  %v895 = vrot.slane %v793, %v894
  %v896 = vlaneseq
  %v897 = vshrl.u32 %v896, 7
  %v898 = vsub.s32 %v518, %v897
  %v899 = vrot.slane %v796, %v898
  %v900 = vlaneseq
  %v901 = vshrl.u32 %v900, 7
  %v902 = vsub.s32 %v518, %v901
  %v903 = vrot.slane %v799, %v902
  %v904 = vlaneseq
  %v905 = vshrl.u32 %v904, 7
  %v906 = vsub.s32 %v518, %v905
  %v907 = vrot.slane %v802, %v906
  %v908 = vlaneseq
  %v909 = vshrl.u32 %v908, 7
  %v910 = vsub.s32 %v518, %v909
  %v911 = vrot.slane %v805, %v910
  %v912 = vlaneseq
  %v913 = vshrl.u32 %v912, 7
  %v914 = vsub.s32 %v518, %v913
  %v915 = vrot.slane %v808, %v914
  %v916 = vlaneseq
  %v917 = vshrl.u32 %v916, 7
  %v918 = vsub.s32 %v518, %v917
  %v919 = vrot.slane %v811, %v918
  %v920 = vlaneseq
  %v921 = vshrl.u32 %v920, 7
  %v922 = vsub.s32 %v518, %v921
  %v923 = vrot.slane %v814, %v922
  %v924 = vlaneseq
  %v925 = vshrl.u32 %v924, 7
  %v926 = vsub.s32 %v518, %v925
  %v927 = vrot.slane %v817, %v926
  %v928 = vlaneseq
  %v929 = vshrl.u32 %v928, 7
  %v930 = vsub.s32 %v518, %v929
  %v931 = vrot.slane %v820, %v930
  %v932 = vlaneseq
  %v933 = vshrl.u32 %v932, 7
  %v934 = vsub.s32 %v518, %v933
  %v935 = vrot.slane %v823, %v934
  %v936 = vlaneseq
  %v937 = vshrl.u32 %v936, 7
  %v938 = vsub.s32 %v518, %v937
  %v939 = vrot.slane %v826, %v938
  %v940 = vlaneseq
  %v941 = vshrl.u32 %v940, 7
  %v942 = vsub.s32 %v518, %v941
  %v943 = vrot.slane %v829, %v942
  %v944 = vlaneseq
  %v945 = vshrl.u32 %v944, 7
  %v946 = vsub.s32 %v518, %v945
  %v947 = vrot.slane %v832, %v946
  %v948 = vlaneseq
  %v949 = vshrl.u32 %v948, 7
  %v950 = vsub.s32 %v518, %v949
  %v951 = vrot.slane %v835, %v950
  %v952 = vlaneseq
  %v953 = vshrl.u32 %v952, 7
  %v954 = vsub.s32 %v518, %v953
  %v955 = vrot.slane %v838, %v954
  %v956 = vlaneseq
  %v957 = vshrl.u32 %v956, 7
  %v958 = vsub.s32 %v518, %v957
  %v959 = vrot.slane %v841, %v958
  %v960 = vlaneseq
  %v961 = vshrl.u32 %v960, 7
  %v962 = vsub.s32 %v518, %v961
  %v963 = vrot.slane %v844, %v962
  %v964 = vlaneseq
  %v965 = vshrl.u32 %v964, 7
  %v966 = vsub.s32 %v518, %v965
  %v967 = vrot.slane %v847, %v966
  %v968 = vlaneseq
  %v969 = vshrl.u32 %v968, 7
  %v970 = vsub.s32 %v518, %v969
  %v971 = vrot.slane %v850, %v970
  %v972 = vlaneseq
  %v973 = vshrl.u32 %v972, 7
  %v974 = vsub.s32 %v518, %v973
  %v975 = vrot.slane %v853, %v974
  %v976 = vlaneseq
  %v977 = vshrl.u32 %v976, 7
  %v978 = vsub.s32 %v518, %v977
  %v979 = vrot.slane %v856, %v978
  %v980 = vlaneseq
  %v981 = vshrl.u32 %v980, 7
  %v982 = vsub.s32 %v518, %v981
  %v983 = vrot.slane %v859, %v982
  %v984 = vlaneseq
  %v985 = vshrl.u32 %v984, 7
  %v986 = vsub.s32 %v518, %v985
  %v987 = vrot.slane %v862, %v986
  %v988 = vlaneseq
  %v989 = vshrl.u32 %v988, 7
  %v990 = vsub.s32 %v518, %v989
  %v991 = vrot.slane %v865, %v990
  %v992 = vlaneseq
  %v993 = vshrl.u32 %v992, 7
  %v994 = vsub.s32 %v518, %v993
  %v995 = vrot.slane %v868, %v994
  %v996 = vlaneseq
  %v997 = vshrl.u32 %v996, 7
  %v998 = vsub.s32 %v518, %v997
  %v999 = vrot.slane %v871, %v998
  %v1000 = vsel %vm647, %v879, %v875
  %v1001 = vsel %vm649, %v883, %v1000
  %v1002 = vsel %vm651, %v887, %v1001
  %v1003 = vsel %vm653, %v891, %v1002
  %v1004 = vsel %vm655, %v895, %v1003
  %v1005 = vsel %vm657, %v899, %v1004
  %v1006 = vsel %vm659, %v903, %v1005
  %v1007 = vsel %vm647, %v911, %v907
  %v1008 = vsel %vm649, %v915, %v1007
  %v1009 = vsel %vm651, %v919, %v1008
  %v1010 = vsel %vm653, %v923, %v1009
  %v1011 = vsel %vm655, %v927, %v1010
  %v1012 = vsel %vm657, %v931, %v1011
  %v1013 = vsel %vm659, %v935, %v1012
  %v1014 = vsel %vm647, %v943, %v939
  %v1015 = vsel %vm649, %v947, %v1014
  %v1016 = vsel %vm651, %v951, %v1015
  %v1017 = vsel %vm653, %v955, %v1016
  %v1018 = vsel %vm655, %v959, %v1017
  %v1019 = vsel %vm657, %v963, %v1018
  %v1020 = vsel %vm659, %v967, %v1019
  %v1021 = vsel %vm647, %v975, %v971
  %v1022 = vsel %vm649, %v979, %v1021
  %v1023 = vsel %vm651, %v983, %v1022
  %v1024 = vsel %vm653, %v987, %v1023
  %v1025 = vsel %vm655, %v991, %v1024
  %v1026 = vsel %vm657, %v995, %v1025
  %v1027 = vsel %vm659, %v999, %v1026
  %v1028 = vsel %vm682, %v1006, 0
  %v1030 = vsel %vm682, %v1013, 0
  %v1032 = vsel %vm682, %v1020, 0
  %v1034 = vsel %vm682, %v1027, 0
  %1036 = vmatprep.subr.mxu0 0.0
  %1037 = vmatpush1.msra.mxu0 0.0
  %1038 = vmatprep.subr.mxu0 0.0
  %1039 = vmatpush1.msra.mxu0 0.0
  %1040 = vmatprep.subr.mxu0 0.0
  %1041 = vmatpush1.msra.mxu0 0.0
  %1042 = vmatprep.subr.mxu0 0.0
  %1043 = vmatpush1.msra.mxu0 0.0
  %1044 = vmatprep.subr.mxu0 0.0
  %1045 = vmatpush1.msra.mxu0 0.0
  %1046 = vmatprep.subr.mxu0 0.0
  %1047 = vmatpush1.msra.mxu0 0.0
  %1048 = vmatprep.subr.mxu0 0.0
  %1049 = vmatpush1.msra.mxu0 0.0
  %1050 = vmatprep.subr.mxu0 0.0
  %1051 = vmatpush1.msra.mxu0 0.0
  %1052 = vmatprep.subr.mxu0 0.0
  %1053 = vmatpush1.msra.mxu0 0.0
  %1054 = vmatprep.subr.mxu0 0.0
  %1055 = vmatpush1.msra.mxu0 0.0
  %1056 = vmatprep.subr.mxu0 0.0
  %1057 = vmatpush1.msra.mxu0 0.0
  %1058 = vmatprep.subr.mxu0 0.0
  %1059 = vmatpush1.msra.mxu0 0.0
  %1060 = vmatprep.subr.mxu0 0.0
  %1061 = vmatpush1.msra.mxu0 0.0
  %1062 = vmatprep.subr.mxu0 0.0
  %1063 = vmatpush1.msra.mxu0 0.0
  %1064 = vmatprep.subr.mxu0 0.0
  %1065 = vmatpush1.msra.mxu0 0.0
  %1066 = vmatprep.subr.mxu0 0.0
  %1067 = vmatpush1.msra.mxu0 %v23
  %1068 = vmatprep.subr.mxu0 0.0
  %1069 = vmatpush2.msra.mxu0 0.0
  %1070 = vmatprep.subr.mxu0 0.0
  %1071 = vmatpush2.msra.mxu0 0.0
  %1072 = vmatprep.subr.mxu0 0.0
  %1073 = vmatpush2.msra.mxu0 0.0
  %1074 = vmatprep.subr.mxu0 0.0
  %1075 = vmatpush2.msra.mxu0 0.0
  %1076 = vmatprep.subr.mxu0 0.0
  %1077 = vmatpush2.msra.mxu0 0.0
  %1078 = vmatprep.subr.mxu0 0.0
  %1079 = vmatpush2.msra.mxu0 0.0
  %1080 = vmatprep.subr.mxu0 0.0
  %1081 = vmatpush2.msra.mxu0 0.0
  %1082 = vmatprep.subr.mxu0 0.0
  %1083 = vmatpush2.msra.mxu0 0.0
  %1084 = vmatprep.subr.mxu0 0.0
  %1085 = vmatpush2.msra.mxu0 0.0
  %1086 = vmatprep.subr.mxu0 0.0
  %1087 = vmatpush2.msra.mxu0 0.0
  %1088 = vmatprep.subr.mxu0 0.0
  %1089 = vmatpush2.msra.mxu0 0.0
  %1090 = vmatprep.subr.mxu0 0.0
  %1091 = vmatpush2.msra.mxu0 0.0
  %1092 = vmatprep.subr.mxu0 0.0
  %1093 = vmatpush2.msra.mxu0 0.0
  %1094 = vmatprep.subr.mxu0 0.0
  %1095 = vmatpush2.msra.mxu0 0.0
  %1096 = vmatprep.subr.mxu0 0.0
  %1097 = vmatpush2.msra.mxu0 0.0
  %1098 = vmatprep.subr.mxu0 0.0
  %1099 = vmatpush2.msra.mxu0 0.0
  %1100 = vmatprep.mubr.f32.mxu0 0.0
  %1101 = vmatmul.mubr.f32.gmra.mxu0 %v1028
  %v1102 = vpop.f32.mrf.mxu0
  %v1103 = vadd.f32 %v758, %v1102
  %v1104 = vpop.f32.mrf.mxu0
  %1105 = vmatprep.mubr.f32.mxu0 0.0
  %1106 = vmatmul.mubr.f32.gmra.mxu0 %v1030
  %v1107 = vpop.f32.mrf.mxu0
  %v1108 = vadd.f32 %v763, %v1107
  %v1109 = vpop.f32.mrf.mxu0
  %1110 = vmatprep.mubr.f32.mxu0 0.0
  %1111 = vmatmul.mubr.f32.gmra.mxu0 %v1032
  %v1112 = vpop.f32.mrf.mxu0
  %v1113 = vadd.f32 %v768, %v1112
  %v1114 = vpop.f32.mrf.mxu0
  %1115 = vmatprep.mubr.f32.mxu0 0.0
  %1116 = vmatmul.mubr.f32.gmra.mxu0 %v1034
  %v1117 = vpop.f32.mrf.mxu0
  %v1118 = vadd.f32 %v773, %v1117
  %v1119 = vpop.f32.mrf.mxu0
  %1120 = vdwg.mxu0
  %vm1121 = vcmp.gt.f32.partialorder %v1103, 0.0
  %vm1122 = vcmp.gt.f32.partialorder %v1108, 0.0
  %vm1123 = vcmp.gt.f32.partialorder %v1113, 0.0
  %vm1124 = vcmp.gt.f32.partialorder %v1118, 0.0
  %v1125 = vmul.f32 %v1103, 0.2
  %v1126 = vmul.f32 %v1108, 0.2
  %v1127 = vmul.f32 %v1113, 0.2
  %v1128 = vmul.f32 %v1118, 0.2
  %v1129 = vsel %vm1121, %v1103, %v1125
  %v1130 = vsel %vm1122, %v1108, %v1126
  %v1131 = vsel %vm1123, %v1113, %v1127
  %v1132 = vsel %vm1124, %v1118, %v1128
  %vm1133 = vcmask 523264
  %v1134 = vsel %vm1133, %v1129, -inf
  %v1135 = vsel %vm1133, %v1130, -inf
  %v1136 = vmax.f32 %v1134, %v1135
  %v1137 = vrot.slane %v1136, 4
  %v1138 = vmax.f32 %v1136, %v1137
  %v1139 = vrot.slane %v1138, 2
  %v1140 = vmax.f32 %v1138, %v1139
  %v1141 = vrot.slane %v1140, 1
  %v1142 = vmax.f32 %v1140, %v1141
  %v1143 = vsel %vm1133, %v1131, -inf
  %v1144 = vsel %vm1133, %v1132, -inf
  %v1145 = vmax.f32 %v1143, %v1144
  %v1146 = vrot.slane %v1145, 4
  %v1147 = vmax.f32 %v1145, %v1146
  %v1148 = vrot.slane %v1147, 2
  %v1149 = vmax.f32 %v1147, %v1148
  %v1150 = vrot.slane %v1149, 1
  %v1151 = vmax.f32 %v1149, %v1150
  %v1152 = vsub.f32 %v1129, %v1142
  %v1153 = vsub.f32 %v1130, %v1142
  %v1154 = vsub.f32 %v1131, %v1151
  %v1155 = vsub.f32 %v1132, %v1151
  %v1156 = vmul.f32 %v1152, 1.442695
  %v1157 = vpow.pop %v1156
  %v1158 = vmul.f32 %v1153, 1.442695
  %v1159 = vpow.pop %v1158
  %v1160 = vmul.f32 %v1154, 1.442695
  %v1161 = vpow.pop %v1160
  %v1162 = vmul.f32 %v1155, 1.442695
  %v1163 = vpow.pop %v1162
  %v1164 = vsel %vm1133, %v1157, 0.0
  %v1165 = vsel %vm1133, %v1159, 0.0
  %v1166 = vadd.f32 %v1164, %v1165
  %v1167 = vrot.slane %v1166, 4
  %v1168 = vadd.f32 %v1166, %v1167
  %v1169 = vrot.slane %v1168, 2
  %v1170 = vadd.f32 %v1168, %v1169
  %v1171 = vrot.slane %v1170, 1
  %v1172 = vadd.f32 %v1170, %v1171
  %v1173 = vsel %vm1133, %v1161, 0.0
  %v1174 = vsel %vm1133, %v1163, 0.0
  %v1175 = vadd.f32 %v1173, %v1174
  %v1176 = vrot.slane %v1175, 4
  %v1177 = vadd.f32 %v1175, %v1176
  %v1178 = vrot.slane %v1177, 2
  %v1179 = vadd.f32 %v1177, %v1178
  %v1180 = vrot.slane %v1179, 1
  %v1181 = vadd.f32 %v1179, %v1180
  %v1182 = vrcp.pop %v1172
  %v1183 = vrcp.pop %v1181
  %v1184 = vmul.f32 %v1157, %v1182
  %v1185 = vmul.f32 %v1159, %v1182
  %v1186 = vmul.f32 %v1161, %v1183
  %v1187 = vmul.f32 %v1163, %v1183
  %v1189 = vsel %vm1133, %v1184, 0
  %v1192 = vsel %vm1133, %v1185, 0
  %v1195 = vsel %vm1133, %v1186, 0
  %v1198 = vsel %vm1133, %v1187, 0
  %1200 = vmatprep.subr.mxu0 0.0
  %1201 = vmatpush1.msra.mxu0 0.0
  %1202 = vmatprep.subr.mxu0 0.0
  %1203 = vmatpush1.msra.mxu0 0.0
  %1204 = vmatprep.subr.mxu0 0.0
  %1205 = vmatpush1.msra.mxu0 0.0
  %1206 = vmatprep.subr.mxu0 0.0
  %1207 = vmatpush1.msra.mxu0 0.0
  %1208 = vmatprep.subr.mxu0 0.0
  %1209 = vmatpush1.msra.mxu0 0.0
  %1210 = vmatprep.subr.mxu0 0.0
  %1211 = vmatpush1.msra.mxu0 0.0
  %1212 = vmatprep.subr.mxu0 0.0
  %1213 = vmatpush1.msra.mxu0 0.0
  %1214 = vmatprep.subr.mxu0 0.0
  %1215 = vmatpush1.msra.mxu0 0.0
  %1216 = vmatprep.subr.mxu0 0.0
  %1217 = vmatpush1.msra.mxu0 %v66
  %1218 = vmatprep.subr.mxu0 0.0
  %1219 = vmatpush1.msra.mxu0 %v65
  %1220 = vmatprep.subr.mxu0 0.0
  %1221 = vmatpush1.msra.mxu0 %v64
  %1222 = vmatprep.subr.mxu0 0.0
  %1223 = vmatpush1.msra.mxu0 %v63
  %1224 = vmatprep.subr.mxu0 0.0
  %1225 = vmatpush1.msra.mxu0 %v62
  %1226 = vmatprep.subr.mxu0 0.0
  %1227 = vmatpush1.msra.mxu0 %v61
  %1228 = vmatprep.subr.mxu0 0.0
  %1229 = vmatpush1.msra.mxu0 %v60
  %1230 = vmatprep.subr.mxu0 0.0
  %1231 = vmatpush1.msra.mxu0 %v59
  %1232 = vmatprep.subr.mxu0 0.0
  %1233 = vmatpush2.msra.mxu0 0.0
  %1234 = vmatprep.subr.mxu0 0.0
  %1235 = vmatpush2.msra.mxu0 0.0
  %1236 = vmatprep.subr.mxu0 0.0
  %1237 = vmatpush2.msra.mxu0 0.0
  %1238 = vmatprep.subr.mxu0 0.0
  %1239 = vmatpush2.msra.mxu0 0.0
  %1240 = vmatprep.subr.mxu0 0.0
  %1241 = vmatpush2.msra.mxu0 0.0
  %1242 = vmatprep.subr.mxu0 0.0
  %1243 = vmatpush2.msra.mxu0 0.0
  %1244 = vmatprep.subr.mxu0 0.0
  %1245 = vmatpush2.msra.mxu0 0.0
  %1246 = vmatprep.subr.mxu0 0.0
  %1247 = vmatpush2.msra.mxu0 0.0
  %1248 = vmatprep.subr.mxu0 0.0
  %1249 = vmatpush2.msra.mxu0 0.0
  %1250 = vmatprep.subr.mxu0 0.0
  %1251 = vmatpush2.msra.mxu0 0.0
  %1252 = vmatprep.subr.mxu0 0.0
  %1253 = vmatpush2.msra.mxu0 0.0
  %1254 = vmatprep.subr.mxu0 0.0
  %1255 = vmatpush2.msra.mxu0 0.0
  %1256 = vmatprep.subr.mxu0 0.0
  %1257 = vmatpush2.msra.mxu0 0.0
  %1258 = vmatprep.subr.mxu0 0.0
  %1259 = vmatpush2.msra.mxu0 0.0
  %1260 = vmatprep.subr.mxu0 0.0
  %1261 = vmatpush2.msra.mxu0 0.0
  %1262 = vmatprep.subr.mxu0 0.0
  %1263 = vmatpush2.msra.mxu0 0.0
  %1264 = vmatprep.mubr.f32.mxu0 0.0
  %1265 = vmatmul.mubr.f32.gmra.mxu0 %v1189
  %v1266 = vpop.f32.mrf.mxu0
  %v1267 = vadd.f32 0.0, %v1266
  %v1268 = vpop.f32.mrf.mxu0
  %1269 = vmatprep.mubr.f32.mxu0 0.0
  %1270 = vmatmul.mubr.f32.gmra.mxu0 %v1192
  %v1271 = vpop.f32.mrf.mxu0
  %v1272 = vadd.f32 0.0, %v1271
  %v1273 = vpop.f32.mrf.mxu0
  %1274 = vmatprep.mubr.f32.mxu0 0.0
  %1275 = vmatmul.mubr.f32.gmra.mxu0 %v1195
  %v1276 = vpop.f32.mrf.mxu0
  %v1277 = vadd.f32 0.0, %v1276
  %v1278 = vpop.f32.mrf.mxu0
  %1279 = vmatprep.mubr.f32.mxu0 0.0
  %1280 = vmatmul.mubr.f32.gmra.mxu0 %v1198
  %v1281 = vpop.f32.mrf.mxu0
  %v1282 = vadd.f32 0.0, %v1281
  %v1283 = vpop.f32.mrf.mxu0
  %1284 = vdwg.mxu0
  %1289 = vrot.lane.b32.xlu0 %v1267, 120
  %v1290 = vpop.permute.xlu0 %1289
  %1291 = vrot.lane.b32.xlu0 %v1272, 120
  %v1292 = vpop.permute.xlu0 %1291
  %1293 = vrot.lane.b32.xlu0 %v1277, 120
  %v1294 = vpop.permute.xlu0 %1293
  %1295 = vrot.lane.b32.xlu0 %v1282, 120
  %v1296 = vpop.permute.xlu0 %1295
  %1301 = vrot.lane.b32.xlu0 %v1267, 112
  %v1302 = vpop.permute.xlu0 %1301
  %1303 = vrot.lane.b32.xlu0 %v1272, 112
  %v1304 = vpop.permute.xlu0 %1303
  %1305 = vrot.lane.b32.xlu0 %v1277, 112
  %v1306 = vpop.permute.xlu0 %1305
  %1307 = vrot.lane.b32.xlu0 %v1282, 112
  %v1308 = vpop.permute.xlu0 %1307
  %1313 = vrot.lane.b32.xlu0 %v1267, 104
  %v1314 = vpop.permute.xlu0 %1313
  %1315 = vrot.lane.b32.xlu0 %v1272, 104
  %v1316 = vpop.permute.xlu0 %1315
  %1317 = vrot.lane.b32.xlu0 %v1277, 104
  %v1318 = vpop.permute.xlu0 %1317
  %1319 = vrot.lane.b32.xlu0 %v1282, 104
  %v1320 = vpop.permute.xlu0 %1319
  %1325 = vrot.lane.b32.xlu0 %v1267, 96
  %v1326 = vpop.permute.xlu0 %1325
  %1327 = vrot.lane.b32.xlu0 %v1272, 96
  %v1328 = vpop.permute.xlu0 %1327
  %1329 = vrot.lane.b32.xlu0 %v1277, 96
  %v1330 = vpop.permute.xlu0 %1329
  %1331 = vrot.lane.b32.xlu0 %v1282, 96
  %v1332 = vpop.permute.xlu0 %1331
  %1337 = vrot.lane.b32.xlu0 %v1267, 88
  %v1338 = vpop.permute.xlu0 %1337
  %1339 = vrot.lane.b32.xlu0 %v1272, 88
  %v1340 = vpop.permute.xlu0 %1339
  %1341 = vrot.lane.b32.xlu0 %v1277, 88
  %v1342 = vpop.permute.xlu0 %1341
  %1343 = vrot.lane.b32.xlu0 %v1282, 88
  %v1344 = vpop.permute.xlu0 %1343
  %1349 = vrot.lane.b32.xlu0 %v1267, 80
  %v1350 = vpop.permute.xlu0 %1349
  %1351 = vrot.lane.b32.xlu0 %v1272, 80
  %v1352 = vpop.permute.xlu0 %1351
  %1353 = vrot.lane.b32.xlu0 %v1277, 80
  %v1354 = vpop.permute.xlu0 %1353
  %1355 = vrot.lane.b32.xlu0 %v1282, 80
  %v1356 = vpop.permute.xlu0 %1355
  %1361 = vrot.lane.b32.xlu0 %v1267, 72
  %v1362 = vpop.permute.xlu0 %1361
  %1363 = vrot.lane.b32.xlu0 %v1272, 72
  %v1364 = vpop.permute.xlu0 %1363
  %1365 = vrot.lane.b32.xlu0 %v1277, 72
  %v1366 = vpop.permute.xlu0 %1365
  %1367 = vrot.lane.b32.xlu0 %v1282, 72
  %v1368 = vpop.permute.xlu0 %1367
  %v1373 = vcombine.low %v1267, %v1302
  %v1374 = vcombine.high %v1267, %v1302
  %v1376 = vunpack.c.l.s4 1983009808
  %v1377 = vunpack.c.0.s8 %v1376
  %v1378 = vlaneseq
  %v1379 = vshrl.u32 %v1378, 7
  %v1380 = vsub.s32 %v1377, %v1379
  %v1381 = vrot.slane %v1373, %v1380
  %v1383 = vunpack.c.l.s4 1983009808
  %v1384 = vunpack.c.0.s8 %v1383
  %v1385 = vlaneseq
  %v1386 = vshrl.u32 %v1385, 7
  %v1387 = vsub.s32 %v1384, %v1386
  %v1388 = vrot.slane %v1374, %v1387
  %v1389 = vcombine.low %v1290, %v1314
  %v1390 = vcombine.high %v1290, %v1314
  %v1392 = vunpack.c.l.s4 1983009808
  %v1393 = vunpack.c.0.s8 %v1392
  %v1394 = vlaneseq
  %v1395 = vshrl.u32 %v1394, 7
  %v1396 = vsub.s32 %v1393, %v1395
  %v1397 = vrot.slane %v1389, %v1396
  %v1399 = vunpack.c.l.s4 1983009808
  %v1400 = vunpack.c.0.s8 %v1399
  %v1401 = vlaneseq
  %v1402 = vshrl.u32 %v1401, 7
  %v1403 = vsub.s32 %v1400, %v1402
  %v1404 = vrot.slane %v1390, %v1403
  %v1405 = vcombine.low %v1326, %v1350
  %v1406 = vcombine.high %v1326, %v1350
  %v1408 = vunpack.c.l.s4 1983009808
  %v1409 = vunpack.c.0.s8 %v1408
  %v1410 = vlaneseq
  %v1411 = vshrl.u32 %v1410, 7
  %v1412 = vsub.s32 %v1409, %v1411
  %v1413 = vrot.slane %v1405, %v1412
  %v1415 = vunpack.c.l.s4 1983009808
  %v1416 = vunpack.c.0.s8 %v1415
  %v1417 = vlaneseq
  %v1418 = vshrl.u32 %v1417, 7
  %v1419 = vsub.s32 %v1416, %v1418
  %v1420 = vrot.slane %v1406, %v1419
  %v1421 = vcombine.low %v1338, %v1362
  %v1422 = vcombine.high %v1338, %v1362
  %v1424 = vunpack.c.l.s4 1983009808
  %v1425 = vunpack.c.0.s8 %v1424
  %v1426 = vlaneseq
  %v1427 = vshrl.u32 %v1426, 7
  %v1428 = vsub.s32 %v1425, %v1427
  %v1429 = vrot.slane %v1421, %v1428
  %v1431 = vunpack.c.l.s4 1983009808
  %v1432 = vunpack.c.0.s8 %v1431
  %v1433 = vlaneseq
  %v1434 = vshrl.u32 %v1433, 7
  %v1435 = vsub.s32 %v1432, %v1434
  %v1436 = vrot.slane %v1422, %v1435
  %v1437 = vcombine.low %v1381, %v1397
  %v1438 = vcombine.high %v1381, %v1397
  %v1440 = vunpack.c.l.s4 1934713408
  %v1441 = vunpack.c.0.s8 %v1440
  %v1442 = vlaneseq
  %v1443 = vshrl.u32 %v1442, 7
  %v1444 = vsub.s32 %v1441, %v1443
  %v1445 = vrot.slane %v1437, %v1444
  %v1447 = vunpack.c.l.s4 1934713408
  %v1448 = vunpack.c.0.s8 %v1447
  %v1449 = vlaneseq
  %v1450 = vshrl.u32 %v1449, 7
  %v1451 = vsub.s32 %v1448, %v1450
  %v1452 = vrot.slane %v1438, %v1451
  %v1453 = vcombine.low %v1388, %v1404
  %v1454 = vcombine.high %v1388, %v1404
  %v1456 = vunpack.c.l.s4 1934713408
  %v1457 = vunpack.c.0.s8 %v1456
  %v1458 = vlaneseq
  %v1459 = vshrl.u32 %v1458, 7
  %v1460 = vsub.s32 %v1457, %v1459
  %v1461 = vrot.slane %v1453, %v1460
  %v1463 = vunpack.c.l.s4 1934713408
  %v1464 = vunpack.c.0.s8 %v1463
  %v1465 = vlaneseq
  %v1466 = vshrl.u32 %v1465, 7
  %v1467 = vsub.s32 %v1464, %v1466
  %v1468 = vrot.slane %v1454, %v1467
  %v1469 = vcombine.low %v1413, %v1429
  %v1470 = vcombine.high %v1413, %v1429
  %v1472 = vunpack.c.l.s4 1934713408
  %v1473 = vunpack.c.0.s8 %v1472
  %v1474 = vlaneseq
  %v1475 = vshrl.u32 %v1474, 7
  %v1476 = vsub.s32 %v1473, %v1475
  %v1477 = vrot.slane %v1469, %v1476
  %v1479 = vunpack.c.l.s4 1934713408
  %v1480 = vunpack.c.0.s8 %v1479
  %v1481 = vlaneseq
  %v1482 = vshrl.u32 %v1481, 7
  %v1483 = vsub.s32 %v1480, %v1482
  %v1484 = vrot.slane %v1470, %v1483
  %v1485 = vcombine.low %v1420, %v1436
  %v1486 = vcombine.high %v1420, %v1436
  %v1488 = vunpack.c.l.s4 1934713408
  %v1489 = vunpack.c.0.s8 %v1488
  %v1490 = vlaneseq
  %v1491 = vshrl.u32 %v1490, 7
  %v1492 = vsub.s32 %v1489, %v1491
  %v1493 = vrot.slane %v1485, %v1492
  %v1495 = vunpack.c.l.s4 1934713408
  %v1496 = vunpack.c.0.s8 %v1495
  %v1497 = vlaneseq
  %v1498 = vshrl.u32 %v1497, 7
  %v1499 = vsub.s32 %v1496, %v1498
  %v1500 = vrot.slane %v1486, %v1499
  %v1501 = vcombine.low %v1445, %v1477
  %v1502 = vcombine.high %v1445, %v1477
  %v1503 = vcombine.low %v1452, %v1484
  %v1504 = vcombine.high %v1452, %v1484
  %v1505 = vcombine.low %v1461, %v1493
  %v1506 = vcombine.high %v1461, %v1493
  %v1507 = vcombine.low %v1468, %v1500
  %v1508 = vcombine.high %v1468, %v1500
  %v1509 = vcombine.low %v1272, %v1304
  %v1510 = vcombine.high %v1272, %v1304
  %v1512 = vunpack.c.l.s4 1983009808
  %v1513 = vunpack.c.0.s8 %v1512
  %v1514 = vlaneseq
  %v1515 = vshrl.u32 %v1514, 7
  %v1516 = vsub.s32 %v1513, %v1515
  %v1517 = vrot.slane %v1509, %v1516
  %v1519 = vunpack.c.l.s4 1983009808
  %v1520 = vunpack.c.0.s8 %v1519
  %v1521 = vlaneseq
  %v1522 = vshrl.u32 %v1521, 7
  %v1523 = vsub.s32 %v1520, %v1522
  %v1524 = vrot.slane %v1510, %v1523
  %v1525 = vcombine.low %v1292, %v1316
  %v1526 = vcombine.high %v1292, %v1316
  %v1528 = vunpack.c.l.s4 1983009808
  %v1529 = vunpack.c.0.s8 %v1528
  %v1530 = vlaneseq
  %v1531 = vshrl.u32 %v1530, 7
  %v1532 = vsub.s32 %v1529, %v1531
  %v1533 = vrot.slane %v1525, %v1532
  %v1535 = vunpack.c.l.s4 1983009808
  %v1536 = vunpack.c.0.s8 %v1535
  %v1537 = vlaneseq
  %v1538 = vshrl.u32 %v1537, 7
  %v1539 = vsub.s32 %v1536, %v1538
  %v1540 = vrot.slane %v1526, %v1539
  %v1541 = vcombine.low %v1328, %v1352
  %v1542 = vcombine.high %v1328, %v1352
  %v1544 = vunpack.c.l.s4 1983009808
  %v1545 = vunpack.c.0.s8 %v1544
  %v1546 = vlaneseq
  %v1547 = vshrl.u32 %v1546, 7
  %v1548 = vsub.s32 %v1545, %v1547
  %v1549 = vrot.slane %v1541, %v1548
  %v1551 = vunpack.c.l.s4 1983009808
  %v1552 = vunpack.c.0.s8 %v1551
  %v1553 = vlaneseq
  %v1554 = vshrl.u32 %v1553, 7
  %v1555 = vsub.s32 %v1552, %v1554
  %v1556 = vrot.slane %v1542, %v1555
  %v1557 = vcombine.low %v1340, %v1364
  %v1558 = vcombine.high %v1340, %v1364
  %v1560 = vunpack.c.l.s4 1983009808
  %v1561 = vunpack.c.0.s8 %v1560
  %v1562 = vlaneseq
  %v1563 = vshrl.u32 %v1562, 7
  %v1564 = vsub.s32 %v1561, %v1563
  %v1565 = vrot.slane %v1557, %v1564
  %v1567 = vunpack.c.l.s4 1983009808
  %v1568 = vunpack.c.0.s8 %v1567
  %v1569 = vlaneseq
  %v1570 = vshrl.u32 %v1569, 7
  %v1571 = vsub.s32 %v1568, %v1570
  %v1572 = vrot.slane %v1558, %v1571
  %v1573 = vcombine.low %v1517, %v1533
  %v1574 = vcombine.high %v1517, %v1533
  %v1576 = vunpack.c.l.s4 1934713408
  %v1577 = vunpack.c.0.s8 %v1576
  %v1578 = vlaneseq
  %v1579 = vshrl.u32 %v1578, 7
  %v1580 = vsub.s32 %v1577, %v1579
  %v1581 = vrot.slane %v1573, %v1580
  %v1583 = vunpack.c.l.s4 1934713408
  %v1584 = vunpack.c.0.s8 %v1583
  %v1585 = vlaneseq
  %v1586 = vshrl.u32 %v1585, 7
  %v1587 = vsub.s32 %v1584, %v1586
  %v1588 = vrot.slane %v1574, %v1587
  %v1589 = vcombine.low %v1524, %v1540
  %v1590 = vcombine.high %v1524, %v1540
  %v1592 = vunpack.c.l.s4 1934713408
  %v1593 = vunpack.c.0.s8 %v1592
  %v1594 = vlaneseq
  %v1595 = vshrl.u32 %v1594, 7
  %v1596 = vsub.s32 %v1593, %v1595
  %v1597 = vrot.slane %v1589, %v1596
  %v1599 = vunpack.c.l.s4 1934713408
  %v1600 = vunpack.c.0.s8 %v1599
  %v1601 = vlaneseq
  %v1602 = vshrl.u32 %v1601, 7
  %v1603 = vsub.s32 %v1600, %v1602
  %v1604 = vrot.slane %v1590, %v1603
  %v1605 = vcombine.low %v1549, %v1565
  %v1606 = vcombine.high %v1549, %v1565
  %v1608 = vunpack.c.l.s4 1934713408
  %v1609 = vunpack.c.0.s8 %v1608
  %v1610 = vlaneseq
  %v1611 = vshrl.u32 %v1610, 7
  %v1612 = vsub.s32 %v1609, %v1611
  %v1613 = vrot.slane %v1605, %v1612
  %v1615 = vunpack.c.l.s4 1934713408
  %v1616 = vunpack.c.0.s8 %v1615
  %v1617 = vlaneseq
  %v1618 = vshrl.u32 %v1617, 7
  %v1619 = vsub.s32 %v1616, %v1618
  %v1620 = vrot.slane %v1606, %v1619
  %v1621 = vcombine.low %v1556, %v1572
  %v1622 = vcombine.high %v1556, %v1572
  %v1624 = vunpack.c.l.s4 1934713408
  %v1625 = vunpack.c.0.s8 %v1624
  %v1626 = vlaneseq
  %v1627 = vshrl.u32 %v1626, 7
  %v1628 = vsub.s32 %v1625, %v1627
  %v1629 = vrot.slane %v1621, %v1628
  %v1631 = vunpack.c.l.s4 1934713408
  %v1632 = vunpack.c.0.s8 %v1631
  %v1633 = vlaneseq
  %v1634 = vshrl.u32 %v1633, 7
  %v1635 = vsub.s32 %v1632, %v1634
  %v1636 = vrot.slane %v1622, %v1635
  %v1637 = vcombine.low %v1581, %v1613
  %v1638 = vcombine.high %v1581, %v1613
  %v1639 = vcombine.low %v1588, %v1620
  %v1640 = vcombine.high %v1588, %v1620
  %v1641 = vcombine.low %v1597, %v1629
  %v1642 = vcombine.high %v1597, %v1629
  %v1643 = vcombine.low %v1604, %v1636
  %v1644 = vcombine.high %v1604, %v1636
  %v1645 = vcombine.low %v1277, %v1306
  %v1646 = vcombine.high %v1277, %v1306
  %v1648 = vunpack.c.l.s4 1983009808
  %v1649 = vunpack.c.0.s8 %v1648
  %v1650 = vlaneseq
  %v1651 = vshrl.u32 %v1650, 7
  %v1652 = vsub.s32 %v1649, %v1651
  %v1653 = vrot.slane %v1645, %v1652
  %v1655 = vunpack.c.l.s4 1983009808
  %v1656 = vunpack.c.0.s8 %v1655
  %v1657 = vlaneseq
  %v1658 = vshrl.u32 %v1657, 7
  %v1659 = vsub.s32 %v1656, %v1658
  %v1660 = vrot.slane %v1646, %v1659
  %v1661 = vcombine.low %v1294, %v1318
  %v1662 = vcombine.high %v1294, %v1318
  %v1664 = vunpack.c.l.s4 1983009808
  %v1665 = vunpack.c.0.s8 %v1664
  %v1666 = vlaneseq
  %v1667 = vshrl.u32 %v1666, 7
  %v1668 = vsub.s32 %v1665, %v1667
  %v1669 = vrot.slane %v1661, %v1668
  %v1671 = vunpack.c.l.s4 1983009808
  %v1672 = vunpack.c.0.s8 %v1671
  %v1673 = vlaneseq
  %v1674 = vshrl.u32 %v1673, 7
  %v1675 = vsub.s32 %v1672, %v1674
  %v1676 = vrot.slane %v1662, %v1675
  %v1677 = vcombine.low %v1330, %v1354
  %v1678 = vcombine.high %v1330, %v1354
  %v1680 = vunpack.c.l.s4 1983009808
  %v1681 = vunpack.c.0.s8 %v1680
  %v1682 = vlaneseq
  %v1683 = vshrl.u32 %v1682, 7
  %v1684 = vsub.s32 %v1681, %v1683
  %v1685 = vrot.slane %v1677, %v1684
  %v1687 = vunpack.c.l.s4 1983009808
  %v1688 = vunpack.c.0.s8 %v1687
  %v1689 = vlaneseq
  %v1690 = vshrl.u32 %v1689, 7
  %v1691 = vsub.s32 %v1688, %v1690
  %v1692 = vrot.slane %v1678, %v1691
  %v1693 = vcombine.low %v1342, %v1366
  %v1694 = vcombine.high %v1342, %v1366
  %v1696 = vunpack.c.l.s4 1983009808
  %v1697 = vunpack.c.0.s8 %v1696
  %v1698 = vlaneseq
  %v1699 = vshrl.u32 %v1698, 7
  %v1700 = vsub.s32 %v1697, %v1699
  %v1701 = vrot.slane %v1693, %v1700
  %v1703 = vunpack.c.l.s4 1983009808
  %v1704 = vunpack.c.0.s8 %v1703
  %v1705 = vlaneseq
  %v1706 = vshrl.u32 %v1705, 7
  %v1707 = vsub.s32 %v1704, %v1706
  %v1708 = vrot.slane %v1694, %v1707
  %v1709 = vcombine.low %v1653, %v1669
  %v1710 = vcombine.high %v1653, %v1669
  %v1712 = vunpack.c.l.s4 1934713408
  %v1713 = vunpack.c.0.s8 %v1712
  %v1714 = vlaneseq
  %v1715 = vshrl.u32 %v1714, 7
  %v1716 = vsub.s32 %v1713, %v1715
  %v1717 = vrot.slane %v1709, %v1716
  %v1719 = vunpack.c.l.s4 1934713408
  %v1720 = vunpack.c.0.s8 %v1719
  %v1721 = vlaneseq
  %v1722 = vshrl.u32 %v1721, 7
  %v1723 = vsub.s32 %v1720, %v1722
  %v1724 = vrot.slane %v1710, %v1723
  %v1725 = vcombine.low %v1660, %v1676
  %v1726 = vcombine.high %v1660, %v1676
  %v1728 = vunpack.c.l.s4 1934713408
  %v1729 = vunpack.c.0.s8 %v1728
  %v1730 = vlaneseq
  %v1731 = vshrl.u32 %v1730, 7
  %v1732 = vsub.s32 %v1729, %v1731
  %v1733 = vrot.slane %v1725, %v1732
  %v1735 = vunpack.c.l.s4 1934713408
  %v1736 = vunpack.c.0.s8 %v1735
  %v1737 = vlaneseq
  %v1738 = vshrl.u32 %v1737, 7
  %v1739 = vsub.s32 %v1736, %v1738
  %v1740 = vrot.slane %v1726, %v1739
  %v1741 = vcombine.low %v1685, %v1701
  %v1742 = vcombine.high %v1685, %v1701
  %v1744 = vunpack.c.l.s4 1934713408
  %v1745 = vunpack.c.0.s8 %v1744
  %v1746 = vlaneseq
  %v1747 = vshrl.u32 %v1746, 7
  %v1748 = vsub.s32 %v1745, %v1747
  %v1749 = vrot.slane %v1741, %v1748
  %v1751 = vunpack.c.l.s4 1934713408
  %v1752 = vunpack.c.0.s8 %v1751
  %v1753 = vlaneseq
  %v1754 = vshrl.u32 %v1753, 7
  %v1755 = vsub.s32 %v1752, %v1754
  %v1756 = vrot.slane %v1742, %v1755
  %v1757 = vcombine.low %v1692, %v1708
  %v1758 = vcombine.high %v1692, %v1708
  %v1760 = vunpack.c.l.s4 1934713408
  %v1761 = vunpack.c.0.s8 %v1760
  %v1762 = vlaneseq
  %v1763 = vshrl.u32 %v1762, 7
  %v1764 = vsub.s32 %v1761, %v1763
  %v1765 = vrot.slane %v1757, %v1764
  %v1767 = vunpack.c.l.s4 1934713408
  %v1768 = vunpack.c.0.s8 %v1767
  %v1769 = vlaneseq
  %v1770 = vshrl.u32 %v1769, 7
  %v1771 = vsub.s32 %v1768, %v1770
  %v1772 = vrot.slane %v1758, %v1771
  %v1773 = vcombine.low %v1717, %v1749
  %v1774 = vcombine.high %v1717, %v1749
  %v1775 = vcombine.low %v1724, %v1756
  %v1776 = vcombine.high %v1724, %v1756
  %v1777 = vcombine.low %v1733, %v1765
  %v1778 = vcombine.high %v1733, %v1765
  %v1779 = vcombine.low %v1740, %v1772
  %v1780 = vcombine.high %v1740, %v1772
  %v1781 = vcombine.low %v1282, %v1308
  %v1782 = vcombine.high %v1282, %v1308
  %v1784 = vunpack.c.l.s4 1983009808
  %v1785 = vunpack.c.0.s8 %v1784
  %v1786 = vlaneseq
  %v1787 = vshrl.u32 %v1786, 7
  %v1788 = vsub.s32 %v1785, %v1787
  %v1789 = vrot.slane %v1781, %v1788
  %v1791 = vunpack.c.l.s4 1983009808
  %v1792 = vunpack.c.0.s8 %v1791
  %v1793 = vlaneseq
  %v1794 = vshrl.u32 %v1793, 7
  %v1795 = vsub.s32 %v1792, %v1794
  %v1796 = vrot.slane %v1782, %v1795
  %v1797 = vcombine.low %v1296, %v1320
  %v1798 = vcombine.high %v1296, %v1320
  %v1800 = vunpack.c.l.s4 1983009808
  %v1801 = vunpack.c.0.s8 %v1800
  %v1802 = vlaneseq
  %v1803 = vshrl.u32 %v1802, 7
  %v1804 = vsub.s32 %v1801, %v1803
  %v1805 = vrot.slane %v1797, %v1804
  %v1807 = vunpack.c.l.s4 1983009808
  %v1808 = vunpack.c.0.s8 %v1807
  %v1809 = vlaneseq
  %v1810 = vshrl.u32 %v1809, 7
  %v1811 = vsub.s32 %v1808, %v1810
  %v1812 = vrot.slane %v1798, %v1811
  %v1813 = vcombine.low %v1332, %v1356
  %v1814 = vcombine.high %v1332, %v1356
  %v1816 = vunpack.c.l.s4 1983009808
  %v1817 = vunpack.c.0.s8 %v1816
  %v1818 = vlaneseq
  %v1819 = vshrl.u32 %v1818, 7
  %v1820 = vsub.s32 %v1817, %v1819
  %v1821 = vrot.slane %v1813, %v1820
  %v1823 = vunpack.c.l.s4 1983009808
  %v1824 = vunpack.c.0.s8 %v1823
  %v1825 = vlaneseq
  %v1826 = vshrl.u32 %v1825, 7
  %v1827 = vsub.s32 %v1824, %v1826
  %v1828 = vrot.slane %v1814, %v1827
  %v1829 = vcombine.low %v1344, %v1368
  %v1830 = vcombine.high %v1344, %v1368
  %v1832 = vunpack.c.l.s4 1983009808
  %v1833 = vunpack.c.0.s8 %v1832
  %v1834 = vlaneseq
  %v1835 = vshrl.u32 %v1834, 7
  %v1836 = vsub.s32 %v1833, %v1835
  %v1837 = vrot.slane %v1829, %v1836
  %v1839 = vunpack.c.l.s4 1983009808
  %v1840 = vunpack.c.0.s8 %v1839
  %v1841 = vlaneseq
  %v1842 = vshrl.u32 %v1841, 7
  %v1843 = vsub.s32 %v1840, %v1842
  %v1844 = vrot.slane %v1830, %v1843
  %v1845 = vcombine.low %v1789, %v1805
  %v1846 = vcombine.high %v1789, %v1805
  %v1848 = vunpack.c.l.s4 1934713408
  %v1849 = vunpack.c.0.s8 %v1848
  %v1850 = vlaneseq
  %v1851 = vshrl.u32 %v1850, 7
  %v1852 = vsub.s32 %v1849, %v1851
  %v1853 = vrot.slane %v1845, %v1852
  %v1855 = vunpack.c.l.s4 1934713408
  %v1856 = vunpack.c.0.s8 %v1855
  %v1857 = vlaneseq
  %v1858 = vshrl.u32 %v1857, 7
  %v1859 = vsub.s32 %v1856, %v1858
  %v1860 = vrot.slane %v1846, %v1859
  %v1861 = vcombine.low %v1796, %v1812
  %v1862 = vcombine.high %v1796, %v1812
  %v1864 = vunpack.c.l.s4 1934713408
  %v1865 = vunpack.c.0.s8 %v1864
  %v1866 = vlaneseq
  %v1867 = vshrl.u32 %v1866, 7
  %v1868 = vsub.s32 %v1865, %v1867
  %v1869 = vrot.slane %v1861, %v1868
  %v1871 = vunpack.c.l.s4 1934713408
  %v1872 = vunpack.c.0.s8 %v1871
  %v1873 = vlaneseq
  %v1874 = vshrl.u32 %v1873, 7
  %v1875 = vsub.s32 %v1872, %v1874
  %v1876 = vrot.slane %v1862, %v1875
  %v1877 = vcombine.low %v1821, %v1837
  %v1878 = vcombine.high %v1821, %v1837
  %v1880 = vunpack.c.l.s4 1934713408
  %v1881 = vunpack.c.0.s8 %v1880
  %v1882 = vlaneseq
  %v1883 = vshrl.u32 %v1882, 7
  %v1884 = vsub.s32 %v1881, %v1883
  %v1885 = vrot.slane %v1877, %v1884
  %v1887 = vunpack.c.l.s4 1934713408
  %v1888 = vunpack.c.0.s8 %v1887
  %v1889 = vlaneseq
  %v1890 = vshrl.u32 %v1889, 7
  %v1891 = vsub.s32 %v1888, %v1890
  %v1892 = vrot.slane %v1878, %v1891
  %v1893 = vcombine.low %v1828, %v1844
  %v1894 = vcombine.high %v1828, %v1844
  %v1896 = vunpack.c.l.s4 1934713408
  %v1897 = vunpack.c.0.s8 %v1896
  %v1898 = vlaneseq
  %v1899 = vshrl.u32 %v1898, 7
  %v1900 = vsub.s32 %v1897, %v1899
  %v1901 = vrot.slane %v1893, %v1900
  %v1903 = vunpack.c.l.s4 1934713408
  %v1904 = vunpack.c.0.s8 %v1903
  %v1905 = vlaneseq
  %v1906 = vshrl.u32 %v1905, 7
  %v1907 = vsub.s32 %v1904, %v1906
  %v1908 = vrot.slane %v1894, %v1907
  %v1909 = vcombine.low %v1853, %v1885
  %v1910 = vcombine.high %v1853, %v1885
  %v1911 = vcombine.low %v1860, %v1892
  %v1912 = vcombine.high %v1860, %v1892
  %v1913 = vcombine.low %v1869, %v1901
  %v1914 = vcombine.high %v1869, %v1901
  %v1915 = vcombine.low %v1876, %v1908
  %v1916 = vcombine.high %v1876, %v1908
  %v1918 = vsel %vm682, %v1501, 0
  %1920 = vmatprep.subr.mxu0 0.0
  %1921 = vmatpush1.msra.mxu0 0.0
  %1922 = vmatprep.subr.mxu0 0.0
  %1923 = vmatpush1.msra.mxu0 0.0
  %1924 = vmatprep.subr.mxu0 0.0
  %1925 = vmatpush1.msra.mxu0 0.0
  %1926 = vmatprep.subr.mxu0 0.0
  %1927 = vmatpush1.msra.mxu0 0.0
  %1928 = vmatprep.subr.mxu0 0.0
  %1929 = vmatpush1.msra.mxu0 0.0
  %1930 = vmatprep.subr.mxu0 0.0
  %1931 = vmatpush1.msra.mxu0 0.0
  %1932 = vmatprep.subr.mxu0 0.0
  %1933 = vmatpush1.msra.mxu0 0.0
  %1934 = vmatprep.subr.mxu0 0.0
  %1935 = vmatpush1.msra.mxu0 0.0
  %1936 = vmatprep.subr.mxu0 0.0
  %1937 = vmatpush1.msra.mxu0 0.0
  %1938 = vmatprep.subr.mxu0 0.0
  %1939 = vmatpush1.msra.mxu0 0.0
  %1940 = vmatprep.subr.mxu0 0.0
  %1941 = vmatpush1.msra.mxu0 0.0
  %1942 = vmatprep.subr.mxu0 0.0
  %1943 = vmatpush1.msra.mxu0 0.0
  %1944 = vmatprep.subr.mxu0 0.0
  %1945 = vmatpush1.msra.mxu0 0.0
  %1946 = vmatprep.subr.mxu0 0.0
  %1947 = vmatpush1.msra.mxu0 0.0
  %1948 = vmatprep.subr.mxu0 0.0
  %1949 = vmatpush1.msra.mxu0 0.0
  %1950 = vmatprep.subr.mxu0 0.0
  %1951 = vmatpush1.msra.mxu0 %v231
  %1952 = vmatprep.subr.mxu0 0.0
  %1953 = vmatpush2.msra.mxu0 0.0
  %1954 = vmatprep.subr.mxu0 0.0
  %1955 = vmatpush2.msra.mxu0 0.0
  %1956 = vmatprep.subr.mxu0 0.0
  %1957 = vmatpush2.msra.mxu0 0.0
  %1958 = vmatprep.subr.mxu0 0.0
  %1959 = vmatpush2.msra.mxu0 0.0
  %1960 = vmatprep.subr.mxu0 0.0
  %1961 = vmatpush2.msra.mxu0 0.0
  %1962 = vmatprep.subr.mxu0 0.0
  %1963 = vmatpush2.msra.mxu0 0.0
  %1964 = vmatprep.subr.mxu0 0.0
  %1965 = vmatpush2.msra.mxu0 0.0
  %1966 = vmatprep.subr.mxu0 0.0
  %1967 = vmatpush2.msra.mxu0 0.0
  %1968 = vmatprep.subr.mxu0 0.0
  %1969 = vmatpush2.msra.mxu0 0.0
  %1970 = vmatprep.subr.mxu0 0.0
  %1971 = vmatpush2.msra.mxu0 0.0
  %1972 = vmatprep.subr.mxu0 0.0
  %1973 = vmatpush2.msra.mxu0 0.0
  %1974 = vmatprep.subr.mxu0 0.0
  %1975 = vmatpush2.msra.mxu0 0.0
  %1976 = vmatprep.subr.mxu0 0.0
  %1977 = vmatpush2.msra.mxu0 0.0
  %1978 = vmatprep.subr.mxu0 0.0
  %1979 = vmatpush2.msra.mxu0 0.0
  %1980 = vmatprep.subr.mxu0 0.0
  %1981 = vmatpush2.msra.mxu0 0.0
  %1982 = vmatprep.subr.mxu0 0.0
  %1983 = vmatpush2.msra.mxu0 0.0
  %1984 = vmatprep.mubr.f32.mxu0 0.0
  %1985 = vmatmul.mubr.f32.gmra.mxu0 %v1918
  %v1986 = vpop.f32.mrf.mxu0
  %v1987 = vadd.f32 0.0, %v1986
  %v1988 = vpop.f32.mrf.mxu0
  %1989 = vdwg.mxu0
  %v1991 = vsel %vm682, %v1502, 0
  %1993 = vmatprep.subr.mxu0 0.0
  %1994 = vmatpush1.msra.mxu0 0.0
  %1995 = vmatprep.subr.mxu0 0.0
  %1996 = vmatpush1.msra.mxu0 0.0
  %1997 = vmatprep.subr.mxu0 0.0
  %1998 = vmatpush1.msra.mxu0 0.0
  %1999 = vmatprep.subr.mxu0 0.0
  %2000 = vmatpush1.msra.mxu0 0.0
  %2001 = vmatprep.subr.mxu0 0.0
  %2002 = vmatpush1.msra.mxu0 0.0
  %2003 = vmatprep.subr.mxu0 0.0
  %2004 = vmatpush1.msra.mxu0 0.0
  %2005 = vmatprep.subr.mxu0 0.0
  %2006 = vmatpush1.msra.mxu0 0.0
  %2007 = vmatprep.subr.mxu0 0.0
  %2008 = vmatpush1.msra.mxu0 0.0
  %2009 = vmatprep.subr.mxu0 0.0
  %2010 = vmatpush1.msra.mxu0 0.0
  %2011 = vmatprep.subr.mxu0 0.0
  %2012 = vmatpush1.msra.mxu0 0.0
  %2013 = vmatprep.subr.mxu0 0.0
  %2014 = vmatpush1.msra.mxu0 0.0
  %2015 = vmatprep.subr.mxu0 0.0
  %2016 = vmatpush1.msra.mxu0 0.0
  %2017 = vmatprep.subr.mxu0 0.0
  %2018 = vmatpush1.msra.mxu0 0.0
  %2019 = vmatprep.subr.mxu0 0.0
  %2020 = vmatpush1.msra.mxu0 0.0
  %2021 = vmatprep.subr.mxu0 0.0
  %2022 = vmatpush1.msra.mxu0 0.0
  %2023 = vmatprep.subr.mxu0 0.0
  %2024 = vmatpush1.msra.mxu0 %v236
  %2025 = vmatprep.subr.mxu0 0.0
  %2026 = vmatpush2.msra.mxu0 0.0
  %2027 = vmatprep.subr.mxu0 0.0
  %2028 = vmatpush2.msra.mxu0 0.0
  %2029 = vmatprep.subr.mxu0 0.0
  %2030 = vmatpush2.msra.mxu0 0.0
  %2031 = vmatprep.subr.mxu0 0.0
  %2032 = vmatpush2.msra.mxu0 0.0
  %2033 = vmatprep.subr.mxu0 0.0
  %2034 = vmatpush2.msra.mxu0 0.0
  %2035 = vmatprep.subr.mxu0 0.0
  %2036 = vmatpush2.msra.mxu0 0.0
  %2037 = vmatprep.subr.mxu0 0.0
  %2038 = vmatpush2.msra.mxu0 0.0
  %2039 = vmatprep.subr.mxu0 0.0
  %2040 = vmatpush2.msra.mxu0 0.0
  %2041 = vmatprep.subr.mxu0 0.0
  %2042 = vmatpush2.msra.mxu0 0.0
  %2043 = vmatprep.subr.mxu0 0.0
  %2044 = vmatpush2.msra.mxu0 0.0
  %2045 = vmatprep.subr.mxu0 0.0
  %2046 = vmatpush2.msra.mxu0 0.0
  %2047 = vmatprep.subr.mxu0 0.0
  %2048 = vmatpush2.msra.mxu0 0.0
  %2049 = vmatprep.subr.mxu0 0.0
  %2050 = vmatpush2.msra.mxu0 0.0
  %2051 = vmatprep.subr.mxu0 0.0
  %2052 = vmatpush2.msra.mxu0 0.0
  %2053 = vmatprep.subr.mxu0 0.0
  %2054 = vmatpush2.msra.mxu0 0.0
  %2055 = vmatprep.subr.mxu0 0.0
  %2056 = vmatpush2.msra.mxu0 0.0
  %2057 = vmatprep.mubr.f32.mxu0 0.0
  %2058 = vmatmul.mubr.f32.gmra.mxu0 %v1991
  %v2059 = vpop.f32.mrf.mxu0
  %v2060 = vadd.f32 0.0, %v2059
  %v2061 = vpop.f32.mrf.mxu0
  %2062 = vdwg.mxu0
  %v2064 = vsel %vm682, %v1503, 0
  %2066 = vmatprep.subr.mxu0 0.0
  %2067 = vmatpush1.msra.mxu0 0.0
  %2068 = vmatprep.subr.mxu0 0.0
  %2069 = vmatpush1.msra.mxu0 0.0
  %2070 = vmatprep.subr.mxu0 0.0
  %2071 = vmatpush1.msra.mxu0 0.0
  %2072 = vmatprep.subr.mxu0 0.0
  %2073 = vmatpush1.msra.mxu0 0.0
  %2074 = vmatprep.subr.mxu0 0.0
  %2075 = vmatpush1.msra.mxu0 0.0
  %2076 = vmatprep.subr.mxu0 0.0
  %2077 = vmatpush1.msra.mxu0 0.0
  %2078 = vmatprep.subr.mxu0 0.0
  %2079 = vmatpush1.msra.mxu0 0.0
  %2080 = vmatprep.subr.mxu0 0.0
  %2081 = vmatpush1.msra.mxu0 0.0
  %2082 = vmatprep.subr.mxu0 0.0
  %2083 = vmatpush1.msra.mxu0 0.0
  %2084 = vmatprep.subr.mxu0 0.0
  %2085 = vmatpush1.msra.mxu0 0.0
  %2086 = vmatprep.subr.mxu0 0.0
  %2087 = vmatpush1.msra.mxu0 0.0
  %2088 = vmatprep.subr.mxu0 0.0
  %2089 = vmatpush1.msra.mxu0 0.0
  %2090 = vmatprep.subr.mxu0 0.0
  %2091 = vmatpush1.msra.mxu0 0.0
  %2092 = vmatprep.subr.mxu0 0.0
  %2093 = vmatpush1.msra.mxu0 0.0
  %2094 = vmatprep.subr.mxu0 0.0
  %2095 = vmatpush1.msra.mxu0 0.0
  %2096 = vmatprep.subr.mxu0 0.0
  %2097 = vmatpush1.msra.mxu0 %v241
  %2098 = vmatprep.subr.mxu0 0.0
  %2099 = vmatpush2.msra.mxu0 0.0
  %2100 = vmatprep.subr.mxu0 0.0
  %2101 = vmatpush2.msra.mxu0 0.0
  %2102 = vmatprep.subr.mxu0 0.0
  %2103 = vmatpush2.msra.mxu0 0.0
  %2104 = vmatprep.subr.mxu0 0.0
  %2105 = vmatpush2.msra.mxu0 0.0
  %2106 = vmatprep.subr.mxu0 0.0
  %2107 = vmatpush2.msra.mxu0 0.0
  %2108 = vmatprep.subr.mxu0 0.0
  %2109 = vmatpush2.msra.mxu0 0.0
  %2110 = vmatprep.subr.mxu0 0.0
  %2111 = vmatpush2.msra.mxu0 0.0
  %2112 = vmatprep.subr.mxu0 0.0
  %2113 = vmatpush2.msra.mxu0 0.0
  %2114 = vmatprep.subr.mxu0 0.0
  %2115 = vmatpush2.msra.mxu0 0.0
  %2116 = vmatprep.subr.mxu0 0.0
  %2117 = vmatpush2.msra.mxu0 0.0
  %2118 = vmatprep.subr.mxu0 0.0
  %2119 = vmatpush2.msra.mxu0 0.0
  %2120 = vmatprep.subr.mxu0 0.0
  %2121 = vmatpush2.msra.mxu0 0.0
  %2122 = vmatprep.subr.mxu0 0.0
  %2123 = vmatpush2.msra.mxu0 0.0
  %2124 = vmatprep.subr.mxu0 0.0
  %2125 = vmatpush2.msra.mxu0 0.0
  %2126 = vmatprep.subr.mxu0 0.0
  %2127 = vmatpush2.msra.mxu0 0.0
  %2128 = vmatprep.subr.mxu0 0.0
  %2129 = vmatpush2.msra.mxu0 0.0
  %2130 = vmatprep.mubr.f32.mxu0 0.0
  %2131 = vmatmul.mubr.f32.gmra.mxu0 %v2064
  %v2132 = vpop.f32.mrf.mxu0
  %v2133 = vadd.f32 0.0, %v2132
  %v2134 = vpop.f32.mrf.mxu0
  %2135 = vdwg.mxu0
  %v2137 = vsel %vm682, %v1504, 0
  %2139 = vmatprep.subr.mxu0 0.0
  %2140 = vmatpush1.msra.mxu0 0.0
  %2141 = vmatprep.subr.mxu0 0.0
  %2142 = vmatpush1.msra.mxu0 0.0
  %2143 = vmatprep.subr.mxu0 0.0
  %2144 = vmatpush1.msra.mxu0 0.0
  %2145 = vmatprep.subr.mxu0 0.0
  %2146 = vmatpush1.msra.mxu0 0.0
  %2147 = vmatprep.subr.mxu0 0.0
  %2148 = vmatpush1.msra.mxu0 0.0
  %2149 = vmatprep.subr.mxu0 0.0
  %2150 = vmatpush1.msra.mxu0 0.0
  %2151 = vmatprep.subr.mxu0 0.0
  %2152 = vmatpush1.msra.mxu0 0.0
  %2153 = vmatprep.subr.mxu0 0.0
  %2154 = vmatpush1.msra.mxu0 0.0
  %2155 = vmatprep.subr.mxu0 0.0
  %2156 = vmatpush1.msra.mxu0 0.0
  %2157 = vmatprep.subr.mxu0 0.0
  %2158 = vmatpush1.msra.mxu0 0.0
  %2159 = vmatprep.subr.mxu0 0.0
  %2160 = vmatpush1.msra.mxu0 0.0
  %2161 = vmatprep.subr.mxu0 0.0
  %2162 = vmatpush1.msra.mxu0 0.0
  %2163 = vmatprep.subr.mxu0 0.0
  %2164 = vmatpush1.msra.mxu0 0.0
  %2165 = vmatprep.subr.mxu0 0.0
  %2166 = vmatpush1.msra.mxu0 0.0
  %2167 = vmatprep.subr.mxu0 0.0
  %2168 = vmatpush1.msra.mxu0 0.0
  %2169 = vmatprep.subr.mxu0 0.0
  %2170 = vmatpush1.msra.mxu0 %v246
  %2171 = vmatprep.subr.mxu0 0.0
  %2172 = vmatpush2.msra.mxu0 0.0
  %2173 = vmatprep.subr.mxu0 0.0
  %2174 = vmatpush2.msra.mxu0 0.0
  %2175 = vmatprep.subr.mxu0 0.0
  %2176 = vmatpush2.msra.mxu0 0.0
  %2177 = vmatprep.subr.mxu0 0.0
  %2178 = vmatpush2.msra.mxu0 0.0
  %2179 = vmatprep.subr.mxu0 0.0
  %2180 = vmatpush2.msra.mxu0 0.0
  %2181 = vmatprep.subr.mxu0 0.0
  %2182 = vmatpush2.msra.mxu0 0.0
  %2183 = vmatprep.subr.mxu0 0.0
  %2184 = vmatpush2.msra.mxu0 0.0
  %2185 = vmatprep.subr.mxu0 0.0
  %2186 = vmatpush2.msra.mxu0 0.0
  %2187 = vmatprep.subr.mxu0 0.0
  %2188 = vmatpush2.msra.mxu0 0.0
  %2189 = vmatprep.subr.mxu0 0.0
  %2190 = vmatpush2.msra.mxu0 0.0
  %2191 = vmatprep.subr.mxu0 0.0
  %2192 = vmatpush2.msra.mxu0 0.0
  %2193 = vmatprep.subr.mxu0 0.0
  %2194 = vmatpush2.msra.mxu0 0.0
  %2195 = vmatprep.subr.mxu0 0.0
  %2196 = vmatpush2.msra.mxu0 0.0
  %2197 = vmatprep.subr.mxu0 0.0
  %2198 = vmatpush2.msra.mxu0 0.0
  %2199 = vmatprep.subr.mxu0 0.0
  %2200 = vmatpush2.msra.mxu0 0.0
  %2201 = vmatprep.subr.mxu0 0.0
  %2202 = vmatpush2.msra.mxu0 0.0
  %2203 = vmatprep.mubr.f32.mxu0 0.0
  %2204 = vmatmul.mubr.f32.gmra.mxu0 %v2137
  %v2205 = vpop.f32.mrf.mxu0
  %v2206 = vadd.f32 0.0, %v2205
  %v2207 = vpop.f32.mrf.mxu0
  %2208 = vdwg.mxu0
  %v2210 = vsel %vm682, %v1505, 0
  %2212 = vmatprep.subr.mxu0 0.0
  %2213 = vmatpush1.msra.mxu0 0.0
  %2214 = vmatprep.subr.mxu0 0.0
  %2215 = vmatpush1.msra.mxu0 0.0
  %2216 = vmatprep.subr.mxu0 0.0
  %2217 = vmatpush1.msra.mxu0 0.0
  %2218 = vmatprep.subr.mxu0 0.0
  %2219 = vmatpush1.msra.mxu0 0.0
  %2220 = vmatprep.subr.mxu0 0.0
  %2221 = vmatpush1.msra.mxu0 0.0
  %2222 = vmatprep.subr.mxu0 0.0
  %2223 = vmatpush1.msra.mxu0 0.0
  %2224 = vmatprep.subr.mxu0 0.0
  %2225 = vmatpush1.msra.mxu0 0.0
  %2226 = vmatprep.subr.mxu0 0.0
  %2227 = vmatpush1.msra.mxu0 0.0
  %2228 = vmatprep.subr.mxu0 0.0
  %2229 = vmatpush1.msra.mxu0 0.0
  %2230 = vmatprep.subr.mxu0 0.0
  %2231 = vmatpush1.msra.mxu0 0.0
  %2232 = vmatprep.subr.mxu0 0.0
  %2233 = vmatpush1.msra.mxu0 0.0
  %2234 = vmatprep.subr.mxu0 0.0
  %2235 = vmatpush1.msra.mxu0 0.0
  %2236 = vmatprep.subr.mxu0 0.0
  %2237 = vmatpush1.msra.mxu0 0.0
  %2238 = vmatprep.subr.mxu0 0.0
  %2239 = vmatpush1.msra.mxu0 0.0
  %2240 = vmatprep.subr.mxu0 0.0
  %2241 = vmatpush1.msra.mxu0 0.0
  %2242 = vmatprep.subr.mxu0 0.0
  %2243 = vmatpush1.msra.mxu0 %v251
  %2244 = vmatprep.subr.mxu0 0.0
  %2245 = vmatpush2.msra.mxu0 0.0
  %2246 = vmatprep.subr.mxu0 0.0
  %2247 = vmatpush2.msra.mxu0 0.0
  %2248 = vmatprep.subr.mxu0 0.0
  %2249 = vmatpush2.msra.mxu0 0.0
  %2250 = vmatprep.subr.mxu0 0.0
  %2251 = vmatpush2.msra.mxu0 0.0
  %2252 = vmatprep.subr.mxu0 0.0
  %2253 = vmatpush2.msra.mxu0 0.0
  %2254 = vmatprep.subr.mxu0 0.0
  %2255 = vmatpush2.msra.mxu0 0.0
  %2256 = vmatprep.subr.mxu0 0.0
  %2257 = vmatpush2.msra.mxu0 0.0
  %2258 = vmatprep.subr.mxu0 0.0
  %2259 = vmatpush2.msra.mxu0 0.0
  %2260 = vmatprep.subr.mxu0 0.0
  %2261 = vmatpush2.msra.mxu0 0.0
  %2262 = vmatprep.subr.mxu0 0.0
  %2263 = vmatpush2.msra.mxu0 0.0
  %2264 = vmatprep.subr.mxu0 0.0
  %2265 = vmatpush2.msra.mxu0 0.0
  %2266 = vmatprep.subr.mxu0 0.0
  %2267 = vmatpush2.msra.mxu0 0.0
  %2268 = vmatprep.subr.mxu0 0.0
  %2269 = vmatpush2.msra.mxu0 0.0
  %2270 = vmatprep.subr.mxu0 0.0
  %2271 = vmatpush2.msra.mxu0 0.0
  %2272 = vmatprep.subr.mxu0 0.0
  %2273 = vmatpush2.msra.mxu0 0.0
  %2274 = vmatprep.subr.mxu0 0.0
  %2275 = vmatpush2.msra.mxu0 0.0
  %2276 = vmatprep.mubr.f32.mxu0 0.0
  %2277 = vmatmul.mubr.f32.gmra.mxu0 %v2210
  %v2278 = vpop.f32.mrf.mxu0
  %v2279 = vadd.f32 0.0, %v2278
  %v2280 = vpop.f32.mrf.mxu0
  %2281 = vdwg.mxu0
  %v2283 = vsel %vm682, %v1506, 0
  %2285 = vmatprep.subr.mxu0 0.0
  %2286 = vmatpush1.msra.mxu0 0.0
  %2287 = vmatprep.subr.mxu0 0.0
  %2288 = vmatpush1.msra.mxu0 0.0
  %2289 = vmatprep.subr.mxu0 0.0
  %2290 = vmatpush1.msra.mxu0 0.0
  %2291 = vmatprep.subr.mxu0 0.0
  %2292 = vmatpush1.msra.mxu0 0.0
  %2293 = vmatprep.subr.mxu0 0.0
  %2294 = vmatpush1.msra.mxu0 0.0
  %2295 = vmatprep.subr.mxu0 0.0
  %2296 = vmatpush1.msra.mxu0 0.0
  %2297 = vmatprep.subr.mxu0 0.0
  %2298 = vmatpush1.msra.mxu0 0.0
  %2299 = vmatprep.subr.mxu0 0.0
  %2300 = vmatpush1.msra.mxu0 0.0
  %2301 = vmatprep.subr.mxu0 0.0
  %2302 = vmatpush1.msra.mxu0 0.0
  %2303 = vmatprep.subr.mxu0 0.0
  %2304 = vmatpush1.msra.mxu0 0.0
  %2305 = vmatprep.subr.mxu0 0.0
  %2306 = vmatpush1.msra.mxu0 0.0
  %2307 = vmatprep.subr.mxu0 0.0
  %2308 = vmatpush1.msra.mxu0 0.0
  %2309 = vmatprep.subr.mxu0 0.0
  %2310 = vmatpush1.msra.mxu0 0.0
  %2311 = vmatprep.subr.mxu0 0.0
  %2312 = vmatpush1.msra.mxu0 0.0
  %2313 = vmatprep.subr.mxu0 0.0
  %2314 = vmatpush1.msra.mxu0 0.0
  %2315 = vmatprep.subr.mxu0 0.0
  %2316 = vmatpush1.msra.mxu0 %v256
  %2317 = vmatprep.subr.mxu0 0.0
  %2318 = vmatpush2.msra.mxu0 0.0
  %2319 = vmatprep.subr.mxu0 0.0
  %2320 = vmatpush2.msra.mxu0 0.0
  %2321 = vmatprep.subr.mxu0 0.0
  %2322 = vmatpush2.msra.mxu0 0.0
  %2323 = vmatprep.subr.mxu0 0.0
  %2324 = vmatpush2.msra.mxu0 0.0
  %2325 = vmatprep.subr.mxu0 0.0
  %2326 = vmatpush2.msra.mxu0 0.0
  %2327 = vmatprep.subr.mxu0 0.0
  %2328 = vmatpush2.msra.mxu0 0.0
  %2329 = vmatprep.subr.mxu0 0.0
  %2330 = vmatpush2.msra.mxu0 0.0
  %2331 = vmatprep.subr.mxu0 0.0
  %2332 = vmatpush2.msra.mxu0 0.0
  %2333 = vmatprep.subr.mxu0 0.0
  %2334 = vmatpush2.msra.mxu0 0.0
  %2335 = vmatprep.subr.mxu0 0.0
  %2336 = vmatpush2.msra.mxu0 0.0
  %2337 = vmatprep.subr.mxu0 0.0
  %2338 = vmatpush2.msra.mxu0 0.0
  %2339 = vmatprep.subr.mxu0 0.0
  %2340 = vmatpush2.msra.mxu0 0.0
  %2341 = vmatprep.subr.mxu0 0.0
  %2342 = vmatpush2.msra.mxu0 0.0
  %2343 = vmatprep.subr.mxu0 0.0
  %2344 = vmatpush2.msra.mxu0 0.0
  %2345 = vmatprep.subr.mxu0 0.0
  %2346 = vmatpush2.msra.mxu0 0.0
  %2347 = vmatprep.subr.mxu0 0.0
  %2348 = vmatpush2.msra.mxu0 0.0
  %2349 = vmatprep.mubr.f32.mxu0 0.0
  %2350 = vmatmul.mubr.f32.gmra.mxu0 %v2283
  %v2351 = vpop.f32.mrf.mxu0
  %v2352 = vadd.f32 0.0, %v2351
  %v2353 = vpop.f32.mrf.mxu0
  %2354 = vdwg.mxu0
  %v2356 = vsel %vm682, %v1507, 0
  %2358 = vmatprep.subr.mxu0 0.0
  %2359 = vmatpush1.msra.mxu0 0.0
  %2360 = vmatprep.subr.mxu0 0.0
  %2361 = vmatpush1.msra.mxu0 0.0
  %2362 = vmatprep.subr.mxu0 0.0
  %2363 = vmatpush1.msra.mxu0 0.0
  %2364 = vmatprep.subr.mxu0 0.0
  %2365 = vmatpush1.msra.mxu0 0.0
  %2366 = vmatprep.subr.mxu0 0.0
  %2367 = vmatpush1.msra.mxu0 0.0
  %2368 = vmatprep.subr.mxu0 0.0
  %2369 = vmatpush1.msra.mxu0 0.0
  %2370 = vmatprep.subr.mxu0 0.0
  %2371 = vmatpush1.msra.mxu0 0.0
  %2372 = vmatprep.subr.mxu0 0.0
  %2373 = vmatpush1.msra.mxu0 0.0
  %2374 = vmatprep.subr.mxu0 0.0
  %2375 = vmatpush1.msra.mxu0 0.0
  %2376 = vmatprep.subr.mxu0 0.0
  %2377 = vmatpush1.msra.mxu0 0.0
  %2378 = vmatprep.subr.mxu0 0.0
  %2379 = vmatpush1.msra.mxu0 0.0
  %2380 = vmatprep.subr.mxu0 0.0
  %2381 = vmatpush1.msra.mxu0 0.0
  %2382 = vmatprep.subr.mxu0 0.0
  %2383 = vmatpush1.msra.mxu0 0.0
  %2384 = vmatprep.subr.mxu0 0.0
  %2385 = vmatpush1.msra.mxu0 0.0
  %2386 = vmatprep.subr.mxu0 0.0
  %2387 = vmatpush1.msra.mxu0 0.0
  %2388 = vmatprep.subr.mxu0 0.0
  %2389 = vmatpush1.msra.mxu0 %v261
  %2390 = vmatprep.subr.mxu0 0.0
  %2391 = vmatpush2.msra.mxu0 0.0
  %2392 = vmatprep.subr.mxu0 0.0
  %2393 = vmatpush2.msra.mxu0 0.0
  %2394 = vmatprep.subr.mxu0 0.0
  %2395 = vmatpush2.msra.mxu0 0.0
  %2396 = vmatprep.subr.mxu0 0.0
  %2397 = vmatpush2.msra.mxu0 0.0
  %2398 = vmatprep.subr.mxu0 0.0
  %2399 = vmatpush2.msra.mxu0 0.0
  %2400 = vmatprep.subr.mxu0 0.0
  %2401 = vmatpush2.msra.mxu0 0.0
  %2402 = vmatprep.subr.mxu0 0.0
  %2403 = vmatpush2.msra.mxu0 0.0
  %2404 = vmatprep.subr.mxu0 0.0
  %2405 = vmatpush2.msra.mxu0 0.0
  %2406 = vmatprep.subr.mxu0 0.0
  %2407 = vmatpush2.msra.mxu0 0.0
  %2408 = vmatprep.subr.mxu0 0.0
  %2409 = vmatpush2.msra.mxu0 0.0
  %2410 = vmatprep.subr.mxu0 0.0
  %2411 = vmatpush2.msra.mxu0 0.0
  %2412 = vmatprep.subr.mxu0 0.0
  %2413 = vmatpush2.msra.mxu0 0.0
  %2414 = vmatprep.subr.mxu0 0.0
  %2415 = vmatpush2.msra.mxu0 0.0
  %2416 = vmatprep.subr.mxu0 0.0
  %2417 = vmatpush2.msra.mxu0 0.0
  %2418 = vmatprep.subr.mxu0 0.0
  %2419 = vmatpush2.msra.mxu0 0.0
  %2420 = vmatprep.subr.mxu0 0.0
  %2421 = vmatpush2.msra.mxu0 0.0
  %2422 = vmatprep.mubr.f32.mxu0 0.0
  %2423 = vmatmul.mubr.f32.gmra.mxu0 %v2356
  %v2424 = vpop.f32.mrf.mxu0
  %v2425 = vadd.f32 0.0, %v2424
  %v2426 = vpop.f32.mrf.mxu0
  %2427 = vdwg.mxu0
  %v2429 = vsel %vm682, %v1508, 0
  %2431 = vmatprep.subr.mxu0 0.0
  %2432 = vmatpush1.msra.mxu0 0.0
  %2433 = vmatprep.subr.mxu0 0.0
  %2434 = vmatpush1.msra.mxu0 0.0
  %2435 = vmatprep.subr.mxu0 0.0
  %2436 = vmatpush1.msra.mxu0 0.0
  %2437 = vmatprep.subr.mxu0 0.0
  %2438 = vmatpush1.msra.mxu0 0.0
  %2439 = vmatprep.subr.mxu0 0.0
  %2440 = vmatpush1.msra.mxu0 0.0
  %2441 = vmatprep.subr.mxu0 0.0
  %2442 = vmatpush1.msra.mxu0 0.0
  %2443 = vmatprep.subr.mxu0 0.0
  %2444 = vmatpush1.msra.mxu0 0.0
  %2445 = vmatprep.subr.mxu0 0.0
  %2446 = vmatpush1.msra.mxu0 0.0
  %2447 = vmatprep.subr.mxu0 0.0
  %2448 = vmatpush1.msra.mxu0 0.0
  %2449 = vmatprep.subr.mxu0 0.0
  %2450 = vmatpush1.msra.mxu0 0.0
  %2451 = vmatprep.subr.mxu0 0.0
  %2452 = vmatpush1.msra.mxu0 0.0
  %2453 = vmatprep.subr.mxu0 0.0
  %2454 = vmatpush1.msra.mxu0 0.0
  %2455 = vmatprep.subr.mxu0 0.0
  %2456 = vmatpush1.msra.mxu0 0.0
  %2457 = vmatprep.subr.mxu0 0.0
  %2458 = vmatpush1.msra.mxu0 0.0
  %2459 = vmatprep.subr.mxu0 0.0
  %2460 = vmatpush1.msra.mxu0 0.0
  %2461 = vmatprep.subr.mxu0 0.0
  %2462 = vmatpush1.msra.mxu0 %v266
  %2463 = vmatprep.subr.mxu0 0.0
  %2464 = vmatpush2.msra.mxu0 0.0
  %2465 = vmatprep.subr.mxu0 0.0
  %2466 = vmatpush2.msra.mxu0 0.0
  %2467 = vmatprep.subr.mxu0 0.0
  %2468 = vmatpush2.msra.mxu0 0.0
  %2469 = vmatprep.subr.mxu0 0.0
  %2470 = vmatpush2.msra.mxu0 0.0
  %2471 = vmatprep.subr.mxu0 0.0
  %2472 = vmatpush2.msra.mxu0 0.0
  %2473 = vmatprep.subr.mxu0 0.0
  %2474 = vmatpush2.msra.mxu0 0.0
  %2475 = vmatprep.subr.mxu0 0.0
  %2476 = vmatpush2.msra.mxu0 0.0
  %2477 = vmatprep.subr.mxu0 0.0
  %2478 = vmatpush2.msra.mxu0 0.0
  %2479 = vmatprep.subr.mxu0 0.0
  %2480 = vmatpush2.msra.mxu0 0.0
  %2481 = vmatprep.subr.mxu0 0.0
  %2482 = vmatpush2.msra.mxu0 0.0
  %2483 = vmatprep.subr.mxu0 0.0
  %2484 = vmatpush2.msra.mxu0 0.0
  %2485 = vmatprep.subr.mxu0 0.0
  %2486 = vmatpush2.msra.mxu0 0.0
  %2487 = vmatprep.subr.mxu0 0.0
  %2488 = vmatpush2.msra.mxu0 0.0
  %2489 = vmatprep.subr.mxu0 0.0
  %2490 = vmatpush2.msra.mxu0 0.0
  %2491 = vmatprep.subr.mxu0 0.0
  %2492 = vmatpush2.msra.mxu0 0.0
  %2493 = vmatprep.subr.mxu0 0.0
  %2494 = vmatpush2.msra.mxu0 0.0
  %2495 = vmatprep.mubr.f32.mxu0 0.0
  %2496 = vmatmul.mubr.f32.gmra.mxu0 %v2429
  %v2497 = vpop.f32.mrf.mxu0
  %v2498 = vadd.f32 0.0, %v2497
  %v2499 = vpop.f32.mrf.mxu0
  %2500 = vdwg.mxu0
  %v2502 = vsel %vm682, %v1637, 0
  %2504 = vmatprep.subr.mxu0 0.0
  %2505 = vmatpush1.msra.mxu0 0.0
  %2506 = vmatprep.subr.mxu0 0.0
  %2507 = vmatpush1.msra.mxu0 0.0
  %2508 = vmatprep.subr.mxu0 0.0
  %2509 = vmatpush1.msra.mxu0 0.0
  %2510 = vmatprep.subr.mxu0 0.0
  %2511 = vmatpush1.msra.mxu0 0.0
  %2512 = vmatprep.subr.mxu0 0.0
  %2513 = vmatpush1.msra.mxu0 0.0
  %2514 = vmatprep.subr.mxu0 0.0
  %2515 = vmatpush1.msra.mxu0 0.0
  %2516 = vmatprep.subr.mxu0 0.0
  %2517 = vmatpush1.msra.mxu0 0.0
  %2518 = vmatprep.subr.mxu0 0.0
  %2519 = vmatpush1.msra.mxu0 0.0
  %2520 = vmatprep.subr.mxu0 0.0
  %2521 = vmatpush1.msra.mxu0 0.0
  %2522 = vmatprep.subr.mxu0 0.0
  %2523 = vmatpush1.msra.mxu0 0.0
  %2524 = vmatprep.subr.mxu0 0.0
  %2525 = vmatpush1.msra.mxu0 0.0
  %2526 = vmatprep.subr.mxu0 0.0
  %2527 = vmatpush1.msra.mxu0 0.0
  %2528 = vmatprep.subr.mxu0 0.0
  %2529 = vmatpush1.msra.mxu0 0.0
  %2530 = vmatprep.subr.mxu0 0.0
  %2531 = vmatpush1.msra.mxu0 0.0
  %2532 = vmatprep.subr.mxu0 0.0
  %2533 = vmatpush1.msra.mxu0 0.0
  %2534 = vmatprep.subr.mxu0 0.0
  %2535 = vmatpush1.msra.mxu0 %v271
  %2536 = vmatprep.subr.mxu0 0.0
  %2537 = vmatpush2.msra.mxu0 0.0
  %2538 = vmatprep.subr.mxu0 0.0
  %2539 = vmatpush2.msra.mxu0 0.0
  %2540 = vmatprep.subr.mxu0 0.0
  %2541 = vmatpush2.msra.mxu0 0.0
  %2542 = vmatprep.subr.mxu0 0.0
  %2543 = vmatpush2.msra.mxu0 0.0
  %2544 = vmatprep.subr.mxu0 0.0
  %2545 = vmatpush2.msra.mxu0 0.0
  %2546 = vmatprep.subr.mxu0 0.0
  %2547 = vmatpush2.msra.mxu0 0.0
  %2548 = vmatprep.subr.mxu0 0.0
  %2549 = vmatpush2.msra.mxu0 0.0
  %2550 = vmatprep.subr.mxu0 0.0
  %2551 = vmatpush2.msra.mxu0 0.0
  %2552 = vmatprep.subr.mxu0 0.0
  %2553 = vmatpush2.msra.mxu0 0.0
  %2554 = vmatprep.subr.mxu0 0.0
  %2555 = vmatpush2.msra.mxu0 0.0
  %2556 = vmatprep.subr.mxu0 0.0
  %2557 = vmatpush2.msra.mxu0 0.0
  %2558 = vmatprep.subr.mxu0 0.0
  %2559 = vmatpush2.msra.mxu0 0.0
  %2560 = vmatprep.subr.mxu0 0.0
  %2561 = vmatpush2.msra.mxu0 0.0
  %2562 = vmatprep.subr.mxu0 0.0
  %2563 = vmatpush2.msra.mxu0 0.0
  %2564 = vmatprep.subr.mxu0 0.0
  %2565 = vmatpush2.msra.mxu0 0.0
  %2566 = vmatprep.subr.mxu0 0.0
  %2567 = vmatpush2.msra.mxu0 0.0
  %2568 = vmatprep.mubr.f32.mxu0 0.0
  %2569 = vmatmul.mubr.f32.gmra.mxu0 %v2502
  %v2570 = vpop.f32.mrf.mxu0
  %v2571 = vadd.f32 0.0, %v2570
  %v2572 = vpop.f32.mrf.mxu0
  %2573 = vdwg.mxu0
  %v2575 = vsel %vm682, %v1638, 0
  %2577 = vmatprep.subr.mxu0 0.0
  %2578 = vmatpush1.msra.mxu0 0.0
  %2579 = vmatprep.subr.mxu0 0.0
  %2580 = vmatpush1.msra.mxu0 0.0
  %2581 = vmatprep.subr.mxu0 0.0
  %2582 = vmatpush1.msra.mxu0 0.0
  %2583 = vmatprep.subr.mxu0 0.0
  %2584 = vmatpush1.msra.mxu0 0.0
  %2585 = vmatprep.subr.mxu0 0.0
  %2586 = vmatpush1.msra.mxu0 0.0
  %2587 = vmatprep.subr.mxu0 0.0
  %2588 = vmatpush1.msra.mxu0 0.0
  %2589 = vmatprep.subr.mxu0 0.0
  %2590 = vmatpush1.msra.mxu0 0.0
  %2591 = vmatprep.subr.mxu0 0.0
  %2592 = vmatpush1.msra.mxu0 0.0
  %2593 = vmatprep.subr.mxu0 0.0
  %2594 = vmatpush1.msra.mxu0 0.0
  %2595 = vmatprep.subr.mxu0 0.0
  %2596 = vmatpush1.msra.mxu0 0.0
  %2597 = vmatprep.subr.mxu0 0.0
  %2598 = vmatpush1.msra.mxu0 0.0
  %2599 = vmatprep.subr.mxu0 0.0
  %2600 = vmatpush1.msra.mxu0 0.0
  %2601 = vmatprep.subr.mxu0 0.0
  %2602 = vmatpush1.msra.mxu0 0.0
  %2603 = vmatprep.subr.mxu0 0.0
  %2604 = vmatpush1.msra.mxu0 0.0
  %2605 = vmatprep.subr.mxu0 0.0
  %2606 = vmatpush1.msra.mxu0 0.0
  %2607 = vmatprep.subr.mxu0 0.0
  %2608 = vmatpush1.msra.mxu0 %v276
  %2609 = vmatprep.subr.mxu0 0.0
  %2610 = vmatpush2.msra.mxu0 0.0
  %2611 = vmatprep.subr.mxu0 0.0
  %2612 = vmatpush2.msra.mxu0 0.0
  %2613 = vmatprep.subr.mxu0 0.0
  %2614 = vmatpush2.msra.mxu0 0.0
  %2615 = vmatprep.subr.mxu0 0.0
  %2616 = vmatpush2.msra.mxu0 0.0
  %2617 = vmatprep.subr.mxu0 0.0
  %2618 = vmatpush2.msra.mxu0 0.0
  %2619 = vmatprep.subr.mxu0 0.0
  %2620 = vmatpush2.msra.mxu0 0.0
  %2621 = vmatprep.subr.mxu0 0.0
  %2622 = vmatpush2.msra.mxu0 0.0
  %2623 = vmatprep.subr.mxu0 0.0
  %2624 = vmatpush2.msra.mxu0 0.0
  %2625 = vmatprep.subr.mxu0 0.0
  %2626 = vmatpush2.msra.mxu0 0.0
  %2627 = vmatprep.subr.mxu0 0.0
  %2628 = vmatpush2.msra.mxu0 0.0
  %2629 = vmatprep.subr.mxu0 0.0
  %2630 = vmatpush2.msra.mxu0 0.0
  %2631 = vmatprep.subr.mxu0 0.0
  %2632 = vmatpush2.msra.mxu0 0.0
  %2633 = vmatprep.subr.mxu0 0.0
  %2634 = vmatpush2.msra.mxu0 0.0
  %2635 = vmatprep.subr.mxu0 0.0
  %2636 = vmatpush2.msra.mxu0 0.0
  %2637 = vmatprep.subr.mxu0 0.0
  %2638 = vmatpush2.msra.mxu0 0.0
  %2639 = vmatprep.subr.mxu0 0.0
  %2640 = vmatpush2.msra.mxu0 0.0
  %2641 = vmatprep.mubr.f32.mxu0 0.0
  %2642 = vmatmul.mubr.f32.gmra.mxu0 %v2575
  %v2643 = vpop.f32.mrf.mxu0
  %v2644 = vadd.f32 0.0, %v2643
  %v2645 = vpop.f32.mrf.mxu0
  %2646 = vdwg.mxu0
  %v2648 = vsel %vm682, %v1639, 0
  %2650 = vmatprep.subr.mxu0 0.0
  %2651 = vmatpush1.msra.mxu0 0.0
  %2652 = vmatprep.subr.mxu0 0.0
  %2653 = vmatpush1.msra.mxu0 0.0
  %2654 = vmatprep.subr.mxu0 0.0
  %2655 = vmatpush1.msra.mxu0 0.0
  %2656 = vmatprep.subr.mxu0 0.0
  %2657 = vmatpush1.msra.mxu0 0.0
  %2658 = vmatprep.subr.mxu0 0.0
  %2659 = vmatpush1.msra.mxu0 0.0
  %2660 = vmatprep.subr.mxu0 0.0
  %2661 = vmatpush1.msra.mxu0 0.0
  %2662 = vmatprep.subr.mxu0 0.0
  %2663 = vmatpush1.msra.mxu0 0.0
  %2664 = vmatprep.subr.mxu0 0.0
  %2665 = vmatpush1.msra.mxu0 0.0
  %2666 = vmatprep.subr.mxu0 0.0
  %2667 = vmatpush1.msra.mxu0 0.0
  %2668 = vmatprep.subr.mxu0 0.0
  %2669 = vmatpush1.msra.mxu0 0.0
  %2670 = vmatprep.subr.mxu0 0.0
  %2671 = vmatpush1.msra.mxu0 0.0
  %2672 = vmatprep.subr.mxu0 0.0
  %2673 = vmatpush1.msra.mxu0 0.0
  %2674 = vmatprep.subr.mxu0 0.0
  %2675 = vmatpush1.msra.mxu0 0.0
  %2676 = vmatprep.subr.mxu0 0.0
  %2677 = vmatpush1.msra.mxu0 0.0
  %2678 = vmatprep.subr.mxu0 0.0
  %2679 = vmatpush1.msra.mxu0 0.0
  %2680 = vmatprep.subr.mxu0 0.0
  %2681 = vmatpush1.msra.mxu0 %v281
  %2682 = vmatprep.subr.mxu0 0.0
  %2683 = vmatpush2.msra.mxu0 0.0
  %2684 = vmatprep.subr.mxu0 0.0
  %2685 = vmatpush2.msra.mxu0 0.0
  %2686 = vmatprep.subr.mxu0 0.0
  %2687 = vmatpush2.msra.mxu0 0.0
  %2688 = vmatprep.subr.mxu0 0.0
  %2689 = vmatpush2.msra.mxu0 0.0
  %2690 = vmatprep.subr.mxu0 0.0
  %2691 = vmatpush2.msra.mxu0 0.0
  %2692 = vmatprep.subr.mxu0 0.0
  %2693 = vmatpush2.msra.mxu0 0.0
  %2694 = vmatprep.subr.mxu0 0.0
  %2695 = vmatpush2.msra.mxu0 0.0
  %2696 = vmatprep.subr.mxu0 0.0
  %2697 = vmatpush2.msra.mxu0 0.0
  %2698 = vmatprep.subr.mxu0 0.0
  %2699 = vmatpush2.msra.mxu0 0.0
  %2700 = vmatprep.subr.mxu0 0.0
  %2701 = vmatpush2.msra.mxu0 0.0
  %2702 = vmatprep.subr.mxu0 0.0
  %2703 = vmatpush2.msra.mxu0 0.0
  %2704 = vmatprep.subr.mxu0 0.0
  %2705 = vmatpush2.msra.mxu0 0.0
  %2706 = vmatprep.subr.mxu0 0.0
  %2707 = vmatpush2.msra.mxu0 0.0
  %2708 = vmatprep.subr.mxu0 0.0
  %2709 = vmatpush2.msra.mxu0 0.0
  %2710 = vmatprep.subr.mxu0 0.0
  %2711 = vmatpush2.msra.mxu0 0.0
  %2712 = vmatprep.subr.mxu0 0.0
  %2713 = vmatpush2.msra.mxu0 0.0
  %2714 = vmatprep.mubr.f32.mxu0 0.0
  %2715 = vmatmul.mubr.f32.gmra.mxu0 %v2648
  %v2716 = vpop.f32.mrf.mxu0
  %v2717 = vadd.f32 0.0, %v2716
  %v2718 = vpop.f32.mrf.mxu0
  %2719 = vdwg.mxu0
  %v2721 = vsel %vm682, %v1640, 0
  %2723 = vmatprep.subr.mxu0 0.0
  %2724 = vmatpush1.msra.mxu0 0.0
  %2725 = vmatprep.subr.mxu0 0.0
  %2726 = vmatpush1.msra.mxu0 0.0
  %2727 = vmatprep.subr.mxu0 0.0
  %2728 = vmatpush1.msra.mxu0 0.0
  %2729 = vmatprep.subr.mxu0 0.0
  %2730 = vmatpush1.msra.mxu0 0.0
  %2731 = vmatprep.subr.mxu0 0.0
  %2732 = vmatpush1.msra.mxu0 0.0
  %2733 = vmatprep.subr.mxu0 0.0
  %2734 = vmatpush1.msra.mxu0 0.0
  %2735 = vmatprep.subr.mxu0 0.0
  %2736 = vmatpush1.msra.mxu0 0.0
  %2737 = vmatprep.subr.mxu0 0.0
  %2738 = vmatpush1.msra.mxu0 0.0
  %2739 = vmatprep.subr.mxu0 0.0
  %2740 = vmatpush1.msra.mxu0 0.0
  %2741 = vmatprep.subr.mxu0 0.0
  %2742 = vmatpush1.msra.mxu0 0.0
  %2743 = vmatprep.subr.mxu0 0.0
  %2744 = vmatpush1.msra.mxu0 0.0
  %2745 = vmatprep.subr.mxu0 0.0
  %2746 = vmatpush1.msra.mxu0 0.0
  %2747 = vmatprep.subr.mxu0 0.0
  %2748 = vmatpush1.msra.mxu0 0.0
  %2749 = vmatprep.subr.mxu0 0.0
  %2750 = vmatpush1.msra.mxu0 0.0
  %2751 = vmatprep.subr.mxu0 0.0
  %2752 = vmatpush1.msra.mxu0 0.0
  %2753 = vmatprep.subr.mxu0 0.0
  %2754 = vmatpush1.msra.mxu0 %v286
  %2755 = vmatprep.subr.mxu0 0.0
  %2756 = vmatpush2.msra.mxu0 0.0
  %2757 = vmatprep.subr.mxu0 0.0
  %2758 = vmatpush2.msra.mxu0 0.0
  %2759 = vmatprep.subr.mxu0 0.0
  %2760 = vmatpush2.msra.mxu0 0.0
  %2761 = vmatprep.subr.mxu0 0.0
  %2762 = vmatpush2.msra.mxu0 0.0
  %2763 = vmatprep.subr.mxu0 0.0
  %2764 = vmatpush2.msra.mxu0 0.0
  %2765 = vmatprep.subr.mxu0 0.0
  %2766 = vmatpush2.msra.mxu0 0.0
  %2767 = vmatprep.subr.mxu0 0.0
  %2768 = vmatpush2.msra.mxu0 0.0
  %2769 = vmatprep.subr.mxu0 0.0
  %2770 = vmatpush2.msra.mxu0 0.0
  %2771 = vmatprep.subr.mxu0 0.0
  %2772 = vmatpush2.msra.mxu0 0.0
  %2773 = vmatprep.subr.mxu0 0.0
  %2774 = vmatpush2.msra.mxu0 0.0
  %2775 = vmatprep.subr.mxu0 0.0
  %2776 = vmatpush2.msra.mxu0 0.0
  %2777 = vmatprep.subr.mxu0 0.0
  %2778 = vmatpush2.msra.mxu0 0.0
  %2779 = vmatprep.subr.mxu0 0.0
  %2780 = vmatpush2.msra.mxu0 0.0
  %2781 = vmatprep.subr.mxu0 0.0
  %2782 = vmatpush2.msra.mxu0 0.0
  %2783 = vmatprep.subr.mxu0 0.0
  %2784 = vmatpush2.msra.mxu0 0.0
  %2785 = vmatprep.subr.mxu0 0.0
  %2786 = vmatpush2.msra.mxu0 0.0
  %2787 = vmatprep.mubr.f32.mxu0 0.0
  %2788 = vmatmul.mubr.f32.gmra.mxu0 %v2721
  %v2789 = vpop.f32.mrf.mxu0
  %v2790 = vadd.f32 0.0, %v2789
  %v2791 = vpop.f32.mrf.mxu0
  %2792 = vdwg.mxu0
  %v2794 = vsel %vm682, %v1641, 0
  %2796 = vmatprep.subr.mxu0 0.0
  %2797 = vmatpush1.msra.mxu0 0.0
  %2798 = vmatprep.subr.mxu0 0.0
  %2799 = vmatpush1.msra.mxu0 0.0
  %2800 = vmatprep.subr.mxu0 0.0
  %2801 = vmatpush1.msra.mxu0 0.0
  %2802 = vmatprep.subr.mxu0 0.0
  %2803 = vmatpush1.msra.mxu0 0.0
  %2804 = vmatprep.subr.mxu0 0.0
  %2805 = vmatpush1.msra.mxu0 0.0
  %2806 = vmatprep.subr.mxu0 0.0
  %2807 = vmatpush1.msra.mxu0 0.0
  %2808 = vmatprep.subr.mxu0 0.0
  %2809 = vmatpush1.msra.mxu0 0.0
  %2810 = vmatprep.subr.mxu0 0.0
  %2811 = vmatpush1.msra.mxu0 0.0
  %2812 = vmatprep.subr.mxu0 0.0
  %2813 = vmatpush1.msra.mxu0 0.0
  %2814 = vmatprep.subr.mxu0 0.0
  %2815 = vmatpush1.msra.mxu0 0.0
  %2816 = vmatprep.subr.mxu0 0.0
  %2817 = vmatpush1.msra.mxu0 0.0
  %2818 = vmatprep.subr.mxu0 0.0
  %2819 = vmatpush1.msra.mxu0 0.0
  %2820 = vmatprep.subr.mxu0 0.0
  %2821 = vmatpush1.msra.mxu0 0.0
  %2822 = vmatprep.subr.mxu0 0.0
  %2823 = vmatpush1.msra.mxu0 0.0
  %2824 = vmatprep.subr.mxu0 0.0
  %2825 = vmatpush1.msra.mxu0 0.0
  %2826 = vmatprep.subr.mxu0 0.0
  %2827 = vmatpush1.msra.mxu0 %v291
  %2828 = vmatprep.subr.mxu0 0.0
  %2829 = vmatpush2.msra.mxu0 0.0
  %2830 = vmatprep.subr.mxu0 0.0
  %2831 = vmatpush2.msra.mxu0 0.0
  %2832 = vmatprep.subr.mxu0 0.0
  %2833 = vmatpush2.msra.mxu0 0.0
  %2834 = vmatprep.subr.mxu0 0.0
  %2835 = vmatpush2.msra.mxu0 0.0
  %2836 = vmatprep.subr.mxu0 0.0
  %2837 = vmatpush2.msra.mxu0 0.0
  %2838 = vmatprep.subr.mxu0 0.0
  %2839 = vmatpush2.msra.mxu0 0.0
  %2840 = vmatprep.subr.mxu0 0.0
  %2841 = vmatpush2.msra.mxu0 0.0
  %2842 = vmatprep.subr.mxu0 0.0
  %2843 = vmatpush2.msra.mxu0 0.0
  %2844 = vmatprep.subr.mxu0 0.0
  %2845 = vmatpush2.msra.mxu0 0.0
  %2846 = vmatprep.subr.mxu0 0.0
  %2847 = vmatpush2.msra.mxu0 0.0
  %2848 = vmatprep.subr.mxu0 0.0
  %2849 = vmatpush2.msra.mxu0 0.0
  %2850 = vmatprep.subr.mxu0 0.0
  %2851 = vmatpush2.msra.mxu0 0.0
  %2852 = vmatprep.subr.mxu0 0.0
  %2853 = vmatpush2.msra.mxu0 0.0
  %2854 = vmatprep.subr.mxu0 0.0
  %2855 = vmatpush2.msra.mxu0 0.0
  %2856 = vmatprep.subr.mxu0 0.0
  %2857 = vmatpush2.msra.mxu0 0.0
  %2858 = vmatprep.subr.mxu0 0.0
  %2859 = vmatpush2.msra.mxu0 0.0
  %2860 = vmatprep.mubr.f32.mxu0 0.0
  %2861 = vmatmul.mubr.f32.gmra.mxu0 %v2794
  %v2862 = vpop.f32.mrf.mxu0
  %v2863 = vadd.f32 0.0, %v2862
  %v2864 = vpop.f32.mrf.mxu0
  %2865 = vdwg.mxu0
  %v2867 = vsel %vm682, %v1642, 0
  %2869 = vmatprep.subr.mxu0 0.0
  %2870 = vmatpush1.msra.mxu0 0.0
  %2871 = vmatprep.subr.mxu0 0.0
  %2872 = vmatpush1.msra.mxu0 0.0
  %2873 = vmatprep.subr.mxu0 0.0
  %2874 = vmatpush1.msra.mxu0 0.0
  %2875 = vmatprep.subr.mxu0 0.0
  %2876 = vmatpush1.msra.mxu0 0.0
  %2877 = vmatprep.subr.mxu0 0.0
  %2878 = vmatpush1.msra.mxu0 0.0
  %2879 = vmatprep.subr.mxu0 0.0
  %2880 = vmatpush1.msra.mxu0 0.0
  %2881 = vmatprep.subr.mxu0 0.0
  %2882 = vmatpush1.msra.mxu0 0.0
  %2883 = vmatprep.subr.mxu0 0.0
  %2884 = vmatpush1.msra.mxu0 0.0
  %2885 = vmatprep.subr.mxu0 0.0
  %2886 = vmatpush1.msra.mxu0 0.0
  %2887 = vmatprep.subr.mxu0 0.0
  %2888 = vmatpush1.msra.mxu0 0.0
  %2889 = vmatprep.subr.mxu0 0.0
  %2890 = vmatpush1.msra.mxu0 0.0
  %2891 = vmatprep.subr.mxu0 0.0
  %2892 = vmatpush1.msra.mxu0 0.0
  %2893 = vmatprep.subr.mxu0 0.0
  %2894 = vmatpush1.msra.mxu0 0.0
  %2895 = vmatprep.subr.mxu0 0.0
  %2896 = vmatpush1.msra.mxu0 0.0
  %2897 = vmatprep.subr.mxu0 0.0
  %2898 = vmatpush1.msra.mxu0 0.0
  %2899 = vmatprep.subr.mxu0 0.0
  %2900 = vmatpush1.msra.mxu0 %v296
  %2901 = vmatprep.subr.mxu0 0.0
  %2902 = vmatpush2.msra.mxu0 0.0
  %2903 = vmatprep.subr.mxu0 0.0
  %2904 = vmatpush2.msra.mxu0 0.0
  %2905 = vmatprep.subr.mxu0 0.0
  %2906 = vmatpush2.msra.mxu0 0.0
  %2907 = vmatprep.subr.mxu0 0.0
  %2908 = vmatpush2.msra.mxu0 0.0
  %2909 = vmatprep.subr.mxu0 0.0
  %2910 = vmatpush2.msra.mxu0 0.0
  %2911 = vmatprep.subr.mxu0 0.0
  %2912 = vmatpush2.msra.mxu0 0.0
  %2913 = vmatprep.subr.mxu0 0.0
  %2914 = vmatpush2.msra.mxu0 0.0
  %2915 = vmatprep.subr.mxu0 0.0
  %2916 = vmatpush2.msra.mxu0 0.0
  %2917 = vmatprep.subr.mxu0 0.0
  %2918 = vmatpush2.msra.mxu0 0.0
  %2919 = vmatprep.subr.mxu0 0.0
  %2920 = vmatpush2.msra.mxu0 0.0
  %2921 = vmatprep.subr.mxu0 0.0
  %2922 = vmatpush2.msra.mxu0 0.0
  %2923 = vmatprep.subr.mxu0 0.0
  %2924 = vmatpush2.msra.mxu0 0.0
  %2925 = vmatprep.subr.mxu0 0.0
  %2926 = vmatpush2.msra.mxu0 0.0
  %2927 = vmatprep.subr.mxu0 0.0
  %2928 = vmatpush2.msra.mxu0 0.0
  %2929 = vmatprep.subr.mxu0 0.0
  %2930 = vmatpush2.msra.mxu0 0.0
  %2931 = vmatprep.subr.mxu0 0.0
  %2932 = vmatpush2.msra.mxu0 0.0
  %2933 = vmatprep.mubr.f32.mxu0 0.0
  %2934 = vmatmul.mubr.f32.gmra.mxu0 %v2867
  %v2935 = vpop.f32.mrf.mxu0
  %v2936 = vadd.f32 0.0, %v2935
  %v2937 = vpop.f32.mrf.mxu0
  %2938 = vdwg.mxu0
  %v2940 = vsel %vm682, %v1643, 0
  %2942 = vmatprep.subr.mxu0 0.0
  %2943 = vmatpush1.msra.mxu0 0.0
  %2944 = vmatprep.subr.mxu0 0.0
  %2945 = vmatpush1.msra.mxu0 0.0
  %2946 = vmatprep.subr.mxu0 0.0
  %2947 = vmatpush1.msra.mxu0 0.0
  %2948 = vmatprep.subr.mxu0 0.0
  %2949 = vmatpush1.msra.mxu0 0.0
  %2950 = vmatprep.subr.mxu0 0.0
  %2951 = vmatpush1.msra.mxu0 0.0
  %2952 = vmatprep.subr.mxu0 0.0
  %2953 = vmatpush1.msra.mxu0 0.0
  %2954 = vmatprep.subr.mxu0 0.0
  %2955 = vmatpush1.msra.mxu0 0.0
  %2956 = vmatprep.subr.mxu0 0.0
  %2957 = vmatpush1.msra.mxu0 0.0
  %2958 = vmatprep.subr.mxu0 0.0
  %2959 = vmatpush1.msra.mxu0 0.0
  %2960 = vmatprep.subr.mxu0 0.0
  %2961 = vmatpush1.msra.mxu0 0.0
  %2962 = vmatprep.subr.mxu0 0.0
  %2963 = vmatpush1.msra.mxu0 0.0
  %2964 = vmatprep.subr.mxu0 0.0
  %2965 = vmatpush1.msra.mxu0 0.0
  %2966 = vmatprep.subr.mxu0 0.0
  %2967 = vmatpush1.msra.mxu0 0.0
  %2968 = vmatprep.subr.mxu0 0.0
  %2969 = vmatpush1.msra.mxu0 0.0
  %2970 = vmatprep.subr.mxu0 0.0
  %2971 = vmatpush1.msra.mxu0 0.0
  %2972 = vmatprep.subr.mxu0 0.0
  %2973 = vmatpush1.msra.mxu0 %v301
  %2974 = vmatprep.subr.mxu0 0.0
  %2975 = vmatpush2.msra.mxu0 0.0
  %2976 = vmatprep.subr.mxu0 0.0
  %2977 = vmatpush2.msra.mxu0 0.0
  %2978 = vmatprep.subr.mxu0 0.0
  %2979 = vmatpush2.msra.mxu0 0.0
  %2980 = vmatprep.subr.mxu0 0.0
  %2981 = vmatpush2.msra.mxu0 0.0
  %2982 = vmatprep.subr.mxu0 0.0
  %2983 = vmatpush2.msra.mxu0 0.0
  %2984 = vmatprep.subr.mxu0 0.0
  %2985 = vmatpush2.msra.mxu0 0.0
  %2986 = vmatprep.subr.mxu0 0.0
  %2987 = vmatpush2.msra.mxu0 0.0
  %2988 = vmatprep.subr.mxu0 0.0
  %2989 = vmatpush2.msra.mxu0 0.0
  %2990 = vmatprep.subr.mxu0 0.0
  %2991 = vmatpush2.msra.mxu0 0.0
  %2992 = vmatprep.subr.mxu0 0.0
  %2993 = vmatpush2.msra.mxu0 0.0
  %2994 = vmatprep.subr.mxu0 0.0
  %2995 = vmatpush2.msra.mxu0 0.0
  %2996 = vmatprep.subr.mxu0 0.0
  %2997 = vmatpush2.msra.mxu0 0.0
  %2998 = vmatprep.subr.mxu0 0.0
  %2999 = vmatpush2.msra.mxu0 0.0
  %3000 = vmatprep.subr.mxu0 0.0
  %3001 = vmatpush2.msra.mxu0 0.0
  %3002 = vmatprep.subr.mxu0 0.0
  %3003 = vmatpush2.msra.mxu0 0.0
  %3004 = vmatprep.subr.mxu0 0.0
  %3005 = vmatpush2.msra.mxu0 0.0
  %3006 = vmatprep.mubr.f32.mxu0 0.0
  %3007 = vmatmul.mubr.f32.gmra.mxu0 %v2940
  %v3008 = vpop.f32.mrf.mxu0
  %v3009 = vadd.f32 0.0, %v3008
  %v3010 = vpop.f32.mrf.mxu0
  %3011 = vdwg.mxu0
  %v3013 = vsel %vm682, %v1644, 0
  %3015 = vmatprep.subr.mxu0 0.0
  %3016 = vmatpush1.msra.mxu0 0.0
  %3017 = vmatprep.subr.mxu0 0.0
  %3018 = vmatpush1.msra.mxu0 0.0
  %3019 = vmatprep.subr.mxu0 0.0
  %3020 = vmatpush1.msra.mxu0 0.0
  %3021 = vmatprep.subr.mxu0 0.0
  %3022 = vmatpush1.msra.mxu0 0.0
  %3023 = vmatprep.subr.mxu0 0.0
  %3024 = vmatpush1.msra.mxu0 0.0
  %3025 = vmatprep.subr.mxu0 0.0
  %3026 = vmatpush1.msra.mxu0 0.0
  %3027 = vmatprep.subr.mxu0 0.0
  %3028 = vmatpush1.msra.mxu0 0.0
  %3029 = vmatprep.subr.mxu0 0.0
  %3030 = vmatpush1.msra.mxu0 0.0
  %3031 = vmatprep.subr.mxu0 0.0
  %3032 = vmatpush1.msra.mxu0 0.0
  %3033 = vmatprep.subr.mxu0 0.0
  %3034 = vmatpush1.msra.mxu0 0.0
  %3035 = vmatprep.subr.mxu0 0.0
  %3036 = vmatpush1.msra.mxu0 0.0
  %3037 = vmatprep.subr.mxu0 0.0
  %3038 = vmatpush1.msra.mxu0 0.0
  %3039 = vmatprep.subr.mxu0 0.0
  %3040 = vmatpush1.msra.mxu0 0.0
  %3041 = vmatprep.subr.mxu0 0.0
  %3042 = vmatpush1.msra.mxu0 0.0
  %3043 = vmatprep.subr.mxu0 0.0
  %3044 = vmatpush1.msra.mxu0 0.0
  %3045 = vmatprep.subr.mxu0 0.0
  %3046 = vmatpush1.msra.mxu0 %v306
  %3047 = vmatprep.subr.mxu0 0.0
  %3048 = vmatpush2.msra.mxu0 0.0
  %3049 = vmatprep.subr.mxu0 0.0
  %3050 = vmatpush2.msra.mxu0 0.0
  %3051 = vmatprep.subr.mxu0 0.0
  %3052 = vmatpush2.msra.mxu0 0.0
  %3053 = vmatprep.subr.mxu0 0.0
  %3054 = vmatpush2.msra.mxu0 0.0
  %3055 = vmatprep.subr.mxu0 0.0
  %3056 = vmatpush2.msra.mxu0 0.0
  %3057 = vmatprep.subr.mxu0 0.0
  %3058 = vmatpush2.msra.mxu0 0.0
  %3059 = vmatprep.subr.mxu0 0.0
  %3060 = vmatpush2.msra.mxu0 0.0
  %3061 = vmatprep.subr.mxu0 0.0
  %3062 = vmatpush2.msra.mxu0 0.0
  %3063 = vmatprep.subr.mxu0 0.0
  %3064 = vmatpush2.msra.mxu0 0.0
  %3065 = vmatprep.subr.mxu0 0.0
  %3066 = vmatpush2.msra.mxu0 0.0
  %3067 = vmatprep.subr.mxu0 0.0
  %3068 = vmatpush2.msra.mxu0 0.0
  %3069 = vmatprep.subr.mxu0 0.0
  %3070 = vmatpush2.msra.mxu0 0.0
  %3071 = vmatprep.subr.mxu0 0.0
  %3072 = vmatpush2.msra.mxu0 0.0
  %3073 = vmatprep.subr.mxu0 0.0
  %3074 = vmatpush2.msra.mxu0 0.0
  %3075 = vmatprep.subr.mxu0 0.0
  %3076 = vmatpush2.msra.mxu0 0.0
  %3077 = vmatprep.subr.mxu0 0.0
  %3078 = vmatpush2.msra.mxu0 0.0
  %3079 = vmatprep.mubr.f32.mxu0 0.0
  %3080 = vmatmul.mubr.f32.gmra.mxu0 %v3013
  %v3081 = vpop.f32.mrf.mxu0
  %v3082 = vadd.f32 0.0, %v3081
  %v3083 = vpop.f32.mrf.mxu0
  %3084 = vdwg.mxu0
  %v3086 = vsel %vm682, %v1773, 0
  %3088 = vmatprep.subr.mxu0 0.0
  %3089 = vmatpush1.msra.mxu0 0.0
  %3090 = vmatprep.subr.mxu0 0.0
  %3091 = vmatpush1.msra.mxu0 0.0
  %3092 = vmatprep.subr.mxu0 0.0
  %3093 = vmatpush1.msra.mxu0 0.0
  %3094 = vmatprep.subr.mxu0 0.0
  %3095 = vmatpush1.msra.mxu0 0.0
  %3096 = vmatprep.subr.mxu0 0.0
  %3097 = vmatpush1.msra.mxu0 0.0
  %3098 = vmatprep.subr.mxu0 0.0
  %3099 = vmatpush1.msra.mxu0 0.0
  %3100 = vmatprep.subr.mxu0 0.0
  %3101 = vmatpush1.msra.mxu0 0.0
  %3102 = vmatprep.subr.mxu0 0.0
  %3103 = vmatpush1.msra.mxu0 0.0
  %3104 = vmatprep.subr.mxu0 0.0
  %3105 = vmatpush1.msra.mxu0 0.0
  %3106 = vmatprep.subr.mxu0 0.0
  %3107 = vmatpush1.msra.mxu0 0.0
  %3108 = vmatprep.subr.mxu0 0.0
  %3109 = vmatpush1.msra.mxu0 0.0
  %3110 = vmatprep.subr.mxu0 0.0
  %3111 = vmatpush1.msra.mxu0 0.0
  %3112 = vmatprep.subr.mxu0 0.0
  %3113 = vmatpush1.msra.mxu0 0.0
  %3114 = vmatprep.subr.mxu0 0.0
  %3115 = vmatpush1.msra.mxu0 0.0
  %3116 = vmatprep.subr.mxu0 0.0
  %3117 = vmatpush1.msra.mxu0 0.0
  %3118 = vmatprep.subr.mxu0 0.0
  %3119 = vmatpush1.msra.mxu0 %v311
  %3120 = vmatprep.subr.mxu0 0.0
  %3121 = vmatpush2.msra.mxu0 0.0
  %3122 = vmatprep.subr.mxu0 0.0
  %3123 = vmatpush2.msra.mxu0 0.0
  %3124 = vmatprep.subr.mxu0 0.0
  %3125 = vmatpush2.msra.mxu0 0.0
  %3126 = vmatprep.subr.mxu0 0.0
  %3127 = vmatpush2.msra.mxu0 0.0
  %3128 = vmatprep.subr.mxu0 0.0
  %3129 = vmatpush2.msra.mxu0 0.0
  %3130 = vmatprep.subr.mxu0 0.0
  %3131 = vmatpush2.msra.mxu0 0.0
  %3132 = vmatprep.subr.mxu0 0.0
  %3133 = vmatpush2.msra.mxu0 0.0
  %3134 = vmatprep.subr.mxu0 0.0
  %3135 = vmatpush2.msra.mxu0 0.0
  %3136 = vmatprep.subr.mxu0 0.0
  %3137 = vmatpush2.msra.mxu0 0.0
  %3138 = vmatprep.subr.mxu0 0.0
  %3139 = vmatpush2.msra.mxu0 0.0
  %3140 = vmatprep.subr.mxu0 0.0
  %3141 = vmatpush2.msra.mxu0 0.0
  %3142 = vmatprep.subr.mxu0 0.0
  %3143 = vmatpush2.msra.mxu0 0.0
  %3144 = vmatprep.subr.mxu0 0.0
  %3145 = vmatpush2.msra.mxu0 0.0
  %3146 = vmatprep.subr.mxu0 0.0
  %3147 = vmatpush2.msra.mxu0 0.0
  %3148 = vmatprep.subr.mxu0 0.0
  %3149 = vmatpush2.msra.mxu0 0.0
  %3150 = vmatprep.subr.mxu0 0.0
  %3151 = vmatpush2.msra.mxu0 0.0
  %3152 = vmatprep.mubr.f32.mxu0 0.0
  %3153 = vmatmul.mubr.f32.gmra.mxu0 %v3086
  %v3154 = vpop.f32.mrf.mxu0
  %v3155 = vadd.f32 0.0, %v3154
  %v3156 = vpop.f32.mrf.mxu0
  %3157 = vdwg.mxu0
  %v3159 = vsel %vm682, %v1774, 0
  %3161 = vmatprep.subr.mxu0 0.0
  %3162 = vmatpush1.msra.mxu0 0.0
  %3163 = vmatprep.subr.mxu0 0.0
  %3164 = vmatpush1.msra.mxu0 0.0
  %3165 = vmatprep.subr.mxu0 0.0
  %3166 = vmatpush1.msra.mxu0 0.0
  %3167 = vmatprep.subr.mxu0 0.0
  %3168 = vmatpush1.msra.mxu0 0.0
  %3169 = vmatprep.subr.mxu0 0.0
  %3170 = vmatpush1.msra.mxu0 0.0
  %3171 = vmatprep.subr.mxu0 0.0
  %3172 = vmatpush1.msra.mxu0 0.0
  %3173 = vmatprep.subr.mxu0 0.0
  %3174 = vmatpush1.msra.mxu0 0.0
  %3175 = vmatprep.subr.mxu0 0.0
  %3176 = vmatpush1.msra.mxu0 0.0
  %3177 = vmatprep.subr.mxu0 0.0
  %3178 = vmatpush1.msra.mxu0 0.0
  %3179 = vmatprep.subr.mxu0 0.0
  %3180 = vmatpush1.msra.mxu0 0.0
  %3181 = vmatprep.subr.mxu0 0.0
  %3182 = vmatpush1.msra.mxu0 0.0
  %3183 = vmatprep.subr.mxu0 0.0
  %3184 = vmatpush1.msra.mxu0 0.0
  %3185 = vmatprep.subr.mxu0 0.0
  %3186 = vmatpush1.msra.mxu0 0.0
  %3187 = vmatprep.subr.mxu0 0.0
  %3188 = vmatpush1.msra.mxu0 0.0
  %3189 = vmatprep.subr.mxu0 0.0
  %3190 = vmatpush1.msra.mxu0 0.0
  %3191 = vmatprep.subr.mxu0 0.0
  %3192 = vmatpush1.msra.mxu0 %v316
  %3193 = vmatprep.subr.mxu0 0.0
  %3194 = vmatpush2.msra.mxu0 0.0
  %3195 = vmatprep.subr.mxu0 0.0
  %3196 = vmatpush2.msra.mxu0 0.0
  %3197 = vmatprep.subr.mxu0 0.0
  %3198 = vmatpush2.msra.mxu0 0.0
  %3199 = vmatprep.subr.mxu0 0.0
  %3200 = vmatpush2.msra.mxu0 0.0
  %3201 = vmatprep.subr.mxu0 0.0
  %3202 = vmatpush2.msra.mxu0 0.0
  %3203 = vmatprep.subr.mxu0 0.0
  %3204 = vmatpush2.msra.mxu0 0.0
  %3205 = vmatprep.subr.mxu0 0.0
  %3206 = vmatpush2.msra.mxu0 0.0
  %3207 = vmatprep.subr.mxu0 0.0
  %3208 = vmatpush2.msra.mxu0 0.0
  %3209 = vmatprep.subr.mxu0 0.0
  %3210 = vmatpush2.msra.mxu0 0.0
  %3211 = vmatprep.subr.mxu0 0.0
  %3212 = vmatpush2.msra.mxu0 0.0
  %3213 = vmatprep.subr.mxu0 0.0
  %3214 = vmatpush2.msra.mxu0 0.0
  %3215 = vmatprep.subr.mxu0 0.0
  %3216 = vmatpush2.msra.mxu0 0.0
  %3217 = vmatprep.subr.mxu0 0.0
  %3218 = vmatpush2.msra.mxu0 0.0
  %3219 = vmatprep.subr.mxu0 0.0
  %3220 = vmatpush2.msra.mxu0 0.0
  %3221 = vmatprep.subr.mxu0 0.0
  %3222 = vmatpush2.msra.mxu0 0.0
  %3223 = vmatprep.subr.mxu0 0.0
  %3224 = vmatpush2.msra.mxu0 0.0
  %3225 = vmatprep.mubr.f32.mxu0 0.0
  %3226 = vmatmul.mubr.f32.gmra.mxu0 %v3159
  %v3227 = vpop.f32.mrf.mxu0
  %v3228 = vadd.f32 0.0, %v3227
  %v3229 = vpop.f32.mrf.mxu0
  %3230 = vdwg.mxu0
  %v3232 = vsel %vm682, %v1775, 0
  %3234 = vmatprep.subr.mxu0 0.0
  %3235 = vmatpush1.msra.mxu0 0.0
  %3236 = vmatprep.subr.mxu0 0.0
  %3237 = vmatpush1.msra.mxu0 0.0
  %3238 = vmatprep.subr.mxu0 0.0
  %3239 = vmatpush1.msra.mxu0 0.0
  %3240 = vmatprep.subr.mxu0 0.0
  %3241 = vmatpush1.msra.mxu0 0.0
  %3242 = vmatprep.subr.mxu0 0.0
  %3243 = vmatpush1.msra.mxu0 0.0
  %3244 = vmatprep.subr.mxu0 0.0
  %3245 = vmatpush1.msra.mxu0 0.0
  %3246 = vmatprep.subr.mxu0 0.0
  %3247 = vmatpush1.msra.mxu0 0.0
  %3248 = vmatprep.subr.mxu0 0.0
  %3249 = vmatpush1.msra.mxu0 0.0
  %3250 = vmatprep.subr.mxu0 0.0
  %3251 = vmatpush1.msra.mxu0 0.0
  %3252 = vmatprep.subr.mxu0 0.0
  %3253 = vmatpush1.msra.mxu0 0.0
  %3254 = vmatprep.subr.mxu0 0.0
  %3255 = vmatpush1.msra.mxu0 0.0
  %3256 = vmatprep.subr.mxu0 0.0
  %3257 = vmatpush1.msra.mxu0 0.0
  %3258 = vmatprep.subr.mxu0 0.0
  %3259 = vmatpush1.msra.mxu0 0.0
  %3260 = vmatprep.subr.mxu0 0.0
  %3261 = vmatpush1.msra.mxu0 0.0
  %3262 = vmatprep.subr.mxu0 0.0
  %3263 = vmatpush1.msra.mxu0 0.0
  %3264 = vmatprep.subr.mxu0 0.0
  %3265 = vmatpush1.msra.mxu0 %v321
  %3266 = vmatprep.subr.mxu0 0.0
  %3267 = vmatpush2.msra.mxu0 0.0
  %3268 = vmatprep.subr.mxu0 0.0
  %3269 = vmatpush2.msra.mxu0 0.0
  %3270 = vmatprep.subr.mxu0 0.0
  %3271 = vmatpush2.msra.mxu0 0.0
  %3272 = vmatprep.subr.mxu0 0.0
  %3273 = vmatpush2.msra.mxu0 0.0
  %3274 = vmatprep.subr.mxu0 0.0
  %3275 = vmatpush2.msra.mxu0 0.0
  %3276 = vmatprep.subr.mxu0 0.0
  %3277 = vmatpush2.msra.mxu0 0.0
  %3278 = vmatprep.subr.mxu0 0.0
  %3279 = vmatpush2.msra.mxu0 0.0
  %3280 = vmatprep.subr.mxu0 0.0
  %3281 = vmatpush2.msra.mxu0 0.0
  %3282 = vmatprep.subr.mxu0 0.0
  %3283 = vmatpush2.msra.mxu0 0.0
  %3284 = vmatprep.subr.mxu0 0.0
  %3285 = vmatpush2.msra.mxu0 0.0
  %3286 = vmatprep.subr.mxu0 0.0
  %3287 = vmatpush2.msra.mxu0 0.0
  %3288 = vmatprep.subr.mxu0 0.0
  %3289 = vmatpush2.msra.mxu0 0.0
  %3290 = vmatprep.subr.mxu0 0.0
  %3291 = vmatpush2.msra.mxu0 0.0
  %3292 = vmatprep.subr.mxu0 0.0
  %3293 = vmatpush2.msra.mxu0 0.0
  %3294 = vmatprep.subr.mxu0 0.0
  %3295 = vmatpush2.msra.mxu0 0.0
  %3296 = vmatprep.subr.mxu0 0.0
  %3297 = vmatpush2.msra.mxu0 0.0
  %3298 = vmatprep.mubr.f32.mxu0 0.0
  %3299 = vmatmul.mubr.f32.gmra.mxu0 %v3232
  %v3300 = vpop.f32.mrf.mxu0
  %v3301 = vadd.f32 0.0, %v3300
  %v3302 = vpop.f32.mrf.mxu0
  %3303 = vdwg.mxu0
  %v3305 = vsel %vm682, %v1776, 0
  %3307 = vmatprep.subr.mxu0 0.0
  %3308 = vmatpush1.msra.mxu0 0.0
  %3309 = vmatprep.subr.mxu0 0.0
  %3310 = vmatpush1.msra.mxu0 0.0
  %3311 = vmatprep.subr.mxu0 0.0
  %3312 = vmatpush1.msra.mxu0 0.0
  %3313 = vmatprep.subr.mxu0 0.0
  %3314 = vmatpush1.msra.mxu0 0.0
  %3315 = vmatprep.subr.mxu0 0.0
  %3316 = vmatpush1.msra.mxu0 0.0
  %3317 = vmatprep.subr.mxu0 0.0
  %3318 = vmatpush1.msra.mxu0 0.0
  %3319 = vmatprep.subr.mxu0 0.0
  %3320 = vmatpush1.msra.mxu0 0.0
  %3321 = vmatprep.subr.mxu0 0.0
  %3322 = vmatpush1.msra.mxu0 0.0
  %3323 = vmatprep.subr.mxu0 0.0
  %3324 = vmatpush1.msra.mxu0 0.0
  %3325 = vmatprep.subr.mxu0 0.0
  %3326 = vmatpush1.msra.mxu0 0.0
  %3327 = vmatprep.subr.mxu0 0.0
  %3328 = vmatpush1.msra.mxu0 0.0
  %3329 = vmatprep.subr.mxu0 0.0
  %3330 = vmatpush1.msra.mxu0 0.0
  %3331 = vmatprep.subr.mxu0 0.0
  %3332 = vmatpush1.msra.mxu0 0.0
  %3333 = vmatprep.subr.mxu0 0.0
  %3334 = vmatpush1.msra.mxu0 0.0
  %3335 = vmatprep.subr.mxu0 0.0
  %3336 = vmatpush1.msra.mxu0 0.0
  %3337 = vmatprep.subr.mxu0 0.0
  %3338 = vmatpush1.msra.mxu0 %v326
  %3339 = vmatprep.subr.mxu0 0.0
  %3340 = vmatpush2.msra.mxu0 0.0
  %3341 = vmatprep.subr.mxu0 0.0
  %3342 = vmatpush2.msra.mxu0 0.0
  %3343 = vmatprep.subr.mxu0 0.0
  %3344 = vmatpush2.msra.mxu0 0.0
  %3345 = vmatprep.subr.mxu0 0.0
  %3346 = vmatpush2.msra.mxu0 0.0
  %3347 = vmatprep.subr.mxu0 0.0
  %3348 = vmatpush2.msra.mxu0 0.0
  %3349 = vmatprep.subr.mxu0 0.0
  %3350 = vmatpush2.msra.mxu0 0.0
  %3351 = vmatprep.subr.mxu0 0.0
  %3352 = vmatpush2.msra.mxu0 0.0
  %3353 = vmatprep.subr.mxu0 0.0
  %3354 = vmatpush2.msra.mxu0 0.0
  %3355 = vmatprep.subr.mxu0 0.0
  %3356 = vmatpush2.msra.mxu0 0.0
  %3357 = vmatprep.subr.mxu0 0.0
  %3358 = vmatpush2.msra.mxu0 0.0
  %3359 = vmatprep.subr.mxu0 0.0
  %3360 = vmatpush2.msra.mxu0 0.0
  %3361 = vmatprep.subr.mxu0 0.0
  %3362 = vmatpush2.msra.mxu0 0.0
  %3363 = vmatprep.subr.mxu0 0.0
  %3364 = vmatpush2.msra.mxu0 0.0
  %3365 = vmatprep.subr.mxu0 0.0
  %3366 = vmatpush2.msra.mxu0 0.0
  %3367 = vmatprep.subr.mxu0 0.0
  %3368 = vmatpush2.msra.mxu0 0.0
  %3369 = vmatprep.subr.mxu0 0.0
  %3370 = vmatpush2.msra.mxu0 0.0
  %3371 = vmatprep.mubr.f32.mxu0 0.0
  %3372 = vmatmul.mubr.f32.gmra.mxu0 %v3305
  %v3373 = vpop.f32.mrf.mxu0
  %v3374 = vadd.f32 0.0, %v3373
  %v3375 = vpop.f32.mrf.mxu0
  %3376 = vdwg.mxu0
  %v3378 = vsel %vm682, %v1777, 0
  %3380 = vmatprep.subr.mxu0 0.0
  %3381 = vmatpush1.msra.mxu0 0.0
  %3382 = vmatprep.subr.mxu0 0.0
  %3383 = vmatpush1.msra.mxu0 0.0
  %3384 = vmatprep.subr.mxu0 0.0
  %3385 = vmatpush1.msra.mxu0 0.0
  %3386 = vmatprep.subr.mxu0 0.0
  %3387 = vmatpush1.msra.mxu0 0.0
  %3388 = vmatprep.subr.mxu0 0.0
  %3389 = vmatpush1.msra.mxu0 0.0
  %3390 = vmatprep.subr.mxu0 0.0
  %3391 = vmatpush1.msra.mxu0 0.0
  %3392 = vmatprep.subr.mxu0 0.0
  %3393 = vmatpush1.msra.mxu0 0.0
  %3394 = vmatprep.subr.mxu0 0.0
  %3395 = vmatpush1.msra.mxu0 0.0
  %3396 = vmatprep.subr.mxu0 0.0
  %3397 = vmatpush1.msra.mxu0 0.0
  %3398 = vmatprep.subr.mxu0 0.0
  %3399 = vmatpush1.msra.mxu0 0.0
  %3400 = vmatprep.subr.mxu0 0.0
  %3401 = vmatpush1.msra.mxu0 0.0
  %3402 = vmatprep.subr.mxu0 0.0
  %3403 = vmatpush1.msra.mxu0 0.0
  %3404 = vmatprep.subr.mxu0 0.0
  %3405 = vmatpush1.msra.mxu0 0.0
  %3406 = vmatprep.subr.mxu0 0.0
  %3407 = vmatpush1.msra.mxu0 0.0
  %3408 = vmatprep.subr.mxu0 0.0
  %3409 = vmatpush1.msra.mxu0 0.0
  %3410 = vmatprep.subr.mxu0 0.0
  %3411 = vmatpush1.msra.mxu0 %v331
  %3412 = vmatprep.subr.mxu0 0.0
  %3413 = vmatpush2.msra.mxu0 0.0
  %3414 = vmatprep.subr.mxu0 0.0
  %3415 = vmatpush2.msra.mxu0 0.0
  %3416 = vmatprep.subr.mxu0 0.0
  %3417 = vmatpush2.msra.mxu0 0.0
  %3418 = vmatprep.subr.mxu0 0.0
  %3419 = vmatpush2.msra.mxu0 0.0
  %3420 = vmatprep.subr.mxu0 0.0
  %3421 = vmatpush2.msra.mxu0 0.0
  %3422 = vmatprep.subr.mxu0 0.0
  %3423 = vmatpush2.msra.mxu0 0.0
  %3424 = vmatprep.subr.mxu0 0.0
  %3425 = vmatpush2.msra.mxu0 0.0
  %3426 = vmatprep.subr.mxu0 0.0
  %3427 = vmatpush2.msra.mxu0 0.0
  %3428 = vmatprep.subr.mxu0 0.0
  %3429 = vmatpush2.msra.mxu0 0.0
  %3430 = vmatprep.subr.mxu0 0.0
  %3431 = vmatpush2.msra.mxu0 0.0
  %3432 = vmatprep.subr.mxu0 0.0
  %3433 = vmatpush2.msra.mxu0 0.0
  %3434 = vmatprep.subr.mxu0 0.0
  %3435 = vmatpush2.msra.mxu0 0.0
  %3436 = vmatprep.subr.mxu0 0.0
  %3437 = vmatpush2.msra.mxu0 0.0
  %3438 = vmatprep.subr.mxu0 0.0
  %3439 = vmatpush2.msra.mxu0 0.0
  %3440 = vmatprep.subr.mxu0 0.0
  %3441 = vmatpush2.msra.mxu0 0.0
  %3442 = vmatprep.subr.mxu0 0.0
  %3443 = vmatpush2.msra.mxu0 0.0
  %3444 = vmatprep.mubr.f32.mxu0 0.0
  %3445 = vmatmul.mubr.f32.gmra.mxu0 %v3378
  %v3446 = vpop.f32.mrf.mxu0
  %v3447 = vadd.f32 0.0, %v3446
  %v3448 = vpop.f32.mrf.mxu0
  %3449 = vdwg.mxu0
  %v3451 = vsel %vm682, %v1778, 0
  %3453 = vmatprep.subr.mxu0 0.0
  %3454 = vmatpush1.msra.mxu0 0.0
  %3455 = vmatprep.subr.mxu0 0.0
  %3456 = vmatpush1.msra.mxu0 0.0
  %3457 = vmatprep.subr.mxu0 0.0
  %3458 = vmatpush1.msra.mxu0 0.0
  %3459 = vmatprep.subr.mxu0 0.0
  %3460 = vmatpush1.msra.mxu0 0.0
  %3461 = vmatprep.subr.mxu0 0.0
  %3462 = vmatpush1.msra.mxu0 0.0
  %3463 = vmatprep.subr.mxu0 0.0
  %3464 = vmatpush1.msra.mxu0 0.0
  %3465 = vmatprep.subr.mxu0 0.0
  %3466 = vmatpush1.msra.mxu0 0.0
  %3467 = vmatprep.subr.mxu0 0.0
  %3468 = vmatpush1.msra.mxu0 0.0
  %3469 = vmatprep.subr.mxu0 0.0
  %3470 = vmatpush1.msra.mxu0 0.0
  %3471 = vmatprep.subr.mxu0 0.0
  %3472 = vmatpush1.msra.mxu0 0.0
  %3473 = vmatprep.subr.mxu0 0.0
  %3474 = vmatpush1.msra.mxu0 0.0
  %3475 = vmatprep.subr.mxu0 0.0
  %3476 = vmatpush1.msra.mxu0 0.0
  %3477 = vmatprep.subr.mxu0 0.0
  %3478 = vmatpush1.msra.mxu0 0.0
  %3479 = vmatprep.subr.mxu0 0.0
  %3480 = vmatpush1.msra.mxu0 0.0
  %3481 = vmatprep.subr.mxu0 0.0
  %3482 = vmatpush1.msra.mxu0 0.0
  %3483 = vmatprep.subr.mxu0 0.0
  %3484 = vmatpush1.msra.mxu0 %v336
  %3485 = vmatprep.subr.mxu0 0.0
  %3486 = vmatpush2.msra.mxu0 0.0
  %3487 = vmatprep.subr.mxu0 0.0
  %3488 = vmatpush2.msra.mxu0 0.0
  %3489 = vmatprep.subr.mxu0 0.0
  %3490 = vmatpush2.msra.mxu0 0.0
  %3491 = vmatprep.subr.mxu0 0.0
  %3492 = vmatpush2.msra.mxu0 0.0
  %3493 = vmatprep.subr.mxu0 0.0
  %3494 = vmatpush2.msra.mxu0 0.0
  %3495 = vmatprep.subr.mxu0 0.0
  %3496 = vmatpush2.msra.mxu0 0.0
  %3497 = vmatprep.subr.mxu0 0.0
  %3498 = vmatpush2.msra.mxu0 0.0
  %3499 = vmatprep.subr.mxu0 0.0
  %3500 = vmatpush2.msra.mxu0 0.0
  %3501 = vmatprep.subr.mxu0 0.0
  %3502 = vmatpush2.msra.mxu0 0.0
  %3503 = vmatprep.subr.mxu0 0.0
  %3504 = vmatpush2.msra.mxu0 0.0
  %3505 = vmatprep.subr.mxu0 0.0
  %3506 = vmatpush2.msra.mxu0 0.0
  %3507 = vmatprep.subr.mxu0 0.0
  %3508 = vmatpush2.msra.mxu0 0.0
  %3509 = vmatprep.subr.mxu0 0.0
  %3510 = vmatpush2.msra.mxu0 0.0
  %3511 = vmatprep.subr.mxu0 0.0
  %3512 = vmatpush2.msra.mxu0 0.0
  %3513 = vmatprep.subr.mxu0 0.0
  %3514 = vmatpush2.msra.mxu0 0.0
  %3515 = vmatprep.subr.mxu0 0.0
  %3516 = vmatpush2.msra.mxu0 0.0
  %3517 = vmatprep.mubr.f32.mxu0 0.0
  %3518 = vmatmul.mubr.f32.gmra.mxu0 %v3451
  %v3519 = vpop.f32.mrf.mxu0
  %v3520 = vadd.f32 0.0, %v3519
  %v3521 = vpop.f32.mrf.mxu0
  %3522 = vdwg.mxu0
  %v3524 = vsel %vm682, %v1779, 0
  %3526 = vmatprep.subr.mxu0 0.0
  %3527 = vmatpush1.msra.mxu0 0.0
  %3528 = vmatprep.subr.mxu0 0.0
  %3529 = vmatpush1.msra.mxu0 0.0
  %3530 = vmatprep.subr.mxu0 0.0
  %3531 = vmatpush1.msra.mxu0 0.0
  %3532 = vmatprep.subr.mxu0 0.0
  %3533 = vmatpush1.msra.mxu0 0.0
  %3534 = vmatprep.subr.mxu0 0.0
  %3535 = vmatpush1.msra.mxu0 0.0
  %3536 = vmatprep.subr.mxu0 0.0
  %3537 = vmatpush1.msra.mxu0 0.0
  %3538 = vmatprep.subr.mxu0 0.0
  %3539 = vmatpush1.msra.mxu0 0.0
  %3540 = vmatprep.subr.mxu0 0.0
  %3541 = vmatpush1.msra.mxu0 0.0
  %3542 = vmatprep.subr.mxu0 0.0
  %3543 = vmatpush1.msra.mxu0 0.0
  %3544 = vmatprep.subr.mxu0 0.0
  %3545 = vmatpush1.msra.mxu0 0.0
  %3546 = vmatprep.subr.mxu0 0.0
  %3547 = vmatpush1.msra.mxu0 0.0
  %3548 = vmatprep.subr.mxu0 0.0
  %3549 = vmatpush1.msra.mxu0 0.0
  %3550 = vmatprep.subr.mxu0 0.0
  %3551 = vmatpush1.msra.mxu0 0.0
  %3552 = vmatprep.subr.mxu0 0.0
  %3553 = vmatpush1.msra.mxu0 0.0
  %3554 = vmatprep.subr.mxu0 0.0
  %3555 = vmatpush1.msra.mxu0 0.0
  %3556 = vmatprep.subr.mxu0 0.0
  %3557 = vmatpush1.msra.mxu0 %v341
  %3558 = vmatprep.subr.mxu0 0.0
  %3559 = vmatpush2.msra.mxu0 0.0
  %3560 = vmatprep.subr.mxu0 0.0
  %3561 = vmatpush2.msra.mxu0 0.0
  %3562 = vmatprep.subr.mxu0 0.0
  %3563 = vmatpush2.msra.mxu0 0.0
  %3564 = vmatprep.subr.mxu0 0.0
  %3565 = vmatpush2.msra.mxu0 0.0
  %3566 = vmatprep.subr.mxu0 0.0
  %3567 = vmatpush2.msra.mxu0 0.0
  %3568 = vmatprep.subr.mxu0 0.0
  %3569 = vmatpush2.msra.mxu0 0.0
  %3570 = vmatprep.subr.mxu0 0.0
  %3571 = vmatpush2.msra.mxu0 0.0
  %3572 = vmatprep.subr.mxu0 0.0
  %3573 = vmatpush2.msra.mxu0 0.0
  %3574 = vmatprep.subr.mxu0 0.0
  %3575 = vmatpush2.msra.mxu0 0.0
  %3576 = vmatprep.subr.mxu0 0.0
  %3577 = vmatpush2.msra.mxu0 0.0
  %3578 = vmatprep.subr.mxu0 0.0
  %3579 = vmatpush2.msra.mxu0 0.0
  %3580 = vmatprep.subr.mxu0 0.0
  %3581 = vmatpush2.msra.mxu0 0.0
  %3582 = vmatprep.subr.mxu0 0.0
  %3583 = vmatpush2.msra.mxu0 0.0
  %3584 = vmatprep.subr.mxu0 0.0
  %3585 = vmatpush2.msra.mxu0 0.0
  %3586 = vmatprep.subr.mxu0 0.0
  %3587 = vmatpush2.msra.mxu0 0.0
  %3588 = vmatprep.subr.mxu0 0.0
  %3589 = vmatpush2.msra.mxu0 0.0
  %3590 = vmatprep.mubr.f32.mxu0 0.0
  %3591 = vmatmul.mubr.f32.gmra.mxu0 %v3524
  %v3592 = vpop.f32.mrf.mxu0
  %v3593 = vadd.f32 0.0, %v3592
  %v3594 = vpop.f32.mrf.mxu0
  %3595 = vdwg.mxu0
  %v3597 = vsel %vm682, %v1780, 0
  %3599 = vmatprep.subr.mxu0 0.0
  %3600 = vmatpush1.msra.mxu0 0.0
  %3601 = vmatprep.subr.mxu0 0.0
  %3602 = vmatpush1.msra.mxu0 0.0
  %3603 = vmatprep.subr.mxu0 0.0
  %3604 = vmatpush1.msra.mxu0 0.0
  %3605 = vmatprep.subr.mxu0 0.0
  %3606 = vmatpush1.msra.mxu0 0.0
  %3607 = vmatprep.subr.mxu0 0.0
  %3608 = vmatpush1.msra.mxu0 0.0
  %3609 = vmatprep.subr.mxu0 0.0
  %3610 = vmatpush1.msra.mxu0 0.0
  %3611 = vmatprep.subr.mxu0 0.0
  %3612 = vmatpush1.msra.mxu0 0.0
  %3613 = vmatprep.subr.mxu0 0.0
  %3614 = vmatpush1.msra.mxu0 0.0
  %3615 = vmatprep.subr.mxu0 0.0
  %3616 = vmatpush1.msra.mxu0 0.0
  %3617 = vmatprep.subr.mxu0 0.0
  %3618 = vmatpush1.msra.mxu0 0.0
  %3619 = vmatprep.subr.mxu0 0.0
  %3620 = vmatpush1.msra.mxu0 0.0
  %3621 = vmatprep.subr.mxu0 0.0
  %3622 = vmatpush1.msra.mxu0 0.0
  %3623 = vmatprep.subr.mxu0 0.0
  %3624 = vmatpush1.msra.mxu0 0.0
  %3625 = vmatprep.subr.mxu0 0.0
  %3626 = vmatpush1.msra.mxu0 0.0
  %3627 = vmatprep.subr.mxu0 0.0
  %3628 = vmatpush1.msra.mxu0 0.0
  %3629 = vmatprep.subr.mxu0 0.0
  %3630 = vmatpush1.msra.mxu0 %v346
  %3631 = vmatprep.subr.mxu0 0.0
  %3632 = vmatpush2.msra.mxu0 0.0
  %3633 = vmatprep.subr.mxu0 0.0
  %3634 = vmatpush2.msra.mxu0 0.0
  %3635 = vmatprep.subr.mxu0 0.0
  %3636 = vmatpush2.msra.mxu0 0.0
  %3637 = vmatprep.subr.mxu0 0.0
  %3638 = vmatpush2.msra.mxu0 0.0
  %3639 = vmatprep.subr.mxu0 0.0
  %3640 = vmatpush2.msra.mxu0 0.0
  %3641 = vmatprep.subr.mxu0 0.0
  %3642 = vmatpush2.msra.mxu0 0.0
  %3643 = vmatprep.subr.mxu0 0.0
  %3644 = vmatpush2.msra.mxu0 0.0
  %3645 = vmatprep.subr.mxu0 0.0
  %3646 = vmatpush2.msra.mxu0 0.0
  %3647 = vmatprep.subr.mxu0 0.0
  %3648 = vmatpush2.msra.mxu0 0.0
  %3649 = vmatprep.subr.mxu0 0.0
  %3650 = vmatpush2.msra.mxu0 0.0
  %3651 = vmatprep.subr.mxu0 0.0
  %3652 = vmatpush2.msra.mxu0 0.0
  %3653 = vmatprep.subr.mxu0 0.0
  %3654 = vmatpush2.msra.mxu0 0.0
  %3655 = vmatprep.subr.mxu0 0.0
  %3656 = vmatpush2.msra.mxu0 0.0
  %3657 = vmatprep.subr.mxu0 0.0
  %3658 = vmatpush2.msra.mxu0 0.0
  %3659 = vmatprep.subr.mxu0 0.0
  %3660 = vmatpush2.msra.mxu0 0.0
  %3661 = vmatprep.subr.mxu0 0.0
  %3662 = vmatpush2.msra.mxu0 0.0
  %3663 = vmatprep.mubr.f32.mxu0 0.0
  %3664 = vmatmul.mubr.f32.gmra.mxu0 %v3597
  %v3665 = vpop.f32.mrf.mxu0
  %v3666 = vadd.f32 0.0, %v3665
  %v3667 = vpop.f32.mrf.mxu0
  %3668 = vdwg.mxu0
  %v3670 = vsel %vm682, %v1909, 0
  %3672 = vmatprep.subr.mxu0 0.0
  %3673 = vmatpush1.msra.mxu0 0.0
  %3674 = vmatprep.subr.mxu0 0.0
  %3675 = vmatpush1.msra.mxu0 0.0
  %3676 = vmatprep.subr.mxu0 0.0
  %3677 = vmatpush1.msra.mxu0 0.0
  %3678 = vmatprep.subr.mxu0 0.0
  %3679 = vmatpush1.msra.mxu0 0.0
  %3680 = vmatprep.subr.mxu0 0.0
  %3681 = vmatpush1.msra.mxu0 0.0
  %3682 = vmatprep.subr.mxu0 0.0
  %3683 = vmatpush1.msra.mxu0 0.0
  %3684 = vmatprep.subr.mxu0 0.0
  %3685 = vmatpush1.msra.mxu0 0.0
  %3686 = vmatprep.subr.mxu0 0.0
  %3687 = vmatpush1.msra.mxu0 0.0
  %3688 = vmatprep.subr.mxu0 0.0
  %3689 = vmatpush1.msra.mxu0 0.0
  %3690 = vmatprep.subr.mxu0 0.0
  %3691 = vmatpush1.msra.mxu0 0.0
  %3692 = vmatprep.subr.mxu0 0.0
  %3693 = vmatpush1.msra.mxu0 0.0
  %3694 = vmatprep.subr.mxu0 0.0
  %3695 = vmatpush1.msra.mxu0 0.0
  %3696 = vmatprep.subr.mxu0 0.0
  %3697 = vmatpush1.msra.mxu0 0.0
  %3698 = vmatprep.subr.mxu0 0.0
  %3699 = vmatpush1.msra.mxu0 0.0
  %3700 = vmatprep.subr.mxu0 0.0
  %3701 = vmatpush1.msra.mxu0 0.0
  %3702 = vmatprep.subr.mxu0 0.0
  %3703 = vmatpush1.msra.mxu0 %v351
  %3704 = vmatprep.subr.mxu0 0.0
  %3705 = vmatpush2.msra.mxu0 0.0
  %3706 = vmatprep.subr.mxu0 0.0
  %3707 = vmatpush2.msra.mxu0 0.0
  %3708 = vmatprep.subr.mxu0 0.0
  %3709 = vmatpush2.msra.mxu0 0.0
  %3710 = vmatprep.subr.mxu0 0.0
  %3711 = vmatpush2.msra.mxu0 0.0
  %3712 = vmatprep.subr.mxu0 0.0
  %3713 = vmatpush2.msra.mxu0 0.0
  %3714 = vmatprep.subr.mxu0 0.0
  %3715 = vmatpush2.msra.mxu0 0.0
  %3716 = vmatprep.subr.mxu0 0.0
  %3717 = vmatpush2.msra.mxu0 0.0
  %3718 = vmatprep.subr.mxu0 0.0
  %3719 = vmatpush2.msra.mxu0 0.0
  %3720 = vmatprep.subr.mxu0 0.0
  %3721 = vmatpush2.msra.mxu0 0.0
  %3722 = vmatprep.subr.mxu0 0.0
  %3723 = vmatpush2.msra.mxu0 0.0
  %3724 = vmatprep.subr.mxu0 0.0
  %3725 = vmatpush2.msra.mxu0 0.0
  %3726 = vmatprep.subr.mxu0 0.0
  %3727 = vmatpush2.msra.mxu0 0.0
  %3728 = vmatprep.subr.mxu0 0.0
  %3729 = vmatpush2.msra.mxu0 0.0
  %3730 = vmatprep.subr.mxu0 0.0
  %3731 = vmatpush2.msra.mxu0 0.0
  %3732 = vmatprep.subr.mxu0 0.0
  %3733 = vmatpush2.msra.mxu0 0.0
  %3734 = vmatprep.subr.mxu0 0.0
  %3735 = vmatpush2.msra.mxu0 0.0
  %3736 = vmatprep.mubr.f32.mxu0 0.0
  %3737 = vmatmul.mubr.f32.gmra.mxu0 %v3670
  %v3738 = vpop.f32.mrf.mxu0
  %v3739 = vadd.f32 0.0, %v3738
  %v3740 = vpop.f32.mrf.mxu0
  %3741 = vdwg.mxu0
  %v3743 = vsel %vm682, %v1910, 0
  %3745 = vmatprep.subr.mxu0 0.0
  %3746 = vmatpush1.msra.mxu0 0.0
  %3747 = vmatprep.subr.mxu0 0.0
  %3748 = vmatpush1.msra.mxu0 0.0
  %3749 = vmatprep.subr.mxu0 0.0
  %3750 = vmatpush1.msra.mxu0 0.0
  %3751 = vmatprep.subr.mxu0 0.0
  %3752 = vmatpush1.msra.mxu0 0.0
  %3753 = vmatprep.subr.mxu0 0.0
  %3754 = vmatpush1.msra.mxu0 0.0
  %3755 = vmatprep.subr.mxu0 0.0
  %3756 = vmatpush1.msra.mxu0 0.0
  %3757 = vmatprep.subr.mxu0 0.0
  %3758 = vmatpush1.msra.mxu0 0.0
  %3759 = vmatprep.subr.mxu0 0.0
  %3760 = vmatpush1.msra.mxu0 0.0
  %3761 = vmatprep.subr.mxu0 0.0
  %3762 = vmatpush1.msra.mxu0 0.0
  %3763 = vmatprep.subr.mxu0 0.0
  %3764 = vmatpush1.msra.mxu0 0.0
  %3765 = vmatprep.subr.mxu0 0.0
  %3766 = vmatpush1.msra.mxu0 0.0
  %3767 = vmatprep.subr.mxu0 0.0
  %3768 = vmatpush1.msra.mxu0 0.0
  %3769 = vmatprep.subr.mxu0 0.0
  %3770 = vmatpush1.msra.mxu0 0.0
  %3771 = vmatprep.subr.mxu0 0.0
  %3772 = vmatpush1.msra.mxu0 0.0
  %3773 = vmatprep.subr.mxu0 0.0
  %3774 = vmatpush1.msra.mxu0 0.0
  %3775 = vmatprep.subr.mxu0 0.0
  %3776 = vmatpush1.msra.mxu0 %v356
  %3777 = vmatprep.subr.mxu0 0.0
  %3778 = vmatpush2.msra.mxu0 0.0
  %3779 = vmatprep.subr.mxu0 0.0
  %3780 = vmatpush2.msra.mxu0 0.0
  %3781 = vmatprep.subr.mxu0 0.0
  %3782 = vmatpush2.msra.mxu0 0.0
  %3783 = vmatprep.subr.mxu0 0.0
  %3784 = vmatpush2.msra.mxu0 0.0
  %3785 = vmatprep.subr.mxu0 0.0
  %3786 = vmatpush2.msra.mxu0 0.0
  %3787 = vmatprep.subr.mxu0 0.0
  %3788 = vmatpush2.msra.mxu0 0.0
  %3789 = vmatprep.subr.mxu0 0.0
  %3790 = vmatpush2.msra.mxu0 0.0
  %3791 = vmatprep.subr.mxu0 0.0
  %3792 = vmatpush2.msra.mxu0 0.0
  %3793 = vmatprep.subr.mxu0 0.0
  %3794 = vmatpush2.msra.mxu0 0.0
  %3795 = vmatprep.subr.mxu0 0.0
  %3796 = vmatpush2.msra.mxu0 0.0
  %3797 = vmatprep.subr.mxu0 0.0
  %3798 = vmatpush2.msra.mxu0 0.0
  %3799 = vmatprep.subr.mxu0 0.0
  %3800 = vmatpush2.msra.mxu0 0.0
  %3801 = vmatprep.subr.mxu0 0.0
  %3802 = vmatpush2.msra.mxu0 0.0
  %3803 = vmatprep.subr.mxu0 0.0
  %3804 = vmatpush2.msra.mxu0 0.0
  %3805 = vmatprep.subr.mxu0 0.0
  %3806 = vmatpush2.msra.mxu0 0.0
  %3807 = vmatprep.subr.mxu0 0.0
  %3808 = vmatpush2.msra.mxu0 0.0
  %3809 = vmatprep.mubr.f32.mxu0 0.0
  %3810 = vmatmul.mubr.f32.gmra.mxu0 %v3743
  %v3811 = vpop.f32.mrf.mxu0
  %v3812 = vadd.f32 0.0, %v3811
  %v3813 = vpop.f32.mrf.mxu0
  %3814 = vdwg.mxu0
  %v3816 = vsel %vm682, %v1911, 0
  %3818 = vmatprep.subr.mxu0 0.0
  %3819 = vmatpush1.msra.mxu0 0.0
  %3820 = vmatprep.subr.mxu0 0.0
  %3821 = vmatpush1.msra.mxu0 0.0
  %3822 = vmatprep.subr.mxu0 0.0
  %3823 = vmatpush1.msra.mxu0 0.0
  %3824 = vmatprep.subr.mxu0 0.0
  %3825 = vmatpush1.msra.mxu0 0.0
  %3826 = vmatprep.subr.mxu0 0.0
  %3827 = vmatpush1.msra.mxu0 0.0
  %3828 = vmatprep.subr.mxu0 0.0
  %3829 = vmatpush1.msra.mxu0 0.0
  %3830 = vmatprep.subr.mxu0 0.0
  %3831 = vmatpush1.msra.mxu0 0.0
  %3832 = vmatprep.subr.mxu0 0.0
  %3833 = vmatpush1.msra.mxu0 0.0
  %3834 = vmatprep.subr.mxu0 0.0
  %3835 = vmatpush1.msra.mxu0 0.0
  %3836 = vmatprep.subr.mxu0 0.0
  %3837 = vmatpush1.msra.mxu0 0.0
  %3838 = vmatprep.subr.mxu0 0.0
  %3839 = vmatpush1.msra.mxu0 0.0
  %3840 = vmatprep.subr.mxu0 0.0
  %3841 = vmatpush1.msra.mxu0 0.0
  %3842 = vmatprep.subr.mxu0 0.0
  %3843 = vmatpush1.msra.mxu0 0.0
  %3844 = vmatprep.subr.mxu0 0.0
  %3845 = vmatpush1.msra.mxu0 0.0
  %3846 = vmatprep.subr.mxu0 0.0
  %3847 = vmatpush1.msra.mxu0 0.0
  %3848 = vmatprep.subr.mxu0 0.0
  %3849 = vmatpush1.msra.mxu0 %v361
  %3850 = vmatprep.subr.mxu0 0.0
  %3851 = vmatpush2.msra.mxu0 0.0
  %3852 = vmatprep.subr.mxu0 0.0
  %3853 = vmatpush2.msra.mxu0 0.0
  %3854 = vmatprep.subr.mxu0 0.0
  %3855 = vmatpush2.msra.mxu0 0.0
  %3856 = vmatprep.subr.mxu0 0.0
  %3857 = vmatpush2.msra.mxu0 0.0
  %3858 = vmatprep.subr.mxu0 0.0
  %3859 = vmatpush2.msra.mxu0 0.0
  %3860 = vmatprep.subr.mxu0 0.0
  %3861 = vmatpush2.msra.mxu0 0.0
  %3862 = vmatprep.subr.mxu0 0.0
  %3863 = vmatpush2.msra.mxu0 0.0
  %3864 = vmatprep.subr.mxu0 0.0
  %3865 = vmatpush2.msra.mxu0 0.0
  %3866 = vmatprep.subr.mxu0 0.0
  %3867 = vmatpush2.msra.mxu0 0.0
  %3868 = vmatprep.subr.mxu0 0.0
  %3869 = vmatpush2.msra.mxu0 0.0
  %3870 = vmatprep.subr.mxu0 0.0
  %3871 = vmatpush2.msra.mxu0 0.0
  %3872 = vmatprep.subr.mxu0 0.0
  %3873 = vmatpush2.msra.mxu0 0.0
  %3874 = vmatprep.subr.mxu0 0.0
  %3875 = vmatpush2.msra.mxu0 0.0
  %3876 = vmatprep.subr.mxu0 0.0
  %3877 = vmatpush2.msra.mxu0 0.0
  %3878 = vmatprep.subr.mxu0 0.0
  %3879 = vmatpush2.msra.mxu0 0.0
  %3880 = vmatprep.subr.mxu0 0.0
  %3881 = vmatpush2.msra.mxu0 0.0
  %3882 = vmatprep.mubr.f32.mxu0 0.0
  %3883 = vmatmul.mubr.f32.gmra.mxu0 %v3816
  %v3884 = vpop.f32.mrf.mxu0
  %v3885 = vadd.f32 0.0, %v3884
  %v3886 = vpop.f32.mrf.mxu0
  %3887 = vdwg.mxu0
  %v3889 = vsel %vm682, %v1912, 0
  %3891 = vmatprep.subr.mxu0 0.0
  %3892 = vmatpush1.msra.mxu0 0.0
  %3893 = vmatprep.subr.mxu0 0.0
  %3894 = vmatpush1.msra.mxu0 0.0
  %3895 = vmatprep.subr.mxu0 0.0
  %3896 = vmatpush1.msra.mxu0 0.0
  %3897 = vmatprep.subr.mxu0 0.0
  %3898 = vmatpush1.msra.mxu0 0.0
  %3899 = vmatprep.subr.mxu0 0.0
  %3900 = vmatpush1.msra.mxu0 0.0
  %3901 = vmatprep.subr.mxu0 0.0
  %3902 = vmatpush1.msra.mxu0 0.0
  %3903 = vmatprep.subr.mxu0 0.0
  %3904 = vmatpush1.msra.mxu0 0.0
  %3905 = vmatprep.subr.mxu0 0.0
  %3906 = vmatpush1.msra.mxu0 0.0
  %3907 = vmatprep.subr.mxu0 0.0
  %3908 = vmatpush1.msra.mxu0 0.0
  %3909 = vmatprep.subr.mxu0 0.0
  %3910 = vmatpush1.msra.mxu0 0.0
  %3911 = vmatprep.subr.mxu0 0.0
  %3912 = vmatpush1.msra.mxu0 0.0
  %3913 = vmatprep.subr.mxu0 0.0
  %3914 = vmatpush1.msra.mxu0 0.0
  %3915 = vmatprep.subr.mxu0 0.0
  %3916 = vmatpush1.msra.mxu0 0.0
  %3917 = vmatprep.subr.mxu0 0.0
  %3918 = vmatpush1.msra.mxu0 0.0
  %3919 = vmatprep.subr.mxu0 0.0
  %3920 = vmatpush1.msra.mxu0 0.0
  %3921 = vmatprep.subr.mxu0 0.0
  %3922 = vmatpush1.msra.mxu0 %v366
  %3923 = vmatprep.subr.mxu0 0.0
  %3924 = vmatpush2.msra.mxu0 0.0
  %3925 = vmatprep.subr.mxu0 0.0
  %3926 = vmatpush2.msra.mxu0 0.0
  %3927 = vmatprep.subr.mxu0 0.0
  %3928 = vmatpush2.msra.mxu0 0.0
  %3929 = vmatprep.subr.mxu0 0.0
  %3930 = vmatpush2.msra.mxu0 0.0
  %3931 = vmatprep.subr.mxu0 0.0
  %3932 = vmatpush2.msra.mxu0 0.0
  %3933 = vmatprep.subr.mxu0 0.0
  %3934 = vmatpush2.msra.mxu0 0.0
  %3935 = vmatprep.subr.mxu0 0.0
  %3936 = vmatpush2.msra.mxu0 0.0
  %3937 = vmatprep.subr.mxu0 0.0
  %3938 = vmatpush2.msra.mxu0 0.0
  %3939 = vmatprep.subr.mxu0 0.0
  %3940 = vmatpush2.msra.mxu0 0.0
  %3941 = vmatprep.subr.mxu0 0.0
  %3942 = vmatpush2.msra.mxu0 0.0
  %3943 = vmatprep.subr.mxu0 0.0
  %3944 = vmatpush2.msra.mxu0 0.0
  %3945 = vmatprep.subr.mxu0 0.0
  %3946 = vmatpush2.msra.mxu0 0.0
  %3947 = vmatprep.subr.mxu0 0.0
  %3948 = vmatpush2.msra.mxu0 0.0
  %3949 = vmatprep.subr.mxu0 0.0
  %3950 = vmatpush2.msra.mxu0 0.0
  %3951 = vmatprep.subr.mxu0 0.0
  %3952 = vmatpush2.msra.mxu0 0.0
  %3953 = vmatprep.subr.mxu0 0.0
  %3954 = vmatpush2.msra.mxu0 0.0
  %3955 = vmatprep.mubr.f32.mxu0 0.0
  %3956 = vmatmul.mubr.f32.gmra.mxu0 %v3889
  %v3957 = vpop.f32.mrf.mxu0
  %v3958 = vadd.f32 0.0, %v3957
  %v3959 = vpop.f32.mrf.mxu0
  %3960 = vdwg.mxu0
  %v3962 = vsel %vm682, %v1913, 0
  %3964 = vmatprep.subr.mxu0 0.0
  %3965 = vmatpush1.msra.mxu0 0.0
  %3966 = vmatprep.subr.mxu0 0.0
  %3967 = vmatpush1.msra.mxu0 0.0
  %3968 = vmatprep.subr.mxu0 0.0
  %3969 = vmatpush1.msra.mxu0 0.0
  %3970 = vmatprep.subr.mxu0 0.0
  %3971 = vmatpush1.msra.mxu0 0.0
  %3972 = vmatprep.subr.mxu0 0.0
  %3973 = vmatpush1.msra.mxu0 0.0
  %3974 = vmatprep.subr.mxu0 0.0
  %3975 = vmatpush1.msra.mxu0 0.0
  %3976 = vmatprep.subr.mxu0 0.0
  %3977 = vmatpush1.msra.mxu0 0.0
  %3978 = vmatprep.subr.mxu0 0.0
  %3979 = vmatpush1.msra.mxu0 0.0
  %3980 = vmatprep.subr.mxu0 0.0
  %3981 = vmatpush1.msra.mxu0 0.0
  %3982 = vmatprep.subr.mxu0 0.0
  %3983 = vmatpush1.msra.mxu0 0.0
  %3984 = vmatprep.subr.mxu0 0.0
  %3985 = vmatpush1.msra.mxu0 0.0
  %3986 = vmatprep.subr.mxu0 0.0
  %3987 = vmatpush1.msra.mxu0 0.0
  %3988 = vmatprep.subr.mxu0 0.0
  %3989 = vmatpush1.msra.mxu0 0.0
  %3990 = vmatprep.subr.mxu0 0.0
  %3991 = vmatpush1.msra.mxu0 0.0
  %3992 = vmatprep.subr.mxu0 0.0
  %3993 = vmatpush1.msra.mxu0 0.0
  %3994 = vmatprep.subr.mxu0 0.0
  %3995 = vmatpush1.msra.mxu0 %v371
  %3996 = vmatprep.subr.mxu0 0.0
  %3997 = vmatpush2.msra.mxu0 0.0
  %3998 = vmatprep.subr.mxu0 0.0
  %3999 = vmatpush2.msra.mxu0 0.0
  %4000 = vmatprep.subr.mxu0 0.0
  %4001 = vmatpush2.msra.mxu0 0.0
  %4002 = vmatprep.subr.mxu0 0.0
  %4003 = vmatpush2.msra.mxu0 0.0
  %4004 = vmatprep.subr.mxu0 0.0
  %4005 = vmatpush2.msra.mxu0 0.0
  %4006 = vmatprep.subr.mxu0 0.0
  %4007 = vmatpush2.msra.mxu0 0.0
  %4008 = vmatprep.subr.mxu0 0.0
  %4009 = vmatpush2.msra.mxu0 0.0
  %4010 = vmatprep.subr.mxu0 0.0
  %4011 = vmatpush2.msra.mxu0 0.0
  %4012 = vmatprep.subr.mxu0 0.0
  %4013 = vmatpush2.msra.mxu0 0.0
  %4014 = vmatprep.subr.mxu0 0.0
  %4015 = vmatpush2.msra.mxu0 0.0
  %4016 = vmatprep.subr.mxu0 0.0
  %4017 = vmatpush2.msra.mxu0 0.0
  %4018 = vmatprep.subr.mxu0 0.0
  %4019 = vmatpush2.msra.mxu0 0.0
  %4020 = vmatprep.subr.mxu0 0.0
  %4021 = vmatpush2.msra.mxu0 0.0
  %4022 = vmatprep.subr.mxu0 0.0
  %4023 = vmatpush2.msra.mxu0 0.0
  %4024 = vmatprep.subr.mxu0 0.0
  %4025 = vmatpush2.msra.mxu0 0.0
  %4026 = vmatprep.subr.mxu0 0.0
  %4027 = vmatpush2.msra.mxu0 0.0
  %4028 = vmatprep.mubr.f32.mxu0 0.0
  %4029 = vmatmul.mubr.f32.gmra.mxu0 %v3962
  %v4030 = vpop.f32.mrf.mxu0
  %v4031 = vadd.f32 0.0, %v4030
  %v4032 = vpop.f32.mrf.mxu0
  %4033 = vdwg.mxu0
  %v4035 = vsel %vm682, %v1914, 0
  %4037 = vmatprep.subr.mxu0 0.0
  %4038 = vmatpush1.msra.mxu0 0.0
  %4039 = vmatprep.subr.mxu0 0.0
  %4040 = vmatpush1.msra.mxu0 0.0
  %4041 = vmatprep.subr.mxu0 0.0
  %4042 = vmatpush1.msra.mxu0 0.0
  %4043 = vmatprep.subr.mxu0 0.0
  %4044 = vmatpush1.msra.mxu0 0.0
  %4045 = vmatprep.subr.mxu0 0.0
  %4046 = vmatpush1.msra.mxu0 0.0
  %4047 = vmatprep.subr.mxu0 0.0
  %4048 = vmatpush1.msra.mxu0 0.0
  %4049 = vmatprep.subr.mxu0 0.0
  %4050 = vmatpush1.msra.mxu0 0.0
  %4051 = vmatprep.subr.mxu0 0.0
  %4052 = vmatpush1.msra.mxu0 0.0
  %4053 = vmatprep.subr.mxu0 0.0
  %4054 = vmatpush1.msra.mxu0 0.0
  %4055 = vmatprep.subr.mxu0 0.0
  %4056 = vmatpush1.msra.mxu0 0.0
  %4057 = vmatprep.subr.mxu0 0.0
  %4058 = vmatpush1.msra.mxu0 0.0
  %4059 = vmatprep.subr.mxu0 0.0
  %4060 = vmatpush1.msra.mxu0 0.0
  %4061 = vmatprep.subr.mxu0 0.0
  %4062 = vmatpush1.msra.mxu0 0.0
  %4063 = vmatprep.subr.mxu0 0.0
  %4064 = vmatpush1.msra.mxu0 0.0
  %4065 = vmatprep.subr.mxu0 0.0
  %4066 = vmatpush1.msra.mxu0 0.0
  %4067 = vmatprep.subr.mxu0 0.0
  %4068 = vmatpush1.msra.mxu0 %v376
  %4069 = vmatprep.subr.mxu0 0.0
  %4070 = vmatpush2.msra.mxu0 0.0
  %4071 = vmatprep.subr.mxu0 0.0
  %4072 = vmatpush2.msra.mxu0 0.0
  %4073 = vmatprep.subr.mxu0 0.0
  %4074 = vmatpush2.msra.mxu0 0.0
  %4075 = vmatprep.subr.mxu0 0.0
  %4076 = vmatpush2.msra.mxu0 0.0
  %4077 = vmatprep.subr.mxu0 0.0
  %4078 = vmatpush2.msra.mxu0 0.0
  %4079 = vmatprep.subr.mxu0 0.0
  %4080 = vmatpush2.msra.mxu0 0.0
  %4081 = vmatprep.subr.mxu0 0.0
  %4082 = vmatpush2.msra.mxu0 0.0
  %4083 = vmatprep.subr.mxu0 0.0
  %4084 = vmatpush2.msra.mxu0 0.0
  %4085 = vmatprep.subr.mxu0 0.0
  %4086 = vmatpush2.msra.mxu0 0.0
  %4087 = vmatprep.subr.mxu0 0.0
  %4088 = vmatpush2.msra.mxu0 0.0
  %4089 = vmatprep.subr.mxu0 0.0
  %4090 = vmatpush2.msra.mxu0 0.0
  %4091 = vmatprep.subr.mxu0 0.0
  %4092 = vmatpush2.msra.mxu0 0.0
  %4093 = vmatprep.subr.mxu0 0.0
  %4094 = vmatpush2.msra.mxu0 0.0
  %4095 = vmatprep.subr.mxu0 0.0
  %4096 = vmatpush2.msra.mxu0 0.0
  %4097 = vmatprep.subr.mxu0 0.0
  %4098 = vmatpush2.msra.mxu0 0.0
  %4099 = vmatprep.subr.mxu0 0.0
  %4100 = vmatpush2.msra.mxu0 0.0
  %4101 = vmatprep.mubr.f32.mxu0 0.0
  %4102 = vmatmul.mubr.f32.gmra.mxu0 %v4035
  %v4103 = vpop.f32.mrf.mxu0
  %v4104 = vadd.f32 0.0, %v4103
  %v4105 = vpop.f32.mrf.mxu0
  %4106 = vdwg.mxu0
  %v4108 = vsel %vm682, %v1915, 0
  %4110 = vmatprep.subr.mxu0 0.0
  %4111 = vmatpush1.msra.mxu0 0.0
  %4112 = vmatprep.subr.mxu0 0.0
  %4113 = vmatpush1.msra.mxu0 0.0
  %4114 = vmatprep.subr.mxu0 0.0
  %4115 = vmatpush1.msra.mxu0 0.0
  %4116 = vmatprep.subr.mxu0 0.0
  %4117 = vmatpush1.msra.mxu0 0.0
  %4118 = vmatprep.subr.mxu0 0.0
  %4119 = vmatpush1.msra.mxu0 0.0
  %4120 = vmatprep.subr.mxu0 0.0
  %4121 = vmatpush1.msra.mxu0 0.0
  %4122 = vmatprep.subr.mxu0 0.0
  %4123 = vmatpush1.msra.mxu0 0.0
  %4124 = vmatprep.subr.mxu0 0.0
  %4125 = vmatpush1.msra.mxu0 0.0
  %4126 = vmatprep.subr.mxu0 0.0
  %4127 = vmatpush1.msra.mxu0 0.0
  %4128 = vmatprep.subr.mxu0 0.0
  %4129 = vmatpush1.msra.mxu0 0.0
  %4130 = vmatprep.subr.mxu0 0.0
  %4131 = vmatpush1.msra.mxu0 0.0
  %4132 = vmatprep.subr.mxu0 0.0
  %4133 = vmatpush1.msra.mxu0 0.0
  %4134 = vmatprep.subr.mxu0 0.0
  %4135 = vmatpush1.msra.mxu0 0.0
  %4136 = vmatprep.subr.mxu0 0.0
  %4137 = vmatpush1.msra.mxu0 0.0
  %4138 = vmatprep.subr.mxu0 0.0
  %4139 = vmatpush1.msra.mxu0 0.0
  %4140 = vmatprep.subr.mxu0 0.0
  %4141 = vmatpush1.msra.mxu0 %v381
  %4142 = vmatprep.subr.mxu0 0.0
  %4143 = vmatpush2.msra.mxu0 0.0
  %4144 = vmatprep.subr.mxu0 0.0
  %4145 = vmatpush2.msra.mxu0 0.0
  %4146 = vmatprep.subr.mxu0 0.0
  %4147 = vmatpush2.msra.mxu0 0.0
  %4148 = vmatprep.subr.mxu0 0.0
  %4149 = vmatpush2.msra.mxu0 0.0
  %4150 = vmatprep.subr.mxu0 0.0
  %4151 = vmatpush2.msra.mxu0 0.0
  %4152 = vmatprep.subr.mxu0 0.0
  %4153 = vmatpush2.msra.mxu0 0.0
  %4154 = vmatprep.subr.mxu0 0.0
  %4155 = vmatpush2.msra.mxu0 0.0
  %4156 = vmatprep.subr.mxu0 0.0
  %4157 = vmatpush2.msra.mxu0 0.0
  %4158 = vmatprep.subr.mxu0 0.0
  %4159 = vmatpush2.msra.mxu0 0.0
  %4160 = vmatprep.subr.mxu0 0.0
  %4161 = vmatpush2.msra.mxu0 0.0
  %4162 = vmatprep.subr.mxu0 0.0
  %4163 = vmatpush2.msra.mxu0 0.0
  %4164 = vmatprep.subr.mxu0 0.0
  %4165 = vmatpush2.msra.mxu0 0.0
  %4166 = vmatprep.subr.mxu0 0.0
  %4167 = vmatpush2.msra.mxu0 0.0
  %4168 = vmatprep.subr.mxu0 0.0
  %4169 = vmatpush2.msra.mxu0 0.0
  %4170 = vmatprep.subr.mxu0 0.0
  %4171 = vmatpush2.msra.mxu0 0.0
  %4172 = vmatprep.subr.mxu0 0.0
  %4173 = vmatpush2.msra.mxu0 0.0
  %4174 = vmatprep.mubr.f32.mxu0 0.0
  %4175 = vmatmul.mubr.f32.gmra.mxu0 %v4108
  %v4176 = vpop.f32.mrf.mxu0
  %v4177 = vadd.f32 0.0, %v4176
  %v4178 = vpop.f32.mrf.mxu0
  %4179 = vdwg.mxu0
  %v4181 = vsel %vm682, %v1916, 0
  %4183 = vmatprep.subr.mxu0 0.0
  %4184 = vmatpush1.msra.mxu0 0.0
  %4185 = vmatprep.subr.mxu0 0.0
  %4186 = vmatpush1.msra.mxu0 0.0
  %4187 = vmatprep.subr.mxu0 0.0
  %4188 = vmatpush1.msra.mxu0 0.0
  %4189 = vmatprep.subr.mxu0 0.0
  %4190 = vmatpush1.msra.mxu0 0.0
  %4191 = vmatprep.subr.mxu0 0.0
  %4192 = vmatpush1.msra.mxu0 0.0
  %4193 = vmatprep.subr.mxu0 0.0
  %4194 = vmatpush1.msra.mxu0 0.0
  %4195 = vmatprep.subr.mxu0 0.0
  %4196 = vmatpush1.msra.mxu0 0.0
  %4197 = vmatprep.subr.mxu0 0.0
  %4198 = vmatpush1.msra.mxu0 0.0
  %4199 = vmatprep.subr.mxu0 0.0
  %4200 = vmatpush1.msra.mxu0 0.0
  %4201 = vmatprep.subr.mxu0 0.0
  %4202 = vmatpush1.msra.mxu0 0.0
  %4203 = vmatprep.subr.mxu0 0.0
  %4204 = vmatpush1.msra.mxu0 0.0
  %4205 = vmatprep.subr.mxu0 0.0
  %4206 = vmatpush1.msra.mxu0 0.0
  %4207 = vmatprep.subr.mxu0 0.0
  %4208 = vmatpush1.msra.mxu0 0.0
  %4209 = vmatprep.subr.mxu0 0.0
  %4210 = vmatpush1.msra.mxu0 0.0
  %4211 = vmatprep.subr.mxu0 0.0
  %4212 = vmatpush1.msra.mxu0 0.0
  %4213 = vmatprep.subr.mxu0 0.0
  %4214 = vmatpush1.msra.mxu0 %v386
  %4215 = vmatprep.subr.mxu0 0.0
  %4216 = vmatpush2.msra.mxu0 0.0
  %4217 = vmatprep.subr.mxu0 0.0
  %4218 = vmatpush2.msra.mxu0 0.0
  %4219 = vmatprep.subr.mxu0 0.0
  %4220 = vmatpush2.msra.mxu0 0.0
  %4221 = vmatprep.subr.mxu0 0.0
  %4222 = vmatpush2.msra.mxu0 0.0
  %4223 = vmatprep.subr.mxu0 0.0
  %4224 = vmatpush2.msra.mxu0 0.0
  %4225 = vmatprep.subr.mxu0 0.0
  %4226 = vmatpush2.msra.mxu0 0.0
  %4227 = vmatprep.subr.mxu0 0.0
  %4228 = vmatpush2.msra.mxu0 0.0
  %4229 = vmatprep.subr.mxu0 0.0
  %4230 = vmatpush2.msra.mxu0 0.0
  %4231 = vmatprep.subr.mxu0 0.0
  %4232 = vmatpush2.msra.mxu0 0.0
  %4233 = vmatprep.subr.mxu0 0.0
  %4234 = vmatpush2.msra.mxu0 0.0
  %4235 = vmatprep.subr.mxu0 0.0
  %4236 = vmatpush2.msra.mxu0 0.0
  %4237 = vmatprep.subr.mxu0 0.0
  %4238 = vmatpush2.msra.mxu0 0.0
  %4239 = vmatprep.subr.mxu0 0.0
  %4240 = vmatpush2.msra.mxu0 0.0
  %4241 = vmatprep.subr.mxu0 0.0
  %4242 = vmatpush2.msra.mxu0 0.0
  %4243 = vmatprep.subr.mxu0 0.0
  %4244 = vmatpush2.msra.mxu0 0.0
  %4245 = vmatprep.subr.mxu0 0.0
  %4246 = vmatpush2.msra.mxu0 0.0
  %4247 = vmatprep.mubr.f32.mxu0 0.0
  %4248 = vmatmul.mubr.f32.gmra.mxu0 %v4181
  %v4249 = vpop.f32.mrf.mxu0
  %v4250 = vadd.f32 0.0, %v4249
  %v4251 = vpop.f32.mrf.mxu0
  %4252 = vdwg.mxu0
  %vm4253 = vcmp.gt.f32.partialorder %v1987, 0.0
  %vm4254 = vcmp.gt.f32.partialorder %v2060, 0.0
  %vm4255 = vcmp.gt.f32.partialorder %v2133, 0.0
  %vm4256 = vcmp.gt.f32.partialorder %v2206, 0.0
  %vm4257 = vcmp.gt.f32.partialorder %v2279, 0.0
  %vm4258 = vcmp.gt.f32.partialorder %v2352, 0.0
  %vm4259 = vcmp.gt.f32.partialorder %v2425, 0.0
  %vm4260 = vcmp.gt.f32.partialorder %v2498, 0.0
  %vm4261 = vcmp.gt.f32.partialorder %v2571, 0.0
  %vm4262 = vcmp.gt.f32.partialorder %v2644, 0.0
  %vm4263 = vcmp.gt.f32.partialorder %v2717, 0.0
  %vm4264 = vcmp.gt.f32.partialorder %v2790, 0.0
  %vm4265 = vcmp.gt.f32.partialorder %v2863, 0.0
  %vm4266 = vcmp.gt.f32.partialorder %v2936, 0.0
  %vm4267 = vcmp.gt.f32.partialorder %v3009, 0.0
  %vm4268 = vcmp.gt.f32.partialorder %v3082, 0.0
  %vm4269 = vcmp.gt.f32.partialorder %v3155, 0.0
  %vm4270 = vcmp.gt.f32.partialorder %v3228, 0.0
  %vm4271 = vcmp.gt.f32.partialorder %v3301, 0.0
  %vm4272 = vcmp.gt.f32.partialorder %v3374, 0.0
  %vm4273 = vcmp.gt.f32.partialorder %v3447, 0.0
  %vm4274 = vcmp.gt.f32.partialorder %v3520, 0.0
  %vm4275 = vcmp.gt.f32.partialorder %v3593, 0.0
  %vm4276 = vcmp.gt.f32.partialorder %v3666, 0.0
  %vm4277 = vcmp.gt.f32.partialorder %v3739, 0.0
  %vm4278 = vcmp.gt.f32.partialorder %v3812, 0.0
  %vm4279 = vcmp.gt.f32.partialorder %v3885, 0.0
  %vm4280 = vcmp.gt.f32.partialorder %v3958, 0.0
  %vm4281 = vcmp.gt.f32.partialorder %v4031, 0.0
  %vm4282 = vcmp.gt.f32.partialorder %v4104, 0.0
  %vm4283 = vcmp.gt.f32.partialorder %v4177, 0.0
  %vm4284 = vcmp.gt.f32.partialorder %v4250, 0.0
  %v4285 = vmin.f32 %v1987, 0.0
  %v4286 = vmin.f32 %v2060, 0.0
  %v4287 = vmin.f32 %v2133, 0.0
  %v4288 = vmin.f32 %v2206, 0.0
  %v4289 = vmin.f32 %v2279, 0.0
  %v4290 = vmin.f32 %v2352, 0.0
  %v4291 = vmin.f32 %v2425, 0.0
  %v4292 = vmin.f32 %v2498, 0.0
  %v4293 = vmin.f32 %v2571, 0.0
  %v4294 = vmin.f32 %v2644, 0.0
  %v4295 = vmin.f32 %v2717, 0.0
  %v4296 = vmin.f32 %v2790, 0.0
  %v4297 = vmin.f32 %v2863, 0.0
  %v4298 = vmin.f32 %v2936, 0.0
  %v4299 = vmin.f32 %v3009, 0.0
  %v4300 = vmin.f32 %v3082, 0.0
  %v4301 = vmin.f32 %v3155, 0.0
  %v4302 = vmin.f32 %v3228, 0.0
  %v4303 = vmin.f32 %v3301, 0.0
  %v4304 = vmin.f32 %v3374, 0.0
  %v4305 = vmin.f32 %v3447, 0.0
  %v4306 = vmin.f32 %v3520, 0.0
  %v4307 = vmin.f32 %v3593, 0.0
  %v4308 = vmin.f32 %v3666, 0.0
  %v4309 = vmin.f32 %v3739, 0.0
  %v4310 = vmin.f32 %v3812, 0.0
  %v4311 = vmin.f32 %v3885, 0.0
  %v4312 = vmin.f32 %v3958, 0.0
  %v4313 = vmin.f32 %v4031, 0.0
  %v4314 = vmin.f32 %v4104, 0.0
  %v4315 = vmin.f32 %v4177, 0.0
  %v4316 = vmin.f32 %v4250, 0.0
  %v4317 = vmul.f32 %v4285, 1.442695
  %v4318 = vpow.pop %v4317
  %v4319 = vmul.f32 %v4286, 1.442695
  %v4320 = vpow.pop %v4319
  %v4321 = vmul.f32 %v4287, 1.442695
  %v4322 = vpow.pop %v4321
  %v4323 = vmul.f32 %v4288, 1.442695
  %v4324 = vpow.pop %v4323
  %v4325 = vmul.f32 %v4289, 1.442695
  %v4326 = vpow.pop %v4325
  %v4327 = vmul.f32 %v4290, 1.442695
  %v4328 = vpow.pop %v4327
  %v4329 = vmul.f32 %v4291, 1.442695
  %v4330 = vpow.pop %v4329
  %v4331 = vmul.f32 %v4292, 1.442695
  %v4332 = vpow.pop %v4331
  %v4333 = vmul.f32 %v4293, 1.442695
  %v4334 = vpow.pop %v4333
  %v4335 = vmul.f32 %v4294, 1.442695
  %v4336 = vpow.pop %v4335
  %v4337 = vmul.f32 %v4295, 1.442695
  %v4338 = vpow.pop %v4337
  %v4339 = vmul.f32 %v4296, 1.442695
  %v4340 = vpow.pop %v4339
  %v4341 = vmul.f32 %v4297, 1.442695
  %v4342 = vpow.pop %v4341
  %v4343 = vmul.f32 %v4298, 1.442695
  %v4344 = vpow.pop %v4343
  %v4345 = vmul.f32 %v4299, 1.442695
  %v4346 = vpow.pop %v4345
  %v4347 = vmul.f32 %v4300, 1.442695
  %v4348 = vpow.pop %v4347
  %v4349 = vmul.f32 %v4301, 1.442695
  %v4350 = vpow.pop %v4349
  %v4351 = vmul.f32 %v4302, 1.442695
  %v4352 = vpow.pop %v4351
  %v4353 = vmul.f32 %v4303, 1.442695
  %v4354 = vpow.pop %v4353
  %v4355 = vmul.f32 %v4304, 1.442695
  %v4356 = vpow.pop %v4355
  %v4357 = vmul.f32 %v4305, 1.442695
  %v4358 = vpow.pop %v4357
  %v4359 = vmul.f32 %v4306, 1.442695
  %v4360 = vpow.pop %v4359
  %v4361 = vmul.f32 %v4307, 1.442695
  %v4362 = vpow.pop %v4361
  %v4363 = vmul.f32 %v4308, 1.442695
  %v4364 = vpow.pop %v4363
  %v4365 = vmul.f32 %v4309, 1.442695
  %v4366 = vpow.pop %v4365
  %v4367 = vmul.f32 %v4310, 1.442695
  %v4368 = vpow.pop %v4367
  %v4369 = vmul.f32 %v4311, 1.442695
  %v4370 = vpow.pop %v4369
  %v4371 = vmul.f32 %v4312, 1.442695
  %v4372 = vpow.pop %v4371
  %v4373 = vmul.f32 %v4313, 1.442695
  %v4374 = vpow.pop %v4373
  %v4375 = vmul.f32 %v4314, 1.442695
  %v4376 = vpow.pop %v4375
  %v4377 = vmul.f32 %v4315, 1.442695
  %v4378 = vpow.pop %v4377
  %v4379 = vmul.f32 %v4316, 1.442695
  %v4380 = vpow.pop %v4379
  %v4381 = vsub.f32 %v4318, 1.0
  %v4382 = vsub.f32 %v4320, 1.0
  %v4383 = vsub.f32 %v4322, 1.0
  %v4384 = vsub.f32 %v4324, 1.0
  %v4385 = vsub.f32 %v4326, 1.0
  %v4386 = vsub.f32 %v4328, 1.0
  %v4387 = vsub.f32 %v4330, 1.0
  %v4388 = vsub.f32 %v4332, 1.0
  %v4389 = vsub.f32 %v4334, 1.0
  %v4390 = vsub.f32 %v4336, 1.0
  %v4391 = vsub.f32 %v4338, 1.0
  %v4392 = vsub.f32 %v4340, 1.0
  %v4393 = vsub.f32 %v4342, 1.0
  %v4394 = vsub.f32 %v4344, 1.0
  %v4395 = vsub.f32 %v4346, 1.0
  %v4396 = vsub.f32 %v4348, 1.0
  %v4397 = vsub.f32 %v4350, 1.0
  %v4398 = vsub.f32 %v4352, 1.0
  %v4399 = vsub.f32 %v4354, 1.0
  %v4400 = vsub.f32 %v4356, 1.0
  %v4401 = vsub.f32 %v4358, 1.0
  %v4402 = vsub.f32 %v4360, 1.0
  %v4403 = vsub.f32 %v4362, 1.0
  %v4404 = vsub.f32 %v4364, 1.0
  %v4405 = vsub.f32 %v4366, 1.0
  %v4406 = vsub.f32 %v4368, 1.0
  %v4407 = vsub.f32 %v4370, 1.0
  %v4408 = vsub.f32 %v4372, 1.0
  %v4409 = vsub.f32 %v4374, 1.0
  %v4410 = vsub.f32 %v4376, 1.0
  %v4411 = vsub.f32 %v4378, 1.0
  %v4412 = vsub.f32 %v4380, 1.0
  %v4413 = vsel %vm4253, %v1987, %v4381
  %v4414 = vsel %vm4254, %v2060, %v4382
  %v4415 = vsel %vm4255, %v2133, %v4383
  %v4416 = vsel %vm4256, %v2206, %v4384
  %v4417 = vsel %vm4257, %v2279, %v4385
  %v4418 = vsel %vm4258, %v2352, %v4386
  %v4419 = vsel %vm4259, %v2425, %v4387
  %v4420 = vsel %vm4260, %v2498, %v4388
  %v4421 = vsel %vm4261, %v2571, %v4389
  %v4422 = vsel %vm4262, %v2644, %v4390
  %v4423 = vsel %vm4263, %v2717, %v4391
  %v4424 = vsel %vm4264, %v2790, %v4392
  %v4425 = vsel %vm4265, %v2863, %v4393
  %v4426 = vsel %vm4266, %v2936, %v4394
  %v4427 = vsel %vm4267, %v3009, %v4395
  %v4428 = vsel %vm4268, %v3082, %v4396
  %v4429 = vsel %vm4269, %v3155, %v4397
  %v4430 = vsel %vm4270, %v3228, %v4398
  %v4431 = vsel %vm4271, %v3301, %v4399
  %v4432 = vsel %vm4272, %v3374, %v4400
  %v4433 = vsel %vm4273, %v3447, %v4401
  %v4434 = vsel %vm4274, %v3520, %v4402
  %v4435 = vsel %vm4275, %v3593, %v4403
  %v4436 = vsel %vm4276, %v3666, %v4404
  %v4437 = vsel %vm4277, %v3739, %v4405
  %v4438 = vsel %vm4278, %v3812, %v4406
  %v4439 = vsel %vm4279, %v3885, %v4407
  %v4440 = vsel %vm4280, %v3958, %v4408
  %v4441 = vsel %vm4281, %v4031, %v4409
  %v4442 = vsel %vm4282, %v4104, %v4410
  %v4443 = vsel %vm4283, %v4177, %v4411
  %v4444 = vsel %vm4284, %v4250, %v4412
  %v4445 = vld [vmem:[%s2] sm:$0xff]
  %v4446 = vld [vmem:[%s2 + $0x8] sm:$0xff]
  %v4447 = vld [vmem:[%s5] sm:$0xff]
  %v4448 = vld [vmem:[%s5 + $0x8] sm:$0xff]
  %v4449 = vld [vmem:[%s5 + $0x10] sm:$0xff]
  %v4450 = vld [vmem:[%s5 + $0x18] sm:$0xff]
  %v4451 = vld [vmem:[%s5 + $0x20] sm:$0xff]
  %v4452 = vld [vmem:[%s5 + $0x28] sm:$0xff]
  %v4453 = vld [vmem:[%s5 + $0x30] sm:$0xff]
  %v4454 = vld [vmem:[%s5 + $0x38] sm:$0xff]
  %v4456 = vsel %vm67, %v4413, 0
  %v4459 = vsel %vm67, %v4414, 0
  %v4462 = vsel %vm67, %v4415, 0
  %v4465 = vsel %vm67, %v4416, 0
  %v4468 = vsel %vm67, %v4417, 0
  %v4471 = vsel %vm67, %v4418, 0
  %v4474 = vsel %vm67, %v4419, 0
  %v4477 = vsel %vm67, %v4420, 0
  %v4480 = vsel %vm67, %v4421, 0
  %v4483 = vsel %vm67, %v4422, 0
  %v4486 = vsel %vm67, %v4423, 0
  %v4489 = vsel %vm67, %v4424, 0
  %v4492 = vsel %vm67, %v4425, 0
  %v4495 = vsel %vm67, %v4426, 0
  %v4498 = vsel %vm67, %v4427, 0
  %v4501 = vsel %vm67, %v4428, 0
  %v4504 = vsel %vm67, %v4429, 0
  %v4507 = vsel %vm67, %v4430, 0
  %v4510 = vsel %vm67, %v4431, 0
  %v4513 = vsel %vm67, %v4432, 0
  %v4516 = vsel %vm67, %v4433, 0
  %v4519 = vsel %vm67, %v4434, 0
  %v4522 = vsel %vm67, %v4435, 0
  %v4525 = vsel %vm67, %v4436, 0
  %v4528 = vsel %vm67, %v4437, 0
  %v4531 = vsel %vm67, %v4438, 0
  %v4534 = vsel %vm67, %v4439, 0
  %v4537 = vsel %vm67, %v4440, 0
  %v4540 = vsel %vm67, %v4441, 0
  %v4543 = vsel %vm67, %v4442, 0
  %v4546 = vsel %vm67, %v4443, 0
  %v4549 = vsel %vm67, %v4444, 0
  %4551 = vmatprep.subr.mxu0 0.0
  %4552 = vmatpush1.msra.mxu0 0.0
  %4553 = vmatprep.subr.mxu0 0.0
  %4554 = vmatpush1.msra.mxu0 0.0
  %4555 = vmatprep.subr.mxu0 0.0
  %4556 = vmatpush1.msra.mxu0 0.0
  %4557 = vmatprep.subr.mxu0 0.0
  %4558 = vmatpush1.msra.mxu0 0.0
  %4559 = vmatprep.subr.mxu0 0.0
  %4560 = vmatpush1.msra.mxu0 0.0
  %4561 = vmatprep.subr.mxu0 0.0
  %4562 = vmatpush1.msra.mxu0 0.0
  %4563 = vmatprep.subr.mxu0 0.0
  %4564 = vmatpush1.msra.mxu0 0.0
  %4565 = vmatprep.subr.mxu0 0.0
  %4566 = vmatpush1.msra.mxu0 0.0
  %4567 = vmatprep.subr.mxu0 0.0
  %4568 = vmatpush1.msra.mxu0 0.0
  %4569 = vmatprep.subr.mxu0 0.0
  %4570 = vmatpush1.msra.mxu0 0.0
  %4571 = vmatprep.subr.mxu0 0.0
  %4572 = vmatpush1.msra.mxu0 0.0
  %4573 = vmatprep.subr.mxu0 0.0
  %4574 = vmatpush1.msra.mxu0 0.0
  %4575 = vmatprep.subr.mxu0 0.0
  %4576 = vmatpush1.msra.mxu0 0.0
  %4577 = vmatprep.subr.mxu0 0.0
  %4578 = vmatpush1.msra.mxu0 0.0
  %4579 = vmatprep.subr.mxu0 0.0
  %4580 = vmatpush1.msra.mxu0 %v4446
  %4581 = vmatprep.subr.mxu0 0.0
  %4582 = vmatpush1.msra.mxu0 %v4445
  %4583 = vmatprep.subr.mxu0 0.0
  %4584 = vmatpush2.msra.mxu0 0.0
  %4585 = vmatprep.subr.mxu0 0.0
  %4586 = vmatpush2.msra.mxu0 0.0
  %4587 = vmatprep.subr.mxu0 0.0
  %4588 = vmatpush2.msra.mxu0 0.0
  %4589 = vmatprep.subr.mxu0 0.0
  %4590 = vmatpush2.msra.mxu0 0.0
  %4591 = vmatprep.subr.mxu0 0.0
  %4592 = vmatpush2.msra.mxu0 0.0
  %4593 = vmatprep.subr.mxu0 0.0
  %4594 = vmatpush2.msra.mxu0 0.0
  %4595 = vmatprep.subr.mxu0 0.0
  %4596 = vmatpush2.msra.mxu0 0.0
  %4597 = vmatprep.subr.mxu0 0.0
  %4598 = vmatpush2.msra.mxu0 0.0
  %4599 = vmatprep.subr.mxu0 0.0
  %4600 = vmatpush2.msra.mxu0 0.0
  %4601 = vmatprep.subr.mxu0 0.0
  %4602 = vmatpush2.msra.mxu0 0.0
  %4603 = vmatprep.subr.mxu0 0.0
  %4604 = vmatpush2.msra.mxu0 0.0
  %4605 = vmatprep.subr.mxu0 0.0
  %4606 = vmatpush2.msra.mxu0 0.0
  %4607 = vmatprep.subr.mxu0 0.0
  %4608 = vmatpush2.msra.mxu0 0.0
  %4609 = vmatprep.subr.mxu0 0.0
  %4610 = vmatpush2.msra.mxu0 0.0
  %4611 = vmatprep.subr.mxu0 0.0
  %4612 = vmatpush2.msra.mxu0 0.0
  %4613 = vmatprep.subr.mxu0 0.0
  %4614 = vmatpush2.msra.mxu0 0.0
  %4615 = vmatprep.mubr.f32.mxu0 0.0
  %4616 = vmatmul.mubr.f32.gmra.mxu0 %v4456
  %v4617 = vpop.f32.mrf.mxu0
  %v4618 = vadd.f32 0.0, %v4617
  %v4619 = vpop.f32.mrf.mxu0
  %4620 = vmatprep.mubr.f32.mxu0 0.0
  %4621 = vmatmul.mubr.f32.gmra.mxu0 %v4459
  %v4622 = vpop.f32.mrf.mxu0
  %v4623 = vadd.f32 0.0, %v4622
  %v4624 = vpop.f32.mrf.mxu0
  %4625 = vmatprep.mubr.f32.mxu0 0.0
  %4626 = vmatmul.mubr.f32.gmra.mxu0 %v4462
  %v4627 = vpop.f32.mrf.mxu0
  %v4628 = vadd.f32 0.0, %v4627
  %v4629 = vpop.f32.mrf.mxu0
  %4630 = vmatprep.mubr.f32.mxu0 0.0
  %4631 = vmatmul.mubr.f32.gmra.mxu0 %v4465
  %v4632 = vpop.f32.mrf.mxu0
  %v4633 = vadd.f32 0.0, %v4632
  %v4634 = vpop.f32.mrf.mxu0
  %4635 = vmatprep.mubr.f32.mxu0 0.0
  %4636 = vmatmul.mubr.f32.gmra.mxu0 %v4468
  %v4637 = vpop.f32.mrf.mxu0
  %v4638 = vadd.f32 0.0, %v4637
  %v4639 = vpop.f32.mrf.mxu0
  %4640 = vmatprep.mubr.f32.mxu0 0.0
  %4641 = vmatmul.mubr.f32.gmra.mxu0 %v4471
  %v4642 = vpop.f32.mrf.mxu0
  %v4643 = vadd.f32 0.0, %v4642
  %v4644 = vpop.f32.mrf.mxu0
  %4645 = vmatprep.mubr.f32.mxu0 0.0
  %4646 = vmatmul.mubr.f32.gmra.mxu0 %v4474
  %v4647 = vpop.f32.mrf.mxu0
  %v4648 = vadd.f32 0.0, %v4647
  %v4649 = vpop.f32.mrf.mxu0
  %4650 = vmatprep.mubr.f32.mxu0 0.0
  %4651 = vmatmul.mubr.f32.gmra.mxu0 %v4477
  %v4652 = vpop.f32.mrf.mxu0
  %v4653 = vadd.f32 0.0, %v4652
  %v4654 = vpop.f32.mrf.mxu0
  %4655 = vmatprep.mubr.f32.mxu0 0.0
  %4656 = vmatmul.mubr.f32.gmra.mxu0 %v4480
  %v4657 = vpop.f32.mrf.mxu0
  %v4658 = vadd.f32 0.0, %v4657
  %v4659 = vpop.f32.mrf.mxu0
  %4660 = vmatprep.mubr.f32.mxu0 0.0
  %4661 = vmatmul.mubr.f32.gmra.mxu0 %v4483
  %v4662 = vpop.f32.mrf.mxu0
  %v4663 = vadd.f32 0.0, %v4662
  %v4664 = vpop.f32.mrf.mxu0
  %4665 = vmatprep.mubr.f32.mxu0 0.0
  %4666 = vmatmul.mubr.f32.gmra.mxu0 %v4486
  %v4667 = vpop.f32.mrf.mxu0
  %v4668 = vadd.f32 0.0, %v4667
  %v4669 = vpop.f32.mrf.mxu0
  %4670 = vmatprep.mubr.f32.mxu0 0.0
  %4671 = vmatmul.mubr.f32.gmra.mxu0 %v4489
  %v4672 = vpop.f32.mrf.mxu0
  %v4673 = vadd.f32 0.0, %v4672
  %v4674 = vpop.f32.mrf.mxu0
  %4675 = vmatprep.mubr.f32.mxu0 0.0
  %4676 = vmatmul.mubr.f32.gmra.mxu0 %v4492
  %v4677 = vpop.f32.mrf.mxu0
  %v4678 = vadd.f32 0.0, %v4677
  %v4679 = vpop.f32.mrf.mxu0
  %4680 = vmatprep.mubr.f32.mxu0 0.0
  %4681 = vmatmul.mubr.f32.gmra.mxu0 %v4495
  %v4682 = vpop.f32.mrf.mxu0
  %v4683 = vadd.f32 0.0, %v4682
  %v4684 = vpop.f32.mrf.mxu0
  %4685 = vmatprep.mubr.f32.mxu0 0.0
  %4686 = vmatmul.mubr.f32.gmra.mxu0 %v4498
  %v4687 = vpop.f32.mrf.mxu0
  %v4688 = vadd.f32 0.0, %v4687
  %v4689 = vpop.f32.mrf.mxu0
  %4690 = vmatprep.mubr.f32.mxu0 0.0
  %4691 = vmatmul.mubr.f32.gmra.mxu0 %v4501
  %v4692 = vpop.f32.mrf.mxu0
  %v4693 = vadd.f32 0.0, %v4692
  %v4694 = vpop.f32.mrf.mxu0
  %4695 = vmatprep.mubr.f32.mxu0 0.0
  %4696 = vmatmul.mubr.f32.gmra.mxu0 %v4504
  %v4697 = vpop.f32.mrf.mxu0
  %v4698 = vadd.f32 0.0, %v4697
  %v4699 = vpop.f32.mrf.mxu0
  %4700 = vmatprep.mubr.f32.mxu0 0.0
  %4701 = vmatmul.mubr.f32.gmra.mxu0 %v4507
  %v4702 = vpop.f32.mrf.mxu0
  %v4703 = vadd.f32 0.0, %v4702
  %v4704 = vpop.f32.mrf.mxu0
  %4705 = vmatprep.mubr.f32.mxu0 0.0
  %4706 = vmatmul.mubr.f32.gmra.mxu0 %v4510
  %v4707 = vpop.f32.mrf.mxu0
  %v4708 = vadd.f32 0.0, %v4707
  %v4709 = vpop.f32.mrf.mxu0
  %4710 = vmatprep.mubr.f32.mxu0 0.0
  %4711 = vmatmul.mubr.f32.gmra.mxu0 %v4513
  %v4712 = vpop.f32.mrf.mxu0
  %v4713 = vadd.f32 0.0, %v4712
  %v4714 = vpop.f32.mrf.mxu0
  %4715 = vmatprep.mubr.f32.mxu0 0.0
  %4716 = vmatmul.mubr.f32.gmra.mxu0 %v4516
  %v4717 = vpop.f32.mrf.mxu0
  %v4718 = vadd.f32 0.0, %v4717
  %v4719 = vpop.f32.mrf.mxu0
  %4720 = vmatprep.mubr.f32.mxu0 0.0
  %4721 = vmatmul.mubr.f32.gmra.mxu0 %v4519
  %v4722 = vpop.f32.mrf.mxu0
  %v4723 = vadd.f32 0.0, %v4722
  %v4724 = vpop.f32.mrf.mxu0
  %4725 = vmatprep.mubr.f32.mxu0 0.0
  %4726 = vmatmul.mubr.f32.gmra.mxu0 %v4522
  %v4727 = vpop.f32.mrf.mxu0
  %v4728 = vadd.f32 0.0, %v4727
  %v4729 = vpop.f32.mrf.mxu0
  %4730 = vmatprep.mubr.f32.mxu0 0.0
  %4731 = vmatmul.mubr.f32.gmra.mxu0 %v4525
  %v4732 = vpop.f32.mrf.mxu0
  %v4733 = vadd.f32 0.0, %v4732
  %v4734 = vpop.f32.mrf.mxu0
  %4735 = vmatprep.mubr.f32.mxu0 0.0
  %4736 = vmatmul.mubr.f32.gmra.mxu0 %v4528
  %v4737 = vpop.f32.mrf.mxu0
  %v4738 = vadd.f32 0.0, %v4737
  %v4739 = vpop.f32.mrf.mxu0
  %4740 = vmatprep.mubr.f32.mxu0 0.0
  %4741 = vmatmul.mubr.f32.gmra.mxu0 %v4531
  %v4742 = vpop.f32.mrf.mxu0
  %v4743 = vadd.f32 0.0, %v4742
  %v4744 = vpop.f32.mrf.mxu0
  %4745 = vmatprep.mubr.f32.mxu0 0.0
  %4746 = vmatmul.mubr.f32.gmra.mxu0 %v4534
  %v4747 = vpop.f32.mrf.mxu0
  %v4748 = vadd.f32 0.0, %v4747
  %v4749 = vpop.f32.mrf.mxu0
  %4750 = vmatprep.mubr.f32.mxu0 0.0
  %4751 = vmatmul.mubr.f32.gmra.mxu0 %v4537
  %v4752 = vpop.f32.mrf.mxu0
  %v4753 = vadd.f32 0.0, %v4752
  %v4754 = vpop.f32.mrf.mxu0
  %4755 = vmatprep.mubr.f32.mxu0 0.0
  %4756 = vmatmul.mubr.f32.gmra.mxu0 %v4540
  %v4757 = vpop.f32.mrf.mxu0
  %v4758 = vadd.f32 0.0, %v4757
  %v4759 = vpop.f32.mrf.mxu0
  %4760 = vmatprep.mubr.f32.mxu0 0.0
  %4761 = vmatmul.mubr.f32.gmra.mxu0 %v4543
  %v4762 = vpop.f32.mrf.mxu0
  %v4763 = vadd.f32 0.0, %v4762
  %v4764 = vpop.f32.mrf.mxu0
  %4765 = vmatprep.mubr.f32.mxu0 0.0
  %4766 = vmatmul.mubr.f32.gmra.mxu0 %v4546
  %v4767 = vpop.f32.mrf.mxu0
  %v4768 = vadd.f32 0.0, %v4767
  %v4769 = vpop.f32.mrf.mxu0
  %4770 = vmatprep.mubr.f32.mxu0 0.0
  %4771 = vmatmul.mubr.f32.gmra.mxu0 %v4549
  %v4772 = vpop.f32.mrf.mxu0
  %v4773 = vadd.f32 0.0, %v4772
  %v4774 = vpop.f32.mrf.mxu0
  %4775 = vdwg.mxu0
  %4808 = vset.pattern.permute.xlu0 17
  %4809 = vperm.xlu0 %4808, %v4618
  %v4810 = vpop.permute.xlu0 %4809
  %4811 = vset.pattern.permute.xlu0 17
  %4812 = vperm.xlu0 %4811, %v4623
  %v4813 = vpop.permute.xlu0 %4812
  %4814 = vset.pattern.permute.xlu0 17
  %4815 = vperm.xlu0 %4814, %v4628
  %v4816 = vpop.permute.xlu0 %4815
  %4817 = vset.pattern.permute.xlu0 17
  %4818 = vperm.xlu0 %4817, %v4633
  %v4819 = vpop.permute.xlu0 %4818
  %4820 = vset.pattern.permute.xlu0 17
  %4821 = vperm.xlu0 %4820, %v4638
  %v4822 = vpop.permute.xlu0 %4821
  %4823 = vset.pattern.permute.xlu0 17
  %4824 = vperm.xlu0 %4823, %v4643
  %v4825 = vpop.permute.xlu0 %4824
  %4826 = vset.pattern.permute.xlu0 17
  %4827 = vperm.xlu0 %4826, %v4648
  %v4828 = vpop.permute.xlu0 %4827
  %4829 = vset.pattern.permute.xlu0 17
  %4830 = vperm.xlu0 %4829, %v4653
  %v4831 = vpop.permute.xlu0 %4830
  %4832 = vset.pattern.permute.xlu0 17
  %4833 = vperm.xlu0 %4832, %v4658
  %v4834 = vpop.permute.xlu0 %4833
  %4835 = vset.pattern.permute.xlu0 17
  %4836 = vperm.xlu0 %4835, %v4663
  %v4837 = vpop.permute.xlu0 %4836
  %4838 = vset.pattern.permute.xlu0 17
  %4839 = vperm.xlu0 %4838, %v4668
  %v4840 = vpop.permute.xlu0 %4839
  %4841 = vset.pattern.permute.xlu0 17
  %4842 = vperm.xlu0 %4841, %v4673
  %v4843 = vpop.permute.xlu0 %4842
  %4844 = vset.pattern.permute.xlu0 17
  %4845 = vperm.xlu0 %4844, %v4678
  %v4846 = vpop.permute.xlu0 %4845
  %4847 = vset.pattern.permute.xlu0 17
  %4848 = vperm.xlu0 %4847, %v4683
  %v4849 = vpop.permute.xlu0 %4848
  %4850 = vset.pattern.permute.xlu0 17
  %4851 = vperm.xlu0 %4850, %v4688
  %v4852 = vpop.permute.xlu0 %4851
  %4853 = vset.pattern.permute.xlu0 17
  %4854 = vperm.xlu0 %4853, %v4693
  %v4855 = vpop.permute.xlu0 %4854
  %4856 = vset.pattern.permute.xlu0 17
  %4857 = vperm.xlu0 %4856, %v4698
  %v4858 = vpop.permute.xlu0 %4857
  %4859 = vset.pattern.permute.xlu0 17
  %4860 = vperm.xlu0 %4859, %v4703
  %v4861 = vpop.permute.xlu0 %4860
  %4862 = vset.pattern.permute.xlu0 17
  %4863 = vperm.xlu0 %4862, %v4708
  %v4864 = vpop.permute.xlu0 %4863
  %4865 = vset.pattern.permute.xlu0 17
  %4866 = vperm.xlu0 %4865, %v4713
  %v4867 = vpop.permute.xlu0 %4866
  %4868 = vset.pattern.permute.xlu0 17
  %4869 = vperm.xlu0 %4868, %v4718
  %v4870 = vpop.permute.xlu0 %4869
  %4871 = vset.pattern.permute.xlu0 17
  %4872 = vperm.xlu0 %4871, %v4723
  %v4873 = vpop.permute.xlu0 %4872
  %4874 = vset.pattern.permute.xlu0 17
  %4875 = vperm.xlu0 %4874, %v4728
  %v4876 = vpop.permute.xlu0 %4875
  %4877 = vset.pattern.permute.xlu0 17
  %4878 = vperm.xlu0 %4877, %v4733
  %v4879 = vpop.permute.xlu0 %4878
  %4880 = vset.pattern.permute.xlu0 17
  %4881 = vperm.xlu0 %4880, %v4738
  %v4882 = vpop.permute.xlu0 %4881
  %4883 = vset.pattern.permute.xlu0 17
  %4884 = vperm.xlu0 %4883, %v4743
  %v4885 = vpop.permute.xlu0 %4884
  %4886 = vset.pattern.permute.xlu0 17
  %4887 = vperm.xlu0 %4886, %v4748
  %v4888 = vpop.permute.xlu0 %4887
  %4889 = vset.pattern.permute.xlu0 17
  %4890 = vperm.xlu0 %4889, %v4753
  %v4891 = vpop.permute.xlu0 %4890
  %4892 = vset.pattern.permute.xlu0 17
  %4893 = vperm.xlu0 %4892, %v4758
  %v4894 = vpop.permute.xlu0 %4893
  %4895 = vset.pattern.permute.xlu0 17
  %4896 = vperm.xlu0 %4895, %v4763
  %v4897 = vpop.permute.xlu0 %4896
  %4898 = vset.pattern.permute.xlu0 17
  %4899 = vperm.xlu0 %4898, %v4768
  %v4900 = vpop.permute.xlu0 %4899
  %4901 = vset.pattern.permute.xlu0 17
  %4902 = vperm.xlu0 %4901, %v4773
  %v4903 = vpop.permute.xlu0 %4902
  %v4904 = vlaneseq
  %v4905 = vshrl.u32 %v4904, 7
  %v4906 = vsub.s32 %v518, %v4905
  %v4907 = vrot.slane %v4810, %v4906
  %v4908 = vlaneseq
  %v4909 = vshrl.u32 %v4908, 7
  %v4910 = vsub.s32 %v518, %v4909
  %v4911 = vrot.slane %v4813, %v4910
  %v4912 = vlaneseq
  %v4913 = vshrl.u32 %v4912, 7
  %v4914 = vsub.s32 %v518, %v4913
  %v4915 = vrot.slane %v4816, %v4914
  %v4916 = vlaneseq
  %v4917 = vshrl.u32 %v4916, 7
  %v4918 = vsub.s32 %v518, %v4917
  %v4919 = vrot.slane %v4819, %v4918
  %v4920 = vlaneseq
  %v4921 = vshrl.u32 %v4920, 7
  %v4922 = vsub.s32 %v518, %v4921
  %v4923 = vrot.slane %v4822, %v4922
  %v4924 = vlaneseq
  %v4925 = vshrl.u32 %v4924, 7
  %v4926 = vsub.s32 %v518, %v4925
  %v4927 = vrot.slane %v4825, %v4926
  %v4928 = vlaneseq
  %v4929 = vshrl.u32 %v4928, 7
  %v4930 = vsub.s32 %v518, %v4929
  %v4931 = vrot.slane %v4828, %v4930
  %v4932 = vlaneseq
  %v4933 = vshrl.u32 %v4932, 7
  %v4934 = vsub.s32 %v518, %v4933
  %v4935 = vrot.slane %v4831, %v4934
  %v4936 = vlaneseq
  %v4937 = vshrl.u32 %v4936, 7
  %v4938 = vsub.s32 %v518, %v4937
  %v4939 = vrot.slane %v4834, %v4938
  %v4940 = vlaneseq
  %v4941 = vshrl.u32 %v4940, 7
  %v4942 = vsub.s32 %v518, %v4941
  %v4943 = vrot.slane %v4837, %v4942
  %v4944 = vlaneseq
  %v4945 = vshrl.u32 %v4944, 7
  %v4946 = vsub.s32 %v518, %v4945
  %v4947 = vrot.slane %v4840, %v4946
  %v4948 = vlaneseq
  %v4949 = vshrl.u32 %v4948, 7
  %v4950 = vsub.s32 %v518, %v4949
  %v4951 = vrot.slane %v4843, %v4950
  %v4952 = vlaneseq
  %v4953 = vshrl.u32 %v4952, 7
  %v4954 = vsub.s32 %v518, %v4953
  %v4955 = vrot.slane %v4846, %v4954
  %v4956 = vlaneseq
  %v4957 = vshrl.u32 %v4956, 7
  %v4958 = vsub.s32 %v518, %v4957
  %v4959 = vrot.slane %v4849, %v4958
  %v4960 = vlaneseq
  %v4961 = vshrl.u32 %v4960, 7
  %v4962 = vsub.s32 %v518, %v4961
  %v4963 = vrot.slane %v4852, %v4962
  %v4964 = vlaneseq
  %v4965 = vshrl.u32 %v4964, 7
  %v4966 = vsub.s32 %v518, %v4965
  %v4967 = vrot.slane %v4855, %v4966
  %v4968 = vlaneseq
  %v4969 = vshrl.u32 %v4968, 7
  %v4970 = vsub.s32 %v518, %v4969
  %v4971 = vrot.slane %v4858, %v4970
  %v4972 = vlaneseq
  %v4973 = vshrl.u32 %v4972, 7
  %v4974 = vsub.s32 %v518, %v4973
  %v4975 = vrot.slane %v4861, %v4974
  %v4976 = vlaneseq
  %v4977 = vshrl.u32 %v4976, 7
  %v4978 = vsub.s32 %v518, %v4977
  %v4979 = vrot.slane %v4864, %v4978
  %v4980 = vlaneseq
  %v4981 = vshrl.u32 %v4980, 7
  %v4982 = vsub.s32 %v518, %v4981
  %v4983 = vrot.slane %v4867, %v4982
  %v4984 = vlaneseq
  %v4985 = vshrl.u32 %v4984, 7
  %v4986 = vsub.s32 %v518, %v4985
  %v4987 = vrot.slane %v4870, %v4986
  %v4988 = vlaneseq
  %v4989 = vshrl.u32 %v4988, 7
  %v4990 = vsub.s32 %v518, %v4989
  %v4991 = vrot.slane %v4873, %v4990
  %v4992 = vlaneseq
  %v4993 = vshrl.u32 %v4992, 7
  %v4994 = vsub.s32 %v518, %v4993
  %v4995 = vrot.slane %v4876, %v4994
  %v4996 = vlaneseq
  %v4997 = vshrl.u32 %v4996, 7
  %v4998 = vsub.s32 %v518, %v4997
  %v4999 = vrot.slane %v4879, %v4998
  %v5000 = vlaneseq
  %v5001 = vshrl.u32 %v5000, 7
  %v5002 = vsub.s32 %v518, %v5001
  %v5003 = vrot.slane %v4882, %v5002
  %v5004 = vlaneseq
  %v5005 = vshrl.u32 %v5004, 7
  %v5006 = vsub.s32 %v518, %v5005
  %v5007 = vrot.slane %v4885, %v5006
  %v5008 = vlaneseq
  %v5009 = vshrl.u32 %v5008, 7
  %v5010 = vsub.s32 %v518, %v5009
  %v5011 = vrot.slane %v4888, %v5010
  %v5012 = vlaneseq
  %v5013 = vshrl.u32 %v5012, 7
  %v5014 = vsub.s32 %v518, %v5013
  %v5015 = vrot.slane %v4891, %v5014
  %v5016 = vlaneseq
  %v5017 = vshrl.u32 %v5016, 7
  %v5018 = vsub.s32 %v518, %v5017
  %v5019 = vrot.slane %v4894, %v5018
  %v5020 = vlaneseq
  %v5021 = vshrl.u32 %v5020, 7
  %v5022 = vsub.s32 %v518, %v5021
  %v5023 = vrot.slane %v4897, %v5022
  %v5024 = vlaneseq
  %v5025 = vshrl.u32 %v5024, 7
  %v5026 = vsub.s32 %v518, %v5025
  %v5027 = vrot.slane %v4900, %v5026
  %v5028 = vlaneseq
  %v5029 = vshrl.u32 %v5028, 7
  %v5030 = vsub.s32 %v518, %v5029
  %v5031 = vrot.slane %v4903, %v5030
  %v5032 = vsel %vm647, %v4911, %v4907
  %v5033 = vsel %vm649, %v4915, %v5032
  %v5034 = vsel %vm651, %v4919, %v5033
  %v5035 = vsel %vm653, %v4923, %v5034
  %v5036 = vsel %vm655, %v4927, %v5035
  %v5037 = vsel %vm657, %v4931, %v5036
  %v5038 = vsel %vm659, %v4935, %v5037
  %v5039 = vsel %vm647, %v4943, %v4939
  %v5040 = vsel %vm649, %v4947, %v5039
  %v5041 = vsel %vm651, %v4951, %v5040
  %v5042 = vsel %vm653, %v4955, %v5041
  %v5043 = vsel %vm655, %v4959, %v5042
  %v5044 = vsel %vm657, %v4963, %v5043
  %v5045 = vsel %vm659, %v4967, %v5044
  %v5046 = vsel %vm647, %v4975, %v4971
  %v5047 = vsel %vm649, %v4979, %v5046
  %v5048 = vsel %vm651, %v4983, %v5047
  %v5049 = vsel %vm653, %v4987, %v5048
  %v5050 = vsel %vm655, %v4991, %v5049
  %v5051 = vsel %vm657, %v4995, %v5050
  %v5052 = vsel %vm659, %v4999, %v5051
  %v5053 = vsel %vm647, %v5007, %v5003
  %v5054 = vsel %vm649, %v5011, %v5053
  %v5055 = vsel %vm651, %v5015, %v5054
  %v5056 = vsel %vm653, %v5019, %v5055
  %v5057 = vsel %vm655, %v5023, %v5056
  %v5058 = vsel %vm657, %v5027, %v5057
  %v5059 = vsel %vm659, %v5031, %v5058
  %v5060 = vsel %vm682, %v5038, 0
  %v5062 = vsel %vm682, %v5045, 0
  %v5064 = vsel %vm682, %v5052, 0
  %v5066 = vsel %vm682, %v5059, 0
  %5068 = vmatprep.subr.mxu0 0.0
  %5069 = vmatpush1.msra.mxu0 0.0
  %5070 = vmatprep.subr.mxu0 0.0
  %5071 = vmatpush1.msra.mxu0 0.0
  %5072 = vmatprep.subr.mxu0 0.0
  %5073 = vmatpush1.msra.mxu0 0.0
  %5074 = vmatprep.subr.mxu0 0.0
  %5075 = vmatpush1.msra.mxu0 0.0
  %5076 = vmatprep.subr.mxu0 0.0
  %5077 = vmatpush1.msra.mxu0 0.0
  %5078 = vmatprep.subr.mxu0 0.0
  %5079 = vmatpush1.msra.mxu0 0.0
  %5080 = vmatprep.subr.mxu0 0.0
  %5081 = vmatpush1.msra.mxu0 0.0
  %5082 = vmatprep.subr.mxu0 0.0
  %5083 = vmatpush1.msra.mxu0 0.0
  %5084 = vmatprep.subr.mxu0 0.0
  %5085 = vmatpush1.msra.mxu0 0.0
  %5086 = vmatprep.subr.mxu0 0.0
  %5087 = vmatpush1.msra.mxu0 0.0
  %5088 = vmatprep.subr.mxu0 0.0
  %5089 = vmatpush1.msra.mxu0 0.0
  %5090 = vmatprep.subr.mxu0 0.0
  %5091 = vmatpush1.msra.mxu0 0.0
  %5092 = vmatprep.subr.mxu0 0.0
  %5093 = vmatpush1.msra.mxu0 0.0
  %5094 = vmatprep.subr.mxu0 0.0
  %5095 = vmatpush1.msra.mxu0 0.0
  %5096 = vmatprep.subr.mxu0 0.0
  %5097 = vmatpush1.msra.mxu0 0.0
  %5098 = vmatprep.subr.mxu0 0.0
  %5099 = vmatpush1.msra.mxu0 %v24
  %5100 = vmatprep.subr.mxu0 0.0
  %5101 = vmatpush2.msra.mxu0 0.0
  %5102 = vmatprep.subr.mxu0 0.0
  %5103 = vmatpush2.msra.mxu0 0.0
  %5104 = vmatprep.subr.mxu0 0.0
  %5105 = vmatpush2.msra.mxu0 0.0
  %5106 = vmatprep.subr.mxu0 0.0
  %5107 = vmatpush2.msra.mxu0 0.0
  %5108 = vmatprep.subr.mxu0 0.0
  %5109 = vmatpush2.msra.mxu0 0.0
  %5110 = vmatprep.subr.mxu0 0.0
  %5111 = vmatpush2.msra.mxu0 0.0
  %5112 = vmatprep.subr.mxu0 0.0
  %5113 = vmatpush2.msra.mxu0 0.0
  %5114 = vmatprep.subr.mxu0 0.0
  %5115 = vmatpush2.msra.mxu0 0.0
  %5116 = vmatprep.subr.mxu0 0.0
  %5117 = vmatpush2.msra.mxu0 0.0
  %5118 = vmatprep.subr.mxu0 0.0
  %5119 = vmatpush2.msra.mxu0 0.0
  %5120 = vmatprep.subr.mxu0 0.0
  %5121 = vmatpush2.msra.mxu0 0.0
  %5122 = vmatprep.subr.mxu0 0.0
  %5123 = vmatpush2.msra.mxu0 0.0
  %5124 = vmatprep.subr.mxu0 0.0
  %5125 = vmatpush2.msra.mxu0 0.0
  %5126 = vmatprep.subr.mxu0 0.0
  %5127 = vmatpush2.msra.mxu0 0.0
  %5128 = vmatprep.subr.mxu0 0.0
  %5129 = vmatpush2.msra.mxu0 0.0
  %5130 = vmatprep.subr.mxu0 0.0
  %5131 = vmatpush2.msra.mxu0 0.0
  %5132 = vmatprep.mubr.f32.mxu0 0.0
  %5133 = vmatmul.mubr.f32.gmra.mxu0 %v5060
  %v5134 = vpop.f32.mrf.mxu0
  %v5135 = vadd.f32 0.0, %v5134
  %v5136 = vpop.f32.mrf.mxu0
  %5137 = vmatprep.mubr.f32.mxu0 0.0
  %5138 = vmatmul.mubr.f32.gmra.mxu0 %v5062
  %v5139 = vpop.f32.mrf.mxu0
  %v5140 = vadd.f32 0.0, %v5139
  %v5141 = vpop.f32.mrf.mxu0
  %5142 = vmatprep.mubr.f32.mxu0 0.0
  %5143 = vmatmul.mubr.f32.gmra.mxu0 %v5064
  %v5144 = vpop.f32.mrf.mxu0
  %v5145 = vadd.f32 0.0, %v5144
  %v5146 = vpop.f32.mrf.mxu0
  %5147 = vmatprep.mubr.f32.mxu0 0.0
  %5148 = vmatmul.mubr.f32.gmra.mxu0 %v5066
  %v5149 = vpop.f32.mrf.mxu0
  %v5150 = vadd.f32 0.0, %v5149
  %v5151 = vpop.f32.mrf.mxu0
  %5152 = vdwg.mxu0
  %5153 = vset.pattern.permute.xlu0 16
  %5154 = vperm.xlu0 %5153, %v4618
  %v5155 = vpop.permute.xlu0 %5154
  %5156 = vset.pattern.permute.xlu0 16
  %5157 = vperm.xlu0 %5156, %v4623
  %v5158 = vpop.permute.xlu0 %5157
  %5159 = vset.pattern.permute.xlu0 16
  %5160 = vperm.xlu0 %5159, %v4628
  %v5161 = vpop.permute.xlu0 %5160
  %5162 = vset.pattern.permute.xlu0 16
  %5163 = vperm.xlu0 %5162, %v4633
  %v5164 = vpop.permute.xlu0 %5163
  %5165 = vset.pattern.permute.xlu0 16
  %5166 = vperm.xlu0 %5165, %v4638
  %v5167 = vpop.permute.xlu0 %5166
  %5168 = vset.pattern.permute.xlu0 16
  %5169 = vperm.xlu0 %5168, %v4643
  %v5170 = vpop.permute.xlu0 %5169
  %5171 = vset.pattern.permute.xlu0 16
  %5172 = vperm.xlu0 %5171, %v4648
  %v5173 = vpop.permute.xlu0 %5172
  %5174 = vset.pattern.permute.xlu0 16
  %5175 = vperm.xlu0 %5174, %v4653
  %v5176 = vpop.permute.xlu0 %5175
  %5177 = vset.pattern.permute.xlu0 16
  %5178 = vperm.xlu0 %5177, %v4658
  %v5179 = vpop.permute.xlu0 %5178
  %5180 = vset.pattern.permute.xlu0 16
  %5181 = vperm.xlu0 %5180, %v4663
  %v5182 = vpop.permute.xlu0 %5181
  %5183 = vset.pattern.permute.xlu0 16
  %5184 = vperm.xlu0 %5183, %v4668
  %v5185 = vpop.permute.xlu0 %5184
  %5186 = vset.pattern.permute.xlu0 16
  %5187 = vperm.xlu0 %5186, %v4673
  %v5188 = vpop.permute.xlu0 %5187
  %5189 = vset.pattern.permute.xlu0 16
  %5190 = vperm.xlu0 %5189, %v4678
  %v5191 = vpop.permute.xlu0 %5190
  %5192 = vset.pattern.permute.xlu0 16
  %5193 = vperm.xlu0 %5192, %v4683
  %v5194 = vpop.permute.xlu0 %5193
  %5195 = vset.pattern.permute.xlu0 16
  %5196 = vperm.xlu0 %5195, %v4688
  %v5197 = vpop.permute.xlu0 %5196
  %5198 = vset.pattern.permute.xlu0 16
  %5199 = vperm.xlu0 %5198, %v4693
  %v5200 = vpop.permute.xlu0 %5199
  %5201 = vset.pattern.permute.xlu0 16
  %5202 = vperm.xlu0 %5201, %v4698
  %v5203 = vpop.permute.xlu0 %5202
  %5204 = vset.pattern.permute.xlu0 16
  %5205 = vperm.xlu0 %5204, %v4703
  %v5206 = vpop.permute.xlu0 %5205
  %5207 = vset.pattern.permute.xlu0 16
  %5208 = vperm.xlu0 %5207, %v4708
  %v5209 = vpop.permute.xlu0 %5208
  %5210 = vset.pattern.permute.xlu0 16
  %5211 = vperm.xlu0 %5210, %v4713
  %v5212 = vpop.permute.xlu0 %5211
  %5213 = vset.pattern.permute.xlu0 16
  %5214 = vperm.xlu0 %5213, %v4718
  %v5215 = vpop.permute.xlu0 %5214
  %5216 = vset.pattern.permute.xlu0 16
  %5217 = vperm.xlu0 %5216, %v4723
  %v5218 = vpop.permute.xlu0 %5217
  %5219 = vset.pattern.permute.xlu0 16
  %5220 = vperm.xlu0 %5219, %v4728
  %v5221 = vpop.permute.xlu0 %5220
  %5222 = vset.pattern.permute.xlu0 16
  %5223 = vperm.xlu0 %5222, %v4733
  %v5224 = vpop.permute.xlu0 %5223
  %5225 = vset.pattern.permute.xlu0 16
  %5226 = vperm.xlu0 %5225, %v4738
  %v5227 = vpop.permute.xlu0 %5226
  %5228 = vset.pattern.permute.xlu0 16
  %5229 = vperm.xlu0 %5228, %v4743
  %v5230 = vpop.permute.xlu0 %5229
  %5231 = vset.pattern.permute.xlu0 16
  %5232 = vperm.xlu0 %5231, %v4748
  %v5233 = vpop.permute.xlu0 %5232
  %5234 = vset.pattern.permute.xlu0 16
  %5235 = vperm.xlu0 %5234, %v4753
  %v5236 = vpop.permute.xlu0 %5235
  %5237 = vset.pattern.permute.xlu0 16
  %5238 = vperm.xlu0 %5237, %v4758
  %v5239 = vpop.permute.xlu0 %5238
  %5240 = vset.pattern.permute.xlu0 16
  %5241 = vperm.xlu0 %5240, %v4763
  %v5242 = vpop.permute.xlu0 %5241
  %5243 = vset.pattern.permute.xlu0 16
  %5244 = vperm.xlu0 %5243, %v4768
  %v5245 = vpop.permute.xlu0 %5244
  %5246 = vset.pattern.permute.xlu0 16
  %5247 = vperm.xlu0 %5246, %v4773
  %v5248 = vpop.permute.xlu0 %5247
  %v5249 = vlaneseq
  %v5250 = vshrl.u32 %v5249, 7
  %v5251 = vsub.s32 %v518, %v5250
  %v5252 = vrot.slane %v5155, %v5251
  %v5253 = vlaneseq
  %v5254 = vshrl.u32 %v5253, 7
  %v5255 = vsub.s32 %v518, %v5254
  %v5256 = vrot.slane %v5158, %v5255
  %v5257 = vlaneseq
  %v5258 = vshrl.u32 %v5257, 7
  %v5259 = vsub.s32 %v518, %v5258
  %v5260 = vrot.slane %v5161, %v5259
  %v5261 = vlaneseq
  %v5262 = vshrl.u32 %v5261, 7
  %v5263 = vsub.s32 %v518, %v5262
  %v5264 = vrot.slane %v5164, %v5263
  %v5265 = vlaneseq
  %v5266 = vshrl.u32 %v5265, 7
  %v5267 = vsub.s32 %v518, %v5266
  %v5268 = vrot.slane %v5167, %v5267
  %v5269 = vlaneseq
  %v5270 = vshrl.u32 %v5269, 7
  %v5271 = vsub.s32 %v518, %v5270
  %v5272 = vrot.slane %v5170, %v5271
  %v5273 = vlaneseq
  %v5274 = vshrl.u32 %v5273, 7
  %v5275 = vsub.s32 %v518, %v5274
  %v5276 = vrot.slane %v5173, %v5275
  %v5277 = vlaneseq
  %v5278 = vshrl.u32 %v5277, 7
  %v5279 = vsub.s32 %v518, %v5278
  %v5280 = vrot.slane %v5176, %v5279
  %v5281 = vlaneseq
  %v5282 = vshrl.u32 %v5281, 7
  %v5283 = vsub.s32 %v518, %v5282
  %v5284 = vrot.slane %v5179, %v5283
  %v5285 = vlaneseq
  %v5286 = vshrl.u32 %v5285, 7
  %v5287 = vsub.s32 %v518, %v5286
  %v5288 = vrot.slane %v5182, %v5287
  %v5289 = vlaneseq
  %v5290 = vshrl.u32 %v5289, 7
  %v5291 = vsub.s32 %v518, %v5290
  %v5292 = vrot.slane %v5185, %v5291
  %v5293 = vlaneseq
  %v5294 = vshrl.u32 %v5293, 7
  %v5295 = vsub.s32 %v518, %v5294
  %v5296 = vrot.slane %v5188, %v5295
  %v5297 = vlaneseq
  %v5298 = vshrl.u32 %v5297, 7
  %v5299 = vsub.s32 %v518, %v5298
  %v5300 = vrot.slane %v5191, %v5299
  %v5301 = vlaneseq
  %v5302 = vshrl.u32 %v5301, 7
  %v5303 = vsub.s32 %v518, %v5302
  %v5304 = vrot.slane %v5194, %v5303
  %v5305 = vlaneseq
  %v5306 = vshrl.u32 %v5305, 7
  %v5307 = vsub.s32 %v518, %v5306
  %v5308 = vrot.slane %v5197, %v5307
  %v5309 = vlaneseq
  %v5310 = vshrl.u32 %v5309, 7
  %v5311 = vsub.s32 %v518, %v5310
  %v5312 = vrot.slane %v5200, %v5311
  %v5313 = vlaneseq
  %v5314 = vshrl.u32 %v5313, 7
  %v5315 = vsub.s32 %v518, %v5314
  %v5316 = vrot.slane %v5203, %v5315
  %v5317 = vlaneseq
  %v5318 = vshrl.u32 %v5317, 7
  %v5319 = vsub.s32 %v518, %v5318
  %v5320 = vrot.slane %v5206, %v5319
  %v5321 = vlaneseq
  %v5322 = vshrl.u32 %v5321, 7
  %v5323 = vsub.s32 %v518, %v5322
  %v5324 = vrot.slane %v5209, %v5323
  %v5325 = vlaneseq
  %v5326 = vshrl.u32 %v5325, 7
  %v5327 = vsub.s32 %v518, %v5326
  %v5328 = vrot.slane %v5212, %v5327
  %v5329 = vlaneseq
  %v5330 = vshrl.u32 %v5329, 7
  %v5331 = vsub.s32 %v518, %v5330
  %v5332 = vrot.slane %v5215, %v5331
  %v5333 = vlaneseq
  %v5334 = vshrl.u32 %v5333, 7
  %v5335 = vsub.s32 %v518, %v5334
  %v5336 = vrot.slane %v5218, %v5335
  %v5337 = vlaneseq
  %v5338 = vshrl.u32 %v5337, 7
  %v5339 = vsub.s32 %v518, %v5338
  %v5340 = vrot.slane %v5221, %v5339
  %v5341 = vlaneseq
  %v5342 = vshrl.u32 %v5341, 7
  %v5343 = vsub.s32 %v518, %v5342
  %v5344 = vrot.slane %v5224, %v5343
  %v5345 = vlaneseq
  %v5346 = vshrl.u32 %v5345, 7
  %v5347 = vsub.s32 %v518, %v5346
  %v5348 = vrot.slane %v5227, %v5347
  %v5349 = vlaneseq
  %v5350 = vshrl.u32 %v5349, 7
  %v5351 = vsub.s32 %v518, %v5350
  %v5352 = vrot.slane %v5230, %v5351
  %v5353 = vlaneseq
  %v5354 = vshrl.u32 %v5353, 7
  %v5355 = vsub.s32 %v518, %v5354
  %v5356 = vrot.slane %v5233, %v5355
  %v5357 = vlaneseq
  %v5358 = vshrl.u32 %v5357, 7
  %v5359 = vsub.s32 %v518, %v5358
  %v5360 = vrot.slane %v5236, %v5359
  %v5361 = vlaneseq
  %v5362 = vshrl.u32 %v5361, 7
  %v5363 = vsub.s32 %v518, %v5362
  %v5364 = vrot.slane %v5239, %v5363
  %v5365 = vlaneseq
  %v5366 = vshrl.u32 %v5365, 7
  %v5367 = vsub.s32 %v518, %v5366
  %v5368 = vrot.slane %v5242, %v5367
  %v5369 = vlaneseq
  %v5370 = vshrl.u32 %v5369, 7
  %v5371 = vsub.s32 %v518, %v5370
  %v5372 = vrot.slane %v5245, %v5371
  %v5373 = vlaneseq
  %v5374 = vshrl.u32 %v5373, 7
  %v5375 = vsub.s32 %v518, %v5374
  %v5376 = vrot.slane %v5248, %v5375
  %v5377 = vsel %vm647, %v5256, %v5252
  %v5378 = vsel %vm649, %v5260, %v5377
  %v5379 = vsel %vm651, %v5264, %v5378
  %v5380 = vsel %vm653, %v5268, %v5379
  %v5381 = vsel %vm655, %v5272, %v5380
  %v5382 = vsel %vm657, %v5276, %v5381
  %v5383 = vsel %vm659, %v5280, %v5382
  %v5384 = vsel %vm647, %v5288, %v5284
  %v5385 = vsel %vm649, %v5292, %v5384
  %v5386 = vsel %vm651, %v5296, %v5385
  %v5387 = vsel %vm653, %v5300, %v5386
  %v5388 = vsel %vm655, %v5304, %v5387
  %v5389 = vsel %vm657, %v5308, %v5388
  %v5390 = vsel %vm659, %v5312, %v5389
  %v5391 = vsel %vm647, %v5320, %v5316
  %v5392 = vsel %vm649, %v5324, %v5391
  %v5393 = vsel %vm651, %v5328, %v5392
  %v5394 = vsel %vm653, %v5332, %v5393
  %v5395 = vsel %vm655, %v5336, %v5394
  %v5396 = vsel %vm657, %v5340, %v5395
  %v5397 = vsel %vm659, %v5344, %v5396
  %v5398 = vsel %vm647, %v5352, %v5348
  %v5399 = vsel %vm649, %v5356, %v5398
  %v5400 = vsel %vm651, %v5360, %v5399
  %v5401 = vsel %vm653, %v5364, %v5400
  %v5402 = vsel %vm655, %v5368, %v5401
  %v5403 = vsel %vm657, %v5372, %v5402
  %v5404 = vsel %vm659, %v5376, %v5403
  %v5405 = vsel %vm682, %v5383, 0
  %v5407 = vsel %vm682, %v5390, 0
  %v5409 = vsel %vm682, %v5397, 0
  %v5411 = vsel %vm682, %v5404, 0
  %5413 = vmatprep.subr.mxu0 0.0
  %5414 = vmatpush1.msra.mxu0 0.0
  %5415 = vmatprep.subr.mxu0 0.0
  %5416 = vmatpush1.msra.mxu0 0.0
  %5417 = vmatprep.subr.mxu0 0.0
  %5418 = vmatpush1.msra.mxu0 0.0
  %5419 = vmatprep.subr.mxu0 0.0
  %5420 = vmatpush1.msra.mxu0 0.0
  %5421 = vmatprep.subr.mxu0 0.0
  %5422 = vmatpush1.msra.mxu0 0.0
  %5423 = vmatprep.subr.mxu0 0.0
  %5424 = vmatpush1.msra.mxu0 0.0
  %5425 = vmatprep.subr.mxu0 0.0
  %5426 = vmatpush1.msra.mxu0 0.0
  %5427 = vmatprep.subr.mxu0 0.0
  %5428 = vmatpush1.msra.mxu0 0.0
  %5429 = vmatprep.subr.mxu0 0.0
  %5430 = vmatpush1.msra.mxu0 0.0
  %5431 = vmatprep.subr.mxu0 0.0
  %5432 = vmatpush1.msra.mxu0 0.0
  %5433 = vmatprep.subr.mxu0 0.0
  %5434 = vmatpush1.msra.mxu0 0.0
  %5435 = vmatprep.subr.mxu0 0.0
  %5436 = vmatpush1.msra.mxu0 0.0
  %5437 = vmatprep.subr.mxu0 0.0
  %5438 = vmatpush1.msra.mxu0 0.0
  %5439 = vmatprep.subr.mxu0 0.0
  %5440 = vmatpush1.msra.mxu0 0.0
  %5441 = vmatprep.subr.mxu0 0.0
  %5442 = vmatpush1.msra.mxu0 0.0
  %5443 = vmatprep.subr.mxu0 0.0
  %5444 = vmatpush1.msra.mxu0 %v23
  %5445 = vmatprep.subr.mxu0 0.0
  %5446 = vmatpush2.msra.mxu0 0.0
  %5447 = vmatprep.subr.mxu0 0.0
  %5448 = vmatpush2.msra.mxu0 0.0
  %5449 = vmatprep.subr.mxu0 0.0
  %5450 = vmatpush2.msra.mxu0 0.0
  %5451 = vmatprep.subr.mxu0 0.0
  %5452 = vmatpush2.msra.mxu0 0.0
  %5453 = vmatprep.subr.mxu0 0.0
  %5454 = vmatpush2.msra.mxu0 0.0
  %5455 = vmatprep.subr.mxu0 0.0
  %5456 = vmatpush2.msra.mxu0 0.0
  %5457 = vmatprep.subr.mxu0 0.0
  %5458 = vmatpush2.msra.mxu0 0.0
  %5459 = vmatprep.subr.mxu0 0.0
  %5460 = vmatpush2.msra.mxu0 0.0
  %5461 = vmatprep.subr.mxu0 0.0
  %5462 = vmatpush2.msra.mxu0 0.0
  %5463 = vmatprep.subr.mxu0 0.0
  %5464 = vmatpush2.msra.mxu0 0.0
  %5465 = vmatprep.subr.mxu0 0.0
  %5466 = vmatpush2.msra.mxu0 0.0
  %5467 = vmatprep.subr.mxu0 0.0
  %5468 = vmatpush2.msra.mxu0 0.0
  %5469 = vmatprep.subr.mxu0 0.0
  %5470 = vmatpush2.msra.mxu0 0.0
  %5471 = vmatprep.subr.mxu0 0.0
  %5472 = vmatpush2.msra.mxu0 0.0
  %5473 = vmatprep.subr.mxu0 0.0
  %5474 = vmatpush2.msra.mxu0 0.0
  %5475 = vmatprep.subr.mxu0 0.0
  %5476 = vmatpush2.msra.mxu0 0.0
  %5477 = vmatprep.mubr.f32.mxu0 0.0
  %5478 = vmatmul.mubr.f32.gmra.mxu0 %v5405
  %v5479 = vpop.f32.mrf.mxu0
  %v5480 = vadd.f32 %v5135, %v5479
  %v5481 = vpop.f32.mrf.mxu0
  %5482 = vmatprep.mubr.f32.mxu0 0.0
  %5483 = vmatmul.mubr.f32.gmra.mxu0 %v5407
  %v5484 = vpop.f32.mrf.mxu0
  %v5485 = vadd.f32 %v5140, %v5484
  %v5486 = vpop.f32.mrf.mxu0
  %5487 = vmatprep.mubr.f32.mxu0 0.0
  %5488 = vmatmul.mubr.f32.gmra.mxu0 %v5409
  %v5489 = vpop.f32.mrf.mxu0
  %v5490 = vadd.f32 %v5145, %v5489
  %v5491 = vpop.f32.mrf.mxu0
  %5492 = vmatprep.mubr.f32.mxu0 0.0
  %5493 = vmatmul.mubr.f32.gmra.mxu0 %v5411
  %v5494 = vpop.f32.mrf.mxu0
  %v5495 = vadd.f32 %v5150, %v5494
  %v5496 = vpop.f32.mrf.mxu0
  %5497 = vdwg.mxu0
  %vm5498 = vcmp.gt.f32.partialorder %v5480, 0.0
  %vm5499 = vcmp.gt.f32.partialorder %v5485, 0.0
  %vm5500 = vcmp.gt.f32.partialorder %v5490, 0.0
  %vm5501 = vcmp.gt.f32.partialorder %v5495, 0.0
  %v5502 = vmul.f32 %v5480, 0.2
  %v5503 = vmul.f32 %v5485, 0.2
  %v5504 = vmul.f32 %v5490, 0.2
  %v5505 = vmul.f32 %v5495, 0.2
  %v5506 = vsel %vm5498, %v5480, %v5502
  %v5507 = vsel %vm5499, %v5485, %v5503
  %v5508 = vsel %vm5500, %v5490, %v5504
  %v5509 = vsel %vm5501, %v5495, %v5505
  %v5510 = vsel %vm1133, %v5506, -inf
  %v5511 = vsel %vm1133, %v5507, -inf
  %v5512 = vmax.f32 %v5510, %v5511
  %v5513 = vrot.slane %v5512, 4
  %v5514 = vmax.f32 %v5512, %v5513
  %v5515 = vrot.slane %v5514, 2
  %v5516 = vmax.f32 %v5514, %v5515
  %v5517 = vrot.slane %v5516, 1
  %v5518 = vmax.f32 %v5516, %v5517
  %v5519 = vsel %vm1133, %v5508, -inf
  %v5520 = vsel %vm1133, %v5509, -inf
  %v5521 = vmax.f32 %v5519, %v5520
  %v5522 = vrot.slane %v5521, 4
  %v5523 = vmax.f32 %v5521, %v5522
  %v5524 = vrot.slane %v5523, 2
  %v5525 = vmax.f32 %v5523, %v5524
  %v5526 = vrot.slane %v5525, 1
  %v5527 = vmax.f32 %v5525, %v5526
  %v5528 = vsub.f32 %v5506, %v5518
  %v5529 = vsub.f32 %v5507, %v5518
  %v5530 = vsub.f32 %v5508, %v5527
  %v5531 = vsub.f32 %v5509, %v5527
  %v5532 = vmul.f32 %v5528, 1.442695
  %v5533 = vpow.pop %v5532
  %v5534 = vmul.f32 %v5529, 1.442695
  %v5535 = vpow.pop %v5534
  %v5536 = vmul.f32 %v5530, 1.442695
  %v5537 = vpow.pop %v5536
  %v5538 = vmul.f32 %v5531, 1.442695
  %v5539 = vpow.pop %v5538
  %v5540 = vsel %vm1133, %v5533, 0.0
  %v5541 = vsel %vm1133, %v5535, 0.0
  %v5542 = vadd.f32 %v5540, %v5541
  %v5543 = vrot.slane %v5542, 4
  %v5544 = vadd.f32 %v5542, %v5543
  %v5545 = vrot.slane %v5544, 2
  %v5546 = vadd.f32 %v5544, %v5545
  %v5547 = vrot.slane %v5546, 1
  %v5548 = vadd.f32 %v5546, %v5547
  %v5549 = vsel %vm1133, %v5537, 0.0
  %v5550 = vsel %vm1133, %v5539, 0.0
  %v5551 = vadd.f32 %v5549, %v5550
  %v5552 = vrot.slane %v5551, 4
  %v5553 = vadd.f32 %v5551, %v5552
  %v5554 = vrot.slane %v5553, 2
  %v5555 = vadd.f32 %v5553, %v5554
  %v5556 = vrot.slane %v5555, 1
  %v5557 = vadd.f32 %v5555, %v5556
  %v5558 = vrcp.pop %v5548
  %v5559 = vrcp.pop %v5557
  %v5560 = vmul.f32 %v5533, %v5558
  %v5561 = vmul.f32 %v5535, %v5558
  %v5562 = vmul.f32 %v5537, %v5559
  %v5563 = vmul.f32 %v5539, %v5559
  %v5565 = vsel %vm1133, %v5560, 0
  %v5568 = vsel %vm1133, %v5561, 0
  %v5571 = vsel %vm1133, %v5562, 0
  %v5574 = vsel %vm1133, %v5563, 0
  %5576 = vmatprep.subr.mxu0 0.0
  %5577 = vmatpush1.msra.mxu0 0.0
  %5578 = vmatprep.subr.mxu0 0.0
  %5579 = vmatpush1.msra.mxu0 0.0
  %5580 = vmatprep.subr.mxu0 0.0
  %5581 = vmatpush1.msra.mxu0 0.0
  %5582 = vmatprep.subr.mxu0 0.0
  %5583 = vmatpush1.msra.mxu0 0.0
  %5584 = vmatprep.subr.mxu0 0.0
  %5585 = vmatpush1.msra.mxu0 0.0
  %5586 = vmatprep.subr.mxu0 0.0
  %5587 = vmatpush1.msra.mxu0 0.0
  %5588 = vmatprep.subr.mxu0 0.0
  %5589 = vmatpush1.msra.mxu0 0.0
  %5590 = vmatprep.subr.mxu0 0.0
  %5591 = vmatpush1.msra.mxu0 0.0
  %5592 = vmatprep.subr.mxu0 0.0
  %5593 = vmatpush1.msra.mxu0 %v4454
  %5594 = vmatprep.subr.mxu0 0.0
  %5595 = vmatpush1.msra.mxu0 %v4453
  %5596 = vmatprep.subr.mxu0 0.0
  %5597 = vmatpush1.msra.mxu0 %v4452
  %5598 = vmatprep.subr.mxu0 0.0
  %5599 = vmatpush1.msra.mxu0 %v4451
  %5600 = vmatprep.subr.mxu0 0.0
  %5601 = vmatpush1.msra.mxu0 %v4450
  %5602 = vmatprep.subr.mxu0 0.0
  %5603 = vmatpush1.msra.mxu0 %v4449
  %5604 = vmatprep.subr.mxu0 0.0
  %5605 = vmatpush1.msra.mxu0 %v4448
  %5606 = vmatprep.subr.mxu0 0.0
  %5607 = vmatpush1.msra.mxu0 %v4447
  %5608 = vmatprep.subr.mxu0 0.0
  %5609 = vmatpush2.msra.mxu0 0.0
  %5610 = vmatprep.subr.mxu0 0.0
  %5611 = vmatpush2.msra.mxu0 0.0
  %5612 = vmatprep.subr.mxu0 0.0
  %5613 = vmatpush2.msra.mxu0 0.0
  %5614 = vmatprep.subr.mxu0 0.0
  %5615 = vmatpush2.msra.mxu0 0.0
  %5616 = vmatprep.subr.mxu0 0.0
  %5617 = vmatpush2.msra.mxu0 0.0
  %5618 = vmatprep.subr.mxu0 0.0
  %5619 = vmatpush2.msra.mxu0 0.0
  %5620 = vmatprep.subr.mxu0 0.0
  %5621 = vmatpush2.msra.mxu0 0.0
  %5622 = vmatprep.subr.mxu0 0.0
  %5623 = vmatpush2.msra.mxu0 0.0
  %5624 = vmatprep.subr.mxu0 0.0
  %5625 = vmatpush2.msra.mxu0 0.0
  %5626 = vmatprep.subr.mxu0 0.0
  %5627 = vmatpush2.msra.mxu0 0.0
  %5628 = vmatprep.subr.mxu0 0.0
  %5629 = vmatpush2.msra.mxu0 0.0
  %5630 = vmatprep.subr.mxu0 0.0
  %5631 = vmatpush2.msra.mxu0 0.0
  %5632 = vmatprep.subr.mxu0 0.0
  %5633 = vmatpush2.msra.mxu0 0.0
  %5634 = vmatprep.subr.mxu0 0.0
  %5635 = vmatpush2.msra.mxu0 0.0
  %5636 = vmatprep.subr.mxu0 0.0
  %5637 = vmatpush2.msra.mxu0 0.0
  %5638 = vmatprep.subr.mxu0 0.0
  %5639 = vmatpush2.msra.mxu0 0.0
  %5640 = vmatprep.mubr.f32.mxu0 0.0
  %5641 = vmatmul.mubr.f32.gmra.mxu0 %v5565
  %v5642 = vpop.f32.mrf.mxu0
  %v5643 = vadd.f32 0.0, %v5642
  %v5644 = vpop.f32.mrf.mxu0
  %5645 = vmatprep.mubr.f32.mxu0 0.0
  %5646 = vmatmul.mubr.f32.gmra.mxu0 %v5568
  %v5647 = vpop.f32.mrf.mxu0
  %v5648 = vadd.f32 0.0, %v5647
  %v5649 = vpop.f32.mrf.mxu0
  %5650 = vmatprep.mubr.f32.mxu0 0.0
  %5651 = vmatmul.mubr.f32.gmra.mxu0 %v5571
  %v5652 = vpop.f32.mrf.mxu0
  %v5653 = vadd.f32 0.0, %v5652
  %v5654 = vpop.f32.mrf.mxu0
  %5655 = vmatprep.mubr.f32.mxu0 0.0
  %5656 = vmatmul.mubr.f32.gmra.mxu0 %v5574
  %v5657 = vpop.f32.mrf.mxu0
  %v5658 = vadd.f32 0.0, %v5657
  %v5659 = vpop.f32.mrf.mxu0
  %5660 = vdwg.mxu0
  %5665 = vrot.lane.b32.xlu0 %v5643, 120
  %v5666 = vpop.permute.xlu0 %5665
  %5667 = vrot.lane.b32.xlu0 %v5648, 120
  %v5668 = vpop.permute.xlu0 %5667
  %5669 = vrot.lane.b32.xlu0 %v5653, 120
  %v5670 = vpop.permute.xlu0 %5669
  %5671 = vrot.lane.b32.xlu0 %v5658, 120
  %v5672 = vpop.permute.xlu0 %5671
  %5677 = vrot.lane.b32.xlu0 %v5643, 112
  %v5678 = vpop.permute.xlu0 %5677
  %5679 = vrot.lane.b32.xlu0 %v5648, 112
  %v5680 = vpop.permute.xlu0 %5679
  %5681 = vrot.lane.b32.xlu0 %v5653, 112
  %v5682 = vpop.permute.xlu0 %5681
  %5683 = vrot.lane.b32.xlu0 %v5658, 112
  %v5684 = vpop.permute.xlu0 %5683
  %5689 = vrot.lane.b32.xlu0 %v5643, 104
  %v5690 = vpop.permute.xlu0 %5689
  %5691 = vrot.lane.b32.xlu0 %v5648, 104
  %v5692 = vpop.permute.xlu0 %5691
  %5693 = vrot.lane.b32.xlu0 %v5653, 104
  %v5694 = vpop.permute.xlu0 %5693
  %5695 = vrot.lane.b32.xlu0 %v5658, 104
  %v5696 = vpop.permute.xlu0 %5695
  %5701 = vrot.lane.b32.xlu0 %v5643, 96
  %v5702 = vpop.permute.xlu0 %5701
  %5703 = vrot.lane.b32.xlu0 %v5648, 96
  %v5704 = vpop.permute.xlu0 %5703
  %5705 = vrot.lane.b32.xlu0 %v5653, 96
  %v5706 = vpop.permute.xlu0 %5705
  %5707 = vrot.lane.b32.xlu0 %v5658, 96
  %v5708 = vpop.permute.xlu0 %5707
  %5713 = vrot.lane.b32.xlu0 %v5643, 88
  %v5714 = vpop.permute.xlu0 %5713
  %5715 = vrot.lane.b32.xlu0 %v5648, 88
  %v5716 = vpop.permute.xlu0 %5715
  %5717 = vrot.lane.b32.xlu0 %v5653, 88
  %v5718 = vpop.permute.xlu0 %5717
  %5719 = vrot.lane.b32.xlu0 %v5658, 88
  %v5720 = vpop.permute.xlu0 %5719
  %5725 = vrot.lane.b32.xlu0 %v5643, 80
  %v5726 = vpop.permute.xlu0 %5725
  %5727 = vrot.lane.b32.xlu0 %v5648, 80
  %v5728 = vpop.permute.xlu0 %5727
  %5729 = vrot.lane.b32.xlu0 %v5653, 80
  %v5730 = vpop.permute.xlu0 %5729
  %5731 = vrot.lane.b32.xlu0 %v5658, 80
  %v5732 = vpop.permute.xlu0 %5731
  %5737 = vrot.lane.b32.xlu0 %v5643, 72
  %v5738 = vpop.permute.xlu0 %5737
  %5739 = vrot.lane.b32.xlu0 %v5648, 72
  %v5740 = vpop.permute.xlu0 %5739
  %5741 = vrot.lane.b32.xlu0 %v5653, 72
  %v5742 = vpop.permute.xlu0 %5741
  %5743 = vrot.lane.b32.xlu0 %v5658, 72
  %v5744 = vpop.permute.xlu0 %5743
  %v5749 = vcombine.low %v5643, %v5678
  %v5750 = vcombine.high %v5643, %v5678
  %v5752 = vunpack.c.l.s4 1983009808
  %v5753 = vunpack.c.0.s8 %v5752
  %v5754 = vlaneseq
  %v5755 = vshrl.u32 %v5754, 7
  %v5756 = vsub.s32 %v5753, %v5755
  %v5757 = vrot.slane %v5749, %v5756
  %v5759 = vunpack.c.l.s4 1983009808
  %v5760 = vunpack.c.0.s8 %v5759
  %v5761 = vlaneseq
  %v5762 = vshrl.u32 %v5761, 7
  %v5763 = vsub.s32 %v5760, %v5762
  %v5764 = vrot.slane %v5750, %v5763
  %v5765 = vcombine.low %v5666, %v5690
  %v5766 = vcombine.high %v5666, %v5690
  %v5768 = vunpack.c.l.s4 1983009808
  %v5769 = vunpack.c.0.s8 %v5768
  %v5770 = vlaneseq
  %v5771 = vshrl.u32 %v5770, 7
  %v5772 = vsub.s32 %v5769, %v5771
  %v5773 = vrot.slane %v5765, %v5772
  %v5775 = vunpack.c.l.s4 1983009808
  %v5776 = vunpack.c.0.s8 %v5775
  %v5777 = vlaneseq
  %v5778 = vshrl.u32 %v5777, 7
  %v5779 = vsub.s32 %v5776, %v5778
  %v5780 = vrot.slane %v5766, %v5779
  %v5781 = vcombine.low %v5702, %v5726
  %v5782 = vcombine.high %v5702, %v5726
  %v5784 = vunpack.c.l.s4 1983009808
  %v5785 = vunpack.c.0.s8 %v5784
  %v5786 = vlaneseq
  %v5787 = vshrl.u32 %v5786, 7
  %v5788 = vsub.s32 %v5785, %v5787
  %v5789 = vrot.slane %v5781, %v5788
  %v5791 = vunpack.c.l.s4 1983009808
  %v5792 = vunpack.c.0.s8 %v5791
  %v5793 = vlaneseq
  %v5794 = vshrl.u32 %v5793, 7
  %v5795 = vsub.s32 %v5792, %v5794
  %v5796 = vrot.slane %v5782, %v5795
  %v5797 = vcombine.low %v5714, %v5738
  %v5798 = vcombine.high %v5714, %v5738
  %v5800 = vunpack.c.l.s4 1983009808
  %v5801 = vunpack.c.0.s8 %v5800
  %v5802 = vlaneseq
  %v5803 = vshrl.u32 %v5802, 7
  %v5804 = vsub.s32 %v5801, %v5803
  %v5805 = vrot.slane %v5797, %v5804
  %v5807 = vunpack.c.l.s4 1983009808
  %v5808 = vunpack.c.0.s8 %v5807
  %v5809 = vlaneseq
  %v5810 = vshrl.u32 %v5809, 7
  %v5811 = vsub.s32 %v5808, %v5810
  %v5812 = vrot.slane %v5798, %v5811
  %v5813 = vcombine.low %v5757, %v5773
  %v5814 = vcombine.high %v5757, %v5773
  %v5816 = vunpack.c.l.s4 1934713408
  %v5817 = vunpack.c.0.s8 %v5816
  %v5818 = vlaneseq
  %v5819 = vshrl.u32 %v5818, 7
  %v5820 = vsub.s32 %v5817, %v5819
  %v5821 = vrot.slane %v5813, %v5820
  %v5823 = vunpack.c.l.s4 1934713408
  %v5824 = vunpack.c.0.s8 %v5823
  %v5825 = vlaneseq
  %v5826 = vshrl.u32 %v5825, 7
  %v5827 = vsub.s32 %v5824, %v5826
  %v5828 = vrot.slane %v5814, %v5827
  %v5829 = vcombine.low %v5764, %v5780
  %v5830 = vcombine.high %v5764, %v5780
  %v5832 = vunpack.c.l.s4 1934713408
  %v5833 = vunpack.c.0.s8 %v5832
  %v5834 = vlaneseq
  %v5835 = vshrl.u32 %v5834, 7
  %v5836 = vsub.s32 %v5833, %v5835
  %v5837 = vrot.slane %v5829, %v5836
  %v5839 = vunpack.c.l.s4 1934713408
  %v5840 = vunpack.c.0.s8 %v5839
  %v5841 = vlaneseq
  %v5842 = vshrl.u32 %v5841, 7
  %v5843 = vsub.s32 %v5840, %v5842
  %v5844 = vrot.slane %v5830, %v5843
  %v5845 = vcombine.low %v5789, %v5805
  %v5846 = vcombine.high %v5789, %v5805
  %v5848 = vunpack.c.l.s4 1934713408
  %v5849 = vunpack.c.0.s8 %v5848
  %v5850 = vlaneseq
  %v5851 = vshrl.u32 %v5850, 7
  %v5852 = vsub.s32 %v5849, %v5851
  %v5853 = vrot.slane %v5845, %v5852
  %v5855 = vunpack.c.l.s4 1934713408
  %v5856 = vunpack.c.0.s8 %v5855
  %v5857 = vlaneseq
  %v5858 = vshrl.u32 %v5857, 7
  %v5859 = vsub.s32 %v5856, %v5858
  %v5860 = vrot.slane %v5846, %v5859
  %v5861 = vcombine.low %v5796, %v5812
  %v5862 = vcombine.high %v5796, %v5812
  %v5864 = vunpack.c.l.s4 1934713408
  %v5865 = vunpack.c.0.s8 %v5864
  %v5866 = vlaneseq
  %v5867 = vshrl.u32 %v5866, 7
  %v5868 = vsub.s32 %v5865, %v5867
  %v5869 = vrot.slane %v5861, %v5868
  %v5871 = vunpack.c.l.s4 1934713408
  %v5872 = vunpack.c.0.s8 %v5871
  %v5873 = vlaneseq
  %v5874 = vshrl.u32 %v5873, 7
  %v5875 = vsub.s32 %v5872, %v5874
  %v5876 = vrot.slane %v5862, %v5875
  %v5877 = vcombine.low %v5821, %v5853
  %v5878 = vcombine.high %v5821, %v5853
  %v5879 = vcombine.low %v5828, %v5860
  %v5880 = vcombine.high %v5828, %v5860
  %v5881 = vcombine.low %v5837, %v5869
  %v5882 = vcombine.high %v5837, %v5869
  %v5883 = vcombine.low %v5844, %v5876
  %v5884 = vcombine.high %v5844, %v5876
  %v5885 = vcombine.low %v5648, %v5680
  %v5886 = vcombine.high %v5648, %v5680
  %v5888 = vunpack.c.l.s4 1983009808
  %v5889 = vunpack.c.0.s8 %v5888
  %v5890 = vlaneseq
  %v5891 = vshrl.u32 %v5890, 7
  %v5892 = vsub.s32 %v5889, %v5891
  %v5893 = vrot.slane %v5885, %v5892
  %v5895 = vunpack.c.l.s4 1983009808
  %v5896 = vunpack.c.0.s8 %v5895
  %v5897 = vlaneseq
  %v5898 = vshrl.u32 %v5897, 7
  %v5899 = vsub.s32 %v5896, %v5898
  %v5900 = vrot.slane %v5886, %v5899
  %v5901 = vcombine.low %v5668, %v5692
  %v5902 = vcombine.high %v5668, %v5692
  %v5904 = vunpack.c.l.s4 1983009808
  %v5905 = vunpack.c.0.s8 %v5904
  %v5906 = vlaneseq
  %v5907 = vshrl.u32 %v5906, 7
  %v5908 = vsub.s32 %v5905, %v5907
  %v5909 = vrot.slane %v5901, %v5908
  %v5911 = vunpack.c.l.s4 1983009808
  %v5912 = vunpack.c.0.s8 %v5911
  %v5913 = vlaneseq
  %v5914 = vshrl.u32 %v5913, 7
  %v5915 = vsub.s32 %v5912, %v5914
  %v5916 = vrot.slane %v5902, %v5915
  %v5917 = vcombine.low %v5704, %v5728
  %v5918 = vcombine.high %v5704, %v5728
  %v5920 = vunpack.c.l.s4 1983009808
  %v5921 = vunpack.c.0.s8 %v5920
  %v5922 = vlaneseq
  %v5923 = vshrl.u32 %v5922, 7
  %v5924 = vsub.s32 %v5921, %v5923
  %v5925 = vrot.slane %v5917, %v5924
  %v5927 = vunpack.c.l.s4 1983009808
  %v5928 = vunpack.c.0.s8 %v5927
  %v5929 = vlaneseq
  %v5930 = vshrl.u32 %v5929, 7
  %v5931 = vsub.s32 %v5928, %v5930
  %v5932 = vrot.slane %v5918, %v5931
  %v5933 = vcombine.low %v5716, %v5740
  %v5934 = vcombine.high %v5716, %v5740
  %v5936 = vunpack.c.l.s4 1983009808
  %v5937 = vunpack.c.0.s8 %v5936
  %v5938 = vlaneseq
  %v5939 = vshrl.u32 %v5938, 7
  %v5940 = vsub.s32 %v5937, %v5939
  %v5941 = vrot.slane %v5933, %v5940
  %v5943 = vunpack.c.l.s4 1983009808
  %v5944 = vunpack.c.0.s8 %v5943
  %v5945 = vlaneseq
  %v5946 = vshrl.u32 %v5945, 7
  %v5947 = vsub.s32 %v5944, %v5946
  %v5948 = vrot.slane %v5934, %v5947
  %v5949 = vcombine.low %v5893, %v5909
  %v5950 = vcombine.high %v5893, %v5909
  %v5952 = vunpack.c.l.s4 1934713408
  %v5953 = vunpack.c.0.s8 %v5952
  %v5954 = vlaneseq
  %v5955 = vshrl.u32 %v5954, 7
  %v5956 = vsub.s32 %v5953, %v5955
  %v5957 = vrot.slane %v5949, %v5956
  %v5959 = vunpack.c.l.s4 1934713408
  %v5960 = vunpack.c.0.s8 %v5959
  %v5961 = vlaneseq
  %v5962 = vshrl.u32 %v5961, 7
  %v5963 = vsub.s32 %v5960, %v5962
  %v5964 = vrot.slane %v5950, %v5963
  %v5965 = vcombine.low %v5900, %v5916
  %v5966 = vcombine.high %v5900, %v5916
  %v5968 = vunpack.c.l.s4 1934713408
  %v5969 = vunpack.c.0.s8 %v5968
  %v5970 = vlaneseq
  %v5971 = vshrl.u32 %v5970, 7
  %v5972 = vsub.s32 %v5969, %v5971
  %v5973 = vrot.slane %v5965, %v5972
  %v5975 = vunpack.c.l.s4 1934713408
  %v5976 = vunpack.c.0.s8 %v5975
  %v5977 = vlaneseq
  %v5978 = vshrl.u32 %v5977, 7
  %v5979 = vsub.s32 %v5976, %v5978
  %v5980 = vrot.slane %v5966, %v5979
  %v5981 = vcombine.low %v5925, %v5941
  %v5982 = vcombine.high %v5925, %v5941
  %v5984 = vunpack.c.l.s4 1934713408
  %v5985 = vunpack.c.0.s8 %v5984
  %v5986 = vlaneseq
  %v5987 = vshrl.u32 %v5986, 7
  %v5988 = vsub.s32 %v5985, %v5987
  %v5989 = vrot.slane %v5981, %v5988
  %v5991 = vunpack.c.l.s4 1934713408
  %v5992 = vunpack.c.0.s8 %v5991
  %v5993 = vlaneseq
  %v5994 = vshrl.u32 %v5993, 7
  %v5995 = vsub.s32 %v5992, %v5994
  %v5996 = vrot.slane %v5982, %v5995
  %v5997 = vcombine.low %v5932, %v5948
  %v5998 = vcombine.high %v5932, %v5948
  %v6000 = vunpack.c.l.s4 1934713408
  %v6001 = vunpack.c.0.s8 %v6000
  %v6002 = vlaneseq
  %v6003 = vshrl.u32 %v6002, 7
  %v6004 = vsub.s32 %v6001, %v6003
  %v6005 = vrot.slane %v5997, %v6004
  %v6007 = vunpack.c.l.s4 1934713408
  %v6008 = vunpack.c.0.s8 %v6007
  %v6009 = vlaneseq
  %v6010 = vshrl.u32 %v6009, 7
  %v6011 = vsub.s32 %v6008, %v6010
  %v6012 = vrot.slane %v5998, %v6011
  %v6013 = vcombine.low %v5957, %v5989
  %v6014 = vcombine.high %v5957, %v5989
  %v6015 = vcombine.low %v5964, %v5996
  %v6016 = vcombine.high %v5964, %v5996
  %v6017 = vcombine.low %v5973, %v6005
  %v6018 = vcombine.high %v5973, %v6005
  %v6019 = vcombine.low %v5980, %v6012
  %v6020 = vcombine.high %v5980, %v6012
  %v6021 = vcombine.low %v5653, %v5682
  %v6022 = vcombine.high %v5653, %v5682
  %v6024 = vunpack.c.l.s4 1983009808
  %v6025 = vunpack.c.0.s8 %v6024
  %v6026 = vlaneseq
  %v6027 = vshrl.u32 %v6026, 7
  %v6028 = vsub.s32 %v6025, %v6027
  %v6029 = vrot.slane %v6021, %v6028
  %v6031 = vunpack.c.l.s4 1983009808
  %v6032 = vunpack.c.0.s8 %v6031
  %v6033 = vlaneseq
  %v6034 = vshrl.u32 %v6033, 7
  %v6035 = vsub.s32 %v6032, %v6034
  %v6036 = vrot.slane %v6022, %v6035
  %v6037 = vcombine.low %v5670, %v5694
  %v6038 = vcombine.high %v5670, %v5694
  %v6040 = vunpack.c.l.s4 1983009808
  %v6041 = vunpack.c.0.s8 %v6040
  %v6042 = vlaneseq
  %v6043 = vshrl.u32 %v6042, 7
  %v6044 = vsub.s32 %v6041, %v6043
  %v6045 = vrot.slane %v6037, %v6044
  %v6047 = vunpack.c.l.s4 1983009808
  %v6048 = vunpack.c.0.s8 %v6047
  %v6049 = vlaneseq
  %v6050 = vshrl.u32 %v6049, 7
  %v6051 = vsub.s32 %v6048, %v6050
  %v6052 = vrot.slane %v6038, %v6051
  %v6053 = vcombine.low %v5706, %v5730
  %v6054 = vcombine.high %v5706, %v5730
  %v6056 = vunpack.c.l.s4 1983009808
  %v6057 = vunpack.c.0.s8 %v6056
  %v6058 = vlaneseq
  %v6059 = vshrl.u32 %v6058, 7
  %v6060 = vsub.s32 %v6057, %v6059
  %v6061 = vrot.slane %v6053, %v6060
  %v6063 = vunpack.c.l.s4 1983009808
  %v6064 = vunpack.c.0.s8 %v6063
  %v6065 = vlaneseq
  %v6066 = vshrl.u32 %v6065, 7
  %v6067 = vsub.s32 %v6064, %v6066
  %v6068 = vrot.slane %v6054, %v6067
  %v6069 = vcombine.low %v5718, %v5742
  %v6070 = vcombine.high %v5718, %v5742
  %v6072 = vunpack.c.l.s4 1983009808
  %v6073 = vunpack.c.0.s8 %v6072
  %v6074 = vlaneseq
  %v6075 = vshrl.u32 %v6074, 7
  %v6076 = vsub.s32 %v6073, %v6075
  %v6077 = vrot.slane %v6069, %v6076
  %v6079 = vunpack.c.l.s4 1983009808
  %v6080 = vunpack.c.0.s8 %v6079
  %v6081 = vlaneseq
  %v6082 = vshrl.u32 %v6081, 7
  %v6083 = vsub.s32 %v6080, %v6082
  %v6084 = vrot.slane %v6070, %v6083
  %v6085 = vcombine.low %v6029, %v6045
  %v6086 = vcombine.high %v6029, %v6045
  %v6088 = vunpack.c.l.s4 1934713408
  %v6089 = vunpack.c.0.s8 %v6088
  %v6090 = vlaneseq
  %v6091 = vshrl.u32 %v6090, 7
  %v6092 = vsub.s32 %v6089, %v6091
  %v6093 = vrot.slane %v6085, %v6092
  %v6095 = vunpack.c.l.s4 1934713408
  %v6096 = vunpack.c.0.s8 %v6095
  %v6097 = vlaneseq
  %v6098 = vshrl.u32 %v6097, 7
  %v6099 = vsub.s32 %v6096, %v6098
  %v6100 = vrot.slane %v6086, %v6099
  %v6101 = vcombine.low %v6036, %v6052
  %v6102 = vcombine.high %v6036, %v6052
  %v6104 = vunpack.c.l.s4 1934713408
  %v6105 = vunpack.c.0.s8 %v6104
  %v6106 = vlaneseq
  %v6107 = vshrl.u32 %v6106, 7
  %v6108 = vsub.s32 %v6105, %v6107
  %v6109 = vrot.slane %v6101, %v6108
  %v6111 = vunpack.c.l.s4 1934713408
  %v6112 = vunpack.c.0.s8 %v6111
  %v6113 = vlaneseq
  %v6114 = vshrl.u32 %v6113, 7
  %v6115 = vsub.s32 %v6112, %v6114
  %v6116 = vrot.slane %v6102, %v6115
  %v6117 = vcombine.low %v6061, %v6077
  %v6118 = vcombine.high %v6061, %v6077
  %v6120 = vunpack.c.l.s4 1934713408
  %v6121 = vunpack.c.0.s8 %v6120
  %v6122 = vlaneseq
  %v6123 = vshrl.u32 %v6122, 7
  %v6124 = vsub.s32 %v6121, %v6123
  %v6125 = vrot.slane %v6117, %v6124
  %v6127 = vunpack.c.l.s4 1934713408
  %v6128 = vunpack.c.0.s8 %v6127
  %v6129 = vlaneseq
  %v6130 = vshrl.u32 %v6129, 7
  %v6131 = vsub.s32 %v6128, %v6130
  %v6132 = vrot.slane %v6118, %v6131
  %v6133 = vcombine.low %v6068, %v6084
  %v6134 = vcombine.high %v6068, %v6084
  %v6136 = vunpack.c.l.s4 1934713408
  %v6137 = vunpack.c.0.s8 %v6136
  %v6138 = vlaneseq
  %v6139 = vshrl.u32 %v6138, 7
  %v6140 = vsub.s32 %v6137, %v6139
  %v6141 = vrot.slane %v6133, %v6140
  %v6143 = vunpack.c.l.s4 1934713408
  %v6144 = vunpack.c.0.s8 %v6143
  %v6145 = vlaneseq
  %v6146 = vshrl.u32 %v6145, 7
  %v6147 = vsub.s32 %v6144, %v6146
  %v6148 = vrot.slane %v6134, %v6147
  %v6149 = vcombine.low %v6093, %v6125
  %v6150 = vcombine.high %v6093, %v6125
  %v6151 = vcombine.low %v6100, %v6132
  %v6152 = vcombine.high %v6100, %v6132
  %v6153 = vcombine.low %v6109, %v6141
  %v6154 = vcombine.high %v6109, %v6141
  %v6155 = vcombine.low %v6116, %v6148
  %v6156 = vcombine.high %v6116, %v6148
  %v6157 = vcombine.low %v5658, %v5684
  %v6158 = vcombine.high %v5658, %v5684
  %v6160 = vunpack.c.l.s4 1983009808
  %v6161 = vunpack.c.0.s8 %v6160
  %v6162 = vlaneseq
  %v6163 = vshrl.u32 %v6162, 7
  %v6164 = vsub.s32 %v6161, %v6163
  %v6165 = vrot.slane %v6157, %v6164
  %v6167 = vunpack.c.l.s4 1983009808
  %v6168 = vunpack.c.0.s8 %v6167
  %v6169 = vlaneseq
  %v6170 = vshrl.u32 %v6169, 7
  %v6171 = vsub.s32 %v6168, %v6170
  %v6172 = vrot.slane %v6158, %v6171
  %v6173 = vcombine.low %v5672, %v5696
  %v6174 = vcombine.high %v5672, %v5696
  %v6176 = vunpack.c.l.s4 1983009808
  %v6177 = vunpack.c.0.s8 %v6176
  %v6178 = vlaneseq
  %v6179 = vshrl.u32 %v6178, 7
  %v6180 = vsub.s32 %v6177, %v6179
  %v6181 = vrot.slane %v6173, %v6180
  %v6183 = vunpack.c.l.s4 1983009808
  %v6184 = vunpack.c.0.s8 %v6183
  %v6185 = vlaneseq
  %v6186 = vshrl.u32 %v6185, 7
  %v6187 = vsub.s32 %v6184, %v6186
  %v6188 = vrot.slane %v6174, %v6187
  %v6189 = vcombine.low %v5708, %v5732
  %v6190 = vcombine.high %v5708, %v5732
  %v6192 = vunpack.c.l.s4 1983009808
  %v6193 = vunpack.c.0.s8 %v6192
  %v6194 = vlaneseq
  %v6195 = vshrl.u32 %v6194, 7
  %v6196 = vsub.s32 %v6193, %v6195
  %v6197 = vrot.slane %v6189, %v6196
  %v6199 = vunpack.c.l.s4 1983009808
  %v6200 = vunpack.c.0.s8 %v6199
  %v6201 = vlaneseq
  %v6202 = vshrl.u32 %v6201, 7
  %v6203 = vsub.s32 %v6200, %v6202
  %v6204 = vrot.slane %v6190, %v6203
  %v6205 = vcombine.low %v5720, %v5744
  %v6206 = vcombine.high %v5720, %v5744
  %v6208 = vunpack.c.l.s4 1983009808
  %v6209 = vunpack.c.0.s8 %v6208
  %v6210 = vlaneseq
  %v6211 = vshrl.u32 %v6210, 7
  %v6212 = vsub.s32 %v6209, %v6211
  %v6213 = vrot.slane %v6205, %v6212
  %v6215 = vunpack.c.l.s4 1983009808
  %v6216 = vunpack.c.0.s8 %v6215
  %v6217 = vlaneseq
  %v6218 = vshrl.u32 %v6217, 7
  %v6219 = vsub.s32 %v6216, %v6218
  %v6220 = vrot.slane %v6206, %v6219
  %v6221 = vcombine.low %v6165, %v6181
  %v6222 = vcombine.high %v6165, %v6181
  %v6224 = vunpack.c.l.s4 1934713408
  %v6225 = vunpack.c.0.s8 %v6224
  %v6226 = vlaneseq
  %v6227 = vshrl.u32 %v6226, 7
  %v6228 = vsub.s32 %v6225, %v6227
  %v6229 = vrot.slane %v6221, %v6228
  %v6231 = vunpack.c.l.s4 1934713408
  %v6232 = vunpack.c.0.s8 %v6231
  %v6233 = vlaneseq
  %v6234 = vshrl.u32 %v6233, 7
  %v6235 = vsub.s32 %v6232, %v6234
  %v6236 = vrot.slane %v6222, %v6235
  %v6237 = vcombine.low %v6172, %v6188
  %v6238 = vcombine.high %v6172, %v6188
  %v6240 = vunpack.c.l.s4 1934713408
  %v6241 = vunpack.c.0.s8 %v6240
  %v6242 = vlaneseq
  %v6243 = vshrl.u32 %v6242, 7
  %v6244 = vsub.s32 %v6241, %v6243
  %v6245 = vrot.slane %v6237, %v6244
  %v6247 = vunpack.c.l.s4 1934713408
  %v6248 = vunpack.c.0.s8 %v6247
  %v6249 = vlaneseq
  %v6250 = vshrl.u32 %v6249, 7
  %v6251 = vsub.s32 %v6248, %v6250
  %v6252 = vrot.slane %v6238, %v6251
  %v6253 = vcombine.low %v6197, %v6213
  %v6254 = vcombine.high %v6197, %v6213
  %v6256 = vunpack.c.l.s4 1934713408
  %v6257 = vunpack.c.0.s8 %v6256
  %v6258 = vlaneseq
  %v6259 = vshrl.u32 %v6258, 7
  %v6260 = vsub.s32 %v6257, %v6259
  %v6261 = vrot.slane %v6253, %v6260
  %v6263 = vunpack.c.l.s4 1934713408
  %v6264 = vunpack.c.0.s8 %v6263
  %v6265 = vlaneseq
  %v6266 = vshrl.u32 %v6265, 7
  %v6267 = vsub.s32 %v6264, %v6266
  %v6268 = vrot.slane %v6254, %v6267
  %v6269 = vcombine.low %v6204, %v6220
  %v6270 = vcombine.high %v6204, %v6220
  %v6272 = vunpack.c.l.s4 1934713408
  %v6273 = vunpack.c.0.s8 %v6272
  %v6274 = vlaneseq
  %v6275 = vshrl.u32 %v6274, 7
  %v6276 = vsub.s32 %v6273, %v6275
  %v6277 = vrot.slane %v6269, %v6276
  %v6279 = vunpack.c.l.s4 1934713408
  %v6280 = vunpack.c.0.s8 %v6279
  %v6281 = vlaneseq
  %v6282 = vshrl.u32 %v6281, 7
  %v6283 = vsub.s32 %v6280, %v6282
  %v6284 = vrot.slane %v6270, %v6283
  %v6285 = vcombine.low %v6229, %v6261
  %v6286 = vcombine.high %v6229, %v6261
  %v6287 = vcombine.low %v6236, %v6268
  %v6288 = vcombine.high %v6236, %v6268
  %v6289 = vcombine.low %v6245, %v6277
  %v6290 = vcombine.high %v6245, %v6277
  %v6291 = vcombine.low %v6252, %v6284
  %v6292 = vcombine.high %v6252, %v6284
  %v6294 = vsel %vm682, %v5877, 0
  %6296 = vmatprep.subr.mxu0 0.0
  %6297 = vmatpush1.msra.mxu0 0.0
  %6298 = vmatprep.subr.mxu0 0.0
  %6299 = vmatpush1.msra.mxu0 0.0
  %6300 = vmatprep.subr.mxu0 0.0
  %6301 = vmatpush1.msra.mxu0 0.0
  %6302 = vmatprep.subr.mxu0 0.0
  %6303 = vmatpush1.msra.mxu0 0.0
  %6304 = vmatprep.subr.mxu0 0.0
  %6305 = vmatpush1.msra.mxu0 0.0
  %6306 = vmatprep.subr.mxu0 0.0
  %6307 = vmatpush1.msra.mxu0 0.0
  %6308 = vmatprep.subr.mxu0 0.0
  %6309 = vmatpush1.msra.mxu0 0.0
  %6310 = vmatprep.subr.mxu0 0.0
  %6311 = vmatpush1.msra.mxu0 0.0
  %6312 = vmatprep.subr.mxu0 0.0
  %6313 = vmatpush1.msra.mxu0 0.0
  %6314 = vmatprep.subr.mxu0 0.0
  %6315 = vmatpush1.msra.mxu0 0.0
  %6316 = vmatprep.subr.mxu0 0.0
  %6317 = vmatpush1.msra.mxu0 0.0
  %6318 = vmatprep.subr.mxu0 0.0
  %6319 = vmatpush1.msra.mxu0 0.0
  %6320 = vmatprep.subr.mxu0 0.0
  %6321 = vmatpush1.msra.mxu0 0.0
  %6322 = vmatprep.subr.mxu0 0.0
  %6323 = vmatpush1.msra.mxu0 0.0
  %6324 = vmatprep.subr.mxu0 0.0
  %6325 = vmatpush1.msra.mxu0 0.0
  %6326 = vmatprep.subr.mxu0 0.0
  %6327 = vmatpush1.msra.mxu0 %v4618
  %6328 = vmatprep.subr.mxu0 0.0
  %6329 = vmatpush2.msra.mxu0 0.0
  %6330 = vmatprep.subr.mxu0 0.0
  %6331 = vmatpush2.msra.mxu0 0.0
  %6332 = vmatprep.subr.mxu0 0.0
  %6333 = vmatpush2.msra.mxu0 0.0
  %6334 = vmatprep.subr.mxu0 0.0
  %6335 = vmatpush2.msra.mxu0 0.0
  %6336 = vmatprep.subr.mxu0 0.0
  %6337 = vmatpush2.msra.mxu0 0.0
  %6338 = vmatprep.subr.mxu0 0.0
  %6339 = vmatpush2.msra.mxu0 0.0
  %6340 = vmatprep.subr.mxu0 0.0
  %6341 = vmatpush2.msra.mxu0 0.0
  %6342 = vmatprep.subr.mxu0 0.0
  %6343 = vmatpush2.msra.mxu0 0.0
  %6344 = vmatprep.subr.mxu0 0.0
  %6345 = vmatpush2.msra.mxu0 0.0
  %6346 = vmatprep.subr.mxu0 0.0
  %6347 = vmatpush2.msra.mxu0 0.0
  %6348 = vmatprep.subr.mxu0 0.0
  %6349 = vmatpush2.msra.mxu0 0.0
  %6350 = vmatprep.subr.mxu0 0.0
  %6351 = vmatpush2.msra.mxu0 0.0
  %6352 = vmatprep.subr.mxu0 0.0
  %6353 = vmatpush2.msra.mxu0 0.0
  %6354 = vmatprep.subr.mxu0 0.0
  %6355 = vmatpush2.msra.mxu0 0.0
  %6356 = vmatprep.subr.mxu0 0.0
  %6357 = vmatpush2.msra.mxu0 0.0
  %6358 = vmatprep.subr.mxu0 0.0
  %6359 = vmatpush2.msra.mxu0 0.0
  %6360 = vmatprep.mubr.f32.mxu0 0.0
  %6361 = vmatmul.mubr.f32.gmra.mxu0 %v6294
  %v6362 = vpop.f32.mrf.mxu0
  %v6363 = vadd.f32 0.0, %v6362
  %v6364 = vpop.f32.mrf.mxu0
  %6365 = vdwg.mxu0
  %v6367 = vsel %vm682, %v5878, 0
  %6369 = vmatprep.subr.mxu0 0.0
  %6370 = vmatpush1.msra.mxu0 0.0
  %6371 = vmatprep.subr.mxu0 0.0
  %6372 = vmatpush1.msra.mxu0 0.0
  %6373 = vmatprep.subr.mxu0 0.0
  %6374 = vmatpush1.msra.mxu0 0.0
  %6375 = vmatprep.subr.mxu0 0.0
  %6376 = vmatpush1.msra.mxu0 0.0
  %6377 = vmatprep.subr.mxu0 0.0
  %6378 = vmatpush1.msra.mxu0 0.0
  %6379 = vmatprep.subr.mxu0 0.0
  %6380 = vmatpush1.msra.mxu0 0.0
  %6381 = vmatprep.subr.mxu0 0.0
  %6382 = vmatpush1.msra.mxu0 0.0
  %6383 = vmatprep.subr.mxu0 0.0
  %6384 = vmatpush1.msra.mxu0 0.0
  %6385 = vmatprep.subr.mxu0 0.0
  %6386 = vmatpush1.msra.mxu0 0.0
  %6387 = vmatprep.subr.mxu0 0.0
  %6388 = vmatpush1.msra.mxu0 0.0
  %6389 = vmatprep.subr.mxu0 0.0
  %6390 = vmatpush1.msra.mxu0 0.0
  %6391 = vmatprep.subr.mxu0 0.0
  %6392 = vmatpush1.msra.mxu0 0.0
  %6393 = vmatprep.subr.mxu0 0.0
  %6394 = vmatpush1.msra.mxu0 0.0
  %6395 = vmatprep.subr.mxu0 0.0
  %6396 = vmatpush1.msra.mxu0 0.0
  %6397 = vmatprep.subr.mxu0 0.0
  %6398 = vmatpush1.msra.mxu0 0.0
  %6399 = vmatprep.subr.mxu0 0.0
  %6400 = vmatpush1.msra.mxu0 %v4623
  %6401 = vmatprep.subr.mxu0 0.0
  %6402 = vmatpush2.msra.mxu0 0.0
  %6403 = vmatprep.subr.mxu0 0.0
  %6404 = vmatpush2.msra.mxu0 0.0
  %6405 = vmatprep.subr.mxu0 0.0
  %6406 = vmatpush2.msra.mxu0 0.0
  %6407 = vmatprep.subr.mxu0 0.0
  %6408 = vmatpush2.msra.mxu0 0.0
  %6409 = vmatprep.subr.mxu0 0.0
  %6410 = vmatpush2.msra.mxu0 0.0
  %6411 = vmatprep.subr.mxu0 0.0
  %6412 = vmatpush2.msra.mxu0 0.0
  %6413 = vmatprep.subr.mxu0 0.0
  %6414 = vmatpush2.msra.mxu0 0.0
  %6415 = vmatprep.subr.mxu0 0.0
  %6416 = vmatpush2.msra.mxu0 0.0
  %6417 = vmatprep.subr.mxu0 0.0
  %6418 = vmatpush2.msra.mxu0 0.0
  %6419 = vmatprep.subr.mxu0 0.0
  %6420 = vmatpush2.msra.mxu0 0.0
  %6421 = vmatprep.subr.mxu0 0.0
  %6422 = vmatpush2.msra.mxu0 0.0
  %6423 = vmatprep.subr.mxu0 0.0
  %6424 = vmatpush2.msra.mxu0 0.0
  %6425 = vmatprep.subr.mxu0 0.0
  %6426 = vmatpush2.msra.mxu0 0.0
  %6427 = vmatprep.subr.mxu0 0.0
  %6428 = vmatpush2.msra.mxu0 0.0
  %6429 = vmatprep.subr.mxu0 0.0
  %6430 = vmatpush2.msra.mxu0 0.0
  %6431 = vmatprep.subr.mxu0 0.0
  %6432 = vmatpush2.msra.mxu0 0.0
  %6433 = vmatprep.mubr.f32.mxu0 0.0
  %6434 = vmatmul.mubr.f32.gmra.mxu0 %v6367
  %v6435 = vpop.f32.mrf.mxu0
  %v6436 = vadd.f32 0.0, %v6435
  %v6437 = vpop.f32.mrf.mxu0
  %6438 = vdwg.mxu0
  %v6440 = vsel %vm682, %v5879, 0
  %6442 = vmatprep.subr.mxu0 0.0
  %6443 = vmatpush1.msra.mxu0 0.0
  %6444 = vmatprep.subr.mxu0 0.0
  %6445 = vmatpush1.msra.mxu0 0.0
  %6446 = vmatprep.subr.mxu0 0.0
  %6447 = vmatpush1.msra.mxu0 0.0
  %6448 = vmatprep.subr.mxu0 0.0
  %6449 = vmatpush1.msra.mxu0 0.0
  %6450 = vmatprep.subr.mxu0 0.0
  %6451 = vmatpush1.msra.mxu0 0.0
  %6452 = vmatprep.subr.mxu0 0.0
  %6453 = vmatpush1.msra.mxu0 0.0
  %6454 = vmatprep.subr.mxu0 0.0
  %6455 = vmatpush1.msra.mxu0 0.0
  %6456 = vmatprep.subr.mxu0 0.0
  %6457 = vmatpush1.msra.mxu0 0.0
  %6458 = vmatprep.subr.mxu0 0.0
  %6459 = vmatpush1.msra.mxu0 0.0
  %6460 = vmatprep.subr.mxu0 0.0
  %6461 = vmatpush1.msra.mxu0 0.0
  %6462 = vmatprep.subr.mxu0 0.0
  %6463 = vmatpush1.msra.mxu0 0.0
  %6464 = vmatprep.subr.mxu0 0.0
  %6465 = vmatpush1.msra.mxu0 0.0
  %6466 = vmatprep.subr.mxu0 0.0
  %6467 = vmatpush1.msra.mxu0 0.0
  %6468 = vmatprep.subr.mxu0 0.0
  %6469 = vmatpush1.msra.mxu0 0.0
  %6470 = vmatprep.subr.mxu0 0.0
  %6471 = vmatpush1.msra.mxu0 0.0
  %6472 = vmatprep.subr.mxu0 0.0
  %6473 = vmatpush1.msra.mxu0 %v4628
  %6474 = vmatprep.subr.mxu0 0.0
  %6475 = vmatpush2.msra.mxu0 0.0
  %6476 = vmatprep.subr.mxu0 0.0
  %6477 = vmatpush2.msra.mxu0 0.0
  %6478 = vmatprep.subr.mxu0 0.0
  %6479 = vmatpush2.msra.mxu0 0.0
  %6480 = vmatprep.subr.mxu0 0.0
  %6481 = vmatpush2.msra.mxu0 0.0
  %6482 = vmatprep.subr.mxu0 0.0
  %6483 = vmatpush2.msra.mxu0 0.0
  %6484 = vmatprep.subr.mxu0 0.0
  %6485 = vmatpush2.msra.mxu0 0.0
  %6486 = vmatprep.subr.mxu0 0.0
  %6487 = vmatpush2.msra.mxu0 0.0
  %6488 = vmatprep.subr.mxu0 0.0
  %6489 = vmatpush2.msra.mxu0 0.0
  %6490 = vmatprep.subr.mxu0 0.0
  %6491 = vmatpush2.msra.mxu0 0.0
  %6492 = vmatprep.subr.mxu0 0.0
  %6493 = vmatpush2.msra.mxu0 0.0
  %6494 = vmatprep.subr.mxu0 0.0
  %6495 = vmatpush2.msra.mxu0 0.0
  %6496 = vmatprep.subr.mxu0 0.0
  %6497 = vmatpush2.msra.mxu0 0.0
  %6498 = vmatprep.subr.mxu0 0.0
  %6499 = vmatpush2.msra.mxu0 0.0
  %6500 = vmatprep.subr.mxu0 0.0
  %6501 = vmatpush2.msra.mxu0 0.0
  %6502 = vmatprep.subr.mxu0 0.0
  %6503 = vmatpush2.msra.mxu0 0.0
  %6504 = vmatprep.subr.mxu0 0.0
  %6505 = vmatpush2.msra.mxu0 0.0
  %6506 = vmatprep.mubr.f32.mxu0 0.0
  %6507 = vmatmul.mubr.f32.gmra.mxu0 %v6440
  %v6508 = vpop.f32.mrf.mxu0
  %v6509 = vadd.f32 0.0, %v6508
  %v6510 = vpop.f32.mrf.mxu0
  %6511 = vdwg.mxu0
  %v6513 = vsel %vm682, %v5880, 0
  %6515 = vmatprep.subr.mxu0 0.0
  %6516 = vmatpush1.msra.mxu0 0.0
  %6517 = vmatprep.subr.mxu0 0.0
  %6518 = vmatpush1.msra.mxu0 0.0
  %6519 = vmatprep.subr.mxu0 0.0
  %6520 = vmatpush1.msra.mxu0 0.0
  %6521 = vmatprep.subr.mxu0 0.0
  %6522 = vmatpush1.msra.mxu0 0.0
  %6523 = vmatprep.subr.mxu0 0.0
  %6524 = vmatpush1.msra.mxu0 0.0
  %6525 = vmatprep.subr.mxu0 0.0
  %6526 = vmatpush1.msra.mxu0 0.0
  %6527 = vmatprep.subr.mxu0 0.0
  %6528 = vmatpush1.msra.mxu0 0.0
  %6529 = vmatprep.subr.mxu0 0.0
  %6530 = vmatpush1.msra.mxu0 0.0
  %6531 = vmatprep.subr.mxu0 0.0
  %6532 = vmatpush1.msra.mxu0 0.0
  %6533 = vmatprep.subr.mxu0 0.0
  %6534 = vmatpush1.msra.mxu0 0.0
  %6535 = vmatprep.subr.mxu0 0.0
  %6536 = vmatpush1.msra.mxu0 0.0
  %6537 = vmatprep.subr.mxu0 0.0
  %6538 = vmatpush1.msra.mxu0 0.0
  %6539 = vmatprep.subr.mxu0 0.0
  %6540 = vmatpush1.msra.mxu0 0.0
  %6541 = vmatprep.subr.mxu0 0.0
  %6542 = vmatpush1.msra.mxu0 0.0
  %6543 = vmatprep.subr.mxu0 0.0
  %6544 = vmatpush1.msra.mxu0 0.0
  %6545 = vmatprep.subr.mxu0 0.0
  %6546 = vmatpush1.msra.mxu0 %v4633
  %6547 = vmatprep.subr.mxu0 0.0
  %6548 = vmatpush2.msra.mxu0 0.0
  %6549 = vmatprep.subr.mxu0 0.0
  %6550 = vmatpush2.msra.mxu0 0.0
  %6551 = vmatprep.subr.mxu0 0.0
  %6552 = vmatpush2.msra.mxu0 0.0
  %6553 = vmatprep.subr.mxu0 0.0
  %6554 = vmatpush2.msra.mxu0 0.0
  %6555 = vmatprep.subr.mxu0 0.0
  %6556 = vmatpush2.msra.mxu0 0.0
  %6557 = vmatprep.subr.mxu0 0.0
  %6558 = vmatpush2.msra.mxu0 0.0
  %6559 = vmatprep.subr.mxu0 0.0
  %6560 = vmatpush2.msra.mxu0 0.0
  %6561 = vmatprep.subr.mxu0 0.0
  %6562 = vmatpush2.msra.mxu0 0.0
  %6563 = vmatprep.subr.mxu0 0.0
  %6564 = vmatpush2.msra.mxu0 0.0
  %6565 = vmatprep.subr.mxu0 0.0
  %6566 = vmatpush2.msra.mxu0 0.0
  %6567 = vmatprep.subr.mxu0 0.0
  %6568 = vmatpush2.msra.mxu0 0.0
  %6569 = vmatprep.subr.mxu0 0.0
  %6570 = vmatpush2.msra.mxu0 0.0
  %6571 = vmatprep.subr.mxu0 0.0
  %6572 = vmatpush2.msra.mxu0 0.0
  %6573 = vmatprep.subr.mxu0 0.0
  %6574 = vmatpush2.msra.mxu0 0.0
  %6575 = vmatprep.subr.mxu0 0.0
  %6576 = vmatpush2.msra.mxu0 0.0
  %6577 = vmatprep.subr.mxu0 0.0
  %6578 = vmatpush2.msra.mxu0 0.0
  %6579 = vmatprep.mubr.f32.mxu0 0.0
  %6580 = vmatmul.mubr.f32.gmra.mxu0 %v6513
  %v6581 = vpop.f32.mrf.mxu0
  %v6582 = vadd.f32 0.0, %v6581
  %v6583 = vpop.f32.mrf.mxu0
  %6584 = vdwg.mxu0
  %v6586 = vsel %vm682, %v5881, 0
  %6588 = vmatprep.subr.mxu0 0.0
  %6589 = vmatpush1.msra.mxu0 0.0
  %6590 = vmatprep.subr.mxu0 0.0
  %6591 = vmatpush1.msra.mxu0 0.0
  %6592 = vmatprep.subr.mxu0 0.0
  %6593 = vmatpush1.msra.mxu0 0.0
  %6594 = vmatprep.subr.mxu0 0.0
  %6595 = vmatpush1.msra.mxu0 0.0
  %6596 = vmatprep.subr.mxu0 0.0
  %6597 = vmatpush1.msra.mxu0 0.0
  %6598 = vmatprep.subr.mxu0 0.0
  %6599 = vmatpush1.msra.mxu0 0.0
  %6600 = vmatprep.subr.mxu0 0.0
  %6601 = vmatpush1.msra.mxu0 0.0
  %6602 = vmatprep.subr.mxu0 0.0
  %6603 = vmatpush1.msra.mxu0 0.0
  %6604 = vmatprep.subr.mxu0 0.0
  %6605 = vmatpush1.msra.mxu0 0.0
  %6606 = vmatprep.subr.mxu0 0.0
  %6607 = vmatpush1.msra.mxu0 0.0
  %6608 = vmatprep.subr.mxu0 0.0
  %6609 = vmatpush1.msra.mxu0 0.0
  %6610 = vmatprep.subr.mxu0 0.0
  %6611 = vmatpush1.msra.mxu0 0.0
  %6612 = vmatprep.subr.mxu0 0.0
  %6613 = vmatpush1.msra.mxu0 0.0
  %6614 = vmatprep.subr.mxu0 0.0
  %6615 = vmatpush1.msra.mxu0 0.0
  %6616 = vmatprep.subr.mxu0 0.0
  %6617 = vmatpush1.msra.mxu0 0.0
  %6618 = vmatprep.subr.mxu0 0.0
  %6619 = vmatpush1.msra.mxu0 %v4638
  %6620 = vmatprep.subr.mxu0 0.0
  %6621 = vmatpush2.msra.mxu0 0.0
  %6622 = vmatprep.subr.mxu0 0.0
  %6623 = vmatpush2.msra.mxu0 0.0
  %6624 = vmatprep.subr.mxu0 0.0
  %6625 = vmatpush2.msra.mxu0 0.0
  %6626 = vmatprep.subr.mxu0 0.0
  %6627 = vmatpush2.msra.mxu0 0.0
  %6628 = vmatprep.subr.mxu0 0.0
  %6629 = vmatpush2.msra.mxu0 0.0
  %6630 = vmatprep.subr.mxu0 0.0
  %6631 = vmatpush2.msra.mxu0 0.0
  %6632 = vmatprep.subr.mxu0 0.0
  %6633 = vmatpush2.msra.mxu0 0.0
  %6634 = vmatprep.subr.mxu0 0.0
  %6635 = vmatpush2.msra.mxu0 0.0
  %6636 = vmatprep.subr.mxu0 0.0
  %6637 = vmatpush2.msra.mxu0 0.0
  %6638 = vmatprep.subr.mxu0 0.0
  %6639 = vmatpush2.msra.mxu0 0.0
  %6640 = vmatprep.subr.mxu0 0.0
  %6641 = vmatpush2.msra.mxu0 0.0
  %6642 = vmatprep.subr.mxu0 0.0
  %6643 = vmatpush2.msra.mxu0 0.0
  %6644 = vmatprep.subr.mxu0 0.0
  %6645 = vmatpush2.msra.mxu0 0.0
  %6646 = vmatprep.subr.mxu0 0.0
  %6647 = vmatpush2.msra.mxu0 0.0
  %6648 = vmatprep.subr.mxu0 0.0
  %6649 = vmatpush2.msra.mxu0 0.0
  %6650 = vmatprep.subr.mxu0 0.0
  %6651 = vmatpush2.msra.mxu0 0.0
  %6652 = vmatprep.mubr.f32.mxu0 0.0
  %6653 = vmatmul.mubr.f32.gmra.mxu0 %v6586
  %v6654 = vpop.f32.mrf.mxu0
  %v6655 = vadd.f32 0.0, %v6654
  %v6656 = vpop.f32.mrf.mxu0
  %6657 = vdwg.mxu0
  %v6659 = vsel %vm682, %v5882, 0
  %6661 = vmatprep.subr.mxu0 0.0
  %6662 = vmatpush1.msra.mxu0 0.0
  %6663 = vmatprep.subr.mxu0 0.0
  %6664 = vmatpush1.msra.mxu0 0.0
  %6665 = vmatprep.subr.mxu0 0.0
  %6666 = vmatpush1.msra.mxu0 0.0
  %6667 = vmatprep.subr.mxu0 0.0
  %6668 = vmatpush1.msra.mxu0 0.0
  %6669 = vmatprep.subr.mxu0 0.0
  %6670 = vmatpush1.msra.mxu0 0.0
  %6671 = vmatprep.subr.mxu0 0.0
  %6672 = vmatpush1.msra.mxu0 0.0
  %6673 = vmatprep.subr.mxu0 0.0
  %6674 = vmatpush1.msra.mxu0 0.0
  %6675 = vmatprep.subr.mxu0 0.0
  %6676 = vmatpush1.msra.mxu0 0.0
  %6677 = vmatprep.subr.mxu0 0.0
  %6678 = vmatpush1.msra.mxu0 0.0
  %6679 = vmatprep.subr.mxu0 0.0
  %6680 = vmatpush1.msra.mxu0 0.0
  %6681 = vmatprep.subr.mxu0 0.0
  %6682 = vmatpush1.msra.mxu0 0.0
  %6683 = vmatprep.subr.mxu0 0.0
  %6684 = vmatpush1.msra.mxu0 0.0
  %6685 = vmatprep.subr.mxu0 0.0
  %6686 = vmatpush1.msra.mxu0 0.0
  %6687 = vmatprep.subr.mxu0 0.0
  %6688 = vmatpush1.msra.mxu0 0.0
  %6689 = vmatprep.subr.mxu0 0.0
  %6690 = vmatpush1.msra.mxu0 0.0
  %6691 = vmatprep.subr.mxu0 0.0
  %6692 = vmatpush1.msra.mxu0 %v4643
  %6693 = vmatprep.subr.mxu0 0.0
  %6694 = vmatpush2.msra.mxu0 0.0
  %6695 = vmatprep.subr.mxu0 0.0
  %6696 = vmatpush2.msra.mxu0 0.0
  %6697 = vmatprep.subr.mxu0 0.0
  %6698 = vmatpush2.msra.mxu0 0.0
  %6699 = vmatprep.subr.mxu0 0.0
  %6700 = vmatpush2.msra.mxu0 0.0
  %6701 = vmatprep.subr.mxu0 0.0
  %6702 = vmatpush2.msra.mxu0 0.0
  %6703 = vmatprep.subr.mxu0 0.0
  %6704 = vmatpush2.msra.mxu0 0.0
  %6705 = vmatprep.subr.mxu0 0.0
  %6706 = vmatpush2.msra.mxu0 0.0
  %6707 = vmatprep.subr.mxu0 0.0
  %6708 = vmatpush2.msra.mxu0 0.0
  %6709 = vmatprep.subr.mxu0 0.0
  %6710 = vmatpush2.msra.mxu0 0.0
  %6711 = vmatprep.subr.mxu0 0.0
  %6712 = vmatpush2.msra.mxu0 0.0
  %6713 = vmatprep.subr.mxu0 0.0
  %6714 = vmatpush2.msra.mxu0 0.0
  %6715 = vmatprep.subr.mxu0 0.0
  %6716 = vmatpush2.msra.mxu0 0.0
  %6717 = vmatprep.subr.mxu0 0.0
  %6718 = vmatpush2.msra.mxu0 0.0
  %6719 = vmatprep.subr.mxu0 0.0
  %6720 = vmatpush2.msra.mxu0 0.0
  %6721 = vmatprep.subr.mxu0 0.0
  %6722 = vmatpush2.msra.mxu0 0.0
  %6723 = vmatprep.subr.mxu0 0.0
  %6724 = vmatpush2.msra.mxu0 0.0
  %6725 = vmatprep.mubr.f32.mxu0 0.0
  %6726 = vmatmul.mubr.f32.gmra.mxu0 %v6659
  %v6727 = vpop.f32.mrf.mxu0
  %v6728 = vadd.f32 0.0, %v6727
  %v6729 = vpop.f32.mrf.mxu0
  %6730 = vdwg.mxu0
  %v6732 = vsel %vm682, %v5883, 0
  %6734 = vmatprep.subr.mxu0 0.0
  %6735 = vmatpush1.msra.mxu0 0.0
  %6736 = vmatprep.subr.mxu0 0.0
  %6737 = vmatpush1.msra.mxu0 0.0
  %6738 = vmatprep.subr.mxu0 0.0
  %6739 = vmatpush1.msra.mxu0 0.0
  %6740 = vmatprep.subr.mxu0 0.0
  %6741 = vmatpush1.msra.mxu0 0.0
  %6742 = vmatprep.subr.mxu0 0.0
  %6743 = vmatpush1.msra.mxu0 0.0
  %6744 = vmatprep.subr.mxu0 0.0
  %6745 = vmatpush1.msra.mxu0 0.0
  %6746 = vmatprep.subr.mxu0 0.0
  %6747 = vmatpush1.msra.mxu0 0.0
  %6748 = vmatprep.subr.mxu0 0.0
  %6749 = vmatpush1.msra.mxu0 0.0
  %6750 = vmatprep.subr.mxu0 0.0
  %6751 = vmatpush1.msra.mxu0 0.0
  %6752 = vmatprep.subr.mxu0 0.0
  %6753 = vmatpush1.msra.mxu0 0.0
  %6754 = vmatprep.subr.mxu0 0.0
  %6755 = vmatpush1.msra.mxu0 0.0
  %6756 = vmatprep.subr.mxu0 0.0
  %6757 = vmatpush1.msra.mxu0 0.0
  %6758 = vmatprep.subr.mxu0 0.0
  %6759 = vmatpush1.msra.mxu0 0.0
  %6760 = vmatprep.subr.mxu0 0.0
  %6761 = vmatpush1.msra.mxu0 0.0
  %6762 = vmatprep.subr.mxu0 0.0
  %6763 = vmatpush1.msra.mxu0 0.0
  %6764 = vmatprep.subr.mxu0 0.0
  %6765 = vmatpush1.msra.mxu0 %v4648
  %6766 = vmatprep.subr.mxu0 0.0
  %6767 = vmatpush2.msra.mxu0 0.0
  %6768 = vmatprep.subr.mxu0 0.0
  %6769 = vmatpush2.msra.mxu0 0.0
  %6770 = vmatprep.subr.mxu0 0.0
  %6771 = vmatpush2.msra.mxu0 0.0
  %6772 = vmatprep.subr.mxu0 0.0
  %6773 = vmatpush2.msra.mxu0 0.0
  %6774 = vmatprep.subr.mxu0 0.0
  %6775 = vmatpush2.msra.mxu0 0.0
  %6776 = vmatprep.subr.mxu0 0.0
  %6777 = vmatpush2.msra.mxu0 0.0
  %6778 = vmatprep.subr.mxu0 0.0
  %6779 = vmatpush2.msra.mxu0 0.0
  %6780 = vmatprep.subr.mxu0 0.0
  %6781 = vmatpush2.msra.mxu0 0.0
  %6782 = vmatprep.subr.mxu0 0.0
  %6783 = vmatpush2.msra.mxu0 0.0
  %6784 = vmatprep.subr.mxu0 0.0
  %6785 = vmatpush2.msra.mxu0 0.0
  %6786 = vmatprep.subr.mxu0 0.0
  %6787 = vmatpush2.msra.mxu0 0.0
  %6788 = vmatprep.subr.mxu0 0.0
  %6789 = vmatpush2.msra.mxu0 0.0
  %6790 = vmatprep.subr.mxu0 0.0
  %6791 = vmatpush2.msra.mxu0 0.0
  %6792 = vmatprep.subr.mxu0 0.0
  %6793 = vmatpush2.msra.mxu0 0.0
  %6794 = vmatprep.subr.mxu0 0.0
  %6795 = vmatpush2.msra.mxu0 0.0
  %6796 = vmatprep.subr.mxu0 0.0
  %6797 = vmatpush2.msra.mxu0 0.0
  %6798 = vmatprep.mubr.f32.mxu0 0.0
  %6799 = vmatmul.mubr.f32.gmra.mxu0 %v6732
  %v6800 = vpop.f32.mrf.mxu0
  %v6801 = vadd.f32 0.0, %v6800
  %v6802 = vpop.f32.mrf.mxu0
  %6803 = vdwg.mxu0
  %v6805 = vsel %vm682, %v5884, 0
  %6807 = vmatprep.subr.mxu0 0.0
  %6808 = vmatpush1.msra.mxu0 0.0
  %6809 = vmatprep.subr.mxu0 0.0
  %6810 = vmatpush1.msra.mxu0 0.0
  %6811 = vmatprep.subr.mxu0 0.0
  %6812 = vmatpush1.msra.mxu0 0.0
  %6813 = vmatprep.subr.mxu0 0.0
  %6814 = vmatpush1.msra.mxu0 0.0
  %6815 = vmatprep.subr.mxu0 0.0
  %6816 = vmatpush1.msra.mxu0 0.0
  %6817 = vmatprep.subr.mxu0 0.0
  %6818 = vmatpush1.msra.mxu0 0.0
  %6819 = vmatprep.subr.mxu0 0.0
  %6820 = vmatpush1.msra.mxu0 0.0
  %6821 = vmatprep.subr.mxu0 0.0
  %6822 = vmatpush1.msra.mxu0 0.0
  %6823 = vmatprep.subr.mxu0 0.0
  %6824 = vmatpush1.msra.mxu0 0.0
  %6825 = vmatprep.subr.mxu0 0.0
  %6826 = vmatpush1.msra.mxu0 0.0
  %6827 = vmatprep.subr.mxu0 0.0
  %6828 = vmatpush1.msra.mxu0 0.0
  %6829 = vmatprep.subr.mxu0 0.0
  %6830 = vmatpush1.msra.mxu0 0.0
  %6831 = vmatprep.subr.mxu0 0.0
  %6832 = vmatpush1.msra.mxu0 0.0
  %6833 = vmatprep.subr.mxu0 0.0
  %6834 = vmatpush1.msra.mxu0 0.0
  %6835 = vmatprep.subr.mxu0 0.0
  %6836 = vmatpush1.msra.mxu0 0.0
  %6837 = vmatprep.subr.mxu0 0.0
  %6838 = vmatpush1.msra.mxu0 %v4653
  %6839 = vmatprep.subr.mxu0 0.0
  %6840 = vmatpush2.msra.mxu0 0.0
  %6841 = vmatprep.subr.mxu0 0.0
  %6842 = vmatpush2.msra.mxu0 0.0
  %6843 = vmatprep.subr.mxu0 0.0
  %6844 = vmatpush2.msra.mxu0 0.0
  %6845 = vmatprep.subr.mxu0 0.0
  %6846 = vmatpush2.msra.mxu0 0.0
  %6847 = vmatprep.subr.mxu0 0.0
  %6848 = vmatpush2.msra.mxu0 0.0
  %6849 = vmatprep.subr.mxu0 0.0
  %6850 = vmatpush2.msra.mxu0 0.0
  %6851 = vmatprep.subr.mxu0 0.0
  %6852 = vmatpush2.msra.mxu0 0.0
  %6853 = vmatprep.subr.mxu0 0.0
  %6854 = vmatpush2.msra.mxu0 0.0
  %6855 = vmatprep.subr.mxu0 0.0
  %6856 = vmatpush2.msra.mxu0 0.0
  %6857 = vmatprep.subr.mxu0 0.0
  %6858 = vmatpush2.msra.mxu0 0.0
  %6859 = vmatprep.subr.mxu0 0.0
  %6860 = vmatpush2.msra.mxu0 0.0
  %6861 = vmatprep.subr.mxu0 0.0
  %6862 = vmatpush2.msra.mxu0 0.0
  %6863 = vmatprep.subr.mxu0 0.0
  %6864 = vmatpush2.msra.mxu0 0.0
  %6865 = vmatprep.subr.mxu0 0.0
  %6866 = vmatpush2.msra.mxu0 0.0
  %6867 = vmatprep.subr.mxu0 0.0
  %6868 = vmatpush2.msra.mxu0 0.0
  %6869 = vmatprep.subr.mxu0 0.0
  %6870 = vmatpush2.msra.mxu0 0.0
  %6871 = vmatprep.mubr.f32.mxu0 0.0
  %6872 = vmatmul.mubr.f32.gmra.mxu0 %v6805
  %v6873 = vpop.f32.mrf.mxu0
  %v6874 = vadd.f32 0.0, %v6873
  %v6875 = vpop.f32.mrf.mxu0
  %6876 = vdwg.mxu0
  %v6878 = vsel %vm682, %v6013, 0
  %6880 = vmatprep.subr.mxu0 0.0
  %6881 = vmatpush1.msra.mxu0 0.0
  %6882 = vmatprep.subr.mxu0 0.0
  %6883 = vmatpush1.msra.mxu0 0.0
  %6884 = vmatprep.subr.mxu0 0.0
  %6885 = vmatpush1.msra.mxu0 0.0
  %6886 = vmatprep.subr.mxu0 0.0
  %6887 = vmatpush1.msra.mxu0 0.0
  %6888 = vmatprep.subr.mxu0 0.0
  %6889 = vmatpush1.msra.mxu0 0.0
  %6890 = vmatprep.subr.mxu0 0.0
  %6891 = vmatpush1.msra.mxu0 0.0
  %6892 = vmatprep.subr.mxu0 0.0
  %6893 = vmatpush1.msra.mxu0 0.0
  %6894 = vmatprep.subr.mxu0 0.0
  %6895 = vmatpush1.msra.mxu0 0.0
  %6896 = vmatprep.subr.mxu0 0.0
  %6897 = vmatpush1.msra.mxu0 0.0
  %6898 = vmatprep.subr.mxu0 0.0
  %6899 = vmatpush1.msra.mxu0 0.0
  %6900 = vmatprep.subr.mxu0 0.0
  %6901 = vmatpush1.msra.mxu0 0.0
  %6902 = vmatprep.subr.mxu0 0.0
  %6903 = vmatpush1.msra.mxu0 0.0
  %6904 = vmatprep.subr.mxu0 0.0
  %6905 = vmatpush1.msra.mxu0 0.0
  %6906 = vmatprep.subr.mxu0 0.0
  %6907 = vmatpush1.msra.mxu0 0.0
  %6908 = vmatprep.subr.mxu0 0.0
  %6909 = vmatpush1.msra.mxu0 0.0
  %6910 = vmatprep.subr.mxu0 0.0
  %6911 = vmatpush1.msra.mxu0 %v4658
  %6912 = vmatprep.subr.mxu0 0.0
  %6913 = vmatpush2.msra.mxu0 0.0
  %6914 = vmatprep.subr.mxu0 0.0
  %6915 = vmatpush2.msra.mxu0 0.0
  %6916 = vmatprep.subr.mxu0 0.0
  %6917 = vmatpush2.msra.mxu0 0.0
  %6918 = vmatprep.subr.mxu0 0.0
  %6919 = vmatpush2.msra.mxu0 0.0
  %6920 = vmatprep.subr.mxu0 0.0
  %6921 = vmatpush2.msra.mxu0 0.0
  %6922 = vmatprep.subr.mxu0 0.0
  %6923 = vmatpush2.msra.mxu0 0.0
  %6924 = vmatprep.subr.mxu0 0.0
  %6925 = vmatpush2.msra.mxu0 0.0
  %6926 = vmatprep.subr.mxu0 0.0
  %6927 = vmatpush2.msra.mxu0 0.0
  %6928 = vmatprep.subr.mxu0 0.0
  %6929 = vmatpush2.msra.mxu0 0.0
  %6930 = vmatprep.subr.mxu0 0.0
  %6931 = vmatpush2.msra.mxu0 0.0
  %6932 = vmatprep.subr.mxu0 0.0
  %6933 = vmatpush2.msra.mxu0 0.0
  %6934 = vmatprep.subr.mxu0 0.0
  %6935 = vmatpush2.msra.mxu0 0.0
  %6936 = vmatprep.subr.mxu0 0.0
  %6937 = vmatpush2.msra.mxu0 0.0
  %6938 = vmatprep.subr.mxu0 0.0
  %6939 = vmatpush2.msra.mxu0 0.0
  %6940 = vmatprep.subr.mxu0 0.0
  %6941 = vmatpush2.msra.mxu0 0.0
  %6942 = vmatprep.subr.mxu0 0.0
  %6943 = vmatpush2.msra.mxu0 0.0
  %6944 = vmatprep.mubr.f32.mxu0 0.0
  %6945 = vmatmul.mubr.f32.gmra.mxu0 %v6878
  %v6946 = vpop.f32.mrf.mxu0
  %v6947 = vadd.f32 0.0, %v6946
  %v6948 = vpop.f32.mrf.mxu0
  %6949 = vdwg.mxu0
  %v6951 = vsel %vm682, %v6014, 0
  %6953 = vmatprep.subr.mxu0 0.0
  %6954 = vmatpush1.msra.mxu0 0.0
  %6955 = vmatprep.subr.mxu0 0.0
  %6956 = vmatpush1.msra.mxu0 0.0
  %6957 = vmatprep.subr.mxu0 0.0
  %6958 = vmatpush1.msra.mxu0 0.0
  %6959 = vmatprep.subr.mxu0 0.0
  %6960 = vmatpush1.msra.mxu0 0.0
  %6961 = vmatprep.subr.mxu0 0.0
  %6962 = vmatpush1.msra.mxu0 0.0
  %6963 = vmatprep.subr.mxu0 0.0
  %6964 = vmatpush1.msra.mxu0 0.0
  %6965 = vmatprep.subr.mxu0 0.0
  %6966 = vmatpush1.msra.mxu0 0.0
  %6967 = vmatprep.subr.mxu0 0.0
  %6968 = vmatpush1.msra.mxu0 0.0
  %6969 = vmatprep.subr.mxu0 0.0
  %6970 = vmatpush1.msra.mxu0 0.0
  %6971 = vmatprep.subr.mxu0 0.0
  %6972 = vmatpush1.msra.mxu0 0.0
  %6973 = vmatprep.subr.mxu0 0.0
  %6974 = vmatpush1.msra.mxu0 0.0
  %6975 = vmatprep.subr.mxu0 0.0
  %6976 = vmatpush1.msra.mxu0 0.0
  %6977 = vmatprep.subr.mxu0 0.0
  %6978 = vmatpush1.msra.mxu0 0.0
  %6979 = vmatprep.subr.mxu0 0.0
  %6980 = vmatpush1.msra.mxu0 0.0
  %6981 = vmatprep.subr.mxu0 0.0
  %6982 = vmatpush1.msra.mxu0 0.0
  %6983 = vmatprep.subr.mxu0 0.0
  %6984 = vmatpush1.msra.mxu0 %v4663
  %6985 = vmatprep.subr.mxu0 0.0
  %6986 = vmatpush2.msra.mxu0 0.0
  %6987 = vmatprep.subr.mxu0 0.0
  %6988 = vmatpush2.msra.mxu0 0.0
  %6989 = vmatprep.subr.mxu0 0.0
  %6990 = vmatpush2.msra.mxu0 0.0
  %6991 = vmatprep.subr.mxu0 0.0
  %6992 = vmatpush2.msra.mxu0 0.0
  %6993 = vmatprep.subr.mxu0 0.0
  %6994 = vmatpush2.msra.mxu0 0.0
  %6995 = vmatprep.subr.mxu0 0.0
  %6996 = vmatpush2.msra.mxu0 0.0
  %6997 = vmatprep.subr.mxu0 0.0
  %6998 = vmatpush2.msra.mxu0 0.0
  %6999 = vmatprep.subr.mxu0 0.0
  %7000 = vmatpush2.msra.mxu0 0.0
  %7001 = vmatprep.subr.mxu0 0.0
  %7002 = vmatpush2.msra.mxu0 0.0
  %7003 = vmatprep.subr.mxu0 0.0
  %7004 = vmatpush2.msra.mxu0 0.0
  %7005 = vmatprep.subr.mxu0 0.0
  %7006 = vmatpush2.msra.mxu0 0.0
  %7007 = vmatprep.subr.mxu0 0.0
  %7008 = vmatpush2.msra.mxu0 0.0
  %7009 = vmatprep.subr.mxu0 0.0
  %7010 = vmatpush2.msra.mxu0 0.0
  %7011 = vmatprep.subr.mxu0 0.0
  %7012 = vmatpush2.msra.mxu0 0.0
  %7013 = vmatprep.subr.mxu0 0.0
  %7014 = vmatpush2.msra.mxu0 0.0
  %7015 = vmatprep.subr.mxu0 0.0
  %7016 = vmatpush2.msra.mxu0 0.0
  %7017 = vmatprep.mubr.f32.mxu0 0.0
  %7018 = vmatmul.mubr.f32.gmra.mxu0 %v6951
  %v7019 = vpop.f32.mrf.mxu0
  %v7020 = vadd.f32 0.0, %v7019
  %v7021 = vpop.f32.mrf.mxu0
  %7022 = vdwg.mxu0
  %v7024 = vsel %vm682, %v6015, 0
  %7026 = vmatprep.subr.mxu0 0.0
  %7027 = vmatpush1.msra.mxu0 0.0
  %7028 = vmatprep.subr.mxu0 0.0
  %7029 = vmatpush1.msra.mxu0 0.0
  %7030 = vmatprep.subr.mxu0 0.0
  %7031 = vmatpush1.msra.mxu0 0.0
  %7032 = vmatprep.subr.mxu0 0.0
  %7033 = vmatpush1.msra.mxu0 0.0
  %7034 = vmatprep.subr.mxu0 0.0
  %7035 = vmatpush1.msra.mxu0 0.0
  %7036 = vmatprep.subr.mxu0 0.0
  %7037 = vmatpush1.msra.mxu0 0.0
  %7038 = vmatprep.subr.mxu0 0.0
  %7039 = vmatpush1.msra.mxu0 0.0
  %7040 = vmatprep.subr.mxu0 0.0
  %7041 = vmatpush1.msra.mxu0 0.0
  %7042 = vmatprep.subr.mxu0 0.0
  %7043 = vmatpush1.msra.mxu0 0.0
  %7044 = vmatprep.subr.mxu0 0.0
  %7045 = vmatpush1.msra.mxu0 0.0
  %7046 = vmatprep.subr.mxu0 0.0
  %7047 = vmatpush1.msra.mxu0 0.0
  %7048 = vmatprep.subr.mxu0 0.0
  %7049 = vmatpush1.msra.mxu0 0.0
  %7050 = vmatprep.subr.mxu0 0.0
  %7051 = vmatpush1.msra.mxu0 0.0
  %7052 = vmatprep.subr.mxu0 0.0
  %7053 = vmatpush1.msra.mxu0 0.0
  %7054 = vmatprep.subr.mxu0 0.0
  %7055 = vmatpush1.msra.mxu0 0.0
  %7056 = vmatprep.subr.mxu0 0.0
  %7057 = vmatpush1.msra.mxu0 %v4668
  %7058 = vmatprep.subr.mxu0 0.0
  %7059 = vmatpush2.msra.mxu0 0.0
  %7060 = vmatprep.subr.mxu0 0.0
  %7061 = vmatpush2.msra.mxu0 0.0
  %7062 = vmatprep.subr.mxu0 0.0
  %7063 = vmatpush2.msra.mxu0 0.0
  %7064 = vmatprep.subr.mxu0 0.0
  %7065 = vmatpush2.msra.mxu0 0.0
  %7066 = vmatprep.subr.mxu0 0.0
  %7067 = vmatpush2.msra.mxu0 0.0
  %7068 = vmatprep.subr.mxu0 0.0
  %7069 = vmatpush2.msra.mxu0 0.0
  %7070 = vmatprep.subr.mxu0 0.0
  %7071 = vmatpush2.msra.mxu0 0.0
  %7072 = vmatprep.subr.mxu0 0.0
  %7073 = vmatpush2.msra.mxu0 0.0
  %7074 = vmatprep.subr.mxu0 0.0
  %7075 = vmatpush2.msra.mxu0 0.0
  %7076 = vmatprep.subr.mxu0 0.0
  %7077 = vmatpush2.msra.mxu0 0.0
  %7078 = vmatprep.subr.mxu0 0.0
  %7079 = vmatpush2.msra.mxu0 0.0
  %7080 = vmatprep.subr.mxu0 0.0
  %7081 = vmatpush2.msra.mxu0 0.0
  %7082 = vmatprep.subr.mxu0 0.0
  %7083 = vmatpush2.msra.mxu0 0.0
  %7084 = vmatprep.subr.mxu0 0.0
  %7085 = vmatpush2.msra.mxu0 0.0
  %7086 = vmatprep.subr.mxu0 0.0
  %7087 = vmatpush2.msra.mxu0 0.0
  %7088 = vmatprep.subr.mxu0 0.0
  %7089 = vmatpush2.msra.mxu0 0.0
  %7090 = vmatprep.mubr.f32.mxu0 0.0
  %7091 = vmatmul.mubr.f32.gmra.mxu0 %v7024
  %v7092 = vpop.f32.mrf.mxu0
  %v7093 = vadd.f32 0.0, %v7092
  %v7094 = vpop.f32.mrf.mxu0
  %7095 = vdwg.mxu0
  %v7097 = vsel %vm682, %v6016, 0
  %7099 = vmatprep.subr.mxu0 0.0
  %7100 = vmatpush1.msra.mxu0 0.0
  %7101 = vmatprep.subr.mxu0 0.0
  %7102 = vmatpush1.msra.mxu0 0.0
  %7103 = vmatprep.subr.mxu0 0.0
  %7104 = vmatpush1.msra.mxu0 0.0
  %7105 = vmatprep.subr.mxu0 0.0
  %7106 = vmatpush1.msra.mxu0 0.0
  %7107 = vmatprep.subr.mxu0 0.0
  %7108 = vmatpush1.msra.mxu0 0.0
  %7109 = vmatprep.subr.mxu0 0.0
  %7110 = vmatpush1.msra.mxu0 0.0
  %7111 = vmatprep.subr.mxu0 0.0
  %7112 = vmatpush1.msra.mxu0 0.0
  %7113 = vmatprep.subr.mxu0 0.0
  %7114 = vmatpush1.msra.mxu0 0.0
  %7115 = vmatprep.subr.mxu0 0.0
  %7116 = vmatpush1.msra.mxu0 0.0
  %7117 = vmatprep.subr.mxu0 0.0
  %7118 = vmatpush1.msra.mxu0 0.0
  %7119 = vmatprep.subr.mxu0 0.0
  %7120 = vmatpush1.msra.mxu0 0.0
  %7121 = vmatprep.subr.mxu0 0.0
  %7122 = vmatpush1.msra.mxu0 0.0
  %7123 = vmatprep.subr.mxu0 0.0
  %7124 = vmatpush1.msra.mxu0 0.0
  %7125 = vmatprep.subr.mxu0 0.0
  %7126 = vmatpush1.msra.mxu0 0.0
  %7127 = vmatprep.subr.mxu0 0.0
  %7128 = vmatpush1.msra.mxu0 0.0
  %7129 = vmatprep.subr.mxu0 0.0
  %7130 = vmatpush1.msra.mxu0 %v4673
  %7131 = vmatprep.subr.mxu0 0.0
  %7132 = vmatpush2.msra.mxu0 0.0
  %7133 = vmatprep.subr.mxu0 0.0
  %7134 = vmatpush2.msra.mxu0 0.0
  %7135 = vmatprep.subr.mxu0 0.0
  %7136 = vmatpush2.msra.mxu0 0.0
  %7137 = vmatprep.subr.mxu0 0.0
  %7138 = vmatpush2.msra.mxu0 0.0
  %7139 = vmatprep.subr.mxu0 0.0
  %7140 = vmatpush2.msra.mxu0 0.0
  %7141 = vmatprep.subr.mxu0 0.0
  %7142 = vmatpush2.msra.mxu0 0.0
  %7143 = vmatprep.subr.mxu0 0.0
  %7144 = vmatpush2.msra.mxu0 0.0
  %7145 = vmatprep.subr.mxu0 0.0
  %7146 = vmatpush2.msra.mxu0 0.0
  %7147 = vmatprep.subr.mxu0 0.0
  %7148 = vmatpush2.msra.mxu0 0.0
  %7149 = vmatprep.subr.mxu0 0.0
  %7150 = vmatpush2.msra.mxu0 0.0
  %7151 = vmatprep.subr.mxu0 0.0
  %7152 = vmatpush2.msra.mxu0 0.0
  %7153 = vmatprep.subr.mxu0 0.0
  %7154 = vmatpush2.msra.mxu0 0.0
  %7155 = vmatprep.subr.mxu0 0.0
  %7156 = vmatpush2.msra.mxu0 0.0
  %7157 = vmatprep.subr.mxu0 0.0
  %7158 = vmatpush2.msra.mxu0 0.0
  %7159 = vmatprep.subr.mxu0 0.0
  %7160 = vmatpush2.msra.mxu0 0.0
  %7161 = vmatprep.subr.mxu0 0.0
  %7162 = vmatpush2.msra.mxu0 0.0
  %7163 = vmatprep.mubr.f32.mxu0 0.0
  %7164 = vmatmul.mubr.f32.gmra.mxu0 %v7097
  %v7165 = vpop.f32.mrf.mxu0
  %v7166 = vadd.f32 0.0, %v7165
  %v7167 = vpop.f32.mrf.mxu0
  %7168 = vdwg.mxu0
  %v7170 = vsel %vm682, %v6017, 0
  %7172 = vmatprep.subr.mxu0 0.0
  %7173 = vmatpush1.msra.mxu0 0.0
  %7174 = vmatprep.subr.mxu0 0.0
  %7175 = vmatpush1.msra.mxu0 0.0
  %7176 = vmatprep.subr.mxu0 0.0
  %7177 = vmatpush1.msra.mxu0 0.0
  %7178 = vmatprep.subr.mxu0 0.0
  %7179 = vmatpush1.msra.mxu0 0.0
  %7180 = vmatprep.subr.mxu0 0.0
  %7181 = vmatpush1.msra.mxu0 0.0
  %7182 = vmatprep.subr.mxu0 0.0
  %7183 = vmatpush1.msra.mxu0 0.0
  %7184 = vmatprep.subr.mxu0 0.0
  %7185 = vmatpush1.msra.mxu0 0.0
  %7186 = vmatprep.subr.mxu0 0.0
  %7187 = vmatpush1.msra.mxu0 0.0
  %7188 = vmatprep.subr.mxu0 0.0
  %7189 = vmatpush1.msra.mxu0 0.0
  %7190 = vmatprep.subr.mxu0 0.0
  %7191 = vmatpush1.msra.mxu0 0.0
  %7192 = vmatprep.subr.mxu0 0.0
  %7193 = vmatpush1.msra.mxu0 0.0
  %7194 = vmatprep.subr.mxu0 0.0
  %7195 = vmatpush1.msra.mxu0 0.0
  %7196 = vmatprep.subr.mxu0 0.0
  %7197 = vmatpush1.msra.mxu0 0.0
  %7198 = vmatprep.subr.mxu0 0.0
  %7199 = vmatpush1.msra.mxu0 0.0
  %7200 = vmatprep.subr.mxu0 0.0
  %7201 = vmatpush1.msra.mxu0 0.0
  %7202 = vmatprep.subr.mxu0 0.0
  %7203 = vmatpush1.msra.mxu0 %v4678
  %7204 = vmatprep.subr.mxu0 0.0
  %7205 = vmatpush2.msra.mxu0 0.0
  %7206 = vmatprep.subr.mxu0 0.0
  %7207 = vmatpush2.msra.mxu0 0.0
  %7208 = vmatprep.subr.mxu0 0.0
  %7209 = vmatpush2.msra.mxu0 0.0
  %7210 = vmatprep.subr.mxu0 0.0
  %7211 = vmatpush2.msra.mxu0 0.0
  %7212 = vmatprep.subr.mxu0 0.0
  %7213 = vmatpush2.msra.mxu0 0.0
  %7214 = vmatprep.subr.mxu0 0.0
  %7215 = vmatpush2.msra.mxu0 0.0
  %7216 = vmatprep.subr.mxu0 0.0
  %7217 = vmatpush2.msra.mxu0 0.0
  %7218 = vmatprep.subr.mxu0 0.0
  %7219 = vmatpush2.msra.mxu0 0.0
  %7220 = vmatprep.subr.mxu0 0.0
  %7221 = vmatpush2.msra.mxu0 0.0
  %7222 = vmatprep.subr.mxu0 0.0
  %7223 = vmatpush2.msra.mxu0 0.0
  %7224 = vmatprep.subr.mxu0 0.0
  %7225 = vmatpush2.msra.mxu0 0.0
  %7226 = vmatprep.subr.mxu0 0.0
  %7227 = vmatpush2.msra.mxu0 0.0
  %7228 = vmatprep.subr.mxu0 0.0
  %7229 = vmatpush2.msra.mxu0 0.0
  %7230 = vmatprep.subr.mxu0 0.0
  %7231 = vmatpush2.msra.mxu0 0.0
  %7232 = vmatprep.subr.mxu0 0.0
  %7233 = vmatpush2.msra.mxu0 0.0
  %7234 = vmatprep.subr.mxu0 0.0
  %7235 = vmatpush2.msra.mxu0 0.0
  %7236 = vmatprep.mubr.f32.mxu0 0.0
  %7237 = vmatmul.mubr.f32.gmra.mxu0 %v7170
  %v7238 = vpop.f32.mrf.mxu0
  %v7239 = vadd.f32 0.0, %v7238
  %v7240 = vpop.f32.mrf.mxu0
  %7241 = vdwg.mxu0
  %v7243 = vsel %vm682, %v6018, 0
  %7245 = vmatprep.subr.mxu0 0.0
  %7246 = vmatpush1.msra.mxu0 0.0
  %7247 = vmatprep.subr.mxu0 0.0
  %7248 = vmatpush1.msra.mxu0 0.0
  %7249 = vmatprep.subr.mxu0 0.0
  %7250 = vmatpush1.msra.mxu0 0.0
  %7251 = vmatprep.subr.mxu0 0.0
  %7252 = vmatpush1.msra.mxu0 0.0
  %7253 = vmatprep.subr.mxu0 0.0
  %7254 = vmatpush1.msra.mxu0 0.0
  %7255 = vmatprep.subr.mxu0 0.0
  %7256 = vmatpush1.msra.mxu0 0.0
  %7257 = vmatprep.subr.mxu0 0.0
  %7258 = vmatpush1.msra.mxu0 0.0
  %7259 = vmatprep.subr.mxu0 0.0
  %7260 = vmatpush1.msra.mxu0 0.0
  %7261 = vmatprep.subr.mxu0 0.0
  %7262 = vmatpush1.msra.mxu0 0.0
  %7263 = vmatprep.subr.mxu0 0.0
  %7264 = vmatpush1.msra.mxu0 0.0
  %7265 = vmatprep.subr.mxu0 0.0
  %7266 = vmatpush1.msra.mxu0 0.0
  %7267 = vmatprep.subr.mxu0 0.0
  %7268 = vmatpush1.msra.mxu0 0.0
  %7269 = vmatprep.subr.mxu0 0.0
  %7270 = vmatpush1.msra.mxu0 0.0
  %7271 = vmatprep.subr.mxu0 0.0
  %7272 = vmatpush1.msra.mxu0 0.0
  %7273 = vmatprep.subr.mxu0 0.0
  %7274 = vmatpush1.msra.mxu0 0.0
  %7275 = vmatprep.subr.mxu0 0.0
  %7276 = vmatpush1.msra.mxu0 %v4683
  %7277 = vmatprep.subr.mxu0 0.0
  %7278 = vmatpush2.msra.mxu0 0.0
  %7279 = vmatprep.subr.mxu0 0.0
  %7280 = vmatpush2.msra.mxu0 0.0
  %7281 = vmatprep.subr.mxu0 0.0
  %7282 = vmatpush2.msra.mxu0 0.0
  %7283 = vmatprep.subr.mxu0 0.0
  %7284 = vmatpush2.msra.mxu0 0.0
  %7285 = vmatprep.subr.mxu0 0.0
  %7286 = vmatpush2.msra.mxu0 0.0
  %7287 = vmatprep.subr.mxu0 0.0
  %7288 = vmatpush2.msra.mxu0 0.0
  %7289 = vmatprep.subr.mxu0 0.0
  %7290 = vmatpush2.msra.mxu0 0.0
  %7291 = vmatprep.subr.mxu0 0.0
  %7292 = vmatpush2.msra.mxu0 0.0
  %7293 = vmatprep.subr.mxu0 0.0
  %7294 = vmatpush2.msra.mxu0 0.0
  %7295 = vmatprep.subr.mxu0 0.0
  %7296 = vmatpush2.msra.mxu0 0.0
  %7297 = vmatprep.subr.mxu0 0.0
  %7298 = vmatpush2.msra.mxu0 0.0
  %7299 = vmatprep.subr.mxu0 0.0
  %7300 = vmatpush2.msra.mxu0 0.0
  %7301 = vmatprep.subr.mxu0 0.0
  %7302 = vmatpush2.msra.mxu0 0.0
  %7303 = vmatprep.subr.mxu0 0.0
  %7304 = vmatpush2.msra.mxu0 0.0
  %7305 = vmatprep.subr.mxu0 0.0
  %7306 = vmatpush2.msra.mxu0 0.0
  %7307 = vmatprep.subr.mxu0 0.0
  %7308 = vmatpush2.msra.mxu0 0.0
  %7309 = vmatprep.mubr.f32.mxu0 0.0
  %7310 = vmatmul.mubr.f32.gmra.mxu0 %v7243
  %v7311 = vpop.f32.mrf.mxu0
  %v7312 = vadd.f32 0.0, %v7311
  %v7313 = vpop.f32.mrf.mxu0
  %7314 = vdwg.mxu0
  %v7316 = vsel %vm682, %v6019, 0
  %7318 = vmatprep.subr.mxu0 0.0
  %7319 = vmatpush1.msra.mxu0 0.0
  %7320 = vmatprep.subr.mxu0 0.0
  %7321 = vmatpush1.msra.mxu0 0.0
  %7322 = vmatprep.subr.mxu0 0.0
  %7323 = vmatpush1.msra.mxu0 0.0
  %7324 = vmatprep.subr.mxu0 0.0
  %7325 = vmatpush1.msra.mxu0 0.0
  %7326 = vmatprep.subr.mxu0 0.0
  %7327 = vmatpush1.msra.mxu0 0.0
  %7328 = vmatprep.subr.mxu0 0.0
  %7329 = vmatpush1.msra.mxu0 0.0
  %7330 = vmatprep.subr.mxu0 0.0
  %7331 = vmatpush1.msra.mxu0 0.0
  %7332 = vmatprep.subr.mxu0 0.0
  %7333 = vmatpush1.msra.mxu0 0.0
  %7334 = vmatprep.subr.mxu0 0.0
  %7335 = vmatpush1.msra.mxu0 0.0
  %7336 = vmatprep.subr.mxu0 0.0
  %7337 = vmatpush1.msra.mxu0 0.0
  %7338 = vmatprep.subr.mxu0 0.0
  %7339 = vmatpush1.msra.mxu0 0.0
  %7340 = vmatprep.subr.mxu0 0.0
  %7341 = vmatpush1.msra.mxu0 0.0
  %7342 = vmatprep.subr.mxu0 0.0
  %7343 = vmatpush1.msra.mxu0 0.0
  %7344 = vmatprep.subr.mxu0 0.0
  %7345 = vmatpush1.msra.mxu0 0.0
  %7346 = vmatprep.subr.mxu0 0.0
  %7347 = vmatpush1.msra.mxu0 0.0
  %7348 = vmatprep.subr.mxu0 0.0
  %7349 = vmatpush1.msra.mxu0 %v4688
  %7350 = vmatprep.subr.mxu0 0.0
  %7351 = vmatpush2.msra.mxu0 0.0
  %7352 = vmatprep.subr.mxu0 0.0
  %7353 = vmatpush2.msra.mxu0 0.0
  %7354 = vmatprep.subr.mxu0 0.0
  %7355 = vmatpush2.msra.mxu0 0.0
  %7356 = vmatprep.subr.mxu0 0.0
  %7357 = vmatpush2.msra.mxu0 0.0
  %7358 = vmatprep.subr.mxu0 0.0
  %7359 = vmatpush2.msra.mxu0 0.0
  %7360 = vmatprep.subr.mxu0 0.0
  %7361 = vmatpush2.msra.mxu0 0.0
  %7362 = vmatprep.subr.mxu0 0.0
  %7363 = vmatpush2.msra.mxu0 0.0
  %7364 = vmatprep.subr.mxu0 0.0
  %7365 = vmatpush2.msra.mxu0 0.0
  %7366 = vmatprep.subr.mxu0 0.0
  %7367 = vmatpush2.msra.mxu0 0.0
  %7368 = vmatprep.subr.mxu0 0.0
  %7369 = vmatpush2.msra.mxu0 0.0
  %7370 = vmatprep.subr.mxu0 0.0
  %7371 = vmatpush2.msra.mxu0 0.0
  %7372 = vmatprep.subr.mxu0 0.0
  %7373 = vmatpush2.msra.mxu0 0.0
  %7374 = vmatprep.subr.mxu0 0.0
  %7375 = vmatpush2.msra.mxu0 0.0
  %7376 = vmatprep.subr.mxu0 0.0
  %7377 = vmatpush2.msra.mxu0 0.0
  %7378 = vmatprep.subr.mxu0 0.0
  %7379 = vmatpush2.msra.mxu0 0.0
  %7380 = vmatprep.subr.mxu0 0.0
  %7381 = vmatpush2.msra.mxu0 0.0
  %7382 = vmatprep.mubr.f32.mxu0 0.0
  %7383 = vmatmul.mubr.f32.gmra.mxu0 %v7316
  %v7384 = vpop.f32.mrf.mxu0
  %v7385 = vadd.f32 0.0, %v7384
  %v7386 = vpop.f32.mrf.mxu0
  %7387 = vdwg.mxu0
  %v7389 = vsel %vm682, %v6020, 0
  %7391 = vmatprep.subr.mxu0 0.0
  %7392 = vmatpush1.msra.mxu0 0.0
  %7393 = vmatprep.subr.mxu0 0.0
  %7394 = vmatpush1.msra.mxu0 0.0
  %7395 = vmatprep.subr.mxu0 0.0
  %7396 = vmatpush1.msra.mxu0 0.0
  %7397 = vmatprep.subr.mxu0 0.0
  %7398 = vmatpush1.msra.mxu0 0.0
  %7399 = vmatprep.subr.mxu0 0.0
  %7400 = vmatpush1.msra.mxu0 0.0
  %7401 = vmatprep.subr.mxu0 0.0
  %7402 = vmatpush1.msra.mxu0 0.0
  %7403 = vmatprep.subr.mxu0 0.0
  %7404 = vmatpush1.msra.mxu0 0.0
  %7405 = vmatprep.subr.mxu0 0.0
  %7406 = vmatpush1.msra.mxu0 0.0
  %7407 = vmatprep.subr.mxu0 0.0
  %7408 = vmatpush1.msra.mxu0 0.0
  %7409 = vmatprep.subr.mxu0 0.0
  %7410 = vmatpush1.msra.mxu0 0.0
  %7411 = vmatprep.subr.mxu0 0.0
  %7412 = vmatpush1.msra.mxu0 0.0
  %7413 = vmatprep.subr.mxu0 0.0
  %7414 = vmatpush1.msra.mxu0 0.0
  %7415 = vmatprep.subr.mxu0 0.0
  %7416 = vmatpush1.msra.mxu0 0.0
  %7417 = vmatprep.subr.mxu0 0.0
  %7418 = vmatpush1.msra.mxu0 0.0
  %7419 = vmatprep.subr.mxu0 0.0
  %7420 = vmatpush1.msra.mxu0 0.0
  %7421 = vmatprep.subr.mxu0 0.0
  %7422 = vmatpush1.msra.mxu0 %v4693
  %7423 = vmatprep.subr.mxu0 0.0
  %7424 = vmatpush2.msra.mxu0 0.0
  %7425 = vmatprep.subr.mxu0 0.0
  %7426 = vmatpush2.msra.mxu0 0.0
  %7427 = vmatprep.subr.mxu0 0.0
  %7428 = vmatpush2.msra.mxu0 0.0
  %7429 = vmatprep.subr.mxu0 0.0
  %7430 = vmatpush2.msra.mxu0 0.0
  %7431 = vmatprep.subr.mxu0 0.0
  %7432 = vmatpush2.msra.mxu0 0.0
  %7433 = vmatprep.subr.mxu0 0.0
  %7434 = vmatpush2.msra.mxu0 0.0
  %7435 = vmatprep.subr.mxu0 0.0
  %7436 = vmatpush2.msra.mxu0 0.0
  %7437 = vmatprep.subr.mxu0 0.0
  %7438 = vmatpush2.msra.mxu0 0.0
  %7439 = vmatprep.subr.mxu0 0.0
  %7440 = vmatpush2.msra.mxu0 0.0
  %7441 = vmatprep.subr.mxu0 0.0
  %7442 = vmatpush2.msra.mxu0 0.0
  %7443 = vmatprep.subr.mxu0 0.0
  %7444 = vmatpush2.msra.mxu0 0.0
  %7445 = vmatprep.subr.mxu0 0.0
  %7446 = vmatpush2.msra.mxu0 0.0
  %7447 = vmatprep.subr.mxu0 0.0
  %7448 = vmatpush2.msra.mxu0 0.0
  %7449 = vmatprep.subr.mxu0 0.0
  %7450 = vmatpush2.msra.mxu0 0.0
  %7451 = vmatprep.subr.mxu0 0.0
  %7452 = vmatpush2.msra.mxu0 0.0
  %7453 = vmatprep.subr.mxu0 0.0
  %7454 = vmatpush2.msra.mxu0 0.0
  %7455 = vmatprep.mubr.f32.mxu0 0.0
  %7456 = vmatmul.mubr.f32.gmra.mxu0 %v7389
  %v7457 = vpop.f32.mrf.mxu0
  %v7458 = vadd.f32 0.0, %v7457
  %v7459 = vpop.f32.mrf.mxu0
  %7460 = vdwg.mxu0
  %v7462 = vsel %vm682, %v6149, 0
  %7464 = vmatprep.subr.mxu0 0.0
  %7465 = vmatpush1.msra.mxu0 0.0
  %7466 = vmatprep.subr.mxu0 0.0
  %7467 = vmatpush1.msra.mxu0 0.0
  %7468 = vmatprep.subr.mxu0 0.0
  %7469 = vmatpush1.msra.mxu0 0.0
  %7470 = vmatprep.subr.mxu0 0.0
  %7471 = vmatpush1.msra.mxu0 0.0
  %7472 = vmatprep.subr.mxu0 0.0
  %7473 = vmatpush1.msra.mxu0 0.0
  %7474 = vmatprep.subr.mxu0 0.0
  %7475 = vmatpush1.msra.mxu0 0.0
  %7476 = vmatprep.subr.mxu0 0.0
  %7477 = vmatpush1.msra.mxu0 0.0
  %7478 = vmatprep.subr.mxu0 0.0
  %7479 = vmatpush1.msra.mxu0 0.0
  %7480 = vmatprep.subr.mxu0 0.0
  %7481 = vmatpush1.msra.mxu0 0.0
  %7482 = vmatprep.subr.mxu0 0.0
  %7483 = vmatpush1.msra.mxu0 0.0
  %7484 = vmatprep.subr.mxu0 0.0
  %7485 = vmatpush1.msra.mxu0 0.0
  %7486 = vmatprep.subr.mxu0 0.0
  %7487 = vmatpush1.msra.mxu0 0.0
  %7488 = vmatprep.subr.mxu0 0.0
  %7489 = vmatpush1.msra.mxu0 0.0
  %7490 = vmatprep.subr.mxu0 0.0
  %7491 = vmatpush1.msra.mxu0 0.0
  %7492 = vmatprep.subr.mxu0 0.0
  %7493 = vmatpush1.msra.mxu0 0.0
  %7494 = vmatprep.subr.mxu0 0.0
  %7495 = vmatpush1.msra.mxu0 %v4698
  %7496 = vmatprep.subr.mxu0 0.0
  %7497 = vmatpush2.msra.mxu0 0.0
  %7498 = vmatprep.subr.mxu0 0.0
  %7499 = vmatpush2.msra.mxu0 0.0
  %7500 = vmatprep.subr.mxu0 0.0
  %7501 = vmatpush2.msra.mxu0 0.0
  %7502 = vmatprep.subr.mxu0 0.0
  %7503 = vmatpush2.msra.mxu0 0.0
  %7504 = vmatprep.subr.mxu0 0.0
  %7505 = vmatpush2.msra.mxu0 0.0
  %7506 = vmatprep.subr.mxu0 0.0
  %7507 = vmatpush2.msra.mxu0 0.0
  %7508 = vmatprep.subr.mxu0 0.0
  %7509 = vmatpush2.msra.mxu0 0.0
  %7510 = vmatprep.subr.mxu0 0.0
  %7511 = vmatpush2.msra.mxu0 0.0
  %7512 = vmatprep.subr.mxu0 0.0
  %7513 = vmatpush2.msra.mxu0 0.0
  %7514 = vmatprep.subr.mxu0 0.0
  %7515 = vmatpush2.msra.mxu0 0.0
  %7516 = vmatprep.subr.mxu0 0.0
  %7517 = vmatpush2.msra.mxu0 0.0
  %7518 = vmatprep.subr.mxu0 0.0
  %7519 = vmatpush2.msra.mxu0 0.0
  %7520 = vmatprep.subr.mxu0 0.0
  %7521 = vmatpush2.msra.mxu0 0.0
  %7522 = vmatprep.subr.mxu0 0.0
  %7523 = vmatpush2.msra.mxu0 0.0
  %7524 = vmatprep.subr.mxu0 0.0
  %7525 = vmatpush2.msra.mxu0 0.0
  %7526 = vmatprep.subr.mxu0 0.0
  %7527 = vmatpush2.msra.mxu0 0.0
  %7528 = vmatprep.mubr.f32.mxu0 0.0
  %7529 = vmatmul.mubr.f32.gmra.mxu0 %v7462
  %v7530 = vpop.f32.mrf.mxu0
  %v7531 = vadd.f32 0.0, %v7530
  %v7532 = vpop.f32.mrf.mxu0
  %7533 = vdwg.mxu0
  %v7535 = vsel %vm682, %v6150, 0
  %7537 = vmatprep.subr.mxu0 0.0
  %7538 = vmatpush1.msra.mxu0 0.0
  %7539 = vmatprep.subr.mxu0 0.0
  %7540 = vmatpush1.msra.mxu0 0.0
  %7541 = vmatprep.subr.mxu0 0.0
  %7542 = vmatpush1.msra.mxu0 0.0
  %7543 = vmatprep.subr.mxu0 0.0
  %7544 = vmatpush1.msra.mxu0 0.0
  %7545 = vmatprep.subr.mxu0 0.0
  %7546 = vmatpush1.msra.mxu0 0.0
  %7547 = vmatprep.subr.mxu0 0.0
  %7548 = vmatpush1.msra.mxu0 0.0
  %7549 = vmatprep.subr.mxu0 0.0
  %7550 = vmatpush1.msra.mxu0 0.0
  %7551 = vmatprep.subr.mxu0 0.0
  %7552 = vmatpush1.msra.mxu0 0.0
  %7553 = vmatprep.subr.mxu0 0.0
  %7554 = vmatpush1.msra.mxu0 0.0
  %7555 = vmatprep.subr.mxu0 0.0
  %7556 = vmatpush1.msra.mxu0 0.0
  %7557 = vmatprep.subr.mxu0 0.0
  %7558 = vmatpush1.msra.mxu0 0.0
  %7559 = vmatprep.subr.mxu0 0.0
  %7560 = vmatpush1.msra.mxu0 0.0
  %7561 = vmatprep.subr.mxu0 0.0
  %7562 = vmatpush1.msra.mxu0 0.0
  %7563 = vmatprep.subr.mxu0 0.0
  %7564 = vmatpush1.msra.mxu0 0.0
  %7565 = vmatprep.subr.mxu0 0.0
  %7566 = vmatpush1.msra.mxu0 0.0
  %7567 = vmatprep.subr.mxu0 0.0
  %7568 = vmatpush1.msra.mxu0 %v4703
  %7569 = vmatprep.subr.mxu0 0.0
  %7570 = vmatpush2.msra.mxu0 0.0
  %7571 = vmatprep.subr.mxu0 0.0
  %7572 = vmatpush2.msra.mxu0 0.0
  %7573 = vmatprep.subr.mxu0 0.0
  %7574 = vmatpush2.msra.mxu0 0.0
  %7575 = vmatprep.subr.mxu0 0.0
  %7576 = vmatpush2.msra.mxu0 0.0
  %7577 = vmatprep.subr.mxu0 0.0
  %7578 = vmatpush2.msra.mxu0 0.0
  %7579 = vmatprep.subr.mxu0 0.0
  %7580 = vmatpush2.msra.mxu0 0.0
  %7581 = vmatprep.subr.mxu0 0.0
  %7582 = vmatpush2.msra.mxu0 0.0
  %7583 = vmatprep.subr.mxu0 0.0
  %7584 = vmatpush2.msra.mxu0 0.0
  %7585 = vmatprep.subr.mxu0 0.0
  %7586 = vmatpush2.msra.mxu0 0.0
  %7587 = vmatprep.subr.mxu0 0.0
  %7588 = vmatpush2.msra.mxu0 0.0
  %7589 = vmatprep.subr.mxu0 0.0
  %7590 = vmatpush2.msra.mxu0 0.0
  %7591 = vmatprep.subr.mxu0 0.0
  %7592 = vmatpush2.msra.mxu0 0.0
  %7593 = vmatprep.subr.mxu0 0.0
  %7594 = vmatpush2.msra.mxu0 0.0
  %7595 = vmatprep.subr.mxu0 0.0
  %7596 = vmatpush2.msra.mxu0 0.0
  %7597 = vmatprep.subr.mxu0 0.0
  %7598 = vmatpush2.msra.mxu0 0.0
  %7599 = vmatprep.subr.mxu0 0.0
  %7600 = vmatpush2.msra.mxu0 0.0
  %7601 = vmatprep.mubr.f32.mxu0 0.0
  %7602 = vmatmul.mubr.f32.gmra.mxu0 %v7535
  %v7603 = vpop.f32.mrf.mxu0
  %v7604 = vadd.f32 0.0, %v7603
  %v7605 = vpop.f32.mrf.mxu0
  %7606 = vdwg.mxu0
  %v7608 = vsel %vm682, %v6151, 0
  %7610 = vmatprep.subr.mxu0 0.0
  %7611 = vmatpush1.msra.mxu0 0.0
  %7612 = vmatprep.subr.mxu0 0.0
  %7613 = vmatpush1.msra.mxu0 0.0
  %7614 = vmatprep.subr.mxu0 0.0
  %7615 = vmatpush1.msra.mxu0 0.0
  %7616 = vmatprep.subr.mxu0 0.0
  %7617 = vmatpush1.msra.mxu0 0.0
  %7618 = vmatprep.subr.mxu0 0.0
  %7619 = vmatpush1.msra.mxu0 0.0
  %7620 = vmatprep.subr.mxu0 0.0
  %7621 = vmatpush1.msra.mxu0 0.0
  %7622 = vmatprep.subr.mxu0 0.0
  %7623 = vmatpush1.msra.mxu0 0.0
  %7624 = vmatprep.subr.mxu0 0.0
  %7625 = vmatpush1.msra.mxu0 0.0
  %7626 = vmatprep.subr.mxu0 0.0
  %7627 = vmatpush1.msra.mxu0 0.0
  %7628 = vmatprep.subr.mxu0 0.0
  %7629 = vmatpush1.msra.mxu0 0.0
  %7630 = vmatprep.subr.mxu0 0.0
  %7631 = vmatpush1.msra.mxu0 0.0
  %7632 = vmatprep.subr.mxu0 0.0
  %7633 = vmatpush1.msra.mxu0 0.0
  %7634 = vmatprep.subr.mxu0 0.0
  %7635 = vmatpush1.msra.mxu0 0.0
  %7636 = vmatprep.subr.mxu0 0.0
  %7637 = vmatpush1.msra.mxu0 0.0
  %7638 = vmatprep.subr.mxu0 0.0
  %7639 = vmatpush1.msra.mxu0 0.0
  %7640 = vmatprep.subr.mxu0 0.0
  %7641 = vmatpush1.msra.mxu0 %v4708
  %7642 = vmatprep.subr.mxu0 0.0
  %7643 = vmatpush2.msra.mxu0 0.0
  %7644 = vmatprep.subr.mxu0 0.0
  %7645 = vmatpush2.msra.mxu0 0.0
  %7646 = vmatprep.subr.mxu0 0.0
  %7647 = vmatpush2.msra.mxu0 0.0
  %7648 = vmatprep.subr.mxu0 0.0
  %7649 = vmatpush2.msra.mxu0 0.0
  %7650 = vmatprep.subr.mxu0 0.0
  %7651 = vmatpush2.msra.mxu0 0.0
  %7652 = vmatprep.subr.mxu0 0.0
  %7653 = vmatpush2.msra.mxu0 0.0
  %7654 = vmatprep.subr.mxu0 0.0
  %7655 = vmatpush2.msra.mxu0 0.0
  %7656 = vmatprep.subr.mxu0 0.0
  %7657 = vmatpush2.msra.mxu0 0.0
  %7658 = vmatprep.subr.mxu0 0.0
  %7659 = vmatpush2.msra.mxu0 0.0
  %7660 = vmatprep.subr.mxu0 0.0
  %7661 = vmatpush2.msra.mxu0 0.0
  %7662 = vmatprep.subr.mxu0 0.0
  %7663 = vmatpush2.msra.mxu0 0.0
  %7664 = vmatprep.subr.mxu0 0.0
  %7665 = vmatpush2.msra.mxu0 0.0
  %7666 = vmatprep.subr.mxu0 0.0
  %7667 = vmatpush2.msra.mxu0 0.0
  %7668 = vmatprep.subr.mxu0 0.0
  %7669 = vmatpush2.msra.mxu0 0.0
  %7670 = vmatprep.subr.mxu0 0.0
  %7671 = vmatpush2.msra.mxu0 0.0
  %7672 = vmatprep.subr.mxu0 0.0
  %7673 = vmatpush2.msra.mxu0 0.0
  %7674 = vmatprep.mubr.f32.mxu0 0.0
  %7675 = vmatmul.mubr.f32.gmra.mxu0 %v7608
  %v7676 = vpop.f32.mrf.mxu0
  %v7677 = vadd.f32 0.0, %v7676
  %v7678 = vpop.f32.mrf.mxu0
  %7679 = vdwg.mxu0
  %v7681 = vsel %vm682, %v6152, 0
  %7683 = vmatprep.subr.mxu0 0.0
  %7684 = vmatpush1.msra.mxu0 0.0
  %7685 = vmatprep.subr.mxu0 0.0
  %7686 = vmatpush1.msra.mxu0 0.0
  %7687 = vmatprep.subr.mxu0 0.0
  %7688 = vmatpush1.msra.mxu0 0.0
  %7689 = vmatprep.subr.mxu0 0.0
  %7690 = vmatpush1.msra.mxu0 0.0
  %7691 = vmatprep.subr.mxu0 0.0
  %7692 = vmatpush1.msra.mxu0 0.0
  %7693 = vmatprep.subr.mxu0 0.0
  %7694 = vmatpush1.msra.mxu0 0.0
  %7695 = vmatprep.subr.mxu0 0.0
  %7696 = vmatpush1.msra.mxu0 0.0
  %7697 = vmatprep.subr.mxu0 0.0
  %7698 = vmatpush1.msra.mxu0 0.0
  %7699 = vmatprep.subr.mxu0 0.0
  %7700 = vmatpush1.msra.mxu0 0.0
  %7701 = vmatprep.subr.mxu0 0.0
  %7702 = vmatpush1.msra.mxu0 0.0
  %7703 = vmatprep.subr.mxu0 0.0
  %7704 = vmatpush1.msra.mxu0 0.0
  %7705 = vmatprep.subr.mxu0 0.0
  %7706 = vmatpush1.msra.mxu0 0.0
  %7707 = vmatprep.subr.mxu0 0.0
  %7708 = vmatpush1.msra.mxu0 0.0
  %7709 = vmatprep.subr.mxu0 0.0
  %7710 = vmatpush1.msra.mxu0 0.0
  %7711 = vmatprep.subr.mxu0 0.0
  %7712 = vmatpush1.msra.mxu0 0.0
  %7713 = vmatprep.subr.mxu0 0.0
  %7714 = vmatpush1.msra.mxu0 %v4713
  %7715 = vmatprep.subr.mxu0 0.0
  %7716 = vmatpush2.msra.mxu0 0.0
  %7717 = vmatprep.subr.mxu0 0.0
  %7718 = vmatpush2.msra.mxu0 0.0
  %7719 = vmatprep.subr.mxu0 0.0
  %7720 = vmatpush2.msra.mxu0 0.0
  %7721 = vmatprep.subr.mxu0 0.0
  %7722 = vmatpush2.msra.mxu0 0.0
  %7723 = vmatprep.subr.mxu0 0.0
  %7724 = vmatpush2.msra.mxu0 0.0
  %7725 = vmatprep.subr.mxu0 0.0
  %7726 = vmatpush2.msra.mxu0 0.0
  %7727 = vmatprep.subr.mxu0 0.0
  %7728 = vmatpush2.msra.mxu0 0.0
  %7729 = vmatprep.subr.mxu0 0.0
  %7730 = vmatpush2.msra.mxu0 0.0
  %7731 = vmatprep.subr.mxu0 0.0
  %7732 = vmatpush2.msra.mxu0 0.0
  %7733 = vmatprep.subr.mxu0 0.0
  %7734 = vmatpush2.msra.mxu0 0.0
  %7735 = vmatprep.subr.mxu0 0.0
  %7736 = vmatpush2.msra.mxu0 0.0
  %7737 = vmatprep.subr.mxu0 0.0
  %7738 = vmatpush2.msra.mxu0 0.0
  %7739 = vmatprep.subr.mxu0 0.0
  %7740 = vmatpush2.msra.mxu0 0.0
  %7741 = vmatprep.subr.mxu0 0.0
  %7742 = vmatpush2.msra.mxu0 0.0
  %7743 = vmatprep.subr.mxu0 0.0
  %7744 = vmatpush2.msra.mxu0 0.0
  %7745 = vmatprep.subr.mxu0 0.0
  %7746 = vmatpush2.msra.mxu0 0.0
  %7747 = vmatprep.mubr.f32.mxu0 0.0
  %7748 = vmatmul.mubr.f32.gmra.mxu0 %v7681
  %v7749 = vpop.f32.mrf.mxu0
  %v7750 = vadd.f32 0.0, %v7749
  %v7751 = vpop.f32.mrf.mxu0
  %7752 = vdwg.mxu0
  %v7754 = vsel %vm682, %v6153, 0
  %7756 = vmatprep.subr.mxu0 0.0
  %7757 = vmatpush1.msra.mxu0 0.0
  %7758 = vmatprep.subr.mxu0 0.0
  %7759 = vmatpush1.msra.mxu0 0.0
  %7760 = vmatprep.subr.mxu0 0.0
  %7761 = vmatpush1.msra.mxu0 0.0
  %7762 = vmatprep.subr.mxu0 0.0
  %7763 = vmatpush1.msra.mxu0 0.0
  %7764 = vmatprep.subr.mxu0 0.0
  %7765 = vmatpush1.msra.mxu0 0.0
  %7766 = vmatprep.subr.mxu0 0.0
  %7767 = vmatpush1.msra.mxu0 0.0
  %7768 = vmatprep.subr.mxu0 0.0
  %7769 = vmatpush1.msra.mxu0 0.0
  %7770 = vmatprep.subr.mxu0 0.0
  %7771 = vmatpush1.msra.mxu0 0.0
  %7772 = vmatprep.subr.mxu0 0.0
  %7773 = vmatpush1.msra.mxu0 0.0
  %7774 = vmatprep.subr.mxu0 0.0
  %7775 = vmatpush1.msra.mxu0 0.0
  %7776 = vmatprep.subr.mxu0 0.0
  %7777 = vmatpush1.msra.mxu0 0.0
  %7778 = vmatprep.subr.mxu0 0.0
  %7779 = vmatpush1.msra.mxu0 0.0
  %7780 = vmatprep.subr.mxu0 0.0
  %7781 = vmatpush1.msra.mxu0 0.0
  %7782 = vmatprep.subr.mxu0 0.0
  %7783 = vmatpush1.msra.mxu0 0.0
  %7784 = vmatprep.subr.mxu0 0.0
  %7785 = vmatpush1.msra.mxu0 0.0
  %7786 = vmatprep.subr.mxu0 0.0
  %7787 = vmatpush1.msra.mxu0 %v4718
  %7788 = vmatprep.subr.mxu0 0.0
  %7789 = vmatpush2.msra.mxu0 0.0
  %7790 = vmatprep.subr.mxu0 0.0
  %7791 = vmatpush2.msra.mxu0 0.0
  %7792 = vmatprep.subr.mxu0 0.0
  %7793 = vmatpush2.msra.mxu0 0.0
  %7794 = vmatprep.subr.mxu0 0.0
  %7795 = vmatpush2.msra.mxu0 0.0
  %7796 = vmatprep.subr.mxu0 0.0
  %7797 = vmatpush2.msra.mxu0 0.0
  %7798 = vmatprep.subr.mxu0 0.0
  %7799 = vmatpush2.msra.mxu0 0.0
  %7800 = vmatprep.subr.mxu0 0.0
  %7801 = vmatpush2.msra.mxu0 0.0
  %7802 = vmatprep.subr.mxu0 0.0
  %7803 = vmatpush2.msra.mxu0 0.0
  %7804 = vmatprep.subr.mxu0 0.0
  %7805 = vmatpush2.msra.mxu0 0.0
  %7806 = vmatprep.subr.mxu0 0.0
  %7807 = vmatpush2.msra.mxu0 0.0
  %7808 = vmatprep.subr.mxu0 0.0
  %7809 = vmatpush2.msra.mxu0 0.0
  %7810 = vmatprep.subr.mxu0 0.0
  %7811 = vmatpush2.msra.mxu0 0.0
  %7812 = vmatprep.subr.mxu0 0.0
  %7813 = vmatpush2.msra.mxu0 0.0
  %7814 = vmatprep.subr.mxu0 0.0
  %7815 = vmatpush2.msra.mxu0 0.0
  %7816 = vmatprep.subr.mxu0 0.0
  %7817 = vmatpush2.msra.mxu0 0.0
  %7818 = vmatprep.subr.mxu0 0.0
  %7819 = vmatpush2.msra.mxu0 0.0
  %7820 = vmatprep.mubr.f32.mxu0 0.0
  %7821 = vmatmul.mubr.f32.gmra.mxu0 %v7754
  %v7822 = vpop.f32.mrf.mxu0
  %v7823 = vadd.f32 0.0, %v7822
  %v7824 = vpop.f32.mrf.mxu0
  %7825 = vdwg.mxu0
  %v7827 = vsel %vm682, %v6154, 0
  %7829 = vmatprep.subr.mxu0 0.0
  %7830 = vmatpush1.msra.mxu0 0.0
  %7831 = vmatprep.subr.mxu0 0.0
  %7832 = vmatpush1.msra.mxu0 0.0
  %7833 = vmatprep.subr.mxu0 0.0
  %7834 = vmatpush1.msra.mxu0 0.0
  %7835 = vmatprep.subr.mxu0 0.0
  %7836 = vmatpush1.msra.mxu0 0.0
  %7837 = vmatprep.subr.mxu0 0.0
  %7838 = vmatpush1.msra.mxu0 0.0
  %7839 = vmatprep.subr.mxu0 0.0
  %7840 = vmatpush1.msra.mxu0 0.0
  %7841 = vmatprep.subr.mxu0 0.0
  %7842 = vmatpush1.msra.mxu0 0.0
  %7843 = vmatprep.subr.mxu0 0.0
  %7844 = vmatpush1.msra.mxu0 0.0
  %7845 = vmatprep.subr.mxu0 0.0
  %7846 = vmatpush1.msra.mxu0 0.0
  %7847 = vmatprep.subr.mxu0 0.0
  %7848 = vmatpush1.msra.mxu0 0.0
  %7849 = vmatprep.subr.mxu0 0.0
  %7850 = vmatpush1.msra.mxu0 0.0
  %7851 = vmatprep.subr.mxu0 0.0
  %7852 = vmatpush1.msra.mxu0 0.0
  %7853 = vmatprep.subr.mxu0 0.0
  %7854 = vmatpush1.msra.mxu0 0.0
  %7855 = vmatprep.subr.mxu0 0.0
  %7856 = vmatpush1.msra.mxu0 0.0
  %7857 = vmatprep.subr.mxu0 0.0
  %7858 = vmatpush1.msra.mxu0 0.0
  %7859 = vmatprep.subr.mxu0 0.0
  %7860 = vmatpush1.msra.mxu0 %v4723
  %7861 = vmatprep.subr.mxu0 0.0
  %7862 = vmatpush2.msra.mxu0 0.0
  %7863 = vmatprep.subr.mxu0 0.0
  %7864 = vmatpush2.msra.mxu0 0.0
  %7865 = vmatprep.subr.mxu0 0.0
  %7866 = vmatpush2.msra.mxu0 0.0
  %7867 = vmatprep.subr.mxu0 0.0
  %7868 = vmatpush2.msra.mxu0 0.0
  %7869 = vmatprep.subr.mxu0 0.0
  %7870 = vmatpush2.msra.mxu0 0.0
  %7871 = vmatprep.subr.mxu0 0.0
  %7872 = vmatpush2.msra.mxu0 0.0
  %7873 = vmatprep.subr.mxu0 0.0
  %7874 = vmatpush2.msra.mxu0 0.0
  %7875 = vmatprep.subr.mxu0 0.0
  %7876 = vmatpush2.msra.mxu0 0.0
  %7877 = vmatprep.subr.mxu0 0.0
  %7878 = vmatpush2.msra.mxu0 0.0
  %7879 = vmatprep.subr.mxu0 0.0
  %7880 = vmatpush2.msra.mxu0 0.0
  %7881 = vmatprep.subr.mxu0 0.0
  %7882 = vmatpush2.msra.mxu0 0.0
  %7883 = vmatprep.subr.mxu0 0.0
  %7884 = vmatpush2.msra.mxu0 0.0
  %7885 = vmatprep.subr.mxu0 0.0
  %7886 = vmatpush2.msra.mxu0 0.0
  %7887 = vmatprep.subr.mxu0 0.0
  %7888 = vmatpush2.msra.mxu0 0.0
  %7889 = vmatprep.subr.mxu0 0.0
  %7890 = vmatpush2.msra.mxu0 0.0
  %7891 = vmatprep.subr.mxu0 0.0
  %7892 = vmatpush2.msra.mxu0 0.0
  %7893 = vmatprep.mubr.f32.mxu0 0.0
  %7894 = vmatmul.mubr.f32.gmra.mxu0 %v7827
  %v7895 = vpop.f32.mrf.mxu0
  %v7896 = vadd.f32 0.0, %v7895
  %v7897 = vpop.f32.mrf.mxu0
  %7898 = vdwg.mxu0
  %v7900 = vsel %vm682, %v6155, 0
  %7902 = vmatprep.subr.mxu0 0.0
  %7903 = vmatpush1.msra.mxu0 0.0
  %7904 = vmatprep.subr.mxu0 0.0
  %7905 = vmatpush1.msra.mxu0 0.0
  %7906 = vmatprep.subr.mxu0 0.0
  %7907 = vmatpush1.msra.mxu0 0.0
  %7908 = vmatprep.subr.mxu0 0.0
  %7909 = vmatpush1.msra.mxu0 0.0
  %7910 = vmatprep.subr.mxu0 0.0
  %7911 = vmatpush1.msra.mxu0 0.0
  %7912 = vmatprep.subr.mxu0 0.0
  %7913 = vmatpush1.msra.mxu0 0.0
  %7914 = vmatprep.subr.mxu0 0.0
  %7915 = vmatpush1.msra.mxu0 0.0
  %7916 = vmatprep.subr.mxu0 0.0
  %7917 = vmatpush1.msra.mxu0 0.0
  %7918 = vmatprep.subr.mxu0 0.0
  %7919 = vmatpush1.msra.mxu0 0.0
  %7920 = vmatprep.subr.mxu0 0.0
  %7921 = vmatpush1.msra.mxu0 0.0
  %7922 = vmatprep.subr.mxu0 0.0
  %7923 = vmatpush1.msra.mxu0 0.0
  %7924 = vmatprep.subr.mxu0 0.0
  %7925 = vmatpush1.msra.mxu0 0.0
  %7926 = vmatprep.subr.mxu0 0.0
  %7927 = vmatpush1.msra.mxu0 0.0
  %7928 = vmatprep.subr.mxu0 0.0
  %7929 = vmatpush1.msra.mxu0 0.0
  %7930 = vmatprep.subr.mxu0 0.0
  %7931 = vmatpush1.msra.mxu0 0.0
  %7932 = vmatprep.subr.mxu0 0.0
  %7933 = vmatpush1.msra.mxu0 %v4728
  %7934 = vmatprep.subr.mxu0 0.0
  %7935 = vmatpush2.msra.mxu0 0.0
  %7936 = vmatprep.subr.mxu0 0.0
  %7937 = vmatpush2.msra.mxu0 0.0
  %7938 = vmatprep.subr.mxu0 0.0
  %7939 = vmatpush2.msra.mxu0 0.0
  %7940 = vmatprep.subr.mxu0 0.0
  %7941 = vmatpush2.msra.mxu0 0.0
  %7942 = vmatprep.subr.mxu0 0.0
  %7943 = vmatpush2.msra.mxu0 0.0
  %7944 = vmatprep.subr.mxu0 0.0
  %7945 = vmatpush2.msra.mxu0 0.0
  %7946 = vmatprep.subr.mxu0 0.0
  %7947 = vmatpush2.msra.mxu0 0.0
  %7948 = vmatprep.subr.mxu0 0.0
  %7949 = vmatpush2.msra.mxu0 0.0
  %7950 = vmatprep.subr.mxu0 0.0
  %7951 = vmatpush2.msra.mxu0 0.0
  %7952 = vmatprep.subr.mxu0 0.0
  %7953 = vmatpush2.msra.mxu0 0.0
  %7954 = vmatprep.subr.mxu0 0.0
  %7955 = vmatpush2.msra.mxu0 0.0
  %7956 = vmatprep.subr.mxu0 0.0
  %7957 = vmatpush2.msra.mxu0 0.0
  %7958 = vmatprep.subr.mxu0 0.0
  %7959 = vmatpush2.msra.mxu0 0.0
  %7960 = vmatprep.subr.mxu0 0.0
  %7961 = vmatpush2.msra.mxu0 0.0
  %7962 = vmatprep.subr.mxu0 0.0
  %7963 = vmatpush2.msra.mxu0 0.0
  %7964 = vmatprep.subr.mxu0 0.0
  %7965 = vmatpush2.msra.mxu0 0.0
  %7966 = vmatprep.mubr.f32.mxu0 0.0
  %7967 = vmatmul.mubr.f32.gmra.mxu0 %v7900
  %v7968 = vpop.f32.mrf.mxu0
  %v7969 = vadd.f32 0.0, %v7968
  %v7970 = vpop.f32.mrf.mxu0
  %7971 = vdwg.mxu0
  %v7973 = vsel %vm682, %v6156, 0
  %7975 = vmatprep.subr.mxu0 0.0
  %7976 = vmatpush1.msra.mxu0 0.0
  %7977 = vmatprep.subr.mxu0 0.0
  %7978 = vmatpush1.msra.mxu0 0.0
  %7979 = vmatprep.subr.mxu0 0.0
  %7980 = vmatpush1.msra.mxu0 0.0
  %7981 = vmatprep.subr.mxu0 0.0
  %7982 = vmatpush1.msra.mxu0 0.0
  %7983 = vmatprep.subr.mxu0 0.0
  %7984 = vmatpush1.msra.mxu0 0.0
  %7985 = vmatprep.subr.mxu0 0.0
  %7986 = vmatpush1.msra.mxu0 0.0
  %7987 = vmatprep.subr.mxu0 0.0
  %7988 = vmatpush1.msra.mxu0 0.0
  %7989 = vmatprep.subr.mxu0 0.0
  %7990 = vmatpush1.msra.mxu0 0.0
  %7991 = vmatprep.subr.mxu0 0.0
  %7992 = vmatpush1.msra.mxu0 0.0
  %7993 = vmatprep.subr.mxu0 0.0
  %7994 = vmatpush1.msra.mxu0 0.0
  %7995 = vmatprep.subr.mxu0 0.0
  %7996 = vmatpush1.msra.mxu0 0.0
  %7997 = vmatprep.subr.mxu0 0.0
  %7998 = vmatpush1.msra.mxu0 0.0
  %7999 = vmatprep.subr.mxu0 0.0
  %8000 = vmatpush1.msra.mxu0 0.0
  %8001 = vmatprep.subr.mxu0 0.0
  %8002 = vmatpush1.msra.mxu0 0.0
  %8003 = vmatprep.subr.mxu0 0.0
  %8004 = vmatpush1.msra.mxu0 0.0
  %8005 = vmatprep.subr.mxu0 0.0
  %8006 = vmatpush1.msra.mxu0 %v4733
  %8007 = vmatprep.subr.mxu0 0.0
  %8008 = vmatpush2.msra.mxu0 0.0
  %8009 = vmatprep.subr.mxu0 0.0
  %8010 = vmatpush2.msra.mxu0 0.0
  %8011 = vmatprep.subr.mxu0 0.0
  %8012 = vmatpush2.msra.mxu0 0.0
  %8013 = vmatprep.subr.mxu0 0.0
  %8014 = vmatpush2.msra.mxu0 0.0
  %8015 = vmatprep.subr.mxu0 0.0
  %8016 = vmatpush2.msra.mxu0 0.0
  %8017 = vmatprep.subr.mxu0 0.0
  %8018 = vmatpush2.msra.mxu0 0.0
  %8019 = vmatprep.subr.mxu0 0.0
  %8020 = vmatpush2.msra.mxu0 0.0
  %8021 = vmatprep.subr.mxu0 0.0
  %8022 = vmatpush2.msra.mxu0 0.0
  %8023 = vmatprep.subr.mxu0 0.0
  %8024 = vmatpush2.msra.mxu0 0.0
  %8025 = vmatprep.subr.mxu0 0.0
  %8026 = vmatpush2.msra.mxu0 0.0
  %8027 = vmatprep.subr.mxu0 0.0
  %8028 = vmatpush2.msra.mxu0 0.0
  %8029 = vmatprep.subr.mxu0 0.0
  %8030 = vmatpush2.msra.mxu0 0.0
  %8031 = vmatprep.subr.mxu0 0.0
  %8032 = vmatpush2.msra.mxu0 0.0
  %8033 = vmatprep.subr.mxu0 0.0
  %8034 = vmatpush2.msra.mxu0 0.0
  %8035 = vmatprep.subr.mxu0 0.0
  %8036 = vmatpush2.msra.mxu0 0.0
  %8037 = vmatprep.subr.mxu0 0.0
  %8038 = vmatpush2.msra.mxu0 0.0
  %8039 = vmatprep.mubr.f32.mxu0 0.0
  %8040 = vmatmul.mubr.f32.gmra.mxu0 %v7973
  %v8041 = vpop.f32.mrf.mxu0
  %v8042 = vadd.f32 0.0, %v8041
  %v8043 = vpop.f32.mrf.mxu0
  %8044 = vdwg.mxu0
  %v8046 = vsel %vm682, %v6285, 0
  %8048 = vmatprep.subr.mxu0 0.0
  %8049 = vmatpush1.msra.mxu0 0.0
  %8050 = vmatprep.subr.mxu0 0.0
  %8051 = vmatpush1.msra.mxu0 0.0
  %8052 = vmatprep.subr.mxu0 0.0
  %8053 = vmatpush1.msra.mxu0 0.0
  %8054 = vmatprep.subr.mxu0 0.0
  %8055 = vmatpush1.msra.mxu0 0.0
  %8056 = vmatprep.subr.mxu0 0.0
  %8057 = vmatpush1.msra.mxu0 0.0
  %8058 = vmatprep.subr.mxu0 0.0
  %8059 = vmatpush1.msra.mxu0 0.0
  %8060 = vmatprep.subr.mxu0 0.0
  %8061 = vmatpush1.msra.mxu0 0.0
  %8062 = vmatprep.subr.mxu0 0.0
  %8063 = vmatpush1.msra.mxu0 0.0
  %8064 = vmatprep.subr.mxu0 0.0
  %8065 = vmatpush1.msra.mxu0 0.0
  %8066 = vmatprep.subr.mxu0 0.0
  %8067 = vmatpush1.msra.mxu0 0.0
  %8068 = vmatprep.subr.mxu0 0.0
  %8069 = vmatpush1.msra.mxu0 0.0
  %8070 = vmatprep.subr.mxu0 0.0
  %8071 = vmatpush1.msra.mxu0 0.0
  %8072 = vmatprep.subr.mxu0 0.0
  %8073 = vmatpush1.msra.mxu0 0.0
  %8074 = vmatprep.subr.mxu0 0.0
  %8075 = vmatpush1.msra.mxu0 0.0
  %8076 = vmatprep.subr.mxu0 0.0
  %8077 = vmatpush1.msra.mxu0 0.0
  %8078 = vmatprep.subr.mxu0 0.0
  %8079 = vmatpush1.msra.mxu0 %v4738
  %8080 = vmatprep.subr.mxu0 0.0
  %8081 = vmatpush2.msra.mxu0 0.0
  %8082 = vmatprep.subr.mxu0 0.0
  %8083 = vmatpush2.msra.mxu0 0.0
  %8084 = vmatprep.subr.mxu0 0.0
  %8085 = vmatpush2.msra.mxu0 0.0
  %8086 = vmatprep.subr.mxu0 0.0
  %8087 = vmatpush2.msra.mxu0 0.0
  %8088 = vmatprep.subr.mxu0 0.0
  %8089 = vmatpush2.msra.mxu0 0.0
  %8090 = vmatprep.subr.mxu0 0.0
  %8091 = vmatpush2.msra.mxu0 0.0
  %8092 = vmatprep.subr.mxu0 0.0
  %8093 = vmatpush2.msra.mxu0 0.0
  %8094 = vmatprep.subr.mxu0 0.0
  %8095 = vmatpush2.msra.mxu0 0.0
  %8096 = vmatprep.subr.mxu0 0.0
  %8097 = vmatpush2.msra.mxu0 0.0
  %8098 = vmatprep.subr.mxu0 0.0
  %8099 = vmatpush2.msra.mxu0 0.0
  %8100 = vmatprep.subr.mxu0 0.0
  %8101 = vmatpush2.msra.mxu0 0.0
  %8102 = vmatprep.subr.mxu0 0.0
  %8103 = vmatpush2.msra.mxu0 0.0
  %8104 = vmatprep.subr.mxu0 0.0
  %8105 = vmatpush2.msra.mxu0 0.0
  %8106 = vmatprep.subr.mxu0 0.0
  %8107 = vmatpush2.msra.mxu0 0.0
  %8108 = vmatprep.subr.mxu0 0.0
  %8109 = vmatpush2.msra.mxu0 0.0
  %8110 = vmatprep.subr.mxu0 0.0
  %8111 = vmatpush2.msra.mxu0 0.0
  %8112 = vmatprep.mubr.f32.mxu0 0.0
  %8113 = vmatmul.mubr.f32.gmra.mxu0 %v8046
  %v8114 = vpop.f32.mrf.mxu0
  %v8115 = vadd.f32 0.0, %v8114
  %v8116 = vpop.f32.mrf.mxu0
  %8117 = vdwg.mxu0
  %v8119 = vsel %vm682, %v6286, 0
  %8121 = vmatprep.subr.mxu0 0.0
  %8122 = vmatpush1.msra.mxu0 0.0
  %8123 = vmatprep.subr.mxu0 0.0
  %8124 = vmatpush1.msra.mxu0 0.0
  %8125 = vmatprep.subr.mxu0 0.0
  %8126 = vmatpush1.msra.mxu0 0.0
  %8127 = vmatprep.subr.mxu0 0.0
  %8128 = vmatpush1.msra.mxu0 0.0
  %8129 = vmatprep.subr.mxu0 0.0
  %8130 = vmatpush1.msra.mxu0 0.0
  %8131 = vmatprep.subr.mxu0 0.0
  %8132 = vmatpush1.msra.mxu0 0.0
  %8133 = vmatprep.subr.mxu0 0.0
  %8134 = vmatpush1.msra.mxu0 0.0
  %8135 = vmatprep.subr.mxu0 0.0
  %8136 = vmatpush1.msra.mxu0 0.0
  %8137 = vmatprep.subr.mxu0 0.0
  %8138 = vmatpush1.msra.mxu0 0.0
  %8139 = vmatprep.subr.mxu0 0.0
  %8140 = vmatpush1.msra.mxu0 0.0
  %8141 = vmatprep.subr.mxu0 0.0
  %8142 = vmatpush1.msra.mxu0 0.0
  %8143 = vmatprep.subr.mxu0 0.0
  %8144 = vmatpush1.msra.mxu0 0.0
  %8145 = vmatprep.subr.mxu0 0.0
  %8146 = vmatpush1.msra.mxu0 0.0
  %8147 = vmatprep.subr.mxu0 0.0
  %8148 = vmatpush1.msra.mxu0 0.0
  %8149 = vmatprep.subr.mxu0 0.0
  %8150 = vmatpush1.msra.mxu0 0.0
  %8151 = vmatprep.subr.mxu0 0.0
  %8152 = vmatpush1.msra.mxu0 %v4743
  %8153 = vmatprep.subr.mxu0 0.0
  %8154 = vmatpush2.msra.mxu0 0.0
  %8155 = vmatprep.subr.mxu0 0.0
  %8156 = vmatpush2.msra.mxu0 0.0
  %8157 = vmatprep.subr.mxu0 0.0
  %8158 = vmatpush2.msra.mxu0 0.0
  %8159 = vmatprep.subr.mxu0 0.0
  %8160 = vmatpush2.msra.mxu0 0.0
  %8161 = vmatprep.subr.mxu0 0.0
  %8162 = vmatpush2.msra.mxu0 0.0
  %8163 = vmatprep.subr.mxu0 0.0
  %8164 = vmatpush2.msra.mxu0 0.0
  %8165 = vmatprep.subr.mxu0 0.0
  %8166 = vmatpush2.msra.mxu0 0.0
  %8167 = vmatprep.subr.mxu0 0.0
  %8168 = vmatpush2.msra.mxu0 0.0
  %8169 = vmatprep.subr.mxu0 0.0
  %8170 = vmatpush2.msra.mxu0 0.0
  %8171 = vmatprep.subr.mxu0 0.0
  %8172 = vmatpush2.msra.mxu0 0.0
  %8173 = vmatprep.subr.mxu0 0.0
  %8174 = vmatpush2.msra.mxu0 0.0
  %8175 = vmatprep.subr.mxu0 0.0
  %8176 = vmatpush2.msra.mxu0 0.0
  %8177 = vmatprep.subr.mxu0 0.0
  %8178 = vmatpush2.msra.mxu0 0.0
  %8179 = vmatprep.subr.mxu0 0.0
  %8180 = vmatpush2.msra.mxu0 0.0
  %8181 = vmatprep.subr.mxu0 0.0
  %8182 = vmatpush2.msra.mxu0 0.0
  %8183 = vmatprep.subr.mxu0 0.0
  %8184 = vmatpush2.msra.mxu0 0.0
  %8185 = vmatprep.mubr.f32.mxu0 0.0
  %8186 = vmatmul.mubr.f32.gmra.mxu0 %v8119
  %v8187 = vpop.f32.mrf.mxu0
  %v8188 = vadd.f32 0.0, %v8187
  %v8189 = vpop.f32.mrf.mxu0
  %8190 = vdwg.mxu0
  %v8192 = vsel %vm682, %v6287, 0
  %8194 = vmatprep.subr.mxu0 0.0
  %8195 = vmatpush1.msra.mxu0 0.0
  %8196 = vmatprep.subr.mxu0 0.0
  %8197 = vmatpush1.msra.mxu0 0.0
  %8198 = vmatprep.subr.mxu0 0.0
  %8199 = vmatpush1.msra.mxu0 0.0
  %8200 = vmatprep.subr.mxu0 0.0
  %8201 = vmatpush1.msra.mxu0 0.0
  %8202 = vmatprep.subr.mxu0 0.0
  %8203 = vmatpush1.msra.mxu0 0.0
  %8204 = vmatprep.subr.mxu0 0.0
  %8205 = vmatpush1.msra.mxu0 0.0
  %8206 = vmatprep.subr.mxu0 0.0
  %8207 = vmatpush1.msra.mxu0 0.0
  %8208 = vmatprep.subr.mxu0 0.0
  %8209 = vmatpush1.msra.mxu0 0.0
  %8210 = vmatprep.subr.mxu0 0.0
  %8211 = vmatpush1.msra.mxu0 0.0
  %8212 = vmatprep.subr.mxu0 0.0
  %8213 = vmatpush1.msra.mxu0 0.0
  %8214 = vmatprep.subr.mxu0 0.0
  %8215 = vmatpush1.msra.mxu0 0.0
  %8216 = vmatprep.subr.mxu0 0.0
  %8217 = vmatpush1.msra.mxu0 0.0
  %8218 = vmatprep.subr.mxu0 0.0
  %8219 = vmatpush1.msra.mxu0 0.0
  %8220 = vmatprep.subr.mxu0 0.0
  %8221 = vmatpush1.msra.mxu0 0.0
  %8222 = vmatprep.subr.mxu0 0.0
  %8223 = vmatpush1.msra.mxu0 0.0
  %8224 = vmatprep.subr.mxu0 0.0
  %8225 = vmatpush1.msra.mxu0 %v4748
  %8226 = vmatprep.subr.mxu0 0.0
  %8227 = vmatpush2.msra.mxu0 0.0
  %8228 = vmatprep.subr.mxu0 0.0
  %8229 = vmatpush2.msra.mxu0 0.0
  %8230 = vmatprep.subr.mxu0 0.0
  %8231 = vmatpush2.msra.mxu0 0.0
  %8232 = vmatprep.subr.mxu0 0.0
  %8233 = vmatpush2.msra.mxu0 0.0
  %8234 = vmatprep.subr.mxu0 0.0
  %8235 = vmatpush2.msra.mxu0 0.0
  %8236 = vmatprep.subr.mxu0 0.0
  %8237 = vmatpush2.msra.mxu0 0.0
  %8238 = vmatprep.subr.mxu0 0.0
  %8239 = vmatpush2.msra.mxu0 0.0
  %8240 = vmatprep.subr.mxu0 0.0
  %8241 = vmatpush2.msra.mxu0 0.0
  %8242 = vmatprep.subr.mxu0 0.0
  %8243 = vmatpush2.msra.mxu0 0.0
  %8244 = vmatprep.subr.mxu0 0.0
  %8245 = vmatpush2.msra.mxu0 0.0
  %8246 = vmatprep.subr.mxu0 0.0
  %8247 = vmatpush2.msra.mxu0 0.0
  %8248 = vmatprep.subr.mxu0 0.0
  %8249 = vmatpush2.msra.mxu0 0.0
  %8250 = vmatprep.subr.mxu0 0.0
  %8251 = vmatpush2.msra.mxu0 0.0
  %8252 = vmatprep.subr.mxu0 0.0
  %8253 = vmatpush2.msra.mxu0 0.0
  %8254 = vmatprep.subr.mxu0 0.0
  %8255 = vmatpush2.msra.mxu0 0.0
  %8256 = vmatprep.subr.mxu0 0.0
  %8257 = vmatpush2.msra.mxu0 0.0
  %8258 = vmatprep.mubr.f32.mxu0 0.0
  %8259 = vmatmul.mubr.f32.gmra.mxu0 %v8192
  %v8260 = vpop.f32.mrf.mxu0
  %v8261 = vadd.f32 0.0, %v8260
  %v8262 = vpop.f32.mrf.mxu0
  %8263 = vdwg.mxu0
  %v8265 = vsel %vm682, %v6288, 0
  %8267 = vmatprep.subr.mxu0 0.0
  %8268 = vmatpush1.msra.mxu0 0.0
  %8269 = vmatprep.subr.mxu0 0.0
  %8270 = vmatpush1.msra.mxu0 0.0
  %8271 = vmatprep.subr.mxu0 0.0
  %8272 = vmatpush1.msra.mxu0 0.0
  %8273 = vmatprep.subr.mxu0 0.0
  %8274 = vmatpush1.msra.mxu0 0.0
  %8275 = vmatprep.subr.mxu0 0.0
  %8276 = vmatpush1.msra.mxu0 0.0
  %8277 = vmatprep.subr.mxu0 0.0
  %8278 = vmatpush1.msra.mxu0 0.0
  %8279 = vmatprep.subr.mxu0 0.0
  %8280 = vmatpush1.msra.mxu0 0.0
  %8281 = vmatprep.subr.mxu0 0.0
  %8282 = vmatpush1.msra.mxu0 0.0
  %8283 = vmatprep.subr.mxu0 0.0
  %8284 = vmatpush1.msra.mxu0 0.0
  %8285 = vmatprep.subr.mxu0 0.0
  %8286 = vmatpush1.msra.mxu0 0.0
  %8287 = vmatprep.subr.mxu0 0.0
  %8288 = vmatpush1.msra.mxu0 0.0
  %8289 = vmatprep.subr.mxu0 0.0
  %8290 = vmatpush1.msra.mxu0 0.0
  %8291 = vmatprep.subr.mxu0 0.0
  %8292 = vmatpush1.msra.mxu0 0.0
  %8293 = vmatprep.subr.mxu0 0.0
  %8294 = vmatpush1.msra.mxu0 0.0
  %8295 = vmatprep.subr.mxu0 0.0
  %8296 = vmatpush1.msra.mxu0 0.0
  %8297 = vmatprep.subr.mxu0 0.0
  %8298 = vmatpush1.msra.mxu0 %v4753
  %8299 = vmatprep.subr.mxu0 0.0
  %8300 = vmatpush2.msra.mxu0 0.0
  %8301 = vmatprep.subr.mxu0 0.0
  %8302 = vmatpush2.msra.mxu0 0.0
  %8303 = vmatprep.subr.mxu0 0.0
  %8304 = vmatpush2.msra.mxu0 0.0
  %8305 = vmatprep.subr.mxu0 0.0
  %8306 = vmatpush2.msra.mxu0 0.0
  %8307 = vmatprep.subr.mxu0 0.0
  %8308 = vmatpush2.msra.mxu0 0.0
  %8309 = vmatprep.subr.mxu0 0.0
  %8310 = vmatpush2.msra.mxu0 0.0
  %8311 = vmatprep.subr.mxu0 0.0
  %8312 = vmatpush2.msra.mxu0 0.0
  %8313 = vmatprep.subr.mxu0 0.0
  %8314 = vmatpush2.msra.mxu0 0.0
  %8315 = vmatprep.subr.mxu0 0.0
  %8316 = vmatpush2.msra.mxu0 0.0
  %8317 = vmatprep.subr.mxu0 0.0
  %8318 = vmatpush2.msra.mxu0 0.0
  %8319 = vmatprep.subr.mxu0 0.0
  %8320 = vmatpush2.msra.mxu0 0.0
  %8321 = vmatprep.subr.mxu0 0.0
  %8322 = vmatpush2.msra.mxu0 0.0
  %8323 = vmatprep.subr.mxu0 0.0
  %8324 = vmatpush2.msra.mxu0 0.0
  %8325 = vmatprep.subr.mxu0 0.0
  %8326 = vmatpush2.msra.mxu0 0.0
  %8327 = vmatprep.subr.mxu0 0.0
  %8328 = vmatpush2.msra.mxu0 0.0
  %8329 = vmatprep.subr.mxu0 0.0
  %8330 = vmatpush2.msra.mxu0 0.0
  %8331 = vmatprep.mubr.f32.mxu0 0.0
  %8332 = vmatmul.mubr.f32.gmra.mxu0 %v8265
  %v8333 = vpop.f32.mrf.mxu0
  %v8334 = vadd.f32 0.0, %v8333
  %v8335 = vpop.f32.mrf.mxu0
  %8336 = vdwg.mxu0
  %v8338 = vsel %vm682, %v6289, 0
  %8340 = vmatprep.subr.mxu0 0.0
  %8341 = vmatpush1.msra.mxu0 0.0
  %8342 = vmatprep.subr.mxu0 0.0
  %8343 = vmatpush1.msra.mxu0 0.0
  %8344 = vmatprep.subr.mxu0 0.0
  %8345 = vmatpush1.msra.mxu0 0.0
  %8346 = vmatprep.subr.mxu0 0.0
  %8347 = vmatpush1.msra.mxu0 0.0
  %8348 = vmatprep.subr.mxu0 0.0
  %8349 = vmatpush1.msra.mxu0 0.0
  %8350 = vmatprep.subr.mxu0 0.0
  %8351 = vmatpush1.msra.mxu0 0.0
  %8352 = vmatprep.subr.mxu0 0.0
  %8353 = vmatpush1.msra.mxu0 0.0
  %8354 = vmatprep.subr.mxu0 0.0
  %8355 = vmatpush1.msra.mxu0 0.0
  %8356 = vmatprep.subr.mxu0 0.0
  %8357 = vmatpush1.msra.mxu0 0.0
  %8358 = vmatprep.subr.mxu0 0.0
  %8359 = vmatpush1.msra.mxu0 0.0
  %8360 = vmatprep.subr.mxu0 0.0
  %8361 = vmatpush1.msra.mxu0 0.0
  %8362 = vmatprep.subr.mxu0 0.0
  %8363 = vmatpush1.msra.mxu0 0.0
  %8364 = vmatprep.subr.mxu0 0.0
  %8365 = vmatpush1.msra.mxu0 0.0
  %8366 = vmatprep.subr.mxu0 0.0
  %8367 = vmatpush1.msra.mxu0 0.0
  %8368 = vmatprep.subr.mxu0 0.0
  %8369 = vmatpush1.msra.mxu0 0.0
  %8370 = vmatprep.subr.mxu0 0.0
  %8371 = vmatpush1.msra.mxu0 %v4758
  %8372 = vmatprep.subr.mxu0 0.0
  %8373 = vmatpush2.msra.mxu0 0.0
  %8374 = vmatprep.subr.mxu0 0.0
  %8375 = vmatpush2.msra.mxu0 0.0
  %8376 = vmatprep.subr.mxu0 0.0
  %8377 = vmatpush2.msra.mxu0 0.0
  %8378 = vmatprep.subr.mxu0 0.0
  %8379 = vmatpush2.msra.mxu0 0.0
  %8380 = vmatprep.subr.mxu0 0.0
  %8381 = vmatpush2.msra.mxu0 0.0
  %8382 = vmatprep.subr.mxu0 0.0
  %8383 = vmatpush2.msra.mxu0 0.0
  %8384 = vmatprep.subr.mxu0 0.0
  %8385 = vmatpush2.msra.mxu0 0.0
  %8386 = vmatprep.subr.mxu0 0.0
  %8387 = vmatpush2.msra.mxu0 0.0
  %8388 = vmatprep.subr.mxu0 0.0
  %8389 = vmatpush2.msra.mxu0 0.0
  %8390 = vmatprep.subr.mxu0 0.0
  %8391 = vmatpush2.msra.mxu0 0.0
  %8392 = vmatprep.subr.mxu0 0.0
  %8393 = vmatpush2.msra.mxu0 0.0
  %8394 = vmatprep.subr.mxu0 0.0
  %8395 = vmatpush2.msra.mxu0 0.0
  %8396 = vmatprep.subr.mxu0 0.0
  %8397 = vmatpush2.msra.mxu0 0.0
  %8398 = vmatprep.subr.mxu0 0.0
  %8399 = vmatpush2.msra.mxu0 0.0
  %8400 = vmatprep.subr.mxu0 0.0
  %8401 = vmatpush2.msra.mxu0 0.0
  %8402 = vmatprep.subr.mxu0 0.0
  %8403 = vmatpush2.msra.mxu0 0.0
  %8404 = vmatprep.mubr.f32.mxu0 0.0
  %8405 = vmatmul.mubr.f32.gmra.mxu0 %v8338
  %v8406 = vpop.f32.mrf.mxu0
  %v8407 = vadd.f32 0.0, %v8406
  %v8408 = vpop.f32.mrf.mxu0
  %8409 = vdwg.mxu0
  %v8411 = vsel %vm682, %v6290, 0
  %8413 = vmatprep.subr.mxu0 0.0
  %8414 = vmatpush1.msra.mxu0 0.0
  %8415 = vmatprep.subr.mxu0 0.0
  %8416 = vmatpush1.msra.mxu0 0.0
  %8417 = vmatprep.subr.mxu0 0.0
  %8418 = vmatpush1.msra.mxu0 0.0
  %8419 = vmatprep.subr.mxu0 0.0
  %8420 = vmatpush1.msra.mxu0 0.0
  %8421 = vmatprep.subr.mxu0 0.0
  %8422 = vmatpush1.msra.mxu0 0.0
  %8423 = vmatprep.subr.mxu0 0.0
  %8424 = vmatpush1.msra.mxu0 0.0
  %8425 = vmatprep.subr.mxu0 0.0
  %8426 = vmatpush1.msra.mxu0 0.0
  %8427 = vmatprep.subr.mxu0 0.0
  %8428 = vmatpush1.msra.mxu0 0.0
  %8429 = vmatprep.subr.mxu0 0.0
  %8430 = vmatpush1.msra.mxu0 0.0
  %8431 = vmatprep.subr.mxu0 0.0
  %8432 = vmatpush1.msra.mxu0 0.0
  %8433 = vmatprep.subr.mxu0 0.0
  %8434 = vmatpush1.msra.mxu0 0.0
  %8435 = vmatprep.subr.mxu0 0.0
  %8436 = vmatpush1.msra.mxu0 0.0
  %8437 = vmatprep.subr.mxu0 0.0
  %8438 = vmatpush1.msra.mxu0 0.0
  %8439 = vmatprep.subr.mxu0 0.0
  %8440 = vmatpush1.msra.mxu0 0.0
  %8441 = vmatprep.subr.mxu0 0.0
  %8442 = vmatpush1.msra.mxu0 0.0
  %8443 = vmatprep.subr.mxu0 0.0
  %8444 = vmatpush1.msra.mxu0 %v4763
  %8445 = vmatprep.subr.mxu0 0.0
  %8446 = vmatpush2.msra.mxu0 0.0
  %8447 = vmatprep.subr.mxu0 0.0
  %8448 = vmatpush2.msra.mxu0 0.0
  %8449 = vmatprep.subr.mxu0 0.0
  %8450 = vmatpush2.msra.mxu0 0.0
  %8451 = vmatprep.subr.mxu0 0.0
  %8452 = vmatpush2.msra.mxu0 0.0
  %8453 = vmatprep.subr.mxu0 0.0
  %8454 = vmatpush2.msra.mxu0 0.0
  %8455 = vmatprep.subr.mxu0 0.0
  %8456 = vmatpush2.msra.mxu0 0.0
  %8457 = vmatprep.subr.mxu0 0.0
  %8458 = vmatpush2.msra.mxu0 0.0
  %8459 = vmatprep.subr.mxu0 0.0
  %8460 = vmatpush2.msra.mxu0 0.0
  %8461 = vmatprep.subr.mxu0 0.0
  %8462 = vmatpush2.msra.mxu0 0.0
  %8463 = vmatprep.subr.mxu0 0.0
  %8464 = vmatpush2.msra.mxu0 0.0
  %8465 = vmatprep.subr.mxu0 0.0
  %8466 = vmatpush2.msra.mxu0 0.0
  %8467 = vmatprep.subr.mxu0 0.0
  %8468 = vmatpush2.msra.mxu0 0.0
  %8469 = vmatprep.subr.mxu0 0.0
  %8470 = vmatpush2.msra.mxu0 0.0
  %8471 = vmatprep.subr.mxu0 0.0
  %8472 = vmatpush2.msra.mxu0 0.0
  %8473 = vmatprep.subr.mxu0 0.0
  %8474 = vmatpush2.msra.mxu0 0.0
  %8475 = vmatprep.subr.mxu0 0.0
  %8476 = vmatpush2.msra.mxu0 0.0
  %8477 = vmatprep.mubr.f32.mxu0 0.0
  %8478 = vmatmul.mubr.f32.gmra.mxu0 %v8411
  %v8479 = vpop.f32.mrf.mxu0
  %v8480 = vadd.f32 0.0, %v8479
  %v8481 = vpop.f32.mrf.mxu0
  %8482 = vdwg.mxu0
  %v8484 = vsel %vm682, %v6291, 0
  %8486 = vmatprep.subr.mxu0 0.0
  %8487 = vmatpush1.msra.mxu0 0.0
  %8488 = vmatprep.subr.mxu0 0.0
  %8489 = vmatpush1.msra.mxu0 0.0
  %8490 = vmatprep.subr.mxu0 0.0
  %8491 = vmatpush1.msra.mxu0 0.0
  %8492 = vmatprep.subr.mxu0 0.0
  %8493 = vmatpush1.msra.mxu0 0.0
  %8494 = vmatprep.subr.mxu0 0.0
  %8495 = vmatpush1.msra.mxu0 0.0
  %8496 = vmatprep.subr.mxu0 0.0
  %8497 = vmatpush1.msra.mxu0 0.0
  %8498 = vmatprep.subr.mxu0 0.0
  %8499 = vmatpush1.msra.mxu0 0.0
  %8500 = vmatprep.subr.mxu0 0.0
  %8501 = vmatpush1.msra.mxu0 0.0
  %8502 = vmatprep.subr.mxu0 0.0
  %8503 = vmatpush1.msra.mxu0 0.0
  %8504 = vmatprep.subr.mxu0 0.0
  %8505 = vmatpush1.msra.mxu0 0.0
  %8506 = vmatprep.subr.mxu0 0.0
  %8507 = vmatpush1.msra.mxu0 0.0
  %8508 = vmatprep.subr.mxu0 0.0
  %8509 = vmatpush1.msra.mxu0 0.0
  %8510 = vmatprep.subr.mxu0 0.0
  %8511 = vmatpush1.msra.mxu0 0.0
  %8512 = vmatprep.subr.mxu0 0.0
  %8513 = vmatpush1.msra.mxu0 0.0
  %8514 = vmatprep.subr.mxu0 0.0
  %8515 = vmatpush1.msra.mxu0 0.0
  %8516 = vmatprep.subr.mxu0 0.0
  %8517 = vmatpush1.msra.mxu0 %v4768
  %8518 = vmatprep.subr.mxu0 0.0
  %8519 = vmatpush2.msra.mxu0 0.0
  %8520 = vmatprep.subr.mxu0 0.0
  %8521 = vmatpush2.msra.mxu0 0.0
  %8522 = vmatprep.subr.mxu0 0.0
  %8523 = vmatpush2.msra.mxu0 0.0
  %8524 = vmatprep.subr.mxu0 0.0
  %8525 = vmatpush2.msra.mxu0 0.0
  %8526 = vmatprep.subr.mxu0 0.0
  %8527 = vmatpush2.msra.mxu0 0.0
  %8528 = vmatprep.subr.mxu0 0.0
  %8529 = vmatpush2.msra.mxu0 0.0
  %8530 = vmatprep.subr.mxu0 0.0
  %8531 = vmatpush2.msra.mxu0 0.0
  %8532 = vmatprep.subr.mxu0 0.0
  %8533 = vmatpush2.msra.mxu0 0.0
  %8534 = vmatprep.subr.mxu0 0.0
  %8535 = vmatpush2.msra.mxu0 0.0
  %8536 = vmatprep.subr.mxu0 0.0
  %8537 = vmatpush2.msra.mxu0 0.0
  %8538 = vmatprep.subr.mxu0 0.0
  %8539 = vmatpush2.msra.mxu0 0.0
  %8540 = vmatprep.subr.mxu0 0.0
  %8541 = vmatpush2.msra.mxu0 0.0
  %8542 = vmatprep.subr.mxu0 0.0
  %8543 = vmatpush2.msra.mxu0 0.0
  %8544 = vmatprep.subr.mxu0 0.0
  %8545 = vmatpush2.msra.mxu0 0.0
  %8546 = vmatprep.subr.mxu0 0.0
  %8547 = vmatpush2.msra.mxu0 0.0
  %8548 = vmatprep.subr.mxu0 0.0
  %8549 = vmatpush2.msra.mxu0 0.0
  %8550 = vmatprep.mubr.f32.mxu0 0.0
  %8551 = vmatmul.mubr.f32.gmra.mxu0 %v8484
  %v8552 = vpop.f32.mrf.mxu0
  %v8553 = vadd.f32 0.0, %v8552
  %v8554 = vpop.f32.mrf.mxu0
  %8555 = vdwg.mxu0
  %v8557 = vsel %vm682, %v6292, 0
  %8559 = vmatprep.subr.mxu0 0.0
  %8560 = vmatpush1.msra.mxu0 0.0
  %8561 = vmatprep.subr.mxu0 0.0
  %8562 = vmatpush1.msra.mxu0 0.0
  %8563 = vmatprep.subr.mxu0 0.0
  %8564 = vmatpush1.msra.mxu0 0.0
  %8565 = vmatprep.subr.mxu0 0.0
  %8566 = vmatpush1.msra.mxu0 0.0
  %8567 = vmatprep.subr.mxu0 0.0
  %8568 = vmatpush1.msra.mxu0 0.0
  %8569 = vmatprep.subr.mxu0 0.0
  %8570 = vmatpush1.msra.mxu0 0.0
  %8571 = vmatprep.subr.mxu0 0.0
  %8572 = vmatpush1.msra.mxu0 0.0
  %8573 = vmatprep.subr.mxu0 0.0
  %8574 = vmatpush1.msra.mxu0 0.0
  %8575 = vmatprep.subr.mxu0 0.0
  %8576 = vmatpush1.msra.mxu0 0.0
  %8577 = vmatprep.subr.mxu0 0.0
  %8578 = vmatpush1.msra.mxu0 0.0
  %8579 = vmatprep.subr.mxu0 0.0
  %8580 = vmatpush1.msra.mxu0 0.0
  %8581 = vmatprep.subr.mxu0 0.0
  %8582 = vmatpush1.msra.mxu0 0.0
  %8583 = vmatprep.subr.mxu0 0.0
  %8584 = vmatpush1.msra.mxu0 0.0
  %8585 = vmatprep.subr.mxu0 0.0
  %8586 = vmatpush1.msra.mxu0 0.0
  %8587 = vmatprep.subr.mxu0 0.0
  %8588 = vmatpush1.msra.mxu0 0.0
  %8589 = vmatprep.subr.mxu0 0.0
  %8590 = vmatpush1.msra.mxu0 %v4773
  %8591 = vmatprep.subr.mxu0 0.0
  %8592 = vmatpush2.msra.mxu0 0.0
  %8593 = vmatprep.subr.mxu0 0.0
  %8594 = vmatpush2.msra.mxu0 0.0
  %8595 = vmatprep.subr.mxu0 0.0
  %8596 = vmatpush2.msra.mxu0 0.0
  %8597 = vmatprep.subr.mxu0 0.0
  %8598 = vmatpush2.msra.mxu0 0.0
  %8599 = vmatprep.subr.mxu0 0.0
  %8600 = vmatpush2.msra.mxu0 0.0
  %8601 = vmatprep.subr.mxu0 0.0
  %8602 = vmatpush2.msra.mxu0 0.0
  %8603 = vmatprep.subr.mxu0 0.0
  %8604 = vmatpush2.msra.mxu0 0.0
  %8605 = vmatprep.subr.mxu0 0.0
  %8606 = vmatpush2.msra.mxu0 0.0
  %8607 = vmatprep.subr.mxu0 0.0
  %8608 = vmatpush2.msra.mxu0 0.0
  %8609 = vmatprep.subr.mxu0 0.0
  %8610 = vmatpush2.msra.mxu0 0.0
  %8611 = vmatprep.subr.mxu0 0.0
  %8612 = vmatpush2.msra.mxu0 0.0
  %8613 = vmatprep.subr.mxu0 0.0
  %8614 = vmatpush2.msra.mxu0 0.0
  %8615 = vmatprep.subr.mxu0 0.0
  %8616 = vmatpush2.msra.mxu0 0.0
  %8617 = vmatprep.subr.mxu0 0.0
  %8618 = vmatpush2.msra.mxu0 0.0
  %8619 = vmatprep.subr.mxu0 0.0
  %8620 = vmatpush2.msra.mxu0 0.0
  %8621 = vmatprep.subr.mxu0 0.0
  %8622 = vmatpush2.msra.mxu0 0.0
  %8623 = vmatprep.mubr.f32.mxu0 0.0
  %8624 = vmatmul.mubr.f32.gmra.mxu0 %v8557
  %v8625 = vpop.f32.mrf.mxu0
  %v8626 = vadd.f32 0.0, %v8625
  %v8627 = vpop.f32.mrf.mxu0
  %8628 = vdwg.mxu0
  %v8629 = vcombine.low %v6363, %v6509
  %v8630 = vcombine.high %v6363, %v6509
  %v8632 = vunpack.c.l.s4 1983009808
  %v8633 = vunpack.c.0.s8 %v8632
  %v8634 = vlaneseq
  %v8635 = vshrl.u32 %v8634, 7
  %v8636 = vsub.s32 %v8633, %v8635
  %v8637 = vrot.slane %v8629, %v8636
  %v8639 = vunpack.c.l.s4 1983009808
  %v8640 = vunpack.c.0.s8 %v8639
  %v8641 = vlaneseq
  %v8642 = vshrl.u32 %v8641, 7
  %v8643 = vsub.s32 %v8640, %v8642
  %v8644 = vrot.slane %v8630, %v8643
  %v8645 = vcombine.low %v6436, %v6582
  %v8646 = vcombine.high %v6436, %v6582
  %v8648 = vunpack.c.l.s4 1983009808
  %v8649 = vunpack.c.0.s8 %v8648
  %v8650 = vlaneseq
  %v8651 = vshrl.u32 %v8650, 7
  %v8652 = vsub.s32 %v8649, %v8651
  %v8653 = vrot.slane %v8645, %v8652
  %v8655 = vunpack.c.l.s4 1983009808
  %v8656 = vunpack.c.0.s8 %v8655
  %v8657 = vlaneseq
  %v8658 = vshrl.u32 %v8657, 7
  %v8659 = vsub.s32 %v8656, %v8658
  %v8660 = vrot.slane %v8646, %v8659
  %v8661 = vcombine.low %v6655, %v6801
  %v8662 = vcombine.high %v6655, %v6801
  %v8664 = vunpack.c.l.s4 1983009808
  %v8665 = vunpack.c.0.s8 %v8664
  %v8666 = vlaneseq
  %v8667 = vshrl.u32 %v8666, 7
  %v8668 = vsub.s32 %v8665, %v8667
  %v8669 = vrot.slane %v8661, %v8668
  %v8671 = vunpack.c.l.s4 1983009808
  %v8672 = vunpack.c.0.s8 %v8671
  %v8673 = vlaneseq
  %v8674 = vshrl.u32 %v8673, 7
  %v8675 = vsub.s32 %v8672, %v8674
  %v8676 = vrot.slane %v8662, %v8675
  %v8677 = vcombine.low %v6728, %v6874
  %v8678 = vcombine.high %v6728, %v6874
  %v8680 = vunpack.c.l.s4 1983009808
  %v8681 = vunpack.c.0.s8 %v8680
  %v8682 = vlaneseq
  %v8683 = vshrl.u32 %v8682, 7
  %v8684 = vsub.s32 %v8681, %v8683
  %v8685 = vrot.slane %v8677, %v8684
  %v8687 = vunpack.c.l.s4 1983009808
  %v8688 = vunpack.c.0.s8 %v8687
  %v8689 = vlaneseq
  %v8690 = vshrl.u32 %v8689, 7
  %v8691 = vsub.s32 %v8688, %v8690
  %v8692 = vrot.slane %v8678, %v8691
  %v8693 = vcombine.low %v8637, %v8653
  %v8694 = vcombine.high %v8637, %v8653
  %v8696 = vunpack.c.l.s4 1934713408
  %v8697 = vunpack.c.0.s8 %v8696
  %v8698 = vlaneseq
  %v8699 = vshrl.u32 %v8698, 7
  %v8700 = vsub.s32 %v8697, %v8699
  %v8701 = vrot.slane %v8693, %v8700
  %v8703 = vunpack.c.l.s4 1934713408
  %v8704 = vunpack.c.0.s8 %v8703
  %v8705 = vlaneseq
  %v8706 = vshrl.u32 %v8705, 7
  %v8707 = vsub.s32 %v8704, %v8706
  %v8708 = vrot.slane %v8694, %v8707
  %v8709 = vcombine.low %v8644, %v8660
  %v8710 = vcombine.high %v8644, %v8660
  %v8712 = vunpack.c.l.s4 1934713408
  %v8713 = vunpack.c.0.s8 %v8712
  %v8714 = vlaneseq
  %v8715 = vshrl.u32 %v8714, 7
  %v8716 = vsub.s32 %v8713, %v8715
  %v8717 = vrot.slane %v8709, %v8716
  %v8719 = vunpack.c.l.s4 1934713408
  %v8720 = vunpack.c.0.s8 %v8719
  %v8721 = vlaneseq
  %v8722 = vshrl.u32 %v8721, 7
  %v8723 = vsub.s32 %v8720, %v8722
  %v8724 = vrot.slane %v8710, %v8723
  %v8725 = vcombine.low %v8669, %v8685
  %v8726 = vcombine.high %v8669, %v8685
  %v8728 = vunpack.c.l.s4 1934713408
  %v8729 = vunpack.c.0.s8 %v8728
  %v8730 = vlaneseq
  %v8731 = vshrl.u32 %v8730, 7
  %v8732 = vsub.s32 %v8729, %v8731
  %v8733 = vrot.slane %v8725, %v8732
  %v8735 = vunpack.c.l.s4 1934713408
  %v8736 = vunpack.c.0.s8 %v8735
  %v8737 = vlaneseq
  %v8738 = vshrl.u32 %v8737, 7
  %v8739 = vsub.s32 %v8736, %v8738
  %v8740 = vrot.slane %v8726, %v8739
  %v8741 = vcombine.low %v8676, %v8692
  %v8742 = vcombine.high %v8676, %v8692
  %v8744 = vunpack.c.l.s4 1934713408
  %v8745 = vunpack.c.0.s8 %v8744
  %v8746 = vlaneseq
  %v8747 = vshrl.u32 %v8746, 7
  %v8748 = vsub.s32 %v8745, %v8747
  %v8749 = vrot.slane %v8741, %v8748
  %v8751 = vunpack.c.l.s4 1934713408
  %v8752 = vunpack.c.0.s8 %v8751
  %v8753 = vlaneseq
  %v8754 = vshrl.u32 %v8753, 7
  %v8755 = vsub.s32 %v8752, %v8754
  %v8756 = vrot.slane %v8742, %v8755
  %v8757 = vcombine.low %v8701, %v8733
  %v8758 = vcombine.high %v8701, %v8733
  %v8759 = vcombine.low %v8708, %v8740
  %v8760 = vcombine.high %v8708, %v8740
  %v8761 = vcombine.low %v8717, %v8749
  %v8762 = vcombine.high %v8717, %v8749
  %v8763 = vcombine.low %v8724, %v8756
  %v8764 = vcombine.high %v8724, %v8756
  %v8765 = vcombine.low %v6947, %v7093
  %v8766 = vcombine.high %v6947, %v7093
  %v8768 = vunpack.c.l.s4 1983009808
  %v8769 = vunpack.c.0.s8 %v8768
  %v8770 = vlaneseq
  %v8771 = vshrl.u32 %v8770, 7
  %v8772 = vsub.s32 %v8769, %v8771
  %v8773 = vrot.slane %v8765, %v8772
  %v8775 = vunpack.c.l.s4 1983009808
  %v8776 = vunpack.c.0.s8 %v8775
  %v8777 = vlaneseq
  %v8778 = vshrl.u32 %v8777, 7
  %v8779 = vsub.s32 %v8776, %v8778
  %v8780 = vrot.slane %v8766, %v8779
  %v8781 = vcombine.low %v7020, %v7166
  %v8782 = vcombine.high %v7020, %v7166
  %v8784 = vunpack.c.l.s4 1983009808
  %v8785 = vunpack.c.0.s8 %v8784
  %v8786 = vlaneseq
  %v8787 = vshrl.u32 %v8786, 7
  %v8788 = vsub.s32 %v8785, %v8787
  %v8789 = vrot.slane %v8781, %v8788
  %v8791 = vunpack.c.l.s4 1983009808
  %v8792 = vunpack.c.0.s8 %v8791
  %v8793 = vlaneseq
  %v8794 = vshrl.u32 %v8793, 7
  %v8795 = vsub.s32 %v8792, %v8794
  %v8796 = vrot.slane %v8782, %v8795
  %v8797 = vcombine.low %v7239, %v7385
  %v8798 = vcombine.high %v7239, %v7385
  %v8800 = vunpack.c.l.s4 1983009808
  %v8801 = vunpack.c.0.s8 %v8800
  %v8802 = vlaneseq
  %v8803 = vshrl.u32 %v8802, 7
  %v8804 = vsub.s32 %v8801, %v8803
  %v8805 = vrot.slane %v8797, %v8804
  %v8807 = vunpack.c.l.s4 1983009808
  %v8808 = vunpack.c.0.s8 %v8807
  %v8809 = vlaneseq
  %v8810 = vshrl.u32 %v8809, 7
  %v8811 = vsub.s32 %v8808, %v8810
  %v8812 = vrot.slane %v8798, %v8811
  %v8813 = vcombine.low %v7312, %v7458
  %v8814 = vcombine.high %v7312, %v7458
  %v8816 = vunpack.c.l.s4 1983009808
  %v8817 = vunpack.c.0.s8 %v8816
  %v8818 = vlaneseq
  %v8819 = vshrl.u32 %v8818, 7
  %v8820 = vsub.s32 %v8817, %v8819
  %v8821 = vrot.slane %v8813, %v8820
  %v8823 = vunpack.c.l.s4 1983009808
  %v8824 = vunpack.c.0.s8 %v8823
  %v8825 = vlaneseq
  %v8826 = vshrl.u32 %v8825, 7
  %v8827 = vsub.s32 %v8824, %v8826
  %v8828 = vrot.slane %v8814, %v8827
  %v8829 = vcombine.low %v8773, %v8789
  %v8830 = vcombine.high %v8773, %v8789
  %v8832 = vunpack.c.l.s4 1934713408
  %v8833 = vunpack.c.0.s8 %v8832
  %v8834 = vlaneseq
  %v8835 = vshrl.u32 %v8834, 7
  %v8836 = vsub.s32 %v8833, %v8835
  %v8837 = vrot.slane %v8829, %v8836
  %v8839 = vunpack.c.l.s4 1934713408
  %v8840 = vunpack.c.0.s8 %v8839
  %v8841 = vlaneseq
  %v8842 = vshrl.u32 %v8841, 7
  %v8843 = vsub.s32 %v8840, %v8842
  %v8844 = vrot.slane %v8830, %v8843
  %v8845 = vcombine.low %v8780, %v8796
  %v8846 = vcombine.high %v8780, %v8796
  %v8848 = vunpack.c.l.s4 1934713408
  %v8849 = vunpack.c.0.s8 %v8848
  %v8850 = vlaneseq
  %v8851 = vshrl.u32 %v8850, 7
  %v8852 = vsub.s32 %v8849, %v8851
  %v8853 = vrot.slane %v8845, %v8852
  %v8855 = vunpack.c.l.s4 1934713408
  %v8856 = vunpack.c.0.s8 %v8855
  %v8857 = vlaneseq
  %v8858 = vshrl.u32 %v8857, 7
  %v8859 = vsub.s32 %v8856, %v8858
  %v8860 = vrot.slane %v8846, %v8859
  %v8861 = vcombine.low %v8805, %v8821
  %v8862 = vcombine.high %v8805, %v8821
  %v8864 = vunpack.c.l.s4 1934713408
  %v8865 = vunpack.c.0.s8 %v8864
  %v8866 = vlaneseq
  %v8867 = vshrl.u32 %v8866, 7
  %v8868 = vsub.s32 %v8865, %v8867
  %v8869 = vrot.slane %v8861, %v8868
  %v8871 = vunpack.c.l.s4 1934713408
  %v8872 = vunpack.c.0.s8 %v8871
  %v8873 = vlaneseq
  %v8874 = vshrl.u32 %v8873, 7
  %v8875 = vsub.s32 %v8872, %v8874
  %v8876 = vrot.slane %v8862, %v8875
  %v8877 = vcombine.low %v8812, %v8828
  %v8878 = vcombine.high %v8812, %v8828
  %v8880 = vunpack.c.l.s4 1934713408
  %v8881 = vunpack.c.0.s8 %v8880
  %v8882 = vlaneseq
  %v8883 = vshrl.u32 %v8882, 7
  %v8884 = vsub.s32 %v8881, %v8883
  %v8885 = vrot.slane %v8877, %v8884
  %v8887 = vunpack.c.l.s4 1934713408
  %v8888 = vunpack.c.0.s8 %v8887
  %v8889 = vlaneseq
  %v8890 = vshrl.u32 %v8889, 7
  %v8891 = vsub.s32 %v8888, %v8890
  %v8892 = vrot.slane %v8878, %v8891
  %v8893 = vcombine.low %v8837, %v8869
  %v8894 = vcombine.high %v8837, %v8869
  %v8895 = vcombine.low %v8844, %v8876
  %v8896 = vcombine.high %v8844, %v8876
  %v8897 = vcombine.low %v8853, %v8885
  %v8898 = vcombine.high %v8853, %v8885
  %v8899 = vcombine.low %v8860, %v8892
  %v8900 = vcombine.high %v8860, %v8892
  %v8901 = vcombine.low %v7531, %v7677
  %v8902 = vcombine.high %v7531, %v7677
  %v8904 = vunpack.c.l.s4 1983009808
  %v8905 = vunpack.c.0.s8 %v8904
  %v8906 = vlaneseq
  %v8907 = vshrl.u32 %v8906, 7
  %v8908 = vsub.s32 %v8905, %v8907
  %v8909 = vrot.slane %v8901, %v8908
  %v8911 = vunpack.c.l.s4 1983009808
  %v8912 = vunpack.c.0.s8 %v8911
  %v8913 = vlaneseq
  %v8914 = vshrl.u32 %v8913, 7
  %v8915 = vsub.s32 %v8912, %v8914
  %v8916 = vrot.slane %v8902, %v8915
  %v8917 = vcombine.low %v7604, %v7750
  %v8918 = vcombine.high %v7604, %v7750
  %v8920 = vunpack.c.l.s4 1983009808
  %v8921 = vunpack.c.0.s8 %v8920
  %v8922 = vlaneseq
  %v8923 = vshrl.u32 %v8922, 7
  %v8924 = vsub.s32 %v8921, %v8923
  %v8925 = vrot.slane %v8917, %v8924
  %v8927 = vunpack.c.l.s4 1983009808
  %v8928 = vunpack.c.0.s8 %v8927
  %v8929 = vlaneseq
  %v8930 = vshrl.u32 %v8929, 7
  %v8931 = vsub.s32 %v8928, %v8930
  %v8932 = vrot.slane %v8918, %v8931
  %v8933 = vcombine.low %v7823, %v7969
  %v8934 = vcombine.high %v7823, %v7969
  %v8936 = vunpack.c.l.s4 1983009808
  %v8937 = vunpack.c.0.s8 %v8936
  %v8938 = vlaneseq
  %v8939 = vshrl.u32 %v8938, 7
  %v8940 = vsub.s32 %v8937, %v8939
  %v8941 = vrot.slane %v8933, %v8940
  %v8943 = vunpack.c.l.s4 1983009808
  %v8944 = vunpack.c.0.s8 %v8943
  %v8945 = vlaneseq
  %v8946 = vshrl.u32 %v8945, 7
  %v8947 = vsub.s32 %v8944, %v8946
  %v8948 = vrot.slane %v8934, %v8947
  %v8949 = vcombine.low %v7896, %v8042
  %v8950 = vcombine.high %v7896, %v8042
  %v8952 = vunpack.c.l.s4 1983009808
  %v8953 = vunpack.c.0.s8 %v8952
  %v8954 = vlaneseq
  %v8955 = vshrl.u32 %v8954, 7
  %v8956 = vsub.s32 %v8953, %v8955
  %v8957 = vrot.slane %v8949, %v8956
  %v8959 = vunpack.c.l.s4 1983009808
  %v8960 = vunpack.c.0.s8 %v8959
  %v8961 = vlaneseq
  %v8962 = vshrl.u32 %v8961, 7
  %v8963 = vsub.s32 %v8960, %v8962
  %v8964 = vrot.slane %v8950, %v8963
  %v8965 = vcombine.low %v8909, %v8925
  %v8966 = vcombine.high %v8909, %v8925
  %v8968 = vunpack.c.l.s4 1934713408
  %v8969 = vunpack.c.0.s8 %v8968
  %v8970 = vlaneseq
  %v8971 = vshrl.u32 %v8970, 7
  %v8972 = vsub.s32 %v8969, %v8971
  %v8973 = vrot.slane %v8965, %v8972
  %v8975 = vunpack.c.l.s4 1934713408
  %v8976 = vunpack.c.0.s8 %v8975
  %v8977 = vlaneseq
  %v8978 = vshrl.u32 %v8977, 7
  %v8979 = vsub.s32 %v8976, %v8978
  %v8980 = vrot.slane %v8966, %v8979
  %v8981 = vcombine.low %v8916, %v8932
  %v8982 = vcombine.high %v8916, %v8932
  %v8984 = vunpack.c.l.s4 1934713408
  %v8985 = vunpack.c.0.s8 %v8984
  %v8986 = vlaneseq
  %v8987 = vshrl.u32 %v8986, 7
  %v8988 = vsub.s32 %v8985, %v8987
  %v8989 = vrot.slane %v8981, %v8988
  %v8991 = vunpack.c.l.s4 1934713408
  %v8992 = vunpack.c.0.s8 %v8991
  %v8993 = vlaneseq
  %v8994 = vshrl.u32 %v8993, 7
  %v8995 = vsub.s32 %v8992, %v8994
  %v8996 = vrot.slane %v8982, %v8995
  %v8997 = vcombine.low %v8941, %v8957
  %v8998 = vcombine.high %v8941, %v8957
  %v9000 = vunpack.c.l.s4 1934713408
  %v9001 = vunpack.c.0.s8 %v9000
  %v9002 = vlaneseq
  %v9003 = vshrl.u32 %v9002, 7
  %v9004 = vsub.s32 %v9001, %v9003
  %v9005 = vrot.slane %v8997, %v9004
  %v9007 = vunpack.c.l.s4 1934713408
  %v9008 = vunpack.c.0.s8 %v9007
  %v9009 = vlaneseq
  %v9010 = vshrl.u32 %v9009, 7
  %v9011 = vsub.s32 %v9008, %v9010
  %v9012 = vrot.slane %v8998, %v9011
  %v9013 = vcombine.low %v8948, %v8964
  %v9014 = vcombine.high %v8948, %v8964
  %v9016 = vunpack.c.l.s4 1934713408
  %v9017 = vunpack.c.0.s8 %v9016
  %v9018 = vlaneseq
  %v9019 = vshrl.u32 %v9018, 7
  %v9020 = vsub.s32 %v9017, %v9019
  %v9021 = vrot.slane %v9013, %v9020
  %v9023 = vunpack.c.l.s4 1934713408
  %v9024 = vunpack.c.0.s8 %v9023
  %v9025 = vlaneseq
  %v9026 = vshrl.u32 %v9025, 7
  %v9027 = vsub.s32 %v9024, %v9026
  %v9028 = vrot.slane %v9014, %v9027
  %v9029 = vcombine.low %v8973, %v9005
  %v9030 = vcombine.high %v8973, %v9005
  %v9031 = vcombine.low %v8980, %v9012
  %v9032 = vcombine.high %v8980, %v9012
  %v9033 = vcombine.low %v8989, %v9021
  %v9034 = vcombine.high %v8989, %v9021
  %v9035 = vcombine.low %v8996, %v9028
  %v9036 = vcombine.high %v8996, %v9028
  %v9037 = vcombine.low %v8115, %v8261
  %v9038 = vcombine.high %v8115, %v8261
  %v9040 = vunpack.c.l.s4 1983009808
  %v9041 = vunpack.c.0.s8 %v9040
  %v9042 = vlaneseq
  %v9043 = vshrl.u32 %v9042, 7
  %v9044 = vsub.s32 %v9041, %v9043
  %v9045 = vrot.slane %v9037, %v9044
  %v9047 = vunpack.c.l.s4 1983009808
  %v9048 = vunpack.c.0.s8 %v9047
  %v9049 = vlaneseq
  %v9050 = vshrl.u32 %v9049, 7
  %v9051 = vsub.s32 %v9048, %v9050
  %v9052 = vrot.slane %v9038, %v9051
  %v9053 = vcombine.low %v8188, %v8334
  %v9054 = vcombine.high %v8188, %v8334
  %v9056 = vunpack.c.l.s4 1983009808
  %v9057 = vunpack.c.0.s8 %v9056
  %v9058 = vlaneseq
  %v9059 = vshrl.u32 %v9058, 7
  %v9060 = vsub.s32 %v9057, %v9059
  %v9061 = vrot.slane %v9053, %v9060
  %v9063 = vunpack.c.l.s4 1983009808
  %v9064 = vunpack.c.0.s8 %v9063
  %v9065 = vlaneseq
  %v9066 = vshrl.u32 %v9065, 7
  %v9067 = vsub.s32 %v9064, %v9066
  %v9068 = vrot.slane %v9054, %v9067
  %v9069 = vcombine.low %v8407, %v8553
  %v9070 = vcombine.high %v8407, %v8553
  %v9072 = vunpack.c.l.s4 1983009808
  %v9073 = vunpack.c.0.s8 %v9072
  %v9074 = vlaneseq
  %v9075 = vshrl.u32 %v9074, 7
  %v9076 = vsub.s32 %v9073, %v9075
  %v9077 = vrot.slane %v9069, %v9076
  %v9079 = vunpack.c.l.s4 1983009808
  %v9080 = vunpack.c.0.s8 %v9079
  %v9081 = vlaneseq
  %v9082 = vshrl.u32 %v9081, 7
  %v9083 = vsub.s32 %v9080, %v9082
  %v9084 = vrot.slane %v9070, %v9083
  %v9085 = vcombine.low %v8480, %v8626
  %v9086 = vcombine.high %v8480, %v8626
  %v9088 = vunpack.c.l.s4 1983009808
  %v9089 = vunpack.c.0.s8 %v9088
  %v9090 = vlaneseq
  %v9091 = vshrl.u32 %v9090, 7
  %v9092 = vsub.s32 %v9089, %v9091
  %v9093 = vrot.slane %v9085, %v9092
  %v9095 = vunpack.c.l.s4 1983009808
  %v9096 = vunpack.c.0.s8 %v9095
  %v9097 = vlaneseq
  %v9098 = vshrl.u32 %v9097, 7
  %v9099 = vsub.s32 %v9096, %v9098
  %v9100 = vrot.slane %v9086, %v9099
  %v9101 = vcombine.low %v9045, %v9061
  %v9102 = vcombine.high %v9045, %v9061
  %v9104 = vunpack.c.l.s4 1934713408
  %v9105 = vunpack.c.0.s8 %v9104
  %v9106 = vlaneseq
  %v9107 = vshrl.u32 %v9106, 7
  %v9108 = vsub.s32 %v9105, %v9107
  %v9109 = vrot.slane %v9101, %v9108
  %v9111 = vunpack.c.l.s4 1934713408
  %v9112 = vunpack.c.0.s8 %v9111
  %v9113 = vlaneseq
  %v9114 = vshrl.u32 %v9113, 7
  %v9115 = vsub.s32 %v9112, %v9114
  %v9116 = vrot.slane %v9102, %v9115
  %v9117 = vcombine.low %v9052, %v9068
  %v9118 = vcombine.high %v9052, %v9068
  %v9120 = vunpack.c.l.s4 1934713408
  %v9121 = vunpack.c.0.s8 %v9120
  %v9122 = vlaneseq
  %v9123 = vshrl.u32 %v9122, 7
  %v9124 = vsub.s32 %v9121, %v9123
  %v9125 = vrot.slane %v9117, %v9124
  %v9127 = vunpack.c.l.s4 1934713408
  %v9128 = vunpack.c.0.s8 %v9127
  %v9129 = vlaneseq
  %v9130 = vshrl.u32 %v9129, 7
  %v9131 = vsub.s32 %v9128, %v9130
  %v9132 = vrot.slane %v9118, %v9131
  %v9133 = vcombine.low %v9077, %v9093
  %v9134 = vcombine.high %v9077, %v9093
  %v9136 = vunpack.c.l.s4 1934713408
  %v9137 = vunpack.c.0.s8 %v9136
  %v9138 = vlaneseq
  %v9139 = vshrl.u32 %v9138, 7
  %v9140 = vsub.s32 %v9137, %v9139
  %v9141 = vrot.slane %v9133, %v9140
  %v9143 = vunpack.c.l.s4 1934713408
  %v9144 = vunpack.c.0.s8 %v9143
  %v9145 = vlaneseq
  %v9146 = vshrl.u32 %v9145, 7
  %v9147 = vsub.s32 %v9144, %v9146
  %v9148 = vrot.slane %v9134, %v9147
  %v9149 = vcombine.low %v9084, %v9100
  %v9150 = vcombine.high %v9084, %v9100
  %v9152 = vunpack.c.l.s4 1934713408
  %v9153 = vunpack.c.0.s8 %v9152
  %v9154 = vlaneseq
  %v9155 = vshrl.u32 %v9154, 7
  %v9156 = vsub.s32 %v9153, %v9155
  %v9157 = vrot.slane %v9149, %v9156
  %v9159 = vunpack.c.l.s4 1934713408
  %v9160 = vunpack.c.0.s8 %v9159
  %v9161 = vlaneseq
  %v9162 = vshrl.u32 %v9161, 7
  %v9163 = vsub.s32 %v9160, %v9162
  %v9164 = vrot.slane %v9150, %v9163
  %v9165 = vcombine.low %v9109, %v9141
  %v9166 = vcombine.high %v9109, %v9141
  %v9167 = vcombine.low %v9116, %v9148
  %v9168 = vcombine.high %v9116, %v9148
  %v9169 = vcombine.low %v9125, %v9157
  %v9170 = vcombine.high %v9125, %v9157
  %v9171 = vcombine.low %v9132, %v9164
  %v9172 = vcombine.high %v9132, %v9164
  %9177 = vrot.lane.b32.xlu0 %v8758, 16
  %v9178 = vpop.permute.xlu0 %9177
  %9179 = vrot.lane.b32.xlu0 %v8894, 16
  %v9180 = vpop.permute.xlu0 %9179
  %9181 = vrot.lane.b32.xlu0 %v9030, 16
  %v9182 = vpop.permute.xlu0 %9181
  %9183 = vrot.lane.b32.xlu0 %v9166, 16
  %v9184 = vpop.permute.xlu0 %9183
  %9193 = vrot.lane.b32.xlu0 %v8759, 32
  %v9194 = vpop.permute.xlu0 %9193
  %9195 = vrot.lane.b32.xlu0 %v8895, 32
  %v9196 = vpop.permute.xlu0 %9195
  %9197 = vrot.lane.b32.xlu0 %v9031, 32
  %v9198 = vpop.permute.xlu0 %9197
  %9199 = vrot.lane.b32.xlu0 %v9167, 32
  %v9200 = vpop.permute.xlu0 %9199
  %9209 = vrot.lane.b32.xlu0 %v8760, 48
  %v9210 = vpop.permute.xlu0 %9209
  %9211 = vrot.lane.b32.xlu0 %v8896, 48
  %v9212 = vpop.permute.xlu0 %9211
  %9213 = vrot.lane.b32.xlu0 %v9032, 48
  %v9214 = vpop.permute.xlu0 %9213
  %9215 = vrot.lane.b32.xlu0 %v9168, 48
  %v9216 = vpop.permute.xlu0 %9215
  %9225 = vrot.lane.b32.xlu0 %v8761, 64
  %v9226 = vpop.permute.xlu0 %9225
  %9227 = vrot.lane.b32.xlu0 %v8897, 64
  %v9228 = vpop.permute.xlu0 %9227
  %9229 = vrot.lane.b32.xlu0 %v9033, 64
  %v9230 = vpop.permute.xlu0 %9229
  %9231 = vrot.lane.b32.xlu0 %v9169, 64
  %v9232 = vpop.permute.xlu0 %9231
  %9241 = vrot.lane.b32.xlu0 %v8762, 80
  %v9242 = vpop.permute.xlu0 %9241
  %9243 = vrot.lane.b32.xlu0 %v8898, 80
  %v9244 = vpop.permute.xlu0 %9243
  %9245 = vrot.lane.b32.xlu0 %v9034, 80
  %v9246 = vpop.permute.xlu0 %9245
  %9247 = vrot.lane.b32.xlu0 %v9170, 80
  %v9248 = vpop.permute.xlu0 %9247
  %9257 = vrot.lane.b32.xlu0 %v8763, 96
  %v9258 = vpop.permute.xlu0 %9257
  %9259 = vrot.lane.b32.xlu0 %v8899, 96
  %v9260 = vpop.permute.xlu0 %9259
  %9261 = vrot.lane.b32.xlu0 %v9035, 96
  %v9262 = vpop.permute.xlu0 %9261
  %9263 = vrot.lane.b32.xlu0 %v9171, 96
  %v9264 = vpop.permute.xlu0 %9263
  %9273 = vrot.lane.b32.xlu0 %v8764, 112
  %v9274 = vpop.permute.xlu0 %9273
  %9275 = vrot.lane.b32.xlu0 %v8900, 112
  %v9276 = vpop.permute.xlu0 %9275
  %9277 = vrot.lane.b32.xlu0 %v9036, 112
  %v9278 = vpop.permute.xlu0 %9277
  %9279 = vrot.lane.b32.xlu0 %v9172, 112
  %v9280 = vpop.permute.xlu0 %9279
  %v9285 = vsel %vm67, %v8757, %v9178
  %v9286 = vsel %vm67, %v8893, %v9180
  %v9287 = vsel %vm67, %v9029, %v9182
  %v9288 = vsel %vm67, %v9165, %v9184
  %vm9289 = vcmask 261120
  %v9290 = vsel %vm9289, %v9285, %v9194
  %v9291 = vsel %vm9289, %v9286, %v9196
  %v9292 = vsel %vm9289, %v9287, %v9198
  %v9293 = vsel %vm9289, %v9288, %v9200
  %vm9294 = vcmask 392192
  %v9295 = vsel %vm9294, %v9290, %v9210
  %v9296 = vsel %vm9294, %v9291, %v9212
  %v9297 = vsel %vm9294, %v9292, %v9214
  %v9298 = vsel %vm9294, %v9293, %v9216
  %v9299 = vsel %vm1133, %v9295, %v9226
  %v9300 = vsel %vm1133, %v9296, %v9228
  %v9301 = vsel %vm1133, %v9297, %v9230
  %v9302 = vsel %vm1133, %v9298, %v9232
  %vm9303 = vcmask 654336
  %v9304 = vsel %vm9303, %v9299, %v9242
  %v9305 = vsel %vm9303, %v9300, %v9244
  %v9306 = vsel %vm9303, %v9301, %v9246
  %v9307 = vsel %vm9303, %v9302, %v9248
  %vm9308 = vcmask 785408
  %v9309 = vsel %vm9308, %v9304, %v9258
  %v9310 = vsel %vm9308, %v9305, %v9260
  %v9311 = vsel %vm9308, %v9306, %v9262
  %v9312 = vsel %vm9308, %v9307, %v9264
  %vm9313 = vcmask 916480
  %v9314 = vsel %vm9313, %v9309, %v9274
  %v9315 = vsel %vm9313, %v9310, %v9276
  %v9316 = vsel %vm9313, %v9311, %v9278
  %v9317 = vsel %vm9313, %v9312, %v9280
  %vm9318 = vcmp.gt.f32.partialorder %v9314, 0.0
  %vm9319 = vcmp.gt.f32.partialorder %v9315, 0.0
  %vm9320 = vcmp.gt.f32.partialorder %v9316, 0.0
  %vm9321 = vcmp.gt.f32.partialorder %v9317, 0.0
  %v9322 = vmin.f32 %v9314, 0.0
  %v9323 = vmin.f32 %v9315, 0.0
  %v9324 = vmin.f32 %v9316, 0.0
  %v9325 = vmin.f32 %v9317, 0.0
  %v9326 = vmul.f32 %v9322, 1.442695
  %v9327 = vpow.pop %v9326
  %v9328 = vmul.f32 %v9323, 1.442695
  %v9329 = vpow.pop %v9328
  %v9330 = vmul.f32 %v9324, 1.442695
  %v9331 = vpow.pop %v9330
  %v9332 = vmul.f32 %v9325, 1.442695
  %v9333 = vpow.pop %v9332
  %v9334 = vsub.f32 %v9327, 1.0
  %v9335 = vsub.f32 %v9329, 1.0
  %v9336 = vsub.f32 %v9331, 1.0
  %v9337 = vsub.f32 %v9333, 1.0
  %v9338 = vsel %vm9318, %v9314, %v9334
  %v9339 = vsel %vm9319, %v9315, %v9335
  %v9340 = vsel %vm9320, %v9316, %v9336
  %v9341 = vsel %vm9321, %v9317, %v9337
  %v9342 = vtanh.pop %v9338
  %v9343 = vtanh.pop %v9339
  %v9344 = vtanh.pop %v9340
  %v9345 = vtanh.pop %v9341
  %9346 = vst [vmem:[%s6] sm:$0xff] %v9342
  %9347 = vst [vmem:[%s6 + $0x8] sm:$0xff] %v9343
  %9348 = vst [vmem:[%s6 + $0x10] sm:$0xff] %v9344
  %9349 = vst [vmem:[%s6 + $0x18] sm:$0xff] %v9345
  // Predicated region
  $region26: #{baseline_model_forward.1} parent=0 // pred_check
    _
  $region27: #{baseline_model_forward.1} parent=0 // pred_check_branch
    %9351 = sbr.rel (0) target = $region29
  $region28: #{baseline_model_forward.1} parent=0 // pred_region
    _
  $region29: #{baseline_model_forward.1} parent=0 // pred_fallthru
    _
  // Predicated region
  $region30: #{baseline_model_forward.1} parent=0 // pred_check
    _
  $region31: #{baseline_model_forward.1} parent=0 // pred_check_branch
    %9353 = sbr.rel (0) target = $region33
  $region32: #{baseline_model_forward.1} parent=0 // pred_region
    _
  $region33: #{baseline_model_forward.1} parent=0 // pred_fallthru
    _

</llo_original>
